<compile_context>
chip_gen: v7x
topology: tpu7x:2x2x1
jax: 0.10.0
libtpu: 0.0.40
codegen_flags: <defaults>
</compile_context>

<pallas_src>
import math
from functools import partial

import jax
import jax.numpy as jnp
from jax import lax
from jax.experimental import pallas as pl
from jax.experimental.pallas import tpu as pltpu


# ---------------------------------------------------------------------------
# In-kernel helpers
# ---------------------------------------------------------------------------

def _ln(x, g, b, eps=1e-5):
    mu = jnp.mean(x, axis=-1, keepdims=True)
    xc = x - mu
    var = jnp.mean(xc * xc, axis=-1, keepdims=True)
    return xc * lax.rsqrt(var + eps) * g + b


def _softmax_attn(q, k, v):
    # single-head softmax attention, 1/sqrt(D) scaling
    scale = 1.0 / math.sqrt(q.shape[-1])
    s = jnp.dot(q, k.T, preferred_element_type=jnp.float32) * scale
    s = s - jnp.max(s, axis=-1, keepdims=True)
    p = jnp.exp(s)
    denom = jnp.sum(p, axis=-1, keepdims=True)
    p = p * pl.reciprocal(denom, approx=True)
    return jnp.dot(p, v, preferred_element_type=jnp.float32)


def _mm(x, w):
    return jnp.dot(x, w, preferred_element_type=jnp.float32)


# ---------------------------------------------------------------------------
# Pallas kernels
# ---------------------------------------------------------------------------

def _preenc_kernel(x_ref, w1_ref, b1_ref, w2_ref, b2_ref, o_ref):
    # pre-encoder pointwise MLP stand-in: two fused linear+ReLU layers
    h = jnp.maximum(_mm(x_ref[...], w1_ref[...]) + b1_ref[...], 0.0)
    o_ref[...] = jnp.maximum(_mm(h, w2_ref[...]) + b2_ref[...], 0.0)


def _encoder_block_kernel(x_ref, w_ref, b_ref, lng_ref, lnb_ref,
                          ffw1_ref, ffb1_ref, ffw2_ref, ffb2_ref, o_ref):
    # fused transformer encoder layer (per batch element on the grid)
    x = x_ref[0]                                              # [N, D]
    q = _mm(x, w_ref[0]) + b_ref[0]
    k = _mm(x, w_ref[1]) + b_ref[1]
    v = _mm(x, w_ref[2]) + b_ref[2]
    a = _softmax_attn(q, k, v)
    a = _mm(a, w_ref[3]) + b_ref[3]
    x1 = _ln(x + a, lng_ref[0], lnb_ref[0])
    h = jnp.maximum(_mm(x1, ffw1_ref[...]) + ffb1_ref[...], 0.0)
    h = _mm(h, ffw2_ref[...]) + ffb2_ref[...]
    o_ref[0] = _ln(x1 + h, lng_ref[1], lnb_ref[1])


def _mlp3_kernel(x_ref, w1_ref, b1_ref, w2_ref, b2_ref, w3_ref, b3_ref, o_ref):
    # encoder_to_decoder_projection: 3x (conv1d + folded-BN + ReLU) fused
    h = jnp.maximum(_mm(x_ref[...], w1_ref[...]) + b1_ref[...], 0.0)
    h = jnp.maximum(_mm(h, w2_ref[...]) + b2_ref[...], 0.0)
    o_ref[...] = jnp.maximum(_mm(h, w3_ref[...]) + b3_ref[...], 0.0)


def _query_embed_kernel(xyz_ref, gb_ref, w1s_ref, w1c_ref, b1_ref,
                        w2_ref, b2_ref, o_ref):
    # fourier positional embedding (2*pi folded into gb) fused with the
    # 2-layer query projection MLP; the first layer's weight is split into
    # sin/cos halves so no in-kernel concatenate is required.
    proj = _mm(xyz_ref[...], gb_ref[...])
    h = _mm(jnp.sin(proj), w1s_ref[...]) + _mm(jnp.cos(proj), w1c_ref[...]) + b1_ref[...]
    h = jnp.maximum(h, 0.0)
    o_ref[...] = jnp.maximum(_mm(h, w2_ref[...]) + b2_ref[...], 0.0)


def _fourier_kernel(xyz_ref, gb_ref, o_ref):
    # raw fourier positional embedding for the encoder memory
    proj = _mm(xyz_ref[...], gb_ref[...])
    o_ref[...] = jnp.concatenate([jnp.sin(proj), jnp.cos(proj)], axis=-1)


def _decoder_layer_kernel(tgt_ref, qpos_ref, mem_ref, mpos_ref,
                          wsa_ref, bsa_ref, wca_ref, bca_ref,
                          lng_ref, lnb_ref,
                          ffw1_ref, ffb1_ref, ffw2_ref, ffb2_ref,
                          fng_ref, fnb_ref,
                          new_ref, inter_ref):
    # fused transformer decoder layer (per batch element on the grid):
    # self-attn + LN, cross-attn + LN, FFN + LN, plus the shared final norm
    # applied to produce this layer's intermediate output.
    tgt = tgt_ref[0]
    qpos = qpos_ref[0]
    mem = mem_ref[0]
    mpos = mpos_ref[0]

    # self attention: q,k from tgt+query_pos, v from tgt
    tq = tgt + qpos
    q = _mm(tq, wsa_ref[0]) + bsa_ref[0]
    k = _mm(tq, wsa_ref[1]) + bsa_ref[1]
    v = _mm(tgt, wsa_ref[2]) + bsa_ref[2]
    sa = _softmax_attn(q, k, v)
    sa = _mm(sa, wsa_ref[3]) + bsa_ref[3]
    t1 = _ln(tgt + sa, lng_ref[0], lnb_ref[0])

    # cross attention: q from tgt+query_pos, k from mem+pos, v from mem
    q = _mm(t1 + qpos, wca_ref[0]) + bca_ref[0]
    k = _mm(mem + mpos, wca_ref[1]) + bca_ref[1]
    v = _mm(mem, wca_ref[2]) + bca_ref[2]
    ca = _softmax_attn(q, k, v)
    ca = _mm(ca, wca_ref[3]) + bca_ref[3]
    t2 = _ln(t1 + ca, lng_ref[1], lnb_ref[1])

    # feed-forward
    h = jnp.maximum(_mm(t2, ffw1_ref[...]) + ffb1_ref[...], 0.0)
    h = _mm(h, ffw2_ref[...]) + ffb2_ref[...]
    t3 = _ln(t2 + h, lng_ref[2], lnb_ref[2])

    new_ref[0] = t3
    inter_ref[0] = _ln(t3, fng_ref[...], fnb_ref[...])


def _heads_kernel(x_ref, w1_ref, w2_ref, w3_ref, b3_ref, o_ref):
    # three GenericMLP heads (cls=2, regression=6, plane_offset=1) packed
    # block-diagonally: one wide MXU pass per layer, lane-dense (128-wide)
    # output store instead of three masked 1/2/6-wide stores.
    h = jnp.maximum(_mm(x_ref[...], w1_ref[...]), 0.0)        # [M, 3D]
    h = jnp.maximum(_mm(h, w2_ref[...]), 0.0)                 # [M, 3D]
    o_ref[...] = _mm(h, w3_ref[...]) + b3_ref[...]            # [M, 128]


# ---------------------------------------------------------------------------
# BlockSpec helpers
# ---------------------------------------------------------------------------

def _bspec(shape):
    """Batch-gridded tensor: block (1, *rest), index (b, 0, ...)."""
    nzero = len(shape) - 1
    return pl.BlockSpec((1,) + tuple(shape[1:]), lambda b: (b,) + (0,) * nzero)


def _wspec(arr):
    """Weight replicated across the batch grid: full-array block, index 0."""
    nd = arr.ndim
    return pl.BlockSpec(arr.shape, lambda b: (0,) * nd)


# ---------------------------------------------------------------------------
# Wrappers (one pallas_call per fused block)
# ---------------------------------------------------------------------------

def pre_encoder(p, xyz, n_sample):
    # TODO(synk): real 3DETR pre_encoder uses furthest-point sampling +
    # PointNet++ set abstraction; deterministic subsample + fused pointwise
    # MLP stand-in is used here.
    bsz = xyz.shape[0]
    inds = jnp.broadcast_to(jnp.arange(n_sample, dtype=jnp.int32)[None], (bsz, n_sample))
    sub_xyz = xyz[:, :n_sample, :]
    d = p['w1'].shape[1]
    feats = pl.pallas_call(
        _preenc_kernel,
        out_shape=jax.ShapeDtypeStruct((bsz * n_sample, d), jnp.float32),
    )(sub_xyz.reshape(bsz * n_sample, 3), p['w1'], p['b1'], p['w2'], p['b2'])
    return sub_xyz, feats.reshape(bsz, n_sample, d), inds


def encoder_block(p, x_bnd):
    bsz, n, d = x_bnd.shape
    return pl.pallas_call(
        _encoder_block_kernel,
        out_shape=jax.ShapeDtypeStruct((bsz, n, d), jnp.float32),
        grid=(bsz,),
        in_specs=[
            _bspec(x_bnd.shape),
            _wspec(p['w_attn']), _wspec(p['b_attn']),
            _wspec(p['ln_g']), _wspec(p['ln_b']),
            _wspec(p['ffw1']), _wspec(p['ffb1']),
            _wspec(p['ffw2']), _wspec(p['ffb2']),
        ],
        out_specs=_bspec((bsz, n, d)),
        compiler_params=pltpu.CompilerParams(dimension_semantics=("parallel",)),
    )(x_bnd, p['w_attn'], p['b_attn'], p['ln_g'], p['ln_b'],
      p['ffw1'], p['ffb1'], p['ffw2'], p['ffb2'])


def mlp3(p, x2d):
    m = x2d.shape[0]
    return pl.pallas_call(
        _mlp3_kernel,
        out_shape=jax.ShapeDtypeStruct((m, p['w3'].shape[1]), jnp.float32),
    )(x2d, p['w1'], p['b1'], p['w2'], p['b2'], p['w3'], p['b3'])


def query_embed(p, gb, xyz_flat):
    m = xyz_flat.shape[0]
    d = p['w2'].shape[1]
    return pl.pallas_call(
        _query_embed_kernel,
        out_shape=jax.ShapeDtypeStruct((m, d), jnp.float32),
    )(xyz_flat, gb, p['w1_sin'], p['w1_cos'], p['b1'], p['w2'], p['b2'])


def fourier_embed(gb, xyz_flat):
    m = xyz_flat.shape[0]
    d = 2 * gb.shape[1]
    return pl.pallas_call(
        _fourier_kernel,
        out_shape=jax.ShapeDtypeStruct((m, d), jnp.float32),
    )(xyz_flat, gb)


def decoder_layer(layer, final_g, final_b, tgt, qpos, mem, mpos):
    bsz, nq, d = tgt.shape
    out_shape = (jax.ShapeDtypeStruct((bsz, nq, d), jnp.float32),
                 jax.ShapeDtypeStruct((bsz, nq, d), jnp.float32))
    return pl.pallas_call(
        _decoder_layer_kernel,
        out_shape=out_shape,
        grid=(bsz,),
        in_specs=[
            _bspec(tgt.shape), _bspec(qpos.shape),
            _bspec(mem.shape), _bspec(mpos.shape),
            _wspec(layer['w_sa']), _wspec(layer['b_sa']),
            _wspec(layer['w_ca']), _wspec(layer['b_ca']),
            _wspec(layer['ln_g']), _wspec(layer['ln_b']),
            _wspec(layer['ffw1']), _wspec(layer['ffb1']),
            _wspec(layer['ffw2']), _wspec(layer['ffb2']),
            _wspec(final_g), _wspec(final_b),
        ],
        out_specs=(_bspec((bsz, nq, d)), _bspec((bsz, nq, d))),
        compiler_params=pltpu.CompilerParams(dimension_semantics=("parallel",)),
    )(tgt, qpos, mem, mpos,
      layer['w_sa'], layer['b_sa'], layer['w_ca'], layer['b_ca'],
      layer['ln_g'], layer['ln_b'],
      layer['ffw1'], layer['ffb1'], layer['ffw2'], layer['ffb2'],
      final_g, final_b)


def get_plane_predictions(params, query_xyz, box_features):
    num_layers, bsz, nq, d = box_features.shape
    hp = params['heads']
    m = num_layers * bsz * nq
    out = pl.pallas_call(
        _heads_kernel,
        out_shape=jax.ShapeDtypeStruct((m, hp['w3'].shape[1]), jnp.float32),
    )(box_features.reshape(m, d), hp['w1'], hp['w2'], hp['w3'], hp['b3'])
    out = out[:, :hp['n_out']].reshape(num_layers, bsz, nq, hp['n_out'])
    cls_logits = out[..., 0:2]
    # normal_offset = out[..., 2:8] feeds compute_predicted_normal, whose
    # ortho6d rotation matrix is dead code in the reference: it returns
    # query_xyz for both normals, so we do exactly that.
    plane_offset = out[..., 8:9]
    outputs = []
    for l in range(num_layers):
        cls_prob = jax.nn.softmax(cls_logits[l], axis=-1)
        outputs.append({
            'cls_logits': cls_logits[l],
            'normal_normalized': query_xyz,
            'normal_unnormalized': query_xyz,
            'plane_offset': plane_offset[l],
            'cls_prob': cls_prob,
        })
    return {'outputs': outputs[-1], 'aux_outputs': outputs[:-1]}


def model_forward(params, inputs, encoder_only=False):
    point_clouds = inputs['point_clouds']
    xyz = point_clouds[..., 0:3]            # _break_up_pc (features=None: only xyz)
    bsz = xyz.shape[0]
    d = params['d']

    sub_xyz, pre_feats, pre_inds = pre_encoder(params['pre_encoder'], xyz,
                                               params['n_sample'])
    enc_feats = encoder_block(params['encoder'], pre_feats)   # [B, N', D]
    enc_xyz = sub_xyz
    enc_inds = pre_inds                                        # encoder returns no inds

    n = enc_feats.shape[1]
    enc_feats = mlp3(params['enc_to_dec'],
                     enc_feats.reshape(bsz * n, d)).reshape(bsz, n, d)
    if encoder_only:
        return enc_xyz, enc_feats

    nq = params['query_normals'].shape[0]
    query_xyz = jnp.broadcast_to(params['query_normals'][None], (bsz, nq, 3))
    q_embed = query_embed(params['query_proj'], params['gauss_B_2pi'],
                          query_xyz.reshape(bsz * nq, 3)).reshape(bsz, nq, d)
    enc_pos = fourier_embed(params['gauss_B_2pi'],
                            enc_xyz.reshape(bsz * n, 3)).reshape(bsz, n, d)

    tgt = jnp.zeros((bsz, nq, d), jnp.float32)
    dec = params['decoder']
    intermediates = []
    for layer in dec['layers']:
        tgt, inter = decoder_layer(layer, dec['final_g'], dec['final_b'],
                                   tgt, q_embed, enc_feats, enc_pos)
        intermediates.append(inter)
    box_features = jnp.stack(intermediates, axis=0)            # [L, B, nq, D]

    return get_plane_predictions(params, query_xyz, box_features)


# ---------------------------------------------------------------------------
# Deterministic parameter construction (bias / eval-BN folded into weights)
# ---------------------------------------------------------------------------

def build_params(key, d=32, d_ff=64, n_sample=16, num_queries=8, num_dec_layers=2):
    ks = iter(jax.random.split(key, 256))

    def wmat(cin, cout):
        return (jax.random.normal(next(ks), (cin, cout), jnp.float32)
                / math.sqrt(cin)).astype(jnp.float32)

    def zeros(*shape):
        return jnp.zeros(shape, jnp.float32)

    def ones(*shape):
        return jnp.ones(shape, jnp.float32)

    def attn_stack():
        # stacked q, k, v, o projection weights + (folded) biases
        w = jnp.stack([wmat(d, d) for _ in range(4)], axis=0)   # [4, D, D]
        b = zeros(4, 1, d)
        return w, b

    params = {'n_sample': n_sample, 'd': d}

    # pre_encoder stand-in: two pointwise linear+ReLU layers
    params['pre_encoder'] = {'w1': wmat(3, d), 'b1': zeros(1, d),
                             'w2': wmat(d, d), 'b2': zeros(1, d)}

    # encoder layer
    ew, eb = attn_stack()
    params['encoder'] = {
        'w_attn': ew, 'b_attn': eb,
        'ln_g': ones(2, 1, d), 'ln_b': zeros(2, 1, d),
        'ffw1': wmat(d, d_ff), 'ffb1': zeros(1, d_ff),
        'ffw2': wmat(d_ff, d), 'ffb2': zeros(1, d),
    }

    # encoder_to_decoder_projection: GenericMLP(D -> [D, D] -> D), bn1d + relu
    # on every layer, no biases; eval-mode fresh-init BN folds to identity so
    # the effective per-layer op is x @ w + 0.
    params['enc_to_dec'] = {'w1': wmat(d, d), 'b1': zeros(1, d),
                            'w2': wmat(d, d), 'b2': zeros(1, d),
                            'w3': wmat(d, d), 'b3': zeros(1, d)}

    # PositionEmbeddingCoordsSine('fourier'): gaussian B buffer [3, d_pos//2],
    # with the 2*pi scale folded in at build time.
    d_half = d // 2
    params['gauss_B_2pi'] = (jax.random.normal(next(ks), (3, d_half), jnp.float32)
                             * (2.0 * math.pi))

    # query_projection: GenericMLP(D -> [D] -> D), biases, relu on hidden and
    # output.  First-layer weight split into sin/cos halves (pos-embed layout
    # is [sin | cos] along the channel dim).
    w1 = wmat(d, d)
    params['query_proj'] = {'w1_sin': w1[:d_half], 'w1_cos': w1[d_half:],
                            'b1': zeros(1, d),
                            'w2': wmat(d, d), 'b2': zeros(1, d)}

    # QUERY_NORMALS global constant: deterministic unit vectors [num_queries, 3]
    ang = jnp.arange(num_queries, dtype=jnp.float32) * (2.0 * math.pi / num_queries)
    qn = jnp.stack([jnp.cos(ang), jnp.sin(ang), 0.5 * jnp.ones_like(ang)], axis=-1)
    params['query_normals'] = qn / jnp.linalg.norm(qn, axis=-1, keepdims=True)

    # decoder layers
    layers = []
    for _ in range(num_dec_layers):
        wsa, bsa = attn_stack()
        wca, bca = attn_stack()
        layers.append({
            'w_sa': wsa, 'b_sa': bsa, 'w_ca': wca, 'b_ca': bca,
            'ln_g': ones(3, 1, d), 'ln_b': zeros(3, 1, d),
            'ffw1': wmat(d, d_ff), 'ffb1': zeros(1, d_ff),
            'ffw2': wmat(d_ff, d), 'ffb2': zeros(1, d),
        })
    params['decoder'] = {'layers': layers,
                         'final_g': ones(1, d), 'final_b': zeros(1, d)}

    # mlp heads: GenericMLP(D -> [D, D] -> c) with bn1d + relu (+ dropout,
    # identity in eval).  The three heads (cls=2, reg=6, offset=1) are packed
    # block-diagonally so one kernel evaluates all of them; the final weight is
    # padded to 128 output columns for a lane-dense store.
    def head_tri(cout):
        return wmat(d, d), wmat(d, d), wmat(d, cout)
    h_cls, h_reg, h_off = head_tri(2), head_tri(6), head_tri(1)
    W1 = jnp.concatenate([h_cls[0], h_reg[0], h_off[0]], axis=1)     # [D, 3D]
    W2 = jnp.zeros((3 * d, 3 * d), jnp.float32)
    W2 = (W2.at[0:d, 0:d].set(h_cls[1])
            .at[d:2 * d, d:2 * d].set(h_reg[1])
            .at[2 * d:, 2 * d:].set(h_off[1]))
    head_pad = 128
    W3 = jnp.zeros((3 * d, head_pad), jnp.float32)
    W3 = (W3.at[0:d, 0:2].set(h_cls[2])
            .at[d:2 * d, 2:8].set(h_reg[2])
            .at[2 * d:, 8:9].set(h_off[2]))
    params['heads'] = {'w1': W1, 'w2': W2, 'w3': W3,
                       'b3': zeros(1, head_pad), 'n_out': 9}
    return params


if __name__ == "__main__":
    key = jax.random.PRNGKey(0)
    pkey, dkey = jax.random.split(key)
    D = 32          # encoder_dim == decoder_dim == d_pos
    B = 2           # batch
    N_POINTS = 64   # raw points per cloud
    params = build_params(pkey, d=D, d_ff=64, n_sample=16, num_queries=8,
                          num_dec_layers=2)
    point_clouds = jax.random.uniform(dkey, (B, N_POINTS, 3), jnp.float32,
                                      minval=-1.0, maxval=1.0)

    fwd = jax.jit(lambda pc: model_forward(params, {'point_clouds': pc}))
    preds = fwd(point_clouds)

    jax.block_until_ready(preds['outputs']['cls_logits'])
    jax.block_until_ready(preds['outputs']['cls_prob'])
    jax.block_until_ready(preds['outputs']['normal_normalized'])
    jax.block_until_ready(preds['outputs']['plane_offset'])
    for aux in preds['aux_outputs']:
        jax.block_until_ready(aux['cls_logits'])
    print("KERNEL_OK")
</pallas_src>

<mosaic_0001>
module attributes {stable_mosaic.version = 11 : i64} {
  func.func @_preenc_kernel(%arg0: memref<32x3xf32, #tpu.memory_space<vmem>>, %arg1: memref<3x32xf32, #tpu.memory_space<vmem>>, %arg2: memref<1x32xf32, #tpu.memory_space<vmem>>, %arg3: memref<32x32xf32, #tpu.memory_space<vmem>>, %arg4: memref<1x32xf32, #tpu.memory_space<vmem>>, %arg5: memref<32x32xf32, #tpu.memory_space<vmem>>) attributes {dimension_semantics = [], scalar_prefetch = 0 : i64, scratch_operands = 0 : i64, tpu.core_type = #tpu.core_type<tc>} {
    %c0 = arith.constant 0 : index
    %c0_0 = arith.constant 0 : index
    %0 = vector.load %arg0[%c0, %c0_0] : memref<32x3xf32, #tpu.memory_space<vmem>>, vector<32x3xf32>
    %c0_1 = arith.constant 0 : index
    %c0_2 = arith.constant 0 : index
    %1 = vector.load %arg1[%c0_1, %c0_2] : memref<3x32xf32, #tpu.memory_space<vmem>>, vector<3x32xf32>
    %cst = arith.constant dense<0.000000e+00> : vector<32x32xf32>
    %2 = tpu.matmul %0, %1, %cst {dimension_numbers = #tpu.dot_dimension_numbers<[1], [0], [0], [1], [0, 0, 1, 1], [], []>} : vector<32x3xf32>, vector<3x32xf32>, vector<32x32xf32> -> vector<32x32xf32>
    %c0_3 = arith.constant 0 : index
    %c0_4 = arith.constant 0 : index
    %3 = vector.load %arg2[%c0_3, %c0_4] : memref<1x32xf32, #tpu.memory_space<vmem>>, vector<1x32xf32>
    %4 = vector.broadcast %3 : vector<1x32xf32> to vector<32x32xf32>
    %5 = arith.addf %2, %4 : vector<32x32xf32>
    %cst_5 = arith.constant 0.000000e+00 : f32
    %6 = vector.broadcast %cst_5 : f32 to vector<32x32xf32>
    %7 = arith.maximumf %5, %6 : vector<32x32xf32>
    %c0_6 = arith.constant 0 : index
    %c0_7 = arith.constant 0 : index
    %8 = vector.load %arg3[%c0_6, %c0_7] : memref<32x32xf32, #tpu.memory_space<vmem>>, vector<32x32xf32>
    %cst_8 = arith.constant dense<0.000000e+00> : vector<32x32xf32>
    %9 = tpu.matmul %7, %8, %cst_8 {dimension_numbers = #tpu.dot_dimension_numbers<[1], [0], [0], [1], [0, 0, 1, 1], [], []>} : vector<32x32xf32>, vector<32x32xf32>, vector<32x32xf32> -> vector<32x32xf32>
    %c0_9 = arith.constant 0 : index
    %c0_10 = arith.constant 0 : index
    %10 = vector.load %arg4[%c0_9, %c0_10] : memref<1x32xf32, #tpu.memory_space<vmem>>, vector<1x32xf32>
    %11 = vector.broadcast %10 : vector<1x32xf32> to vector<32x32xf32>
    %12 = arith.addf %9, %11 : vector<32x32xf32>
    %cst_11 = arith.constant 0.000000e+00 : f32
    %13 = vector.broadcast %cst_11 : f32 to vector<32x32xf32>
    %14 = arith.maximumf %12, %13 : vector<32x32xf32>
    %c0_12 = arith.constant 0 : index
    %c0_13 = arith.constant 0 : index
    %15 = vector.load %arg5[%c0_12, %c0_13] : memref<32x32xf32, #tpu.memory_space<vmem>>, vector<32x32xf32>
    tpu.vector_store %arg5[%c0_12, %c0_13], %14 {strides = array<i32>} : memref<32x32xf32, #tpu.memory_space<vmem>>, vector<32x32xf32>,
    return
  }
}

module attributes {stable_mosaic.version = 11 : i64} {
  func.func @_mlp3_kernel(%arg0: memref<32x32xf32, #tpu.memory_space<vmem>>, %arg1: memref<32x32xf32, #tpu.memory_space<vmem>>, %arg2: memref<1x32xf32, #tpu.memory_space<vmem>>, %arg3: memref<32x32xf32, #tpu.memory_space<vmem>>, %arg4: memref<1x32xf32, #tpu.memory_space<vmem>>, %arg5: memref<32x32xf32, #tpu.memory_space<vmem>>, %arg6: memref<1x32xf32, #tpu.memory_space<vmem>>, %arg7: memref<32x32xf32, #tpu.memory_space<vmem>>) attributes {dimension_semantics = [], scalar_prefetch = 0 : i64, scratch_operands = 0 : i64, tpu.core_type = #tpu.core_type<tc>} {
    %c0 = arith.constant 0 : index
    %c0_0 = arith.constant 0 : index
    %0 = vector.load %arg0[%c0, %c0_0] : memref<32x32xf32, #tpu.memory_space<vmem>>, vector<32x32xf32>
    %c0_1 = arith.constant 0 : index
    %c0_2 = arith.constant 0 : index
    %1 = vector.load %arg1[%c0_1, %c0_2] : memref<32x32xf32, #tpu.memory_space<vmem>>, vector<32x32xf32>
    %cst = arith.constant dense<0.000000e+00> : vector<32x32xf32>
    %2 = tpu.matmul %0, %1, %cst {dimension_numbers = #tpu.dot_dimension_numbers<[1], [0], [0], [1], [0, 0, 1, 1], [], []>} : vector<32x32xf32>, vector<32x32xf32>, vector<32x32xf32> -> vector<32x32xf32>
    %c0_3 = arith.constant 0 : index
    %c0_4 = arith.constant 0 : index
    %3 = vector.load %arg2[%c0_3, %c0_4] : memref<1x32xf32, #tpu.memory_space<vmem>>, vector<1x32xf32>
    %4 = vector.broadcast %3 : vector<1x32xf32> to vector<32x32xf32>
    %5 = arith.addf %2, %4 : vector<32x32xf32>
    %cst_5 = arith.constant 0.000000e+00 : f32
    %6 = vector.broadcast %cst_5 : f32 to vector<32x32xf32>
    %7 = arith.maximumf %5, %6 : vector<32x32xf32>
    %c0_6 = arith.constant 0 : index
    %c0_7 = arith.constant 0 : index
    %8 = vector.load %arg3[%c0_6, %c0_7] : memref<32x32xf32, #tpu.memory_space<vmem>>, vector<32x32xf32>
    %cst_8 = arith.constant dense<0.000000e+00> : vector<32x32xf32>
    %9 = tpu.matmul %7, %8, %cst_8 {dimension_numbers = #tpu.dot_dimension_numbers<[1], [0], [0], [1], [0, 0, 1, 1], [], []>} : vector<32x32xf32>, vector<32x32xf32>, vector<32x32xf32> -> vector<32x32xf32>
    %c0_9 = arith.constant 0 : index
    %c0_10 = arith.constant 0 : index
    %10 = vector.load %arg4[%c0_9, %c0_10] : memref<1x32xf32, #tpu.memory_space<vmem>>, vector<1x32xf32>
    %11 = vector.broadcast %10 : vector<1x32xf32> to vector<32x32xf32>
    %12 = arith.addf %9, %11 : vector<32x32xf32>
    %cst_11 = arith.constant 0.000000e+00 : f32
    %13 = vector.broadcast %cst_11 : f32 to vector<32x32xf32>
    %14 = arith.maximumf %12, %13 : vector<32x32xf32>
    %c0_12 = arith.constant 0 : index
    %c0_13 = arith.constant 0 : index
    %15 = vector.load %arg5[%c0_12, %c0_13] : memref<32x32xf32, #tpu.memory_space<vmem>>, vector<32x32xf32>
    %cst_14 = arith.constant dense<0.000000e+00> : vector<32x32xf32>
    %16 = tpu.matmul %14, %15, %cst_14 {dimension_numbers = #tpu.dot_dimension_numbers<[1], [0], [0], [1], [0, 0, 1, 1], [], []>} : vector<32x32xf32>, vector<32x32xf32>, vector<32x32xf32> -> vector<32x32xf32>
    %c0_15 = arith.constant 0 : index
    %c0_16 = arith.constant 0 : index
    %17 = vector.load %arg6[%c0_15, %c0_16] : memref<1x32xf32, #tpu.memory_space<vmem>>, vector<1x32xf32>
    %18 = vector.broadcast %17 : vector<1x32xf32> to vector<32x32xf32>
    %19 = arith.addf %16, %18 : vector<32x32xf32>
    %cst_17 = arith.constant 0.000000e+00 : f32
    %20 = vector.broadcast %cst_17 : f32 to vector<32x32xf32>
    %21 = arith.maximumf %19, %20 : vector<32x32xf32>
    %c0_18 = arith.constant 0 : index
    %c0_19 = arith.constant 0 : index
    %22 = vector.load %arg7[%c0_18, %c0_19] : memref<32x32xf32, #tpu.memory_space<vmem>>, vector<32x32xf32>
    tpu.vector_store %arg7[%c0_18, %c0_19], %21 {strides = array<i32>} : memref<32x32xf32, #tpu.memory_space<vmem>>, vector<32x32xf32>,
    return
  }
}

module attributes {stable_mosaic.version = 11 : i64} {
  func.func @_encoder_block_kernel(%arg0: i32, %arg1: memref<1x16x32xf32, #tpu.memory_space<vmem>>, %arg2: memref<4x32x32xf32, #tpu.memory_space<vmem>>, %arg3: memref<4x1x32xf32, #tpu.memory_space<vmem>>, %arg4: memref<2x1x32xf32, #tpu.memory_space<vmem>>, %arg5: memref<2x1x32xf32, #tpu.memory_space<vmem>>, %arg6: memref<32x64xf32, #tpu.memory_space<vmem>>, %arg7: memref<1x64xf32, #tpu.memory_space<vmem>>, %arg8: memref<64x32xf32, #tpu.memory_space<vmem>>, %arg9: memref<1x32xf32, #tpu.memory_space<vmem>>, %arg10: memref<1x16x32xf32, #tpu.memory_space<vmem>>) attributes {dimension_semantics = [#tpu.dimension_semantics<parallel>], iteration_bounds = array<i64: 2>, scalar_prefetch = 0 : i64, scratch_operands = 0 : i64, tpu.core_type = #tpu.core_type<tc>, window_params = [{transform_indices = @transform_0, window_bounds = array<i64: 1, 16, 32>}, {pipeline_mode = #tpu.pipeline_mode<synchronous>, transform_indices = @transform_1, window_bounds = array<i64: 4, 32, 32>}, {pipeline_mode = #tpu.pipeline_mode<synchronous>, transform_indices = @transform_2, window_bounds = array<i64: 4, 1, 32>}, {pipeline_mode = #tpu.pipeline_mode<synchronous>, transform_indices = @transform_3, window_bounds = array<i64: 2, 1, 32>}, {pipeline_mode = #tpu.pipeline_mode<synchronous>, transform_indices = @transform_4, window_bounds = array<i64: 2, 1, 32>}, {pipeline_mode = #tpu.pipeline_mode<synchronous>, transform_indices = @transform_5, window_bounds = array<i64: 32, 64>}, {pipeline_mode = #tpu.pipeline_mode<synchronous>, transform_indices = @transform_6, window_bounds = array<i64: 1, 64>}, {pipeline_mode = #tpu.pipeline_mode<synchronous>, transform_indices = @transform_7, window_bounds = array<i64: 64, 32>}, {pipeline_mode = #tpu.pipeline_mode<synchronous>, transform_indices = @transform_8, window_bounds = array<i64: 1, 32>}, {transform_indices = @transform_9, window_bounds = array<i64: 1, 16, 32>}]} {
    %c0 = arith.constant 0 : index
    %c0_0 = arith.constant 0 : index
    %c0_1 = arith.constant 0 : index
    %0 = vector.load %arg1[%c0, %c0_0, %c0_1] : memref<1x16x32xf32, #tpu.memory_space<vmem>>, vector<1x16x32xf32>
    %1 = vector.shape_cast %0 : vector<1x16x32xf32> to vector<16x32xf32>
    %c0_2 = arith.constant 0 : index
    %c0_3 = arith.constant 0 : index
    %c0_4 = arith.constant 0 : index
    %2 = vector.load %arg2[%c0_2, %c0_3, %c0_4] : memref<4x32x32xf32, #tpu.memory_space<vmem>>, vector<1x32x32xf32>
    %3 = vector.shape_cast %2 : vector<1x32x32xf32> to vector<32x32xf32>
    %cst = arith.constant dense<0.000000e+00> : vector<16x32xf32>
    %4 = tpu.matmul %1, %3, %cst {dimension_numbers = #tpu.dot_dimension_numbers<[1], [0], [0], [1], [0, 0, 1, 1], [], []>} : vector<16x32xf32>, vector<32x32xf32>, vector<16x32xf32> -> vector<16x32xf32>
    %c0_5 = arith.constant 0 : index
    %c0_6 = arith.constant 0 : index
    %c0_7 = arith.constant 0 : index
    %5 = vector.load %arg3[%c0_5, %c0_6, %c0_7] : memref<4x1x32xf32, #tpu.memory_space<vmem>>, vector<1x1x32xf32>
    %6 = vector.shape_cast %5 : vector<1x1x32xf32> to vector<1x32xf32>
    %7 = vector.broadcast %6 : vector<1x32xf32> to vector<16x32xf32>
    %8 = arith.addf %4, %7 : vector<16x32xf32>
    %c1 = arith.constant 1 : index
    %c0_8 = arith.constant 0 : index
    %c0_9 = arith.constant 0 : index
    %9 = vector.load %arg2[%c1, %c0_8, %c0_9] : memref<4x32x32xf32, #tpu.memory_space<vmem>>, vector<1x32x32xf32>
    %10 = vector.shape_cast %9 : vector<1x32x32xf32> to vector<32x32xf32>
    %cst_10 = arith.constant dense<0.000000e+00> : vector<16x32xf32>
    %11 = tpu.matmul %1, %10, %cst_10 {dimension_numbers = #tpu.dot_dimension_numbers<[1], [0], [0], [1], [0, 0, 1, 1], [], []>} : vector<16x32xf32>, vector<32x32xf32>, vector<16x32xf32> -> vector<16x32xf32>
    %c1_11 = arith.constant 1 : index
    %c0_12 = arith.constant 0 : index
    %c0_13 = arith.constant 0 : index
    %12 = vector.load %arg3[%c1_11, %c0_12, %c0_13] : memref<4x1x32xf32, #tpu.memory_space<vmem>>, vector<1x1x32xf32>
    %13 = vector.shape_cast %12 : vector<1x1x32xf32> to vector<1x32xf32>
    %14 = vector.broadcast %13 : vector<1x32xf32> to vector<16x32xf32>
    %15 = arith.addf %11, %14 : vector<16x32xf32>
    %c2 = arith.constant 2 : index
    %c0_14 = arith.constant 0 : index
    %c0_15 = arith.constant 0 : index
    %16 = vector.load %arg2[%c2, %c0_14, %c0_15] : memref<4x32x32xf32, #tpu.memory_space<vmem>>, vector<1x32x32xf32>
    %17 = vector.shape_cast %16 : vector<1x32x32xf32> to vector<32x32xf32>
    %cst_16 = arith.constant dense<0.000000e+00> : vector<16x32xf32>
    %18 = tpu.matmul %1, %17, %cst_16 {dimension_numbers = #tpu.dot_dimension_numbers<[1], [0], [0], [1], [0, 0, 1, 1], [], []>} : vector<16x32xf32>, vector<32x32xf32>, vector<16x32xf32> -> vector<16x32xf32>
    %c2_17 = arith.constant 2 : index
    %c0_18 = arith.constant 0 : index
    %c0_19 = arith.constant 0 : index
    %19 = vector.load %arg3[%c2_17, %c0_18, %c0_19] : memref<4x1x32xf32, #tpu.memory_space<vmem>>, vector<1x1x32xf32>
    %20 = vector.shape_cast %19 : vector<1x1x32xf32> to vector<1x32xf32>
    %21 = vector.broadcast %20 : vector<1x32xf32> to vector<16x32xf32>
    %22 = arith.addf %18, %21 : vector<16x32xf32>
    %23 = tpu.transpose %15, [1, 0] : vector<16x32xf32> -> vector<32x16xf32>
    %cst_20 = arith.constant dense<0.000000e+00> : vector<16x16xf32>
    %24 = tpu.matmul %8, %23, %cst_20 {dimension_numbers = #tpu.dot_dimension_numbers<[1], [0], [0], [1], [0, 0, 1, 1], [], []>} : vector<16x32xf32>, vector<32x16xf32>, vector<16x16xf32> -> vector<16x16xf32>
    %cst_21 = arith.constant 0.176776692 : f32
    %25 = vector.broadcast %cst_21 : f32 to vector<16x16xf32>
    %26 = arith.mulf %24, %25 : vector<16x16xf32>
    %cst_22 = arith.constant dense<0xFF800000> : vector<16xf32>
    %27 = vector.multi_reduction <maximumf>, %26, %cst_22 [1] : vector<16x16xf32> to vector<16xf32>
    %28 = vector.shape_cast %27 : vector<16xf32> to vector<16x1xf32>
    %29 = vector.broadcast %28 : vector<16x1xf32> to vector<16x16xf32>
    %30 = arith.subf %26, %29 : vector<16x16xf32>
    %31 = math.exp %30 : vector<16x16xf32>
    %cst_23 = arith.constant dense<0.000000e+00> : vector<16xf32>
    %32 = vector.multi_reduction <add>, %31, %cst_23 [1] : vector<16x16xf32> to vector<16xf32>
    %33 = vector.shape_cast %32 : vector<16xf32> to vector<16x1xf32>
    %34 = tpu.reciprocal %33 {approx = true} : vector<16x1xf32> -> vector<16x1xf32>
    %35 = vector.broadcast %34 : vector<16x1xf32> to vector<16x16xf32>
    %36 = arith.mulf %31, %35 : vector<16x16xf32>
    %cst_24 = arith.constant dense<0.000000e+00> : vector<16x32xf32>
    %37 = tpu.matmul %36, %22, %cst_24 {dimension_numbers = #tpu.dot_dimension_numbers<[1], [0], [0], [1], [0, 0, 1, 1], [], []>} : vector<16x16xf32>, vector<16x32xf32>, vector<16x32xf32> -> vector<16x32xf32>
    %c3 = arith.constant 3 : index
    %c0_25 = arith.constant 0 : index
    %c0_26 = arith.constant 0 : index
    %38 = vector.load %arg2[%c3, %c0_25, %c0_26] : memref<4x32x32xf32, #tpu.memory_space<vmem>>, vector<1x32x32xf32>
    %39 = vector.shape_cast %38 : vector<1x32x32xf32> to vector<32x32xf32>
    %cst_27 = arith.constant dense<0.000000e+00> : vector<16x32xf32>
    %40 = tpu.matmul %37, %39, %cst_27 {dimension_numbers = #tpu.dot_dimension_numbers<[1], [0], [0], [1], [0, 0, 1, 1], [], []>} : vector<16x32xf32>, vector<32x32xf32>, vector<16x32xf32> -> vector<16x32xf32>
    %c3_28 = arith.constant 3 : index
    %c0_29 = arith.constant 0 : index
    %c0_30 = arith.constant 0 : index
    %41 = vector.load %arg3[%c3_28, %c0_29, %c0_30] : memref<4x1x32xf32, #tpu.memory_space<vmem>>, vector<1x1x32xf32>
    %42 = vector.shape_cast %41 : vector<1x1x32xf32> to vector<1x32xf32>
    %43 = vector.broadcast %42 : vector<1x32xf32> to vector<16x32xf32>
    %44 = arith.addf %40, %43 : vector<16x32xf32>
    %45 = arith.addf %1, %44 : vector<16x32xf32>
    %c0_31 = arith.constant 0 : index
    %c0_32 = arith.constant 0 : index
    %c0_33 = arith.constant 0 : index
    %46 = vector.load %arg4[%c0_31, %c0_32, %c0_33] : memref<2x1x32xf32, #tpu.memory_space<vmem>>, vector<1x1x32xf32>
    %47 = vector.shape_cast %46 : vector<1x1x32xf32> to vector<1x32xf32>
    %c0_34 = arith.constant 0 : index
    %c0_35 = arith.constant 0 : index
    %c0_36 = arith.constant 0 : index
    %48 = vector.load %arg5[%c0_34, %c0_35, %c0_36] : memref<2x1x32xf32, #tpu.memory_space<vmem>>, vector<1x1x32xf32>
    %49 = vector.shape_cast %48 : vector<1x1x32xf32> to vector<1x32xf32>
    %cst_37 = arith.constant dense<0.000000e+00> : vector<16xf32>
    %50 = vector.multi_reduction <add>, %45, %cst_37 [1] : vector<16x32xf32> to vector<16xf32>
    %51 = vector.shape_cast %50 : vector<16xf32> to vector<16x1xf32>
    %cst_38 = arith.constant 3.200000e+01 : f32
    %52 = vector.broadcast %cst_38 : f32 to vector<16x1xf32>
    %53 = arith.divf %51, %52 : vector<16x1xf32>
    %54 = vector.broadcast %53 : vector<16x1xf32> to vector<16x32xf32>
    %55 = arith.subf %45, %54 : vector<16x32xf32>
    %56 = arith.mulf %55, %55 : vector<16x32xf32>
    %cst_39 = arith.constant dense<0.000000e+00> : vector<16xf32>
    %57 = vector.multi_reduction <add>, %56, %cst_39 [1] : vector<16x32xf32> to vector<16xf32>
    %58 = vector.shape_cast %57 : vector<16xf32> to vector<16x1xf32>
    %cst_40 = arith.constant 3.200000e+01 : f32
    %59 = vector.broadcast %cst_40 : f32 to vector<16x1xf32>
    %60 = arith.divf %58, %59 : vector<16x1xf32>
    %cst_41 = arith.constant 9.99999974E-6 : f32
    %61 = vector.broadcast %cst_41 : f32 to vector<16x1xf32>
    %62 = arith.addf %60, %61 : vector<16x1xf32>
    %63 = math.rsqrt %62 : vector<16x1xf32>
    %64 = vector.broadcast %63 : vector<16x1xf32> to vector<16x32xf32>
    %65 = arith.mulf %55, %64 : vector<16x32xf32>
    %66 = vector.broadcast %47 : vector<1x32xf32> to vector<16x32xf32>
    %67 = arith.mulf %65, %66 : vector<16x32xf32>
    %68 = vector.broadcast %49 : vector<1x32xf32> to vector<16x32xf32>
    %69 = arith.addf %67, %68 : vector<16x32xf32>
    %c0_42 = arith.constant 0 : index
    %c0_43 = arith.constant 0 : index
    %70 = vector.load %arg6[%c0_42, %c0_43] : memref<32x64xf32, #tpu.memory_space<vmem>>, vector<32x64xf32>
    %cst_44 = arith.constant dense<0.000000e+00> : vector<16x64xf32>
    %71 = tpu.matmul %69, %70, %cst_44 {dimension_numbers = #tpu.dot_dimension_numbers<[1], [0], [0], [1], [0, 0, 1, 1], [], []>} : vector<16x32xf32>, vector<32x64xf32>, vector<16x64xf32> -> vector<16x64xf32>
    %c0_45 = arith.constant 0 : index
    %c0_46 = arith.constant 0 : index
    %72 = vector.load %arg7[%c0_45, %c0_46] : memref<1x64xf32, #tpu.memory_space<vmem>>, vector<1x64xf32>
    %73 = vector.broadcast %72 : vector<1x64xf32> to vector<16x64xf32>
    %74 = arith.addf %71, %73 : vector<16x64xf32>
    %cst_47 = arith.constant 0.000000e+00 : f32
    %75 = vector.broadcast %cst_47 : f32 to vector<16x64xf32>
    %76 = arith.maximumf %74, %75 : vector<16x64xf32>
    %c0_48 = arith.constant 0 : index
    %c0_49 = arith.constant 0 : index
    %77 = vector.load %arg8[%c0_48, %c0_49] : memref<64x32xf32, #tpu.memory_space<vmem>>, vector<64x32xf32>
    %cst_50 = arith.constant dense<0.000000e+00> : vector<16x32xf32>
    %78 = tpu.matmul %76, %77, %cst_50 {dimension_numbers = #tpu.dot_dimension_numbers<[1], [0], [0], [1], [0, 0, 1, 1], [], []>} : vector<16x64xf32>, vector<64x32xf32>, vector<16x32xf32> -> vector<16x32xf32>
    %c0_51 = arith.constant 0 : index
    %c0_52 = arith.constant 0 : index
    %79 = vector.load %arg9[%c0_51, %c0_52] : memref<1x32xf32, #tpu.memory_space<vmem>>, vector<1x32xf32>
    %80 = vector.broadcast %79 : vector<1x32xf32> to vector<16x32xf32>
    %81 = arith.addf %78, %80 : vector<16x32xf32>
    %82 = arith.addf %69, %81 : vector<16x32xf32>
    %c1_53 = arith.constant 1 : index
    %c0_54 = arith.constant 0 : index
    %c0_55 = arith.constant 0 : index
    %83 = vector.load %arg4[%c1_53, %c0_54, %c0_55] : memref<2x1x32xf32, #tpu.memory_space<vmem>>, vector<1x1x32xf32>
    %84 = vector.shape_cast %83 : vector<1x1x32xf32> to vector<1x32xf32>
    %c1_56 = arith.constant 1 : index
    %c0_57 = arith.constant 0 : index
    %c0_58 = arith.constant 0 : index
    %85 = vector.load %arg5[%c1_56, %c0_57, %c0_58] : memref<2x1x32xf32, #tpu.memory_space<vmem>>, vector<1x1x32xf32>
    %86 = vector.shape_cast %85 : vector<1x1x32xf32> to vector<1x32xf32>
    %cst_59 = arith.constant dense<0.000000e+00> : vector<16xf32>
    %87 = vector.multi_reduction <add>, %82, %cst_59 [1] : vector<16x32xf32> to vector<16xf32>
    %88 = vector.shape_cast %87 : vector<16xf32> to vector<16x1xf32>
    %cst_60 = arith.constant 3.200000e+01 : f32
    %89 = vector.broadcast %cst_60 : f32 to vector<16x1xf32>
    %90 = arith.divf %88, %89 : vector<16x1xf32>
    %91 = vector.broadcast %90 : vector<16x1xf32> to vector<16x32xf32>
    %92 = arith.subf %82, %91 : vector<16x32xf32>
    %93 = arith.mulf %92, %92 : vector<16x32xf32>
    %cst_61 = arith.constant dense<0.000000e+00> : vector<16xf32>
    %94 = vector.multi_reduction <add>, %93, %cst_61 [1] : vector<16x32xf32> to vector<16xf32>
    %95 = vector.shape_cast %94 : vector<16xf32> to vector<16x1xf32>
    %cst_62 = arith.constant 3.200000e+01 : f32
    %96 = vector.broadcast %cst_62 : f32 to vector<16x1xf32>
    %97 = arith.divf %95, %96 : vector<16x1xf32>
    %cst_63 = arith.constant 9.99999974E-6 : f32
    %98 = vector.broadcast %cst_63 : f32 to vector<16x1xf32>
    %99 = arith.addf %97, %98 : vector<16x1xf32>
    %100 = math.rsqrt %99 : vector<16x1xf32>
    %101 = vector.broadcast %100 : vector<16x1xf32> to vector<16x32xf32>
    %102 = arith.mulf %92, %101 : vector<16x32xf32>
    %103 = vector.broadcast %84 : vector<1x32xf32> to vector<16x32xf32>
    %104 = arith.mulf %102, %103 : vector<16x32xf32>
    %105 = vector.broadcast %86 : vector<1x32xf32> to vector<16x32xf32>
    %106 = arith.addf %104, %105 : vector<16x32xf32>
    %c0_64 = arith.constant 0 : index
    %c0_65 = arith.constant 0 : index
    %c0_66 = arith.constant 0 : index
    %107 = vector.load %arg10[%c0_64, %c0_65, %c0_66] : memref<1x16x32xf32, #tpu.memory_space<vmem>>, vector<1x16x32xf32>
    %108 = vector.shape_cast %107 : vector<1x16x32xf32> to vector<16x32xf32>
    %109 = vector.shape_cast %106 : vector<16x32xf32> to vector<1x16x32xf32>
    tpu.vector_store %arg10[%c0_64, %c0_65, %c0_66], %109 {strides = array<i32>} : memref<1x16x32xf32, #tpu.memory_space<vmem>>, vector<1x16x32xf32>,
    return
  }
  func.func @transform_0(%arg0: i32) -> (i32, i32, i32) {
    %c0_i32 = arith.constant 0 : i32
    %c0_i32_0 = arith.constant 0 : i32
    %c0_i32_1 = arith.constant 0 : i32
    return %arg0, %c0_i32, %c0_i32_0 : i32, i32, i32
  }
  func.func @transform_1(%arg0: i32) -> (i32, i32, i32) {
    %c0_i32 = arith.constant 0 : i32
    %c0_i32_0 = arith.constant 0 : i32
    %c0_i32_1 = arith.constant 0 : i32
    %c0_i32_2 = arith.constant 0 : i32
    return %c0_i32, %c0_i32_0, %c0_i32_1 : i32, i32, i32
  }
  func.func @transform_2(%arg0: i32) -> (i32, i32, i32) {
    %c0_i32 = arith.constant 0 : i32
    %c0_i32_0 = arith.constant 0 : i32
    %c0_i32_1 = arith.constant 0 : i32
    %c0_i32_2 = arith.constant 0 : i32
    return %c0_i32, %c0_i32_0, %c0_i32_1 : i32, i32, i32
  }
  func.func @transform_3(%arg0: i32) -> (i32, i32, i32) {
    %c0_i32 = arith.constant 0 : i32
    %c0_i32_0 = arith.constant 0 : i32
    %c0_i32_1 = arith.constant 0 : i32
    %c0_i32_2 = arith.constant 0 : i32
    return %c0_i32, %c0_i32_0, %c0_i32_1 : i32, i32, i32
  }
  func.func @transform_4(%arg0: i32) -> (i32, i32, i32) {
    %c0_i32 = arith.constant 0 : i32
    %c0_i32_0 = arith.constant 0 : i32
    %c0_i32_1 = arith.constant 0 : i32
    %c0_i32_2 = arith.constant 0 : i32
    return %c0_i32, %c0_i32_0, %c0_i32_1 : i32, i32, i32
  }
  func.func @transform_5(%arg0: i32) -> (i32, i32) {
    %c0_i32 = arith.constant 0 : i32
    %c0_i32_0 = arith.constant 0 : i32
    %c0_i32_1 = arith.constant 0 : i32
    return %c0_i32, %c0_i32_0 : i32, i32
  }
  func.func @transform_6(%arg0: i32) -> (i32, i32) {
    %c0_i32 = arith.constant 0 : i32
    %c0_i32_0 = arith.constant 0 : i32
    %c0_i32_1 = arith.constant 0 : i32
    return %c0_i32, %c0_i32_0 : i32, i32
  }
  func.func @transform_7(%arg0: i32) -> (i32, i32) {
    %c0_i32 = arith.constant 0 : i32
    %c0_i32_0 = arith.constant 0 : i32
    %c0_i32_1 = arith.constant 0 : i32
    return %c0_i32, %c0_i32_0 : i32, i32
  }
  func.func @transform_8(%arg0: i32) -> (i32, i32) {
    %c0_i32 = arith.constant 0 : i32
    %c0_i32_0 = arith.constant 0 : i32
    %c0_i32_1 = arith.constant 0 : i32
    return %c0_i32, %c0_i32_0 : i32, i32
  }
  func.func @transform_9(%arg0: i32) -> (i32, i32, i32) {
    %c0_i32 = arith.constant 0 : i32
    %c0_i32_0 = arith.constant 0 : i32
    %c0_i32_1 = arith.constant 0 : i32
    return %arg0, %c0_i32, %c0_i32_0 : i32, i32, i32
  }
}

module attributes {stable_mosaic.version = 11 : i64} {
  func.func @_query_embed_kernel(%arg0: memref<16x3xf32, #tpu.memory_space<vmem>>, %arg1: memref<3x16xf32, #tpu.memory_space<vmem>>, %arg2: memref<16x32xf32, #tpu.memory_space<vmem>>, %arg3: memref<16x32xf32, #tpu.memory_space<vmem>>, %arg4: memref<1x32xf32, #tpu.memory_space<vmem>>, %arg5: memref<32x32xf32, #tpu.memory_space<vmem>>, %arg6: memref<1x32xf32, #tpu.memory_space<vmem>>, %arg7: memref<16x32xf32, #tpu.memory_space<vmem>>) attributes {dimension_semantics = [], scalar_prefetch = 0 : i64, scratch_operands = 0 : i64, tpu.core_type = #tpu.core_type<tc>} {
    %c0 = arith.constant 0 : index
    %c0_0 = arith.constant 0 : index
    %0 = vector.load %arg0[%c0, %c0_0] : memref<16x3xf32, #tpu.memory_space<vmem>>, vector<16x3xf32>
    %c0_1 = arith.constant 0 : index
    %c0_2 = arith.constant 0 : index
    %1 = vector.load %arg1[%c0_1, %c0_2] : memref<3x16xf32, #tpu.memory_space<vmem>>, vector<3x16xf32>
    %cst = arith.constant dense<0.000000e+00> : vector<16x16xf32>
    %2 = tpu.matmul %0, %1, %cst {dimension_numbers = #tpu.dot_dimension_numbers<[1], [0], [0], [1], [0, 0, 1, 1], [], []>} : vector<16x3xf32>, vector<3x16xf32>, vector<16x16xf32> -> vector<16x16xf32>
    %3 = math.sin %2 : vector<16x16xf32>
    %c0_3 = arith.constant 0 : index
    %c0_4 = arith.constant 0 : index
    %4 = vector.load %arg2[%c0_3, %c0_4] : memref<16x32xf32, #tpu.memory_space<vmem>>, vector<16x32xf32>
    %cst_5 = arith.constant dense<0.000000e+00> : vector<16x32xf32>
    %5 = tpu.matmul %3, %4, %cst_5 {dimension_numbers = #tpu.dot_dimension_numbers<[1], [0], [0], [1], [0, 0, 1, 1], [], []>} : vector<16x16xf32>, vector<16x32xf32>, vector<16x32xf32> -> vector<16x32xf32>
    %6 = math.cos %2 : vector<16x16xf32>
    %c0_6 = arith.constant 0 : index
    %c0_7 = arith.constant 0 : index
    %7 = vector.load %arg3[%c0_6, %c0_7] : memref<16x32xf32, #tpu.memory_space<vmem>>, vector<16x32xf32>
    %cst_8 = arith.constant dense<0.000000e+00> : vector<16x32xf32>
    %8 = tpu.matmul %6, %7, %cst_8 {dimension_numbers = #tpu.dot_dimension_numbers<[1], [0], [0], [1], [0, 0, 1, 1], [], []>} : vector<16x16xf32>, vector<16x32xf32>, vector<16x32xf32> -> vector<16x32xf32>
    %9 = arith.addf %5, %8 : vector<16x32xf32>
    %c0_9 = arith.constant 0 : index
    %c0_10 = arith.constant 0 : index
    %10 = vector.load %arg4[%c0_9, %c0_10] : memref<1x32xf32, #tpu.memory_space<vmem>>, vector<1x32xf32>
    %11 = vector.broadcast %10 : vector<1x32xf32> to vector<16x32xf32>
    %12 = arith.addf %9, %11 : vector<16x32xf32>
    %cst_11 = arith.constant 0.000000e+00 : f32
    %13 = vector.broadcast %cst_11 : f32 to vector<16x32xf32>
    %14 = arith.maximumf %12, %13 : vector<16x32xf32>
    %c0_12 = arith.constant 0 : index
    %c0_13 = arith.constant 0 : index
    %15 = vector.load %arg5[%c0_12, %c0_13] : memref<32x32xf32, #tpu.memory_space<vmem>>, vector<32x32xf32>
    %cst_14 = arith.constant dense<0.000000e+00> : vector<16x32xf32>
    %16 = tpu.matmul %14, %15, %cst_14 {dimension_numbers = #tpu.dot_dimension_numbers<[1], [0], [0], [1], [0, 0, 1, 1], [], []>} : vector<16x32xf32>, vector<32x32xf32>, vector<16x32xf32> -> vector<16x32xf32>
    %c0_15 = arith.constant 0 : index
    %c0_16 = arith.constant 0 : index
    %17 = vector.load %arg6[%c0_15, %c0_16] : memref<1x32xf32, #tpu.memory_space<vmem>>, vector<1x32xf32>
    %18 = vector.broadcast %17 : vector<1x32xf32> to vector<16x32xf32>
    %19 = arith.addf %16, %18 : vector<16x32xf32>
    %cst_17 = arith.constant 0.000000e+00 : f32
    %20 = vector.broadcast %cst_17 : f32 to vector<16x32xf32>
    %21 = arith.maximumf %19, %20 : vector<16x32xf32>
    %c0_18 = arith.constant 0 : index
    %c0_19 = arith.constant 0 : index
    %22 = vector.load %arg7[%c0_18, %c0_19] : memref<16x32xf32, #tpu.memory_space<vmem>>, vector<16x32xf32>
    tpu.vector_store %arg7[%c0_18, %c0_19], %21 {strides = array<i32>} : memref<16x32xf32, #tpu.memory_space<vmem>>, vector<16x32xf32>,
    return
  }
}

module attributes {stable_mosaic.version = 11 : i64} {
  func.func @_fourier_kernel(%arg0: memref<32x3xf32, #tpu.memory_space<vmem>>, %arg1: memref<3x16xf32, #tpu.memory_space<vmem>>, %arg2: memref<32x32xf32, #tpu.memory_space<vmem>>) attributes {dimension_semantics = [], scalar_prefetch = 0 : i64, scratch_operands = 0 : i64, tpu.core_type = #tpu.core_type<tc>} {
    %c0 = arith.constant 0 : index
    %c0_0 = arith.constant 0 : index
    %0 = vector.load %arg0[%c0, %c0_0] : memref<32x3xf32, #tpu.memory_space<vmem>>, vector<32x3xf32>
    %c0_1 = arith.constant 0 : index
    %c0_2 = arith.constant 0 : index
    %1 = vector.load %arg1[%c0_1, %c0_2] : memref<3x16xf32, #tpu.memory_space<vmem>>, vector<3x16xf32>
    %cst = arith.constant dense<0.000000e+00> : vector<32x16xf32>
    %2 = tpu.matmul %0, %1, %cst {dimension_numbers = #tpu.dot_dimension_numbers<[1], [0], [0], [1], [0, 0, 1, 1], [], []>} : vector<32x3xf32>, vector<3x16xf32>, vector<32x16xf32> -> vector<32x16xf32>
    %3 = math.sin %2 : vector<32x16xf32>
    %4 = math.cos %2 : vector<32x16xf32>
    %5 = tpu.concatenate %3, %4 in 1 : vector<32x16xf32>, vector<32x16xf32> -> vector<32x32xf32>
    %c0_3 = arith.constant 0 : index
    %c0_4 = arith.constant 0 : index
    %6 = vector.load %arg2[%c0_3, %c0_4] : memref<32x32xf32, #tpu.memory_space<vmem>>, vector<32x32xf32>
    tpu.vector_store %arg2[%c0_3, %c0_4], %5 {strides = array<i32>} : memref<32x32xf32, #tpu.memory_space<vmem>>, vector<32x32xf32>,
    return
  }
}

module attributes {stable_mosaic.version = 11 : i64} {
  func.func @_decoder_layer_kernel(%arg0: i32, %arg1: memref<1x8x32xf32, #tpu.memory_space<vmem>>, %arg2: memref<1x8x32xf32, #tpu.memory_space<vmem>>, %arg3: memref<1x16x32xf32, #tpu.memory_space<vmem>>, %arg4: memref<1x16x32xf32, #tpu.memory_space<vmem>>, %arg5: memref<4x32x32xf32, #tpu.memory_space<vmem>>, %arg6: memref<4x1x32xf32, #tpu.memory_space<vmem>>, %arg7: memref<4x32x32xf32, #tpu.memory_space<vmem>>, %arg8: memref<4x1x32xf32, #tpu.memory_space<vmem>>, %arg9: memref<3x1x32xf32, #tpu.memory_space<vmem>>, %arg10: memref<3x1x32xf32, #tpu.memory_space<vmem>>, %arg11: memref<32x64xf32, #tpu.memory_space<vmem>>, %arg12: memref<1x64xf32, #tpu.memory_space<vmem>>, %arg13: memref<64x32xf32, #tpu.memory_space<vmem>>, %arg14: memref<1x32xf32, #tpu.memory_space<vmem>>, %arg15: memref<1x32xf32, #tpu.memory_space<vmem>>, %arg16: memref<1x32xf32, #tpu.memory_space<vmem>>, %arg17: memref<1x8x32xf32, #tpu.memory_space<vmem>>, %arg18: memref<1x8x32xf32, #tpu.memory_space<vmem>>) attributes {dimension_semantics = [#tpu.dimension_semantics<parallel>], iteration_bounds = array<i64: 2>, scalar_prefetch = 0 : i64, scratch_operands = 0 : i64, tpu.core_type = #tpu.core_type<tc>, window_params = [{transform_indices = @transform_0, window_bounds = array<i64: 1, 8, 32>}, {transform_indices = @transform_1, window_bounds = array<i64: 1, 8, 32>}, {transform_indices = @transform_2, window_bounds = array<i64: 1, 16, 32>}, {transform_indices = @transform_3, window_bounds = array<i64: 1, 16, 32>}, {pipeline_mode = #tpu.pipeline_mode<synchronous>, transform_indices = @transform_4, window_bounds = array<i64: 4, 32, 32>}, {pipeline_mode = #tpu.pipeline_mode<synchronous>, transform_indices = @transform_5, window_bounds = array<i64: 4, 1, 32>}, {pipeline_mode = #tpu.pipeline_mode<synchronous>, transform_indices = @transform_6, window_bounds = array<i64: 4, 32, 32>}, {pipeline_mode = #tpu.pipeline_mode<synchronous>, transform_indices = @transform_7, window_bounds = array<i64: 4, 1, 32>}, {pipeline_mode = #tpu.pipeline_mode<synchronous>, transform_indices = @transform_8, window_bounds = array<i64: 3, 1, 32>}, {pipeline_mode = #tpu.pipeline_mode<synchronous>, transform_indices = @transform_9, window_bounds = array<i64: 3, 1, 32>}, {pipeline_mode = #tpu.pipeline_mode<synchronous>, transform_indices = @transform_10, window_bounds = array<i64: 32, 64>}, {pipeline_mode = #tpu.pipeline_mode<synchronous>, transform_indices = @transform_11, window_bounds = array<i64: 1, 64>}, {pipeline_mode = #tpu.pipeline_mode<synchronous>, transform_indices = @transform_12, window_bounds = array<i64: 64, 32>}, {pipeline_mode = #tpu.pipeline_mode<synchronous>, transform_indices = @transform_13, window_bounds = array<i64: 1, 32>}, {pipeline_mode = #tpu.pipeline_mode<synchronous>, transform_indices = @transform_14, window_bounds = array<i64: 1, 32>}, {pipeline_mode = #tpu.pipeline_mode<synchronous>, transform_indices = @transform_15, window_bounds = array<i64: 1, 32>}, {transform_indices = @transform_16, window_bounds = array<i64: 1, 8, 32>}, {transform_indices = @transform_17, window_bounds = array<i64: 1, 8, 32>}]} {
    %c0 = arith.constant 0 : index
    %c0_0 = arith.constant 0 : index
    %c0_1 = arith.constant 0 : index
    %0 = vector.load %arg1[%c0, %c0_0, %c0_1] : memref<1x8x32xf32, #tpu.memory_space<vmem>>, vector<1x8x32xf32>
    %1 = vector.shape_cast %0 : vector<1x8x32xf32> to vector<8x32xf32>
    %c0_2 = arith.constant 0 : index
    %c0_3 = arith.constant 0 : index
    %c0_4 = arith.constant 0 : index
    %2 = vector.load %arg2[%c0_2, %c0_3, %c0_4] : memref<1x8x32xf32, #tpu.memory_space<vmem>>, vector<1x8x32xf32>
    %3 = vector.shape_cast %2 : vector<1x8x32xf32> to vector<8x32xf32>
    %c0_5 = arith.constant 0 : index
    %c0_6 = arith.constant 0 : index
    %c0_7 = arith.constant 0 : index
    %4 = vector.load %arg3[%c0_5, %c0_6, %c0_7] : memref<1x16x32xf32, #tpu.memory_space<vmem>>, vector<1x16x32xf32>
    %5 = vector.shape_cast %4 : vector<1x16x32xf32> to vector<16x32xf32>
    %c0_8 = arith.constant 0 : index
    %c0_9 = arith.constant 0 : index
    %c0_10 = arith.constant 0 : index
    %6 = vector.load %arg4[%c0_8, %c0_9, %c0_10] : memref<1x16x32xf32, #tpu.memory_space<vmem>>, vector<1x16x32xf32>
    %7 = vector.shape_cast %6 : vector<1x16x32xf32> to vector<16x32xf32>
    %8 = arith.addf %1, %3 : vector<8x32xf32>
    %c0_11 = arith.constant 0 : index
    %c0_12 = arith.constant 0 : index
    %c0_13 = arith.constant 0 : index
    %9 = vector.load %arg5[%c0_11, %c0_12, %c0_13] : memref<4x32x32xf32, #tpu.memory_space<vmem>>, vector<1x32x32xf32>
    %10 = vector.shape_cast %9 : vector<1x32x32xf32> to vector<32x32xf32>
    %cst = arith.constant dense<0.000000e+00> : vector<8x32xf32>
    %11 = tpu.matmul %8, %10, %cst {dimension_numbers = #tpu.dot_dimension_numbers<[1], [0], [0], [1], [0, 0, 1, 1], [], []>} : vector<8x32xf32>, vector<32x32xf32>, vector<8x32xf32> -> vector<8x32xf32>
    %c0_14 = arith.constant 0 : index
    %c0_15 = arith.constant 0 : index
    %c0_16 = arith.constant 0 : index
    %12 = vector.load %arg6[%c0_14, %c0_15, %c0_16] : memref<4x1x32xf32, #tpu.memory_space<vmem>>, vector<1x1x32xf32>
    %13 = vector.shape_cast %12 : vector<1x1x32xf32> to vector<1x32xf32>
    %14 = vector.broadcast %13 : vector<1x32xf32> to vector<8x32xf32>
    %15 = arith.addf %11, %14 : vector<8x32xf32>
    %c1 = arith.constant 1 : index
    %c0_17 = arith.constant 0 : index
    %c0_18 = arith.constant 0 : index
    %16 = vector.load %arg5[%c1, %c0_17, %c0_18] : memref<4x32x32xf32, #tpu.memory_space<vmem>>, vector<1x32x32xf32>
    %17 = vector.shape_cast %16 : vector<1x32x32xf32> to vector<32x32xf32>
    %cst_19 = arith.constant dense<0.000000e+00> : vector<8x32xf32>
    %18 = tpu.matmul %8, %17, %cst_19 {dimension_numbers = #tpu.dot_dimension_numbers<[1], [0], [0], [1], [0, 0, 1, 1], [], []>} : vector<8x32xf32>, vector<32x32xf32>, vector<8x32xf32> -> vector<8x32xf32>
    %c1_20 = arith.constant 1 : index
    %c0_21 = arith.constant 0 : index
    %c0_22 = arith.constant 0 : index
    %19 = vector.load %arg6[%c1_20, %c0_21, %c0_22] : memref<4x1x32xf32, #tpu.memory_space<vmem>>, vector<1x1x32xf32>
    %20 = vector.shape_cast %19 : vector<1x1x32xf32> to vector<1x32xf32>
    %21 = vector.broadcast %20 : vector<1x32xf32> to vector<8x32xf32>
    %22 = arith.addf %18, %21 : vector<8x32xf32>
    %c2 = arith.constant 2 : index
    %c0_23 = arith.constant 0 : index
    %c0_24 = arith.constant 0 : index
    %23 = vector.load %arg5[%c2, %c0_23, %c0_24] : memref<4x32x32xf32, #tpu.memory_space<vmem>>, vector<1x32x32xf32>
    %24 = vector.shape_cast %23 : vector<1x32x32xf32> to vector<32x32xf32>
    %cst_25 = arith.constant dense<0.000000e+00> : vector<8x32xf32>
    %25 = tpu.matmul %1, %24, %cst_25 {dimension_numbers = #tpu.dot_dimension_numbers<[1], [0], [0], [1], [0, 0, 1, 1], [], []>} : vector<8x32xf32>, vector<32x32xf32>, vector<8x32xf32> -> vector<8x32xf32>
    %c2_26 = arith.constant 2 : index
    %c0_27 = arith.constant 0 : index
    %c0_28 = arith.constant 0 : index
    %26 = vector.load %arg6[%c2_26, %c0_27, %c0_28] : memref<4x1x32xf32, #tpu.memory_space<vmem>>, vector<1x1x32xf32>
    %27 = vector.shape_cast %26 : vector<1x1x32xf32> to vector<1x32xf32>
    %28 = vector.broadcast %27 : vector<1x32xf32> to vector<8x32xf32>
    %29 = arith.addf %25, %28 : vector<8x32xf32>
    %30 = tpu.transpose %22, [1, 0] : vector<8x32xf32> -> vector<32x8xf32>
    %cst_29 = arith.constant dense<0.000000e+00> : vector<8x8xf32>
    %31 = tpu.matmul %15, %30, %cst_29 {dimension_numbers = #tpu.dot_dimension_numbers<[1], [0], [0], [1], [0, 0, 1, 1], [], []>} : vector<8x32xf32>, vector<32x8xf32>, vector<8x8xf32> -> vector<8x8xf32>
    %cst_30 = arith.constant 0.176776692 : f32
    %32 = vector.broadcast %cst_30 : f32 to vector<8x8xf32>
    %33 = arith.mulf %31, %32 : vector<8x8xf32>
    %cst_31 = arith.constant dense<0xFF800000> : vector<8xf32>
    %34 = vector.multi_reduction <maximumf>, %33, %cst_31 [1] : vector<8x8xf32> to vector<8xf32>
    %35 = vector.shape_cast %34 : vector<8xf32> to vector<8x1xf32>
    %36 = vector.broadcast %35 : vector<8x1xf32> to vector<8x8xf32>
    %37 = arith.subf %33, %36 : vector<8x8xf32>
    %38 = math.exp %37 : vector<8x8xf32>
    %cst_32 = arith.constant dense<0.000000e+00> : vector<8xf32>
    %39 = vector.multi_reduction <add>, %38, %cst_32 [1] : vector<8x8xf32> to vector<8xf32>
    %40 = vector.shape_cast %39 : vector<8xf32> to vector<8x1xf32>
    %41 = tpu.reciprocal %40 {approx = true} : vector<8x1xf32> -> vector<8x1xf32>
    %42 = vector.broadcast %41 : vector<8x1xf32> to vector<8x8xf32>
    %43 = arith.mulf %38, %42 : vector<8x8xf32>
    %cst_33 = arith.constant dense<0.000000e+00> : vector<8x32xf32>
    %44 = tpu.matmul %43, %29, %cst_33 {dimension_numbers = #tpu.dot_dimension_numbers<[1], [0], [0], [1], [0, 0, 1, 1], [], []>} : vector<8x8xf32>, vector<8x32xf32>, vector<8x32xf32> -> vector<8x32xf32>
    %c3 = arith.constant 3 : index
    %c0_34 = arith.constant 0 : index
    %c0_35 = arith.constant 0 : index
    %45 = vector.load %arg5[%c3, %c0_34, %c0_35] : memref<4x32x32xf32, #tpu.memory_space<vmem>>, vector<1x32x32xf32>
    %46 = vector.shape_cast %45 : vector<1x32x32xf32> to vector<32x32xf32>
    %cst_36 = arith.constant dense<0.000000e+00> : vector<8x32xf32>
    %47 = tpu.matmul %44, %46, %cst_36 {dimension_numbers = #tpu.dot_dimension_numbers<[1], [0], [0], [1], [0, 0, 1, 1], [], []>} : vector<8x32xf32>, vector<32x32xf32>, vector<8x32xf32> -> vector<8x32xf32>
    %c3_37 = arith.constant 3 : index
    %c0_38 = arith.constant 0 : index
    %c0_39 = arith.constant 0 : index
    %48 = vector.load %arg6[%c3_37, %c0_38, %c0_39] : memref<4x1x32xf32, #tpu.memory_space<vmem>>, vector<1x1x32xf32>
    %49 = vector.shape_cast %48 : vector<1x1x32xf32> to vector<1x32xf32>
    %50 = vector.broadcast %49 : vector<1x32xf32> to vector<8x32xf32>
    %51 = arith.addf %47, %50 : vector<8x32xf32>
    %52 = arith.addf %1, %51 : vector<8x32xf32>
    %c0_40 = arith.constant 0 : index
    %c0_41 = arith.constant 0 : index
    %c0_42 = arith.constant 0 : index
    %53 = vector.load %arg9[%c0_40, %c0_41, %c0_42] : memref<3x1x32xf32, #tpu.memory_space<vmem>>, vector<1x1x32xf32>
    %54 = vector.shape_cast %53 : vector<1x1x32xf32> to vector<1x32xf32>
    %c0_43 = arith.constant 0 : index
    %c0_44 = arith.constant 0 : index
    %c0_45 = arith.constant 0 : index
    %55 = vector.load %arg10[%c0_43, %c0_44, %c0_45] : memref<3x1x32xf32, #tpu.memory_space<vmem>>, vector<1x1x32xf32>
    %56 = vector.shape_cast %55 : vector<1x1x32xf32> to vector<1x32xf32>
    %cst_46 = arith.constant dense<0.000000e+00> : vector<8xf32>
    %57 = vector.multi_reduction <add>, %52, %cst_46 [1] : vector<8x32xf32> to vector<8xf32>
    %58 = vector.shape_cast %57 : vector<8xf32> to vector<8x1xf32>
    %cst_47 = arith.constant 3.200000e+01 : f32
    %59 = vector.broadcast %cst_47 : f32 to vector<8x1xf32>
    %60 = arith.divf %58, %59 : vector<8x1xf32>
    %61 = vector.broadcast %60 : vector<8x1xf32> to vector<8x32xf32>
    %62 = arith.subf %52, %61 : vector<8x32xf32>
    %63 = arith.mulf %62, %62 : vector<8x32xf32>
    %cst_48 = arith.constant dense<0.000000e+00> : vector<8xf32>
    %64 = vector.multi_reduction <add>, %63, %cst_48 [1] : vector<8x32xf32> to vector<8xf32>
    %65 = vector.shape_cast %64 : vector<8xf32> to vector<8x1xf32>
    %cst_49 = arith.constant 3.200000e+01 : f32
    %66 = vector.broadcast %cst_49 : f32 to vector<8x1xf32>
    %67 = arith.divf %65, %66 : vector<8x1xf32>
    %cst_50 = arith.constant 9.99999974E-6 : f32
    %68 = vector.broadcast %cst_50 : f32 to vector<8x1xf32>
    %69 = arith.addf %67, %68 : vector<8x1xf32>
    %70 = math.rsqrt %69 : vector<8x1xf32>
    %71 = vector.broadcast %70 : vector<8x1xf32> to vector<8x32xf32>
    %72 = arith.mulf %62, %71 : vector<8x32xf32>
    %73 = vector.broadcast %54 : vector<1x32xf32> to vector<8x32xf32>
    %74 = arith.mulf %72, %73 : vector<8x32xf32>
    %75 = vector.broadcast %56 : vector<1x32xf32> to vector<8x32xf32>
    %76 = arith.addf %74, %75 : vector<8x32xf32>
    %77 = arith.addf %76, %3 : vector<8x32xf32>
    %c0_51 = arith.constant 0 : index
    %c0_52 = arith.constant 0 : index
    %c0_53 = arith.constant 0 : index
    %78 = vector.load %arg7[%c0_51, %c0_52, %c0_53] : memref<4x32x32xf32, #tpu.memory_space<vmem>>, vector<1x32x32xf32>
    %79 = vector.shape_cast %78 : vector<1x32x32xf32> to vector<32x32xf32>
    %cst_54 = arith.constant dense<0.000000e+00> : vector<8x32xf32>
    %80 = tpu.matmul %77, %79, %cst_54 {dimension_numbers = #tpu.dot_dimension_numbers<[1], [0], [0], [1], [0, 0, 1, 1], [], []>} : vector<8x32xf32>, vector<32x32xf32>, vector<8x32xf32> -> vector<8x32xf32>
    %c0_55 = arith.constant 0 : index
    %c0_56 = arith.constant 0 : index
    %c0_57 = arith.constant 0 : index
    %81 = vector.load %arg8[%c0_55, %c0_56, %c0_57] : memref<4x1x32xf32, #tpu.memory_space<vmem>>, vector<1x1x32xf32>
    %82 = vector.shape_cast %81 : vector<1x1x32xf32> to vector<1x32xf32>
    %83 = vector.broadcast %82 : vector<1x32xf32> to vector<8x32xf32>
    %84 = arith.addf %80, %83 : vector<8x32xf32>
    %85 = arith.addf %5, %7 : vector<16x32xf32>
    %c1_58 = arith.constant 1 : index
    %c0_59 = arith.constant 0 : index
    %c0_60 = arith.constant 0 : index
    %86 = vector.load %arg7[%c1_58, %c0_59, %c0_60] : memref<4x32x32xf32, #tpu.memory_space<vmem>>, vector<1x32x32xf32>
    %87 = vector.shape_cast %86 : vector<1x32x32xf32> to vector<32x32xf32>
    %cst_61 = arith.constant dense<0.000000e+00> : vector<16x32xf32>
    %88 = tpu.matmul %85, %87, %cst_61 {dimension_numbers = #tpu.dot_dimension_numbers<[1], [0], [0], [1], [0, 0, 1, 1], [], []>} : vector<16x32xf32>, vector<32x32xf32>, vector<16x32xf32> -> vector<16x32xf32>
    %c1_62 = arith.constant 1 : index
    %c0_63 = arith.constant 0 : index
    %c0_64 = arith.constant 0 : index
    %89 = vector.load %arg8[%c1_62, %c0_63, %c0_64] : memref<4x1x32xf32, #tpu.memory_space<vmem>>, vector<1x1x32xf32>
    %90 = vector.shape_cast %89 : vector<1x1x32xf32> to vector<1x32xf32>
    %91 = vector.broadcast %90 : vector<1x32xf32> to vector<16x32xf32>
    %92 = arith.addf %88, %91 : vector<16x32xf32>
    %c2_65 = arith.constant 2 : index
    %c0_66 = arith.constant 0 : index
    %c0_67 = arith.constant 0 : index
    %93 = vector.load %arg7[%c2_65, %c0_66, %c0_67] : memref<4x32x32xf32, #tpu.memory_space<vmem>>, vector<1x32x32xf32>
    %94 = vector.shape_cast %93 : vector<1x32x32xf32> to vector<32x32xf32>
    %cst_68 = arith.constant dense<0.000000e+00> : vector<16x32xf32>
    %95 = tpu.matmul %5, %94, %cst_68 {dimension_numbers = #tpu.dot_dimension_numbers<[1], [0], [0], [1], [0, 0, 1, 1], [], []>} : vector<16x32xf32>, vector<32x32xf32>, vector<16x32xf32> -> vector<16x32xf32>
    %c2_69 = arith.constant 2 : index
    %c0_70 = arith.constant 0 : index
    %c0_71 = arith.constant 0 : index
    %96 = vector.load %arg8[%c2_69, %c0_70, %c0_71] : memref<4x1x32xf32, #tpu.memory_space<vmem>>, vector<1x1x32xf32>
    %97 = vector.shape_cast %96 : vector<1x1x32xf32> to vector<1x32xf32>
    %98 = vector.broadcast %97 : vector<1x32xf32> to vector<16x32xf32>
    %99 = arith.addf %95, %98 : vector<16x32xf32>
    %100 = tpu.transpose %92, [1, 0] : vector<16x32xf32> -> vector<32x16xf32>
    %cst_72 = arith.constant dense<0.000000e+00> : vector<8x16xf32>
    %101 = tpu.matmul %84, %100, %cst_72 {dimension_numbers = #tpu.dot_dimension_numbers<[1], [0], [0], [1], [0, 0, 1, 1], [], []>} : vector<8x32xf32>, vector<32x16xf32>, vector<8x16xf32> -> vector<8x16xf32>
    %cst_73 = arith.constant 0.176776692 : f32
    %102 = vector.broadcast %cst_73 : f32 to vector<8x16xf32>
    %103 = arith.mulf %101, %102 : vector<8x16xf32>
    %cst_74 = arith.constant dense<0xFF800000> : vector<8xf32>
    %104 = vector.multi_reduction <maximumf>, %103, %cst_74 [1] : vector<8x16xf32> to vector<8xf32>
    %105 = vector.shape_cast %104 : vector<8xf32> to vector<8x1xf32>
    %106 = vector.broadcast %105 : vector<8x1xf32> to vector<8x16xf32>
    %107 = arith.subf %103, %106 : vector<8x16xf32>
    %108 = math.exp %107 : vector<8x16xf32>
    %cst_75 = arith.constant dense<0.000000e+00> : vector<8xf32>
    %109 = vector.multi_reduction <add>, %108, %cst_75 [1] : vector<8x16xf32> to vector<8xf32>
    %110 = vector.shape_cast %109 : vector<8xf32> to vector<8x1xf32>
    %111 = tpu.reciprocal %110 {approx = true} : vector<8x1xf32> -> vector<8x1xf32>
    %112 = vector.broadcast %111 : vector<8x1xf32> to vector<8x16xf32>
    %113 = arith.mulf %108, %112 : vector<8x16xf32>
    %cst_76 = arith.constant dense<0.000000e+00> : vector<8x32xf32>
    %114 = tpu.matmul %113, %99, %cst_76 {dimension_numbers = #tpu.dot_dimension_numbers<[1], [0], [0], [1], [0, 0, 1, 1], [], []>} : vector<8x16xf32>, vector<16x32xf32>, vector<8x32xf32> -> vector<8x32xf32>
    %c3_77 = arith.constant 3 : index
    %c0_78 = arith.constant 0 : index
    %c0_79 = arith.constant 0 : index
    %115 = vector.load %arg7[%c3_77, %c0_78, %c0_79] : memref<4x32x32xf32, #tpu.memory_space<vmem>>, vector<1x32x32xf32>
    %116 = vector.shape_cast %115 : vector<1x32x32xf32> to vector<32x32xf32>
    %cst_80 = arith.constant dense<0.000000e+00> : vector<8x32xf32>
    %117 = tpu.matmul %114, %116, %cst_80 {dimension_numbers = #tpu.dot_dimension_numbers<[1], [0], [0], [1], [0, 0, 1, 1], [], []>} : vector<8x32xf32>, vector<32x32xf32>, vector<8x32xf32> -> vector<8x32xf32>
    %c3_81 = arith.constant 3 : index
    %c0_82 = arith.constant 0 : index
    %c0_83 = arith.constant 0 : index
    %118 = vector.load %arg8[%c3_81, %c0_82, %c0_83] : memref<4x1x32xf32, #tpu.memory_space<vmem>>, vector<1x1x32xf32>
    %119 = vector.shape_cast %118 : vector<1x1x32xf32> to vector<1x32xf32>
    %120 = vector.broadcast %119 : vector<1x32xf32> to vector<8x32xf32>
    %121 = arith.addf %117, %120 : vector<8x32xf32>
    %122 = arith.addf %76, %121 : vector<8x32xf32>
    %c1_84 = arith.constant 1 : index
    %c0_85 = arith.constant 0 : index
    %c0_86 = arith.constant 0 : index
    %123 = vector.load %arg9[%c1_84, %c0_85, %c0_86] : memref<3x1x32xf32, #tpu.memory_space<vmem>>, vector<1x1x32xf32>
    %124 = vector.shape_cast %123 : vector<1x1x32xf32> to vector<1x32xf32>
    %c1_87 = arith.constant 1 : index
    %c0_88 = arith.constant 0 : index
    %c0_89 = arith.constant 0 : index
    %125 = vector.load %arg10[%c1_87, %c0_88, %c0_89] : memref<3x1x32xf32, #tpu.memory_space<vmem>>, vector<1x1x32xf32>
    %126 = vector.shape_cast %125 : vector<1x1x32xf32> to vector<1x32xf32>
    %cst_90 = arith.constant dense<0.000000e+00> : vector<8xf32>
    %127 = vector.multi_reduction <add>, %122, %cst_90 [1] : vector<8x32xf32> to vector<8xf32>
    %128 = vector.shape_cast %127 : vector<8xf32> to vector<8x1xf32>
    %cst_91 = arith.constant 3.200000e+01 : f32
    %129 = vector.broadcast %cst_91 : f32 to vector<8x1xf32>
    %130 = arith.divf %128, %129 : vector<8x1xf32>
    %131 = vector.broadcast %130 : vector<8x1xf32> to vector<8x32xf32>
    %132 = arith.subf %122, %131 : vector<8x32xf32>
    %133 = arith.mulf %132, %132 : vector<8x32xf32>
    %cst_92 = arith.constant dense<0.000000e+00> : vector<8xf32>
    %134 = vector.multi_reduction <add>, %133, %cst_92 [1] : vector<8x32xf32> to vector<8xf32>
    %135 = vector.shape_cast %134 : vector<8xf32> to vector<8x1xf32>
    %cst_93 = arith.constant 3.200000e+01 : f32
    %136 = vector.broadcast %cst_93 : f32 to vector<8x1xf32>
    %137 = arith.divf %135, %136 : vector<8x1xf32>
    %cst_94 = arith.constant 9.99999974E-6 : f32
    %138 = vector.broadcast %cst_94 : f32 to vector<8x1xf32>
    %139 = arith.addf %137, %138 : vector<8x1xf32>
    %140 = math.rsqrt %139 : vector<8x1xf32>
    %141 = vector.broadcast %140 : vector<8x1xf32> to vector<8x32xf32>
    %142 = arith.mulf %132, %141 : vector<8x32xf32>
    %143 = vector.broadcast %124 : vector<1x32xf32> to vector<8x32xf32>
    %144 = arith.mulf %142, %143 : vector<8x32xf32>
    %145 = vector.broadcast %126 : vector<1x32xf32> to vector<8x32xf32>
    %146 = arith.addf %144, %145 : vector<8x32xf32>
    %c0_95 = arith.constant 0 : index
    %c0_96 = arith.constant 0 : index
    %147 = vector.load %arg11[%c0_95, %c0_96] : memref<32x64xf32, #tpu.memory_space<vmem>>, vector<32x64xf32>
    %cst_97 = arith.constant dense<0.000000e+00> : vector<8x64xf32>
    %148 = tpu.matmul %146, %147, %cst_97 {dimension_numbers = #tpu.dot_dimension_numbers<[1], [0], [0], [1], [0, 0, 1, 1], [], []>} : vector<8x32xf32>, vector<32x64xf32>, vector<8x64xf32> -> vector<8x64xf32>
    %c0_98 = arith.constant 0 : index
    %c0_99 = arith.constant 0 : index
    %149 = vector.load %arg12[%c0_98, %c0_99] : memref<1x64xf32, #tpu.memory_space<vmem>>, vector<1x64xf32>
    %150 = vector.broadcast %149 : vector<1x64xf32> to vector<8x64xf32>
    %151 = arith.addf %148, %150 : vector<8x64xf32>
    %cst_100 = arith.constant 0.000000e+00 : f32
    %152 = vector.broadcast %cst_100 : f32 to vector<8x64xf32>
    %153 = arith.maximumf %151, %152 : vector<8x64xf32>
    %c0_101 = arith.constant 0 : index
    %c0_102 = arith.constant 0 : index
    %154 = vector.load %arg13[%c0_101, %c0_102] : memref<64x32xf32, #tpu.memory_space<vmem>>, vector<64x32xf32>
    %cst_103 = arith.constant dense<0.000000e+00> : vector<8x32xf32>
    %155 = tpu.matmul %153, %154, %cst_103 {dimension_numbers = #tpu.dot_dimension_numbers<[1], [0], [0], [1], [0, 0, 1, 1], [], []>} : vector<8x64xf32>, vector<64x32xf32>, vector<8x32xf32> -> vector<8x32xf32>
    %c0_104 = arith.constant 0 : index
    %c0_105 = arith.constant 0 : index
    %156 = vector.load %arg14[%c0_104, %c0_105] : memref<1x32xf32, #tpu.memory_space<vmem>>, vector<1x32xf32>
    %157 = vector.broadcast %156 : vector<1x32xf32> to vector<8x32xf32>
    %158 = arith.addf %155, %157 : vector<8x32xf32>
    %159 = arith.addf %146, %158 : vector<8x32xf32>
    %c2_106 = arith.constant 2 : index
    %c0_107 = arith.constant 0 : index
    %c0_108 = arith.constant 0 : index
    %160 = vector.load %arg9[%c2_106, %c0_107, %c0_108] : memref<3x1x32xf32, #tpu.memory_space<vmem>>, vector<1x1x32xf32>
    %161 = vector.shape_cast %160 : vector<1x1x32xf32> to vector<1x32xf32>
    %c2_109 = arith.constant 2 : index
    %c0_110 = arith.constant 0 : index
    %c0_111 = arith.constant 0 : index
    %162 = vector.load %arg10[%c2_109, %c0_110, %c0_111] : memref<3x1x32xf32, #tpu.memory_space<vmem>>, vector<1x1x32xf32>
    %163 = vector.shape_cast %162 : vector<1x1x32xf32> to vector<1x32xf32>
    %cst_112 = arith.constant dense<0.000000e+00> : vector<8xf32>
    %164 = vector.multi_reduction <add>, %159, %cst_112 [1] : vector<8x32xf32> to vector<8xf32>
    %165 = vector.shape_cast %164 : vector<8xf32> to vector<8x1xf32>
    %cst_113 = arith.constant 3.200000e+01 : f32
    %166 = vector.broadcast %cst_113 : f32 to vector<8x1xf32>
    %167 = arith.divf %165, %166 : vector<8x1xf32>
    %168 = vector.broadcast %167 : vector<8x1xf32> to vector<8x32xf32>
    %169 = arith.subf %159, %168 : vector<8x32xf32>
    %170 = arith.mulf %169, %169 : vector<8x32xf32>
    %cst_114 = arith.constant dense<0.000000e+00> : vector<8xf32>
    %171 = vector.multi_reduction <add>, %170, %cst_114 [1] : vector<8x32xf32> to vector<8xf32>
    %172 = vector.shape_cast %171 : vector<8xf32> to vector<8x1xf32>
    %cst_115 = arith.constant 3.200000e+01 : f32
    %173 = vector.broadcast %cst_115 : f32 to vector<8x1xf32>
    %174 = arith.divf %172, %173 : vector<8x1xf32>
    %cst_116 = arith.constant 9.99999974E-6 : f32
    %175 = vector.broadcast %cst_116 : f32 to vector<8x1xf32>
    %176 = arith.addf %174, %175 : vector<8x1xf32>
    %177 = math.rsqrt %176 : vector<8x1xf32>
    %178 = vector.broadcast %177 : vector<8x1xf32> to vector<8x32xf32>
    %179 = arith.mulf %169, %178 : vector<8x32xf32>
    %180 = vector.broadcast %161 : vector<1x32xf32> to vector<8x32xf32>
    %181 = arith.mulf %179, %180 : vector<8x32xf32>
    %182 = vector.broadcast %163 : vector<1x32xf32> to vector<8x32xf32>
    %183 = arith.addf %181, %182 : vector<8x32xf32>
    %c0_117 = arith.constant 0 : index
    %c0_118 = arith.constant 0 : index
    %c0_119 = arith.constant 0 : index
    %184 = vector.load %arg17[%c0_117, %c0_118, %c0_119] : memref<1x8x32xf32, #tpu.memory_space<vmem>>, vector<1x8x32xf32>
    %185 = vector.shape_cast %184 : vector<1x8x32xf32> to vector<8x32xf32>
    %186 = vector.shape_cast %183 : vector<8x32xf32> to vector<1x8x32xf32>
    tpu.vector_store %arg17[%c0_117, %c0_118, %c0_119], %186 {strides = array<i32>} : memref<1x8x32xf32, #tpu.memory_space<vmem>>, vector<1x8x32xf32>,
    %c0_120 = arith.constant 0 : index
    %c0_121 = arith.constant 0 : index
    %187 = vector.load %arg15[%c0_120, %c0_121] : memref<1x32xf32, #tpu.memory_space<vmem>>, vector<1x32xf32>
    %c0_122 = arith.constant 0 : index
    %c0_123 = arith.constant 0 : index
    %188 = vector.load %arg16[%c0_122, %c0_123] : memref<1x32xf32, #tpu.memory_space<vmem>>, vector<1x32xf32>
    %cst_124 = arith.constant dense<0.000000e+00> : vector<8xf32>
    %189 = vector.multi_reduction <add>, %183, %cst_124 [1] : vector<8x32xf32> to vector<8xf32>
    %190 = vector.shape_cast %189 : vector<8xf32> to vector<8x1xf32>
    %cst_125 = arith.constant 3.200000e+01 : f32
    %191 = vector.broadcast %cst_125 : f32 to vector<8x1xf32>
    %192 = arith.divf %190, %191 : vector<8x1xf32>
    %193 = vector.broadcast %192 : vector<8x1xf32> to vector<8x32xf32>
    %194 = arith.subf %183, %193 : vector<8x32xf32>
    %195 = arith.mulf %194, %194 : vector<8x32xf32>
    %cst_126 = arith.constant dense<0.000000e+00> : vector<8xf32>
    %196 = vector.multi_reduction <add>, %195, %cst_126 [1] : vector<8x32xf32> to vector<8xf32>
    %197 = vector.shape_cast %196 : vector<8xf32> to vector<8x1xf32>
    %cst_127 = arith.constant 3.200000e+01 : f32
    %198 = vector.broadcast %cst_127 : f32 to vector<8x1xf32>
    %199 = arith.divf %197, %198 : vector<8x1xf32>
    %cst_128 = arith.constant 9.99999974E-6 : f32
    %200 = vector.broadcast %cst_128 : f32 to vector<8x1xf32>
    %201 = arith.addf %199, %200 : vector<8x1xf32>
    %202 = math.rsqrt %201 : vector<8x1xf32>
    %203 = vector.broadcast %202 : vector<8x1xf32> to vector<8x32xf32>
    %204 = arith.mulf %194, %203 : vector<8x32xf32>
    %205 = vector.broadcast %187 : vector<1x32xf32> to vector<8x32xf32>
    %206 = arith.mulf %204, %205 : vector<8x32xf32>
    %207 = vector.broadcast %188 : vector<1x32xf32> to vector<8x32xf32>
    %208 = arith.addf %206, %207 : vector<8x32xf32>
    %c0_129 = arith.constant 0 : index
    %c0_130 = arith.constant 0 : index
    %c0_131 = arith.constant 0 : index
    %209 = vector.load %arg18[%c0_129, %c0_130, %c0_131] : memref<1x8x32xf32, #tpu.memory_space<vmem>>, vector<1x8x32xf32>
    %210 = vector.shape_cast %209 : vector<1x8x32xf32> to vector<8x32xf32>
    %211 = vector.shape_cast %208 : vector<8x32xf32> to vector<1x8x32xf32>
    tpu.vector_store %arg18[%c0_129, %c0_130, %c0_131], %211 {strides = array<i32>} : memref<1x8x32xf32, #tpu.memory_space<vmem>>, vector<1x8x32xf32>,
    return
  }
  func.func @transform_0(%arg0: i32) -> (i32, i32, i32) {
    %c0_i32 = arith.constant 0 : i32
    %c0_i32_0 = arith.constant 0 : i32
    %c0_i32_1 = arith.constant 0 : i32
    return %arg0, %c0_i32, %c0_i32_0 : i32, i32, i32
  }
  func.func @transform_1(%arg0: i32) -> (i32, i32, i32) {
    %c0_i32 = arith.constant 0 : i32
    %c0_i32_0 = arith.constant 0 : i32
    %c0_i32_1 = arith.constant 0 : i32
    return %arg0, %c0_i32, %c0_i32_0 : i32, i32, i32
  }
  func.func @transform_2(%arg0: i32) -> (i32, i32, i32) {
    %c0_i32 = arith.constant 0 : i32
    %c0_i32_0 = arith.constant 0 : i32
    %c0_i32_1 = arith.constant 0 : i32
    return %arg0, %c0_i32, %c0_i32_0 : i32, i32, i32
  }
  func.func @transform_3(%arg0: i32) -> (i32, i32, i32) {
    %c0_i32 = arith.constant 0 : i32
    %c0_i32_0 = arith.constant 0 : i32
    %c0_i32_1 = arith.constant 0 : i32
    return %arg0, %c0_i32, %c0_i32_0 : i32, i32, i32
  }
  func.func @transform_4(%arg0: i32) -> (i32, i32, i32) {
    %c0_i32 = arith.constant 0 : i32
    %c0_i32_0 = arith.constant 0 : i32
    %c0_i32_1 = arith.constant 0 : i32
    %c0_i32_2 = arith.constant 0 : i32
    return %c0_i32, %c0_i32_0, %c0_i32_1 : i32, i32, i32
  }
  func.func @transform_5(%arg0: i32) -> (i32, i32, i32) {
    %c0_i32 = arith.constant 0 : i32
    %c0_i32_0 = arith.constant 0 : i32
    %c0_i32_1 = arith.constant 0 : i32
    %c0_i32_2 = arith.constant 0 : i32
    return %c0_i32, %c0_i32_0, %c0_i32_1 : i32, i32, i32
  }
  func.func @transform_6(%arg0: i32) -> (i32, i32, i32) {
    %c0_i32 = arith.constant 0 : i32
    %c0_i32_0 = arith.constant 0 : i32
    %c0_i32_1 = arith.constant 0 : i32
    %c0_i32_2 = arith.constant 0 : i32
    return %c0_i32, %c0_i32_0, %c0_i32_1 : i32, i32, i32
  }
  func.func @transform_7(%arg0: i32) -> (i32, i32, i32) {
    %c0_i32 = arith.constant 0 : i32
    %c0_i32_0 = arith.constant 0 : i32
    %c0_i32_1 = arith.constant 0 : i32
    %c0_i32_2 = arith.constant 0 : i32
    return %c0_i32, %c0_i32_0, %c0_i32_1 : i32, i32, i32
  }
  func.func @transform_8(%arg0: i32) -> (i32, i32, i32) {
    %c0_i32 = arith.constant 0 : i32
    %c0_i32_0 = arith.constant 0 : i32
    %c0_i32_1 = arith.constant 0 : i32
    %c0_i32_2 = arith.constant 0 : i32
    return %c0_i32, %c0_i32_0, %c0_i32_1 : i32, i32, i32
  }
  func.func @transform_9(%arg0: i32) -> (i32, i32, i32) {
    %c0_i32 = arith.constant 0 : i32
    %c0_i32_0 = arith.constant 0 : i32
    %c0_i32_1 = arith.constant 0 : i32
    %c0_i32_2 = arith.constant 0 : i32
    return %c0_i32, %c0_i32_0, %c0_i32_1 : i32, i32, i32
  }
  func.func @transform_10(%arg0: i32) -> (i32, i32) {
    %c0_i32 = arith.constant 0 : i32
    %c0_i32_0 = arith.constant 0 : i32
    %c0_i32_1 = arith.constant 0 : i32
    return %c0_i32, %c0_i32_0 : i32, i32
  }
  func.func @transform_11(%arg0: i32) -> (i32, i32) {
    %c0_i32 = arith.constant 0 : i32
    %c0_i32_0 = arith.constant 0 : i32
    %c0_i32_1 = arith.constant 0 : i32
    return %c0_i32, %c0_i32_0 : i32, i32
  }
  func.func @transform_12(%arg0: i32) -> (i32, i32) {
    %c0_i32 = arith.constant 0 : i32
    %c0_i32_0 = arith.constant 0 : i32
    %c0_i32_1 = arith.constant 0 : i32
    return %c0_i32, %c0_i32_0 : i32, i32
  }
  func.func @transform_13(%arg0: i32) -> (i32, i32) {
    %c0_i32 = arith.constant 0 : i32
    %c0_i32_0 = arith.constant 0 : i32
    %c0_i32_1 = arith.constant 0 : i32
    return %c0_i32, %c0_i32_0 : i32, i32
  }
  func.func @transform_14(%arg0: i32) -> (i32, i32) {
    %c0_i32 = arith.constant 0 : i32
    %c0_i32_0 = arith.constant 0 : i32
    %c0_i32_1 = arith.constant 0 : i32
    return %c0_i32, %c0_i32_0 : i32, i32
  }
  func.func @transform_15(%arg0: i32) -> (i32, i32) {
    %c0_i32 = arith.constant 0 : i32
    %c0_i32_0 = arith.constant 0 : i32
    %c0_i32_1 = arith.constant 0 : i32
    return %c0_i32, %c0_i32_0 : i32, i32
  }
  func.func @transform_16(%arg0: i32) -> (i32, i32, i32) {
    %c0_i32 = arith.constant 0 : i32
    %c0_i32_0 = arith.constant 0 : i32
    %c0_i32_1 = arith.constant 0 : i32
    return %arg0, %c0_i32, %c0_i32_0 : i32, i32, i32
  }
  func.func @transform_17(%arg0: i32) -> (i32, i32, i32) {
    %c0_i32 = arith.constant 0 : i32
    %c0_i32_0 = arith.constant 0 : i32
    %c0_i32_1 = arith.constant 0 : i32
    return %arg0, %c0_i32, %c0_i32_0 : i32, i32, i32
  }
}

module attributes {stable_mosaic.version = 11 : i64} {
  func.func @_decoder_layer_kernel(%arg0: i32, %arg1: memref<1x8x32xf32, #tpu.memory_space<vmem>>, %arg2: memref<1x8x32xf32, #tpu.memory_space<vmem>>, %arg3: memref<1x16x32xf32, #tpu.memory_space<vmem>>, %arg4: memref<1x16x32xf32, #tpu.memory_space<vmem>>, %arg5: memref<4x32x32xf32, #tpu.memory_space<vmem>>, %arg6: memref<4x1x32xf32, #tpu.memory_space<vmem>>, %arg7: memref<4x32x32xf32, #tpu.memory_space<vmem>>, %arg8: memref<4x1x32xf32, #tpu.memory_space<vmem>>, %arg9: memref<3x1x32xf32, #tpu.memory_space<vmem>>, %arg10: memref<3x1x32xf32, #tpu.memory_space<vmem>>, %arg11: memref<32x64xf32, #tpu.memory_space<vmem>>, %arg12: memref<1x64xf32, #tpu.memory_space<vmem>>, %arg13: memref<64x32xf32, #tpu.memory_space<vmem>>, %arg14: memref<1x32xf32, #tpu.memory_space<vmem>>, %arg15: memref<1x32xf32, #tpu.memory_space<vmem>>, %arg16: memref<1x32xf32, #tpu.memory_space<vmem>>, %arg17: memref<1x8x32xf32, #tpu.memory_space<vmem>>, %arg18: memref<1x8x32xf32, #tpu.memory_space<vmem>>) attributes {dimension_semantics = [#tpu.dimension_semantics<parallel>], iteration_bounds = array<i64: 2>, scalar_prefetch = 0 : i64, scratch_operands = 0 : i64, tpu.core_type = #tpu.core_type<tc>, window_params = [{transform_indices = @transform_0, window_bounds = array<i64: 1, 8, 32>}, {transform_indices = @transform_1, window_bounds = array<i64: 1, 8, 32>}, {transform_indices = @transform_2, window_bounds = array<i64: 1, 16, 32>}, {transform_indices = @transform_3, window_bounds = array<i64: 1, 16, 32>}, {pipeline_mode = #tpu.pipeline_mode<synchronous>, transform_indices = @transform_4, window_bounds = array<i64: 4, 32, 32>}, {pipeline_mode = #tpu.pipeline_mode<synchronous>, transform_indices = @transform_5, window_bounds = array<i64: 4, 1, 32>}, {pipeline_mode = #tpu.pipeline_mode<synchronous>, transform_indices = @transform_6, window_bounds = array<i64: 4, 32, 32>}, {pipeline_mode = #tpu.pipeline_mode<synchronous>, transform_indices = @transform_7, window_bounds = array<i64: 4, 1, 32>}, {pipeline_mode = #tpu.pipeline_mode<synchronous>, transform_indices = @transform_8, window_bounds = array<i64: 3, 1, 32>}, {pipeline_mode = #tpu.pipeline_mode<synchronous>, transform_indices = @transform_9, window_bounds = array<i64: 3, 1, 32>}, {pipeline_mode = #tpu.pipeline_mode<synchronous>, transform_indices = @transform_10, window_bounds = array<i64: 32, 64>}, {pipeline_mode = #tpu.pipeline_mode<synchronous>, transform_indices = @transform_11, window_bounds = array<i64: 1, 64>}, {pipeline_mode = #tpu.pipeline_mode<synchronous>, transform_indices = @transform_12, window_bounds = array<i64: 64, 32>}, {pipeline_mode = #tpu.pipeline_mode<synchronous>, transform_indices = @transform_13, window_bounds = array<i64: 1, 32>}, {pipeline_mode = #tpu.pipeline_mode<synchronous>, transform_indices = @transform_14, window_bounds = array<i64: 1, 32>}, {pipeline_mode = #tpu.pipeline_mode<synchronous>, transform_indices = @transform_15, window_bounds = array<i64: 1, 32>}, {transform_indices = @transform_16, window_bounds = array<i64: 1, 8, 32>}, {transform_indices = @transform_17, window_bounds = array<i64: 1, 8, 32>}]} {
    %c0 = arith.constant 0 : index
    %c0_0 = arith.constant 0 : index
    %c0_1 = arith.constant 0 : index
    %0 = vector.load %arg1[%c0, %c0_0, %c0_1] : memref<1x8x32xf32, #tpu.memory_space<vmem>>, vector<1x8x32xf32>
    %1 = vector.shape_cast %0 : vector<1x8x32xf32> to vector<8x32xf32>
    %c0_2 = arith.constant 0 : index
    %c0_3 = arith.constant 0 : index
    %c0_4 = arith.constant 0 : index
    %2 = vector.load %arg2[%c0_2, %c0_3, %c0_4] : memref<1x8x32xf32, #tpu.memory_space<vmem>>, vector<1x8x32xf32>
    %3 = vector.shape_cast %2 : vector<1x8x32xf32> to vector<8x32xf32>
    %c0_5 = arith.constant 0 : index
    %c0_6 = arith.constant 0 : index
    %c0_7 = arith.constant 0 : index
    %4 = vector.load %arg3[%c0_5, %c0_6, %c0_7] : memref<1x16x32xf32, #tpu.memory_space<vmem>>, vector<1x16x32xf32>
    %5 = vector.shape_cast %4 : vector<1x16x32xf32> to vector<16x32xf32>
    %c0_8 = arith.constant 0 : index
    %c0_9 = arith.constant 0 : index
    %c0_10 = arith.constant 0 : index
    %6 = vector.load %arg4[%c0_8, %c0_9, %c0_10] : memref<1x16x32xf32, #tpu.memory_space<vmem>>, vector<1x16x32xf32>
    %7 = vector.shape_cast %6 : vector<1x16x32xf32> to vector<16x32xf32>
    %8 = arith.addf %1, %3 : vector<8x32xf32>
    %c0_11 = arith.constant 0 : index
    %c0_12 = arith.constant 0 : index
    %c0_13 = arith.constant 0 : index
    %9 = vector.load %arg5[%c0_11, %c0_12, %c0_13] : memref<4x32x32xf32, #tpu.memory_space<vmem>>, vector<1x32x32xf32>
    %10 = vector.shape_cast %9 : vector<1x32x32xf32> to vector<32x32xf32>
    %cst = arith.constant dense<0.000000e+00> : vector<8x32xf32>
    %11 = tpu.matmul %8, %10, %cst {dimension_numbers = #tpu.dot_dimension_numbers<[1], [0], [0], [1], [0, 0, 1, 1], [], []>} : vector<8x32xf32>, vector<32x32xf32>, vector<8x32xf32> -> vector<8x32xf32>
    %c0_14 = arith.constant 0 : index
    %c0_15 = arith.constant 0 : index
    %c0_16 = arith.constant 0 : index
    %12 = vector.load %arg6[%c0_14, %c0_15, %c0_16] : memref<4x1x32xf32, #tpu.memory_space<vmem>>, vector<1x1x32xf32>
    %13 = vector.shape_cast %12 : vector<1x1x32xf32> to vector<1x32xf32>
    %14 = vector.broadcast %13 : vector<1x32xf32> to vector<8x32xf32>
    %15 = arith.addf %11, %14 : vector<8x32xf32>
    %c1 = arith.constant 1 : index
    %c0_17 = arith.constant 0 : index
    %c0_18 = arith.constant 0 : index
    %16 = vector.load %arg5[%c1, %c0_17, %c0_18] : memref<4x32x32xf32, #tpu.memory_space<vmem>>, vector<1x32x32xf32>
    %17 = vector.shape_cast %16 : vector<1x32x32xf32> to vector<32x32xf32>
    %cst_19 = arith.constant dense<0.000000e+00> : vector<8x32xf32>
    %18 = tpu.matmul %8, %17, %cst_19 {dimension_numbers = #tpu.dot_dimension_numbers<[1], [0], [0], [1], [0, 0, 1, 1], [], []>} : vector<8x32xf32>, vector<32x32xf32>, vector<8x32xf32> -> vector<8x32xf32>
    %c1_20 = arith.constant 1 : index
    %c0_21 = arith.constant 0 : index
    %c0_22 = arith.constant 0 : index
    %19 = vector.load %arg6[%c1_20, %c0_21, %c0_22] : memref<4x1x32xf32, #tpu.memory_space<vmem>>, vector<1x1x32xf32>
    %20 = vector.shape_cast %19 : vector<1x1x32xf32> to vector<1x32xf32>
    %21 = vector.broadcast %20 : vector<1x32xf32> to vector<8x32xf32>
    %22 = arith.addf %18, %21 : vector<8x32xf32>
    %c2 = arith.constant 2 : index
    %c0_23 = arith.constant 0 : index
    %c0_24 = arith.constant 0 : index
    %23 = vector.load %arg5[%c2, %c0_23, %c0_24] : memref<4x32x32xf32, #tpu.memory_space<vmem>>, vector<1x32x32xf32>
    %24 = vector.shape_cast %23 : vector<1x32x32xf32> to vector<32x32xf32>
    %cst_25 = arith.constant dense<0.000000e+00> : vector<8x32xf32>
    %25 = tpu.matmul %1, %24, %cst_25 {dimension_numbers = #tpu.dot_dimension_numbers<[1], [0], [0], [1], [0, 0, 1, 1], [], []>} : vector<8x32xf32>, vector<32x32xf32>, vector<8x32xf32> -> vector<8x32xf32>
    %c2_26 = arith.constant 2 : index
    %c0_27 = arith.constant 0 : index
    %c0_28 = arith.constant 0 : index
    %26 = vector.load %arg6[%c2_26, %c0_27, %c0_28] : memref<4x1x32xf32, #tpu.memory_space<vmem>>, vector<1x1x32xf32>
    %27 = vector.shape_cast %26 : vector<1x1x32xf32> to vector<1x32xf32>
    %28 = vector.broadcast %27 : vector<1x32xf32> to vector<8x32xf32>
    %29 = arith.addf %25, %28 : vector<8x32xf32>
    %30 = tpu.transpose %22, [1, 0] : vector<8x32xf32> -> vector<32x8xf32>
    %cst_29 = arith.constant dense<0.000000e+00> : vector<8x8xf32>
    %31 = tpu.matmul %15, %30, %cst_29 {dimension_numbers = #tpu.dot_dimension_numbers<[1], [0], [0], [1], [0, 0, 1, 1], [], []>} : vector<8x32xf32>, vector<32x8xf32>, vector<8x8xf32> -> vector<8x8xf32>
    %cst_30 = arith.constant 0.176776692 : f32
    %32 = vector.broadcast %cst_30 : f32 to vector<8x8xf32>
    %33 = arith.mulf %31, %32 : vector<8x8xf32>
    %cst_31 = arith.constant dense<0xFF800000> : vector<8xf32>
    %34 = vector.multi_reduction <maximumf>, %33, %cst_31 [1] : vector<8x8xf32> to vector<8xf32>
    %35 = vector.shape_cast %34 : vector<8xf32> to vector<8x1xf32>
    %36 = vector.broadcast %35 : vector<8x1xf32> to vector<8x8xf32>
    %37 = arith.subf %33, %36 : vector<8x8xf32>
    %38 = math.exp %37 : vector<8x8xf32>
    %cst_32 = arith.constant dense<0.000000e+00> : vector<8xf32>
    %39 = vector.multi_reduction <add>, %38, %cst_32 [1] : vector<8x8xf32> to vector<8xf32>
    %40 = vector.shape_cast %39 : vector<8xf32> to vector<8x1xf32>
    %41 = tpu.reciprocal %40 {approx = true} : vector<8x1xf32> -> vector<8x1xf32>
    %42 = vector.broadcast %41 : vector<8x1xf32> to vector<8x8xf32>
    %43 = arith.mulf %38, %42 : vector<8x8xf32>
    %cst_33 = arith.constant dense<0.000000e+00> : vector<8x32xf32>
    %44 = tpu.matmul %43, %29, %cst_33 {dimension_numbers = #tpu.dot_dimension_numbers<[1], [0], [0], [1], [0, 0, 1, 1], [], []>} : vector<8x8xf32>, vector<8x32xf32>, vector<8x32xf32> -> vector<8x32xf32>
    %c3 = arith.constant 3 : index
    %c0_34 = arith.constant 0 : index
    %c0_35 = arith.constant 0 : index
    %45 = vector.load %arg5[%c3, %c0_34, %c0_35] : memref<4x32x32xf32, #tpu.memory_space<vmem>>, vector<1x32x32xf32>
    %46 = vector.shape_cast %45 : vector<1x32x32xf32> to vector<32x32xf32>
    %cst_36 = arith.constant dense<0.000000e+00> : vector<8x32xf32>
    %47 = tpu.matmul %44, %46, %cst_36 {dimension_numbers = #tpu.dot_dimension_numbers<[1], [0], [0], [1], [0, 0, 1, 1], [], []>} : vector<8x32xf32>, vector<32x32xf32>, vector<8x32xf32> -> vector<8x32xf32>
    %c3_37 = arith.constant 3 : index
    %c0_38 = arith.constant 0 : index
    %c0_39 = arith.constant 0 : index
    %48 = vector.load %arg6[%c3_37, %c0_38, %c0_39] : memref<4x1x32xf32, #tpu.memory_space<vmem>>, vector<1x1x32xf32>
    %49 = vector.shape_cast %48 : vector<1x1x32xf32> to vector<1x32xf32>
    %50 = vector.broadcast %49 : vector<1x32xf32> to vector<8x32xf32>
    %51 = arith.addf %47, %50 : vector<8x32xf32>
    %52 = arith.addf %1, %51 : vector<8x32xf32>
    %c0_40 = arith.constant 0 : index
    %c0_41 = arith.constant 0 : index
    %c0_42 = arith.constant 0 : index
    %53 = vector.load %arg9[%c0_40, %c0_41, %c0_42] : memref<3x1x32xf32, #tpu.memory_space<vmem>>, vector<1x1x32xf32>
    %54 = vector.shape_cast %53 : vector<1x1x32xf32> to vector<1x32xf32>
    %c0_43 = arith.constant 0 : index
    %c0_44 = arith.constant 0 : index
    %c0_45 = arith.constant 0 : index
    %55 = vector.load %arg10[%c0_43, %c0_44, %c0_45] : memref<3x1x32xf32, #tpu.memory_space<vmem>>, vector<1x1x32xf32>
    %56 = vector.shape_cast %55 : vector<1x1x32xf32> to vector<1x32xf32>
    %cst_46 = arith.constant dense<0.000000e+00> : vector<8xf32>
    %57 = vector.multi_reduction <add>, %52, %cst_46 [1] : vector<8x32xf32> to vector<8xf32>
    %58 = vector.shape_cast %57 : vector<8xf32> to vector<8x1xf32>
    %cst_47 = arith.constant 3.200000e+01 : f32
    %59 = vector.broadcast %cst_47 : f32 to vector<8x1xf32>
    %60 = arith.divf %58, %59 : vector<8x1xf32>
    %61 = vector.broadcast %60 : vector<8x1xf32> to vector<8x32xf32>
    %62 = arith.subf %52, %61 : vector<8x32xf32>
    %63 = arith.mulf %62, %62 : vector<8x32xf32>
    %cst_48 = arith.constant dense<0.000000e+00> : vector<8xf32>
    %64 = vector.multi_reduction <add>, %63, %cst_48 [1] : vector<8x32xf32> to vector<8xf32>
    %65 = vector.shape_cast %64 : vector<8xf32> to vector<8x1xf32>
    %cst_49 = arith.constant 3.200000e+01 : f32
    %66 = vector.broadcast %cst_49 : f32 to vector<8x1xf32>
    %67 = arith.divf %65, %66 : vector<8x1xf32>
    %cst_50 = arith.constant 9.99999974E-6 : f32
    %68 = vector.broadcast %cst_50 : f32 to vector<8x1xf32>
    %69 = arith.addf %67, %68 : vector<8x1xf32>
    %70 = math.rsqrt %69 : vector<8x1xf32>
    %71 = vector.broadcast %70 : vector<8x1xf32> to vector<8x32xf32>
    %72 = arith.mulf %62, %71 : vector<8x32xf32>
    %73 = vector.broadcast %54 : vector<1x32xf32> to vector<8x32xf32>
    %74 = arith.mulf %72, %73 : vector<8x32xf32>
    %75 = vector.broadcast %56 : vector<1x32xf32> to vector<8x32xf32>
    %76 = arith.addf %74, %75 : vector<8x32xf32>
    %77 = arith.addf %76, %3 : vector<8x32xf32>
    %c0_51 = arith.constant 0 : index
    %c0_52 = arith.constant 0 : index
    %c0_53 = arith.constant 0 : index
    %78 = vector.load %arg7[%c0_51, %c0_52, %c0_53] : memref<4x32x32xf32, #tpu.memory_space<vmem>>, vector<1x32x32xf32>
    %79 = vector.shape_cast %78 : vector<1x32x32xf32> to vector<32x32xf32>
    %cst_54 = arith.constant dense<0.000000e+00> : vector<8x32xf32>
    %80 = tpu.matmul %77, %79, %cst_54 {dimension_numbers = #tpu.dot_dimension_numbers<[1], [0], [0], [1], [0, 0, 1, 1], [], []>} : vector<8x32xf32>, vector<32x32xf32>, vector<8x32xf32> -> vector<8x32xf32>
    %c0_55 = arith.constant 0 : index
    %c0_56 = arith.constant 0 : index
    %c0_57 = arith.constant 0 : index
    %81 = vector.load %arg8[%c0_55, %c0_56, %c0_57] : memref<4x1x32xf32, #tpu.memory_space<vmem>>, vector<1x1x32xf32>
    %82 = vector.shape_cast %81 : vector<1x1x32xf32> to vector<1x32xf32>
    %83 = vector.broadcast %82 : vector<1x32xf32> to vector<8x32xf32>
    %84 = arith.addf %80, %83 : vector<8x32xf32>
    %85 = arith.addf %5, %7 : vector<16x32xf32>
    %c1_58 = arith.constant 1 : index
    %c0_59 = arith.constant 0 : index
    %c0_60 = arith.constant 0 : index
    %86 = vector.load %arg7[%c1_58, %c0_59, %c0_60] : memref<4x32x32xf32, #tpu.memory_space<vmem>>, vector<1x32x32xf32>
    %87 = vector.shape_cast %86 : vector<1x32x32xf32> to vector<32x32xf32>
    %cst_61 = arith.constant dense<0.000000e+00> : vector<16x32xf32>
    %88 = tpu.matmul %85, %87, %cst_61 {dimension_numbers = #tpu.dot_dimension_numbers<[1], [0], [0], [1], [0, 0, 1, 1], [], []>} : vector<16x32xf32>, vector<32x32xf32>, vector<16x32xf32> -> vector<16x32xf32>
    %c1_62 = arith.constant 1 : index
    %c0_63 = arith.constant 0 : index
    %c0_64 = arith.constant 0 : index
    %89 = vector.load %arg8[%c1_62, %c0_63, %c0_64] : memref<4x1x32xf32, #tpu.memory_space<vmem>>, vector<1x1x32xf32>
    %90 = vector.shape_cast %89 : vector<1x1x32xf32> to vector<1x32xf32>
    %91 = vector.broadcast %90 : vector<1x32xf32> to vector<16x32xf32>
    %92 = arith.addf %88, %91 : vector<16x32xf32>
    %c2_65 = arith.constant 2 : index
    %c0_66 = arith.constant 0 : index
    %c0_67 = arith.constant 0 : index
    %93 = vector.load %arg7[%c2_65, %c0_66, %c0_67] : memref<4x32x32xf32, #tpu.memory_space<vmem>>, vector<1x32x32xf32>
    %94 = vector.shape_cast %93 : vector<1x32x32xf32> to vector<32x32xf32>
    %cst_68 = arith.constant dense<0.000000e+00> : vector<16x32xf32>
    %95 = tpu.matmul %5, %94, %cst_68 {dimension_numbers = #tpu.dot_dimension_numbers<[1], [0], [0], [1], [0, 0, 1, 1], [], []>} : vector<16x32xf32>, vector<32x32xf32>, vector<16x32xf32> -> vector<16x32xf32>
    %c2_69 = arith.constant 2 : index
    %c0_70 = arith.constant 0 : index
    %c0_71 = arith.constant 0 : index
    %96 = vector.load %arg8[%c2_69, %c0_70, %c0_71] : memref<4x1x32xf32, #tpu.memory_space<vmem>>, vector<1x1x32xf32>
    %97 = vector.shape_cast %96 : vector<1x1x32xf32> to vector<1x32xf32>
    %98 = vector.broadcast %97 : vector<1x32xf32> to vector<16x32xf32>
    %99 = arith.addf %95, %98 : vector<16x32xf32>
    %100 = tpu.transpose %92, [1, 0] : vector<16x32xf32> -> vector<32x16xf32>
    %cst_72 = arith.constant dense<0.000000e+00> : vector<8x16xf32>
    %101 = tpu.matmul %84, %100, %cst_72 {dimension_numbers = #tpu.dot_dimension_numbers<[1], [0], [0], [1], [0, 0, 1, 1], [], []>} : vector<8x32xf32>, vector<32x16xf32>, vector<8x16xf32> -> vector<8x16xf32>
    %cst_73 = arith.constant 0.176776692 : f32
    %102 = vector.broadcast %cst_73 : f32 to vector<8x16xf32>
    %103 = arith.mulf %101, %102 : vector<8x16xf32>
    %cst_74 = arith.constant dense<0xFF800000> : vector<8xf32>
    %104 = vector.multi_reduction <maximumf>, %103, %cst_74 [1] : vector<8x16xf32> to vector<8xf32>
    %105 = vector.shape_cast %104 : vector<8xf32> to vector<8x1xf32>
    %106 = vector.broadcast %105 : vector<8x1xf32> to vector<8x16xf32>
    %107 = arith.subf %103, %106 : vector<8x16xf32>
    %108 = math.exp %107 : vector<8x16xf32>
    %cst_75 = arith.constant dense<0.000000e+00> : vector<8xf32>
    %109 = vector.multi_reduction <add>, %108, %cst_75 [1] : vector<8x16xf32> to vector<8xf32>
    %110 = vector.shape_cast %109 : vector<8xf32> to vector<8x1xf32>
    %111 = tpu.reciprocal %110 {approx = true} : vector<8x1xf32> -> vector<8x1xf32>
    %112 = vector.broadcast %111 : vector<8x1xf32> to vector<8x16xf32>
    %113 = arith.mulf %108, %112 : vector<8x16xf32>
    %cst_76 = arith.constant dense<0.000000e+00> : vector<8x32xf32>
    %114 = tpu.matmul %113, %99, %cst_76 {dimension_numbers = #tpu.dot_dimension_numbers<[1], [0], [0], [1], [0, 0, 1, 1], [], []>} : vector<8x16xf32>, vector<16x32xf32>, vector<8x32xf32> -> vector<8x32xf32>
    %c3_77 = arith.constant 3 : index
    %c0_78 = arith.constant 0 : index
    %c0_79 = arith.constant 0 : index
    %115 = vector.load %arg7[%c3_77, %c0_78, %c0_79] : memref<4x32x32xf32, #tpu.memory_space<vmem>>, vector<1x32x32xf32>
    %116 = vector.shape_cast %115 : vector<1x32x32xf32> to vector<32x32xf32>
    %cst_80 = arith.constant dense<0.000000e+00> : vector<8x32xf32>
    %117 = tpu.matmul %114, %116, %cst_80 {dimension_numbers = #tpu.dot_dimension_numbers<[1], [0], [0], [1], [0, 0, 1, 1], [], []>} : vector<8x32xf32>, vector<32x32xf32>, vector<8x32xf32> -> vector<8x32xf32>
    %c3_81 = arith.constant 3 : index
    %c0_82 = arith.constant 0 : index
    %c0_83 = arith.constant 0 : index
    %118 = vector.load %arg8[%c3_81, %c0_82, %c0_83] : memref<4x1x32xf32, #tpu.memory_space<vmem>>, vector<1x1x32xf32>
    %119 = vector.shape_cast %118 : vector<1x1x32xf32> to vector<1x32xf32>
    %120 = vector.broadcast %119 : vector<1x32xf32> to vector<8x32xf32>
    %121 = arith.addf %117, %120 : vector<8x32xf32>
    %122 = arith.addf %76, %121 : vector<8x32xf32>
    %c1_84 = arith.constant 1 : index
    %c0_85 = arith.constant 0 : index
    %c0_86 = arith.constant 0 : index
    %123 = vector.load %arg9[%c1_84, %c0_85, %c0_86] : memref<3x1x32xf32, #tpu.memory_space<vmem>>, vector<1x1x32xf32>
    %124 = vector.shape_cast %123 : vector<1x1x32xf32> to vector<1x32xf32>
    %c1_87 = arith.constant 1 : index
    %c0_88 = arith.constant 0 : index
    %c0_89 = arith.constant 0 : index
    %125 = vector.load %arg10[%c1_87, %c0_88, %c0_89] : memref<3x1x32xf32, #tpu.memory_space<vmem>>, vector<1x1x32xf32>
    %126 = vector.shape_cast %125 : vector<1x1x32xf32> to vector<1x32xf32>
    %cst_90 = arith.constant dense<0.000000e+00> : vector<8xf32>
    %127 = vector.multi_reduction <add>, %122, %cst_90 [1] : vector<8x32xf32> to vector<8xf32>
    %128 = vector.shape_cast %127 : vector<8xf32> to vector<8x1xf32>
    %cst_91 = arith.constant 3.200000e+01 : f32
    %129 = vector.broadcast %cst_91 : f32 to vector<8x1xf32>
    %130 = arith.divf %128, %129 : vector<8x1xf32>
    %131 = vector.broadcast %130 : vector<8x1xf32> to vector<8x32xf32>
    %132 = arith.subf %122, %131 : vector<8x32xf32>
    %133 = arith.mulf %132, %132 : vector<8x32xf32>
    %cst_92 = arith.constant dense<0.000000e+00> : vector<8xf32>
    %134 = vector.multi_reduction <add>, %133, %cst_92 [1] : vector<8x32xf32> to vector<8xf32>
    %135 = vector.shape_cast %134 : vector<8xf32> to vector<8x1xf32>
    %cst_93 = arith.constant 3.200000e+01 : f32
    %136 = vector.broadcast %cst_93 : f32 to vector<8x1xf32>
    %137 = arith.divf %135, %136 : vector<8x1xf32>
    %cst_94 = arith.constant 9.99999974E-6 : f32
    %138 = vector.broadcast %cst_94 : f32 to vector<8x1xf32>
    %139 = arith.addf %137, %138 : vector<8x1xf32>
    %140 = math.rsqrt %139 : vector<8x1xf32>
    %141 = vector.broadcast %140 : vector<8x1xf32> to vector<8x32xf32>
    %142 = arith.mulf %132, %141 : vector<8x32xf32>
    %143 = vector.broadcast %124 : vector<1x32xf32> to vector<8x32xf32>
    %144 = arith.mulf %142, %143 : vector<8x32xf32>
    %145 = vector.broadcast %126 : vector<1x32xf32> to vector<8x32xf32>
    %146 = arith.addf %144, %145 : vector<8x32xf32>
    %c0_95 = arith.constant 0 : index
    %c0_96 = arith.constant 0 : index
    %147 = vector.load %arg11[%c0_95, %c0_96] : memref<32x64xf32, #tpu.memory_space<vmem>>, vector<32x64xf32>
    %cst_97 = arith.constant dense<0.000000e+00> : vector<8x64xf32>
    %148 = tpu.matmul %146, %147, %cst_97 {dimension_numbers = #tpu.dot_dimension_numbers<[1], [0], [0], [1], [0, 0, 1, 1], [], []>} : vector<8x32xf32>, vector<32x64xf32>, vector<8x64xf32> -> vector<8x64xf32>
    %c0_98 = arith.constant 0 : index
    %c0_99 = arith.constant 0 : index
    %149 = vector.load %arg12[%c0_98, %c0_99] : memref<1x64xf32, #tpu.memory_space<vmem>>, vector<1x64xf32>
    %150 = vector.broadcast %149 : vector<1x64xf32> to vector<8x64xf32>
    %151 = arith.addf %148, %150 : vector<8x64xf32>
    %cst_100 = arith.constant 0.000000e+00 : f32
    %152 = vector.broadcast %cst_100 : f32 to vector<8x64xf32>
    %153 = arith.maximumf %151, %152 : vector<8x64xf32>
    %c0_101 = arith.constant 0 : index
    %c0_102 = arith.constant 0 : index
    %154 = vector.load %arg13[%c0_101, %c0_102] : memref<64x32xf32, #tpu.memory_space<vmem>>, vector<64x32xf32>
    %cst_103 = arith.constant dense<0.000000e+00> : vector<8x32xf32>
    %155 = tpu.matmul %153, %154, %cst_103 {dimension_numbers = #tpu.dot_dimension_numbers<[1], [0], [0], [1], [0, 0, 1, 1], [], []>} : vector<8x64xf32>, vector<64x32xf32>, vector<8x32xf32> -> vector<8x32xf32>
    %c0_104 = arith.constant 0 : index
    %c0_105 = arith.constant 0 : index
    %156 = vector.load %arg14[%c0_104, %c0_105] : memref<1x32xf32, #tpu.memory_space<vmem>>, vector<1x32xf32>
    %157 = vector.broadcast %156 : vector<1x32xf32> to vector<8x32xf32>
    %158 = arith.addf %155, %157 : vector<8x32xf32>
    %159 = arith.addf %146, %158 : vector<8x32xf32>
    %c2_106 = arith.constant 2 : index
    %c0_107 = arith.constant 0 : index
    %c0_108 = arith.constant 0 : index
    %160 = vector.load %arg9[%c2_106, %c0_107, %c0_108] : memref<3x1x32xf32, #tpu.memory_space<vmem>>, vector<1x1x32xf32>
    %161 = vector.shape_cast %160 : vector<1x1x32xf32> to vector<1x32xf32>
    %c2_109 = arith.constant 2 : index
    %c0_110 = arith.constant 0 : index
    %c0_111 = arith.constant 0 : index
    %162 = vector.load %arg10[%c2_109, %c0_110, %c0_111] : memref<3x1x32xf32, #tpu.memory_space<vmem>>, vector<1x1x32xf32>
    %163 = vector.shape_cast %162 : vector<1x1x32xf32> to vector<1x32xf32>
    %cst_112 = arith.constant dense<0.000000e+00> : vector<8xf32>
    %164 = vector.multi_reduction <add>, %159, %cst_112 [1] : vector<8x32xf32> to vector<8xf32>
    %165 = vector.shape_cast %164 : vector<8xf32> to vector<8x1xf32>
    %cst_113 = arith.constant 3.200000e+01 : f32
    %166 = vector.broadcast %cst_113 : f32 to vector<8x1xf32>
    %167 = arith.divf %165, %166 : vector<8x1xf32>
    %168 = vector.broadcast %167 : vector<8x1xf32> to vector<8x32xf32>
    %169 = arith.subf %159, %168 : vector<8x32xf32>
    %170 = arith.mulf %169, %169 : vector<8x32xf32>
    %cst_114 = arith.constant dense<0.000000e+00> : vector<8xf32>
    %171 = vector.multi_reduction <add>, %170, %cst_114 [1] : vector<8x32xf32> to vector<8xf32>
    %172 = vector.shape_cast %171 : vector<8xf32> to vector<8x1xf32>
    %cst_115 = arith.constant 3.200000e+01 : f32
    %173 = vector.broadcast %cst_115 : f32 to vector<8x1xf32>
    %174 = arith.divf %172, %173 : vector<8x1xf32>
    %cst_116 = arith.constant 9.99999974E-6 : f32
    %175 = vector.broadcast %cst_116 : f32 to vector<8x1xf32>
    %176 = arith.addf %174, %175 : vector<8x1xf32>
    %177 = math.rsqrt %176 : vector<8x1xf32>
    %178 = vector.broadcast %177 : vector<8x1xf32> to vector<8x32xf32>
    %179 = arith.mulf %169, %178 : vector<8x32xf32>
    %180 = vector.broadcast %161 : vector<1x32xf32> to vector<8x32xf32>
    %181 = arith.mulf %179, %180 : vector<8x32xf32>
    %182 = vector.broadcast %163 : vector<1x32xf32> to vector<8x32xf32>
    %183 = arith.addf %181, %182 : vector<8x32xf32>
    %c0_117 = arith.constant 0 : index
    %c0_118 = arith.constant 0 : index
    %c0_119 = arith.constant 0 : index
    %184 = vector.load %arg17[%c0_117, %c0_118, %c0_119] : memref<1x8x32xf32, #tpu.memory_space<vmem>>, vector<1x8x32xf32>
    %185 = vector.shape_cast %184 : vector<1x8x32xf32> to vector<8x32xf32>
    %186 = vector.shape_cast %183 : vector<8x32xf32> to vector<1x8x32xf32>
    tpu.vector_store %arg17[%c0_117, %c0_118, %c0_119], %186 {strides = array<i32>} : memref<1x8x32xf32, #tpu.memory_space<vmem>>, vector<1x8x32xf32>,
    %c0_120 = arith.constant 0 : index
    %c0_121 = arith.constant 0 : index
    %187 = vector.load %arg15[%c0_120, %c0_121] : memref<1x32xf32, #tpu.memory_space<vmem>>, vector<1x32xf32>
    %c0_122 = arith.constant 0 : index
    %c0_123 = arith.constant 0 : index
    %188 = vector.load %arg16[%c0_122, %c0_123] : memref<1x32xf32, #tpu.memory_space<vmem>>, vector<1x32xf32>
    %cst_124 = arith.constant dense<0.000000e+00> : vector<8xf32>
    %189 = vector.multi_reduction <add>, %183, %cst_124 [1] : vector<8x32xf32> to vector<8xf32>
    %190 = vector.shape_cast %189 : vector<8xf32> to vector<8x1xf32>
    %cst_125 = arith.constant 3.200000e+01 : f32
    %191 = vector.broadcast %cst_125 : f32 to vector<8x1xf32>
    %192 = arith.divf %190, %191 : vector<8x1xf32>
    %193 = vector.broadcast %192 : vector<8x1xf32> to vector<8x32xf32>
    %194 = arith.subf %183, %193 : vector<8x32xf32>
    %195 = arith.mulf %194, %194 : vector<8x32xf32>
    %cst_126 = arith.constant dense<0.000000e+00> : vector<8xf32>
    %196 = vector.multi_reduction <add>, %195, %cst_126 [1] : vector<8x32xf32> to vector<8xf32>
    %197 = vector.shape_cast %196 : vector<8xf32> to vector<8x1xf32>
    %cst_127 = arith.constant 3.200000e+01 : f32
    %198 = vector.broadcast %cst_127 : f32 to vector<8x1xf32>
    %199 = arith.divf %197, %198 : vector<8x1xf32>
    %cst_128 = arith.constant 9.99999974E-6 : f32
    %200 = vector.broadcast %cst_128 : f32 to vector<8x1xf32>
    %201 = arith.addf %199, %200 : vector<8x1xf32>
    %202 = math.rsqrt %201 : vector<8x1xf32>
    %203 = vector.broadcast %202 : vector<8x1xf32> to vector<8x32xf32>
    %204 = arith.mulf %194, %203 : vector<8x32xf32>
    %205 = vector.broadcast %187 : vector<1x32xf32> to vector<8x32xf32>
    %206 = arith.mulf %204, %205 : vector<8x32xf32>
    %207 = vector.broadcast %188 : vector<1x32xf32> to vector<8x32xf32>
    %208 = arith.addf %206, %207 : vector<8x32xf32>
    %c0_129 = arith.constant 0 : index
    %c0_130 = arith.constant 0 : index
    %c0_131 = arith.constant 0 : index
    %209 = vector.load %arg18[%c0_129, %c0_130, %c0_131] : memref<1x8x32xf32, #tpu.memory_space<vmem>>, vector<1x8x32xf32>
    %210 = vector.shape_cast %209 : vector<1x8x32xf32> to vector<8x32xf32>
    %211 = vector.shape_cast %208 : vector<8x32xf32> to vector<1x8x32xf32>
    tpu.vector_store %arg18[%c0_129, %c0_130, %c0_131], %211 {strides = array<i32>} : memref<1x8x32xf32, #tpu.memory_space<vmem>>, vector<1x8x32xf32>,
    return
  }
  func.func @transform_0(%arg0: i32) -> (i32, i32, i32) {
    %c0_i32 = arith.constant 0 : i32
    %c0_i32_0 = arith.constant 0 : i32
    %c0_i32_1 = arith.constant 0 : i32
    return %arg0, %c0_i32, %c0_i32_0 : i32, i32, i32
  }
  func.func @transform_1(%arg0: i32) -> (i32, i32, i32) {
    %c0_i32 = arith.constant 0 : i32
    %c0_i32_0 = arith.constant 0 : i32
    %c0_i32_1 = arith.constant 0 : i32
    return %arg0, %c0_i32, %c0_i32_0 : i32, i32, i32
  }
  func.func @transform_2(%arg0: i32) -> (i32, i32, i32) {
    %c0_i32 = arith.constant 0 : i32
    %c0_i32_0 = arith.constant 0 : i32
    %c0_i32_1 = arith.constant 0 : i32
    return %arg0, %c0_i32, %c0_i32_0 : i32, i32, i32
  }
  func.func @transform_3(%arg0: i32) -> (i32, i32, i32) {
    %c0_i32 = arith.constant 0 : i32
    %c0_i32_0 = arith.constant 0 : i32
    %c0_i32_1 = arith.constant 0 : i32
    return %arg0, %c0_i32, %c0_i32_0 : i32, i32, i32
  }
  func.func @transform_4(%arg0: i32) -> (i32, i32, i32) {
    %c0_i32 = arith.constant 0 : i32
    %c0_i32_0 = arith.constant 0 : i32
    %c0_i32_1 = arith.constant 0 : i32
    %c0_i32_2 = arith.constant 0 : i32
    return %c0_i32, %c0_i32_0, %c0_i32_1 : i32, i32, i32
  }
  func.func @transform_5(%arg0: i32) -> (i32, i32, i32) {
    %c0_i32 = arith.constant 0 : i32
    %c0_i32_0 = arith.constant 0 : i32
    %c0_i32_1 = arith.constant 0 : i32
    %c0_i32_2 = arith.constant 0 : i32
    return %c0_i32, %c0_i32_0, %c0_i32_1 : i32, i32, i32
  }
  func.func @transform_6(%arg0: i32) -> (i32, i32, i32) {
    %c0_i32 = arith.constant 0 : i32
    %c0_i32_0 = arith.constant 0 : i32
    %c0_i32_1 = arith.constant 0 : i32
    %c0_i32_2 = arith.constant 0 : i32
    return %c0_i32, %c0_i32_0, %c0_i32_1 : i32, i32, i32
  }
  func.func @transform_7(%arg0: i32) -> (i32, i32, i32) {
    %c0_i32 = arith.constant 0 : i32
    %c0_i32_0 = arith.constant 0 : i32
    %c0_i32_1 = arith.constant 0 : i32
    %c0_i32_2 = arith.constant 0 : i32
    return %c0_i32, %c0_i32_0, %c0_i32_1 : i32, i32, i32
  }
  func.func @transform_8(%arg0: i32) -> (i32, i32, i32) {
    %c0_i32 = arith.constant 0 : i32
    %c0_i32_0 = arith.constant 0 : i32
    %c0_i32_1 = arith.constant 0 : i32
    %c0_i32_2 = arith.constant 0 : i32
    return %c0_i32, %c0_i32_0, %c0_i32_1 : i32, i32, i32
  }
  func.func @transform_9(%arg0: i32) -> (i32, i32, i32) {
    %c0_i32 = arith.constant 0 : i32
    %c0_i32_0 = arith.constant 0 : i32
    %c0_i32_1 = arith.constant 0 : i32
    %c0_i32_2 = arith.constant 0 : i32
    return %c0_i32, %c0_i32_0, %c0_i32_1 : i32, i32, i32
  }
  func.func @transform_10(%arg0: i32) -> (i32, i32) {
    %c0_i32 = arith.constant 0 : i32
    %c0_i32_0 = arith.constant 0 : i32
    %c0_i32_1 = arith.constant 0 : i32
    return %c0_i32, %c0_i32_0 : i32, i32
  }
  func.func @transform_11(%arg0: i32) -> (i32, i32) {
    %c0_i32 = arith.constant 0 : i32
    %c0_i32_0 = arith.constant 0 : i32
    %c0_i32_1 = arith.constant 0 : i32
    return %c0_i32, %c0_i32_0 : i32, i32
  }
  func.func @transform_12(%arg0: i32) -> (i32, i32) {
    %c0_i32 = arith.constant 0 : i32
    %c0_i32_0 = arith.constant 0 : i32
    %c0_i32_1 = arith.constant 0 : i32
    return %c0_i32, %c0_i32_0 : i32, i32
  }
  func.func @transform_13(%arg0: i32) -> (i32, i32) {
    %c0_i32 = arith.constant 0 : i32
    %c0_i32_0 = arith.constant 0 : i32
    %c0_i32_1 = arith.constant 0 : i32
    return %c0_i32, %c0_i32_0 : i32, i32
  }
  func.func @transform_14(%arg0: i32) -> (i32, i32) {
    %c0_i32 = arith.constant 0 : i32
    %c0_i32_0 = arith.constant 0 : i32
    %c0_i32_1 = arith.constant 0 : i32
    return %c0_i32, %c0_i32_0 : i32, i32
  }
  func.func @transform_15(%arg0: i32) -> (i32, i32) {
    %c0_i32 = arith.constant 0 : i32
    %c0_i32_0 = arith.constant 0 : i32
    %c0_i32_1 = arith.constant 0 : i32
    return %c0_i32, %c0_i32_0 : i32, i32
  }
  func.func @transform_16(%arg0: i32) -> (i32, i32, i32) {
    %c0_i32 = arith.constant 0 : i32
    %c0_i32_0 = arith.constant 0 : i32
    %c0_i32_1 = arith.constant 0 : i32
    return %arg0, %c0_i32, %c0_i32_0 : i32, i32, i32
  }
  func.func @transform_17(%arg0: i32) -> (i32, i32, i32) {
    %c0_i32 = arith.constant 0 : i32
    %c0_i32_0 = arith.constant 0 : i32
    %c0_i32_1 = arith.constant 0 : i32
    return %arg0, %c0_i32, %c0_i32_0 : i32, i32, i32
  }
}

module attributes {stable_mosaic.version = 11 : i64} {
  func.func @_heads_kernel(%arg0: memref<32x32xf32, #tpu.memory_space<vmem>>, %arg1: memref<32x96xf32, #tpu.memory_space<vmem>>, %arg2: memref<96x96xf32, #tpu.memory_space<vmem>>, %arg3: memref<96x128xf32, #tpu.memory_space<vmem>>, %arg4: memref<1x128xf32, #tpu.memory_space<vmem>>, %arg5: memref<32x128xf32, #tpu.memory_space<vmem>>) attributes {dimension_semantics = [], scalar_prefetch = 0 : i64, scratch_operands = 0 : i64, tpu.core_type = #tpu.core_type<tc>} {
    %c0 = arith.constant 0 : index
    %c0_0 = arith.constant 0 : index
    %0 = vector.load %arg0[%c0, %c0_0] : memref<32x32xf32, #tpu.memory_space<vmem>>, vector<32x32xf32>
    %c0_1 = arith.constant 0 : index
    %c0_2 = arith.constant 0 : index
    %1 = vector.load %arg1[%c0_1, %c0_2] : memref<32x96xf32, #tpu.memory_space<vmem>>, vector<32x96xf32>
    %cst = arith.constant dense<0.000000e+00> : vector<32x96xf32>
    %2 = tpu.matmul %0, %1, %cst {dimension_numbers = #tpu.dot_dimension_numbers<[1], [0], [0], [1], [0, 0, 1, 1], [], []>} : vector<32x32xf32>, vector<32x96xf32>, vector<32x96xf32> -> vector<32x96xf32>
    %cst_3 = arith.constant 0.000000e+00 : f32
    %3 = vector.broadcast %cst_3 : f32 to vector<32x96xf32>
    %4 = arith.maximumf %2, %3 : vector<32x96xf32>
    %c0_4 = arith.constant 0 : index
    %c0_5 = arith.constant 0 : index
    %5 = vector.load %arg2[%c0_4, %c0_5] : memref<96x96xf32, #tpu.memory_space<vmem>>, vector<96x96xf32>
    %cst_6 = arith.constant dense<0.000000e+00> : vector<32x96xf32>
    %6 = tpu.matmul %4, %5, %cst_6 {dimension_numbers = #tpu.dot_dimension_numbers<[1], [0], [0], [1], [0, 0, 1, 1], [], []>} : vector<32x96xf32>, vector<96x96xf32>, vector<32x96xf32> -> vector<32x96xf32>
    %cst_7 = arith.constant 0.000000e+00 : f32
    %7 = vector.broadcast %cst_7 : f32 to vector<32x96xf32>
    %8 = arith.maximumf %6, %7 : vector<32x96xf32>
    %c0_8 = arith.constant 0 : index
    %c0_9 = arith.constant 0 : index
    %9 = vector.load %arg3[%c0_8, %c0_9] : memref<96x128xf32, #tpu.memory_space<vmem>>, vector<96x128xf32>
    %cst_10 = arith.constant dense<0.000000e+00> : vector<32x128xf32>
    %10 = tpu.matmul %8, %9, %cst_10 {dimension_numbers = #tpu.dot_dimension_numbers<[1], [0], [0], [1], [0, 0, 1, 1], [], []>} : vector<32x96xf32>, vector<96x128xf32>, vector<32x128xf32> -> vector<32x128xf32>
    %c0_11 = arith.constant 0 : index
    %c0_12 = arith.constant 0 : index
    %11 = vector.load %arg4[%c0_11, %c0_12] : memref<1x128xf32, #tpu.memory_space<vmem>>, vector<1x128xf32>
    %12 = vector.broadcast %11 : vector<1x128xf32> to vector<32x128xf32>
    %13 = arith.addf %10, %12 : vector<32x128xf32>
    %c0_13 = arith.constant 0 : index
    %c0_14 = arith.constant 0 : index
    %14 = vector.load %arg5[%c0_13, %c0_14] : memref<32x128xf32, #tpu.memory_space<vmem>>, vector<32x128xf32>
    tpu.vector_store %arg5[%c0_13, %c0_14], %13 {strides = array<i32>} : memref<32x128xf32, #tpu.memory_space<vmem>>, vector<32x128xf32>,
    return
  }
}

</mosaic_0001>

<llo_original>
// kernel: _lambda_.8
$region0: #{_lambda_.8}
  #allocation0 [shape = 'u32[]', space=smem, size = 0x4, offset = 0x4, fixed_abs, tag = 'smem constant byte address 0x4 - core index']
  #allocation1 [shape = 'u32[144,128]{1,0:T(1,128)}', space=vmem, size = 0x12000, scoped, tag = 'internal scratch']
  %s0 = inlined_call_operand.vmem [shape: f32[32,3], index: 0, kind: input, shape index: {}]
  %s1 = inlined_call_operand.vmem [shape: f32[3,32], index: 1, kind: input, shape index: {}]
  %s2 = inlined_call_operand.vmem [shape: f32[1,32], index: 2, kind: input, shape index: {}, may-alias: {2,4}]
  %s3 = inlined_call_operand.vmem [shape: f32[32,32], index: 3, kind: input, shape index: {}]
  %s4 = inlined_call_operand.vmem [shape: f32[1,32], index: 4, kind: input, shape index: {}, may-alias: {2,4}]
  %s5 = inlined_call_operand.vmem [shape: f32[32,32], index: 5, kind: output, shape index: {}]
  %s6 = sld [smem:[#allocation0]]
  $region30: #{_lambda_.8} parent=0
    _
  %s8 = ssub.s32 1, %s6
  %s9 = scalar_select 0, %s8, %s6
  // Predicated region
  $region2: #{_lambda_.8} parent=0 // pred_check
    _
  $region3: #{_lambda_.8} parent=0 // pred_check_branch
    %11 = sbr.rel (0) target = $region5
  $region4: #{_lambda_.8} parent=0 // pred_region
    _
  $region5: #{_lambda_.8} parent=0 // pred_fallthru
    _
  // Predicated region
  $region6: #{_lambda_.8} parent=0 // pred_check
    _
  $region7: #{_lambda_.8} parent=0 // pred_check_branch
    %13 = sbr.rel (0) target = $region9
  $region8: #{_lambda_.8} parent=0 // pred_region
    _
  $region9: #{_lambda_.8} parent=0 // pred_fallthru
    _
  // Predicated region
  $region10: #{_lambda_.8} parent=0 // pred_check
    _
  $region11: #{_lambda_.8} parent=0 // pred_check_branch
    %15 = sbr.rel (0) target = $region13
  $region12: #{_lambda_.8} parent=0 // pred_region
    _
  $region13: #{_lambda_.8} parent=0 // pred_fallthru
    _
  // Predicated region
  $region14: #{_lambda_.8} parent=0 // pred_check
    _
  $region15: #{_lambda_.8} parent=0 // pred_check_branch
    %17 = sbr.rel (0) target = $region17
  $region16: #{_lambda_.8} parent=0 // pred_region
    _
  $region17: #{_lambda_.8} parent=0 // pred_fallthru
    _
  // Predicated region
  $region18: #{_lambda_.8} parent=0 // pred_check
    _
  $region19: #{_lambda_.8} parent=0 // pred_check_branch
    %19 = sbr.rel (0) target = $region21
  $region20: #{_lambda_.8} parent=0 // pred_region
    _
  $region21: #{_lambda_.8} parent=0 // pred_fallthru
    _
  %v20 = vld [vmem:[%s0] sm:$0xff]
  %v21 = vld [vmem:[%s0 + $0x8] sm:$0xff]
  %v22 = vld [vmem:[%s0 + $0x10] sm:$0xff]
  %v23 = vld [vmem:[%s0 + $0x18] sm:$0xff]
  %v24 = vld [vmem:[%s1] sm:$0x7]
  %v25 = vld [vmem:[%s2] sm:$0x1]
  %v27 = vlaneseq
  %v28 = vshrl.u32 %v27, 7
  %v29 = vsub.s32 0, %v28
  %v30 = vrot.slane %v25, %v29
  %vm32 = vcmask 23552
  %v34 = vsel %vm32, %v20, 0
  %v37 = vsel %vm32, %v21, 0
  %v40 = vsel %vm32, %v22, 0
  %v43 = vsel %vm32, %v23, 0
  %vm45 = vcmask 1042432
  %v47 = vsel %vm45, %v24, 0
  %49 = vmatprep.subr.mxu0 0.0
  %50 = vmatpush1.msra.mxu0 %v47
  %51 = vmatprep.subr.mxu0 0.0
  %52 = vmatpush1.msra.mxu0 0.0
  %53 = vmatprep.subr.mxu0 0.0
  %54 = vmatpush1.msra.mxu0 0.0
  %55 = vmatprep.subr.mxu0 0.0
  %56 = vmatpush1.msra.mxu0 0.0
  %57 = vmatprep.subr.mxu0 0.0
  %58 = vmatpush1.msra.mxu0 0.0
  %59 = vmatprep.subr.mxu0 0.0
  %60 = vmatpush1.msra.mxu0 0.0
  %61 = vmatprep.subr.mxu0 0.0
  %62 = vmatpush1.msra.mxu0 0.0
  %63 = vmatprep.subr.mxu0 0.0
  %64 = vmatpush1.msra.mxu0 0.0
  %65 = vmatprep.subr.mxu0 0.0
  %66 = vmatpush1.msra.mxu0 0.0
  %67 = vmatprep.subr.mxu0 0.0
  %68 = vmatpush1.msra.mxu0 0.0
  %69 = vmatprep.subr.mxu0 0.0
  %70 = vmatpush1.msra.mxu0 0.0
  %71 = vmatprep.subr.mxu0 0.0
  %72 = vmatpush1.msra.mxu0 0.0
  %73 = vmatprep.subr.mxu0 0.0
  %74 = vmatpush1.msra.mxu0 0.0
  %75 = vmatprep.subr.mxu0 0.0
  %76 = vmatpush1.msra.mxu0 0.0
  %77 = vmatprep.subr.mxu0 0.0
  %78 = vmatpush1.msra.mxu0 0.0
  %79 = vmatprep.subr.mxu0 0.0
  %80 = vmatpush1.msra.mxu0 0.0
  %81 = vmatprep.subr.mxu0 0.0
  %82 = vmatpush1.msra.mxu0 0.0
  %83 = vmatprep.subr.mxu0 0.0
  %84 = vmatpush1.msra.mxu0 0.0
  %85 = vmatprep.subr.mxu0 0.0
  %86 = vmatpush1.msra.mxu0 0.0
  %87 = vmatprep.subr.mxu0 0.0
  %88 = vmatpush1.msra.mxu0 0.0
  %89 = vmatprep.subr.mxu0 0.0
  %90 = vmatpush1.msra.mxu0 0.0
  %91 = vmatprep.subr.mxu0 0.0
  %92 = vmatpush1.msra.mxu0 0.0
  %93 = vmatprep.subr.mxu0 0.0
  %94 = vmatpush1.msra.mxu0 0.0
  %95 = vmatprep.subr.mxu0 0.0
  %96 = vmatpush1.msra.mxu0 0.0
  %97 = vmatprep.subr.mxu0 0.0
  %98 = vmatpush1.msra.mxu0 0.0
  %99 = vmatprep.subr.mxu0 0.0
  %100 = vmatpush1.msra.mxu0 0.0
  %101 = vmatprep.subr.mxu0 0.0
  %102 = vmatpush1.msra.mxu0 0.0
  %103 = vmatprep.subr.mxu0 0.0
  %104 = vmatpush1.msra.mxu0 0.0
  %105 = vmatprep.subr.mxu0 0.0
  %106 = vmatpush1.msra.mxu0 0.0
  %107 = vmatprep.subr.mxu0 0.0
  %108 = vmatpush1.msra.mxu0 0.0
  %109 = vmatprep.subr.mxu0 0.0
  %110 = vmatpush1.msra.mxu0 0.0
  %111 = vmatprep.subr.mxu0 0.0
  %112 = vmatpush1.msra.mxu0 0.0
  %113 = vmatprep.mubr.f32.mxu0 0.0
  %114 = vmatmul.mubr.f32.gmra.mrb[0].mxu0 %v34
  %v115 = vpop.f32.mrb[0].mxu0
  %v116 = vadd.f32 %v30, %v115
  %v117 = vpop.f32.mrb[0].mxu0
  %118 = vmatprep.mubr.f32.mxu0 0.0
  %119 = vmatmul.mubr.f32.gmra.mrb[0].mxu0 %v37
  %v120 = vpop.f32.mrb[0].mxu0
  %v121 = vadd.f32 %v30, %v120
  %v122 = vpop.f32.mrb[0].mxu0
  %123 = vmatprep.mubr.f32.mxu0 0.0
  %124 = vmatmul.mubr.f32.gmra.mrb[0].mxu0 %v40
  %v125 = vpop.f32.mrb[0].mxu0
  %v126 = vadd.f32 %v30, %v125
  %v127 = vpop.f32.mrb[0].mxu0
  %128 = vmatprep.mubr.f32.mxu0 0.0
  %129 = vmatmul.mubr.f32.gmra.mrb[0].mxu0 %v43
  %v130 = vpop.f32.mrb[0].mxu0
  %v131 = vadd.f32 %v30, %v130
  %v132 = vpop.f32.mrb[0].mxu0
  %133 = vdwg.mxu0
  %v134 = vmax.f32 %v116, 0.0
  %v135 = vmax.f32 %v121, 0.0
  %v136 = vmax.f32 %v126, 0.0
  %v137 = vmax.f32 %v131, 0.0
  %v138 = vld [vmem:[%s3] sm:$0xff]
  %v139 = vld [vmem:[%s3 + $0x8] sm:$0xff]
  %v140 = vld [vmem:[%s3 + $0x10] sm:$0xff]
  %v141 = vld [vmem:[%s3 + $0x18] sm:$0xff]
  %v142 = vld [vmem:[%s4] sm:$0x1]
  %v144 = vlaneseq
  %v145 = vshrl.u32 %v144, 7
  %v146 = vsub.s32 0, %v145
  %v147 = vrot.slane %v142, %v146
  %vm149 = vcmask 261120
  %v151 = vsel %vm149, %v134, 0
  %v154 = vsel %vm149, %v135, 0
  %v157 = vsel %vm149, %v136, 0
  %v160 = vsel %vm149, %v137, 0
  %162 = vmatprep.subr.mxu0 0.0
  %163 = vmatpush1.msra.mxu0 %v138
  %164 = vmatprep.subr.mxu0 0.0
  %165 = vmatpush1.msra.mxu0 %v139
  %166 = vmatprep.subr.mxu0 0.0
  %167 = vmatpush1.msra.mxu0 %v140
  %168 = vmatprep.subr.mxu0 0.0
  %169 = vmatpush1.msra.mxu0 %v141
  %170 = vmatprep.subr.mxu0 0.0
  %171 = vmatpush1.msra.mxu0 0.0
  %172 = vmatprep.subr.mxu0 0.0
  %173 = vmatpush1.msra.mxu0 0.0
  %174 = vmatprep.subr.mxu0 0.0
  %175 = vmatpush1.msra.mxu0 0.0
  %176 = vmatprep.subr.mxu0 0.0
  %177 = vmatpush1.msra.mxu0 0.0
  %178 = vmatprep.subr.mxu0 0.0
  %179 = vmatpush1.msra.mxu0 0.0
  %180 = vmatprep.subr.mxu0 0.0
  %181 = vmatpush1.msra.mxu0 0.0
  %182 = vmatprep.subr.mxu0 0.0
  %183 = vmatpush1.msra.mxu0 0.0
  %184 = vmatprep.subr.mxu0 0.0
  %185 = vmatpush1.msra.mxu0 0.0
  %186 = vmatprep.subr.mxu0 0.0
  %187 = vmatpush1.msra.mxu0 0.0
  %188 = vmatprep.subr.mxu0 0.0
  %189 = vmatpush1.msra.mxu0 0.0
  %190 = vmatprep.subr.mxu0 0.0
  %191 = vmatpush1.msra.mxu0 0.0
  %192 = vmatprep.subr.mxu0 0.0
  %193 = vmatpush1.msra.mxu0 0.0
  %194 = vmatprep.subr.mxu0 0.0
  %195 = vmatpush1.msra.mxu0 0.0
  %196 = vmatprep.subr.mxu0 0.0
  %197 = vmatpush1.msra.mxu0 0.0
  %198 = vmatprep.subr.mxu0 0.0
  %199 = vmatpush1.msra.mxu0 0.0
  %200 = vmatprep.subr.mxu0 0.0
  %201 = vmatpush1.msra.mxu0 0.0
  %202 = vmatprep.subr.mxu0 0.0
  %203 = vmatpush1.msra.mxu0 0.0
  %204 = vmatprep.subr.mxu0 0.0
  %205 = vmatpush1.msra.mxu0 0.0
  %206 = vmatprep.subr.mxu0 0.0
  %207 = vmatpush1.msra.mxu0 0.0
  %208 = vmatprep.subr.mxu0 0.0
  %209 = vmatpush1.msra.mxu0 0.0
  %210 = vmatprep.subr.mxu0 0.0
  %211 = vmatpush1.msra.mxu0 0.0
  %212 = vmatprep.subr.mxu0 0.0
  %213 = vmatpush1.msra.mxu0 0.0
  %214 = vmatprep.subr.mxu0 0.0
  %215 = vmatpush1.msra.mxu0 0.0
  %216 = vmatprep.subr.mxu0 0.0
  %217 = vmatpush1.msra.mxu0 0.0
  %218 = vmatprep.subr.mxu0 0.0
  %219 = vmatpush1.msra.mxu0 0.0
  %220 = vmatprep.subr.mxu0 0.0
  %221 = vmatpush1.msra.mxu0 0.0
  %222 = vmatprep.subr.mxu0 0.0
  %223 = vmatpush1.msra.mxu0 0.0
  %224 = vmatprep.subr.mxu0 0.0
  %225 = vmatpush1.msra.mxu0 0.0
  %226 = vmatprep.mubr.f32.mxu0 0.0
  %227 = vmatmul.mubr.f32.gmra.mrb[0].mxu0 %v151
  %v228 = vpop.f32.mrb[0].mxu0
  %v229 = vadd.f32 %v147, %v228
  %v230 = vpop.f32.mrb[0].mxu0
  %231 = vmatprep.mubr.f32.mxu0 0.0
  %232 = vmatmul.mubr.f32.gmra.mrb[0].mxu0 %v154
  %v233 = vpop.f32.mrb[0].mxu0
  %v234 = vadd.f32 %v147, %v233
  %v235 = vpop.f32.mrb[0].mxu0
  %236 = vmatprep.mubr.f32.mxu0 0.0
  %237 = vmatmul.mubr.f32.gmra.mrb[0].mxu0 %v157
  %v238 = vpop.f32.mrb[0].mxu0
  %v239 = vadd.f32 %v147, %v238
  %v240 = vpop.f32.mrb[0].mxu0
  %241 = vmatprep.mubr.f32.mxu0 0.0
  %242 = vmatmul.mubr.f32.gmra.mrb[0].mxu0 %v160
  %v243 = vpop.f32.mrb[0].mxu0
  %v244 = vadd.f32 %v147, %v243
  %v245 = vpop.f32.mrb[0].mxu0
  %246 = vdwg.mxu0
  %v247 = vmax.f32 %v229, 0.0
  %v248 = vmax.f32 %v234, 0.0
  %v249 = vmax.f32 %v239, 0.0
  %v250 = vmax.f32 %v244, 0.0
  %251 = vst.msk [vmem:[%s5] sm:$0xff] %vm149, %v247
  %252 = vst.msk [vmem:[%s5 + $0x8] sm:$0xff] %vm149, %v248
  %253 = vst.msk [vmem:[%s5 + $0x10] sm:$0xff] %vm149, %v249
  %254 = vst.msk [vmem:[%s5 + $0x18] sm:$0xff] %vm149, %v250
  // Predicated region
  $region22: #{_lambda_.8} parent=0 // pred_check
    _
  $region23: #{_lambda_.8} parent=0 // pred_check_branch
    %256 = sbr.rel (0) target = $region25
  $region24: #{_lambda_.8} parent=0 // pred_region
    _
  $region25: #{_lambda_.8} parent=0 // pred_fallthru
    _
  // Predicated region
  $region26: #{_lambda_.8} parent=0 // pred_check
    _
  $region27: #{_lambda_.8} parent=0 // pred_check_branch
    %258 = sbr.rel (0) target = $region29
  $region28: #{_lambda_.8} parent=0 // pred_region
    _
  $region29: #{_lambda_.8} parent=0 // pred_fallthru
    _

// kernel: _lambda_.10
$region0: #{_lambda_.10}
  #allocation0 [shape = 'u32[]', space=smem, size = 0x4, offset = 0x4, fixed_abs, tag = 'smem constant byte address 0x4 - core index']
  #allocation1 [shape = 'u32[144,128]{1,0:T(1,128)}', space=vmem, size = 0x12000, scoped, tag = 'internal scratch']
  %s0 = inlined_call_operand.vmem [shape: f32[32,32], index: 0, kind: input, shape index: {}]
  %s1 = inlined_call_operand.vmem [shape: f32[32,32], index: 1, kind: input, shape index: {}]
  %s2 = inlined_call_operand.vmem [shape: f32[1,32], index: 2, kind: input, shape index: {}, may-alias: {2,4,6}]
  %s3 = inlined_call_operand.vmem [shape: f32[32,32], index: 3, kind: input, shape index: {}]
  %s4 = inlined_call_operand.vmem [shape: f32[1,32], index: 4, kind: input, shape index: {}, may-alias: {2,4,6}]
  %s5 = inlined_call_operand.vmem [shape: f32[32,32], index: 5, kind: input, shape index: {}]
  %s6 = inlined_call_operand.vmem [shape: f32[1,32], index: 6, kind: input, shape index: {}, may-alias: {2,4,6}]
  %s7 = inlined_call_operand.vmem [shape: f32[32,32], index: 7, kind: output, shape index: {}]
  %s8 = sld [smem:[#allocation0]]
  $region38: #{_lambda_.10} parent=0
    _
  %s10 = ssub.s32 1, %s8
  %s11 = scalar_select 0, %s10, %s8
  // Predicated region
  $region2: #{_lambda_.10} parent=0 // pred_check
    _
  $region3: #{_lambda_.10} parent=0 // pred_check_branch
    %13 = sbr.rel (0) target = $region5
  $region4: #{_lambda_.10} parent=0 // pred_region
    _
  $region5: #{_lambda_.10} parent=0 // pred_fallthru
    _
  // Predicated region
  $region6: #{_lambda_.10} parent=0 // pred_check
    _
  $region7: #{_lambda_.10} parent=0 // pred_check_branch
    %15 = sbr.rel (0) target = $region9
  $region8: #{_lambda_.10} parent=0 // pred_region
    _
  $region9: #{_lambda_.10} parent=0 // pred_fallthru
    _
  // Predicated region
  $region10: #{_lambda_.10} parent=0 // pred_check
    _
  $region11: #{_lambda_.10} parent=0 // pred_check_branch
    %17 = sbr.rel (0) target = $region13
  $region12: #{_lambda_.10} parent=0 // pred_region
    _
  $region13: #{_lambda_.10} parent=0 // pred_fallthru
    _
  // Predicated region
  $region14: #{_lambda_.10} parent=0 // pred_check
    _
  $region15: #{_lambda_.10} parent=0 // pred_check_branch
    %19 = sbr.rel (0) target = $region17
  $region16: #{_lambda_.10} parent=0 // pred_region
    _
  $region17: #{_lambda_.10} parent=0 // pred_fallthru
    _
  // Predicated region
  $region18: #{_lambda_.10} parent=0 // pred_check
    _
  $region19: #{_lambda_.10} parent=0 // pred_check_branch
    %21 = sbr.rel (0) target = $region21
  $region20: #{_lambda_.10} parent=0 // pred_region
    _
  $region21: #{_lambda_.10} parent=0 // pred_fallthru
    _
  // Predicated region
  $region22: #{_lambda_.10} parent=0 // pred_check
    _
  $region23: #{_lambda_.10} parent=0 // pred_check_branch
    %23 = sbr.rel (0) target = $region25
  $region24: #{_lambda_.10} parent=0 // pred_region
    _
  $region25: #{_lambda_.10} parent=0 // pred_fallthru
    _
  // Predicated region
  $region26: #{_lambda_.10} parent=0 // pred_check
    _
  $region27: #{_lambda_.10} parent=0 // pred_check_branch
    %25 = sbr.rel (0) target = $region29
  $region28: #{_lambda_.10} parent=0 // pred_region
    _
  $region29: #{_lambda_.10} parent=0 // pred_fallthru
    _
  %v26 = vld [vmem:[%s0] sm:$0xff]
  %v27 = vld [vmem:[%s0 + $0x8] sm:$0xff]
  %v28 = vld [vmem:[%s0 + $0x10] sm:$0xff]
  %v29 = vld [vmem:[%s0 + $0x18] sm:$0xff]
  %v30 = vld [vmem:[%s1] sm:$0xff]
  %v31 = vld [vmem:[%s1 + $0x8] sm:$0xff]
  %v32 = vld [vmem:[%s1 + $0x10] sm:$0xff]
  %v33 = vld [vmem:[%s1 + $0x18] sm:$0xff]
  %v34 = vld [vmem:[%s2] sm:$0x1]
  %v36 = vlaneseq
  %v37 = vshrl.u32 %v36, 7
  %v38 = vsub.s32 0, %v37
  %v39 = vrot.slane %v34, %v38
  %vm41 = vcmask 261120
  %v43 = vsel %vm41, %v26, 0
  %v46 = vsel %vm41, %v27, 0
  %v49 = vsel %vm41, %v28, 0
  %v52 = vsel %vm41, %v29, 0
  %54 = vmatprep.subr.mxu0 0.0
  %55 = vmatpush1.msra.mxu0 %v30
  %56 = vmatprep.subr.mxu0 0.0
  %57 = vmatpush1.msra.mxu0 %v31
  %58 = vmatprep.subr.mxu0 0.0
  %59 = vmatpush1.msra.mxu0 %v32
  %60 = vmatprep.subr.mxu0 0.0
  %61 = vmatpush1.msra.mxu0 %v33
  %62 = vmatprep.subr.mxu0 0.0
  %63 = vmatpush1.msra.mxu0 0.0
  %64 = vmatprep.subr.mxu0 0.0
  %65 = vmatpush1.msra.mxu0 0.0
  %66 = vmatprep.subr.mxu0 0.0
  %67 = vmatpush1.msra.mxu0 0.0
  %68 = vmatprep.subr.mxu0 0.0
  %69 = vmatpush1.msra.mxu0 0.0
  %70 = vmatprep.subr.mxu0 0.0
  %71 = vmatpush1.msra.mxu0 0.0
  %72 = vmatprep.subr.mxu0 0.0
  %73 = vmatpush1.msra.mxu0 0.0
  %74 = vmatprep.subr.mxu0 0.0
  %75 = vmatpush1.msra.mxu0 0.0
  %76 = vmatprep.subr.mxu0 0.0
  %77 = vmatpush1.msra.mxu0 0.0
  %78 = vmatprep.subr.mxu0 0.0
  %79 = vmatpush1.msra.mxu0 0.0
  %80 = vmatprep.subr.mxu0 0.0
  %81 = vmatpush1.msra.mxu0 0.0
  %82 = vmatprep.subr.mxu0 0.0
  %83 = vmatpush1.msra.mxu0 0.0
  %84 = vmatprep.subr.mxu0 0.0
  %85 = vmatpush1.msra.mxu0 0.0
  %86 = vmatprep.subr.mxu0 0.0
  %87 = vmatpush1.msra.mxu0 0.0
  %88 = vmatprep.subr.mxu0 0.0
  %89 = vmatpush1.msra.mxu0 0.0
  %90 = vmatprep.subr.mxu0 0.0
  %91 = vmatpush1.msra.mxu0 0.0
  %92 = vmatprep.subr.mxu0 0.0
  %93 = vmatpush1.msra.mxu0 0.0
  %94 = vmatprep.subr.mxu0 0.0
  %95 = vmatpush1.msra.mxu0 0.0
  %96 = vmatprep.subr.mxu0 0.0
  %97 = vmatpush1.msra.mxu0 0.0
  %98 = vmatprep.subr.mxu0 0.0
  %99 = vmatpush1.msra.mxu0 0.0
  %100 = vmatprep.subr.mxu0 0.0
  %101 = vmatpush1.msra.mxu0 0.0
  %102 = vmatprep.subr.mxu0 0.0
  %103 = vmatpush1.msra.mxu0 0.0
  %104 = vmatprep.subr.mxu0 0.0
  %105 = vmatpush1.msra.mxu0 0.0
  %106 = vmatprep.subr.mxu0 0.0
  %107 = vmatpush1.msra.mxu0 0.0
  %108 = vmatprep.subr.mxu0 0.0
  %109 = vmatpush1.msra.mxu0 0.0
  %110 = vmatprep.subr.mxu0 0.0
  %111 = vmatpush1.msra.mxu0 0.0
  %112 = vmatprep.subr.mxu0 0.0
  %113 = vmatpush1.msra.mxu0 0.0
  %114 = vmatprep.subr.mxu0 0.0
  %115 = vmatpush1.msra.mxu0 0.0
  %116 = vmatprep.subr.mxu0 0.0
  %117 = vmatpush1.msra.mxu0 0.0
  %118 = vmatprep.mubr.f32.mxu0 0.0
  %119 = vmatmul.mubr.f32.gmra.mrb[0].mxu0 %v43
  %v120 = vpop.f32.mrb[0].mxu0
  %v121 = vadd.f32 %v39, %v120
  %v122 = vpop.f32.mrb[0].mxu0
  %123 = vmatprep.mubr.f32.mxu0 0.0
  %124 = vmatmul.mubr.f32.gmra.mrb[0].mxu0 %v46
  %v125 = vpop.f32.mrb[0].mxu0
  %v126 = vadd.f32 %v39, %v125
  %v127 = vpop.f32.mrb[0].mxu0
  %128 = vmatprep.mubr.f32.mxu0 0.0
  %129 = vmatmul.mubr.f32.gmra.mrb[0].mxu0 %v49
  %v130 = vpop.f32.mrb[0].mxu0
  %v131 = vadd.f32 %v39, %v130
  %v132 = vpop.f32.mrb[0].mxu0
  %133 = vmatprep.mubr.f32.mxu0 0.0
  %134 = vmatmul.mubr.f32.gmra.mrb[0].mxu0 %v52
  %v135 = vpop.f32.mrb[0].mxu0
  %v136 = vadd.f32 %v39, %v135
  %v137 = vpop.f32.mrb[0].mxu0
  %138 = vdwg.mxu0
  %v139 = vmax.f32 %v121, 0.0
  %v140 = vmax.f32 %v126, 0.0
  %v141 = vmax.f32 %v131, 0.0
  %v142 = vmax.f32 %v136, 0.0
  %v143 = vld [vmem:[%s3] sm:$0xff]
  %v144 = vld [vmem:[%s3 + $0x8] sm:$0xff]
  %v145 = vld [vmem:[%s3 + $0x10] sm:$0xff]
  %v146 = vld [vmem:[%s3 + $0x18] sm:$0xff]
  %v147 = vld [vmem:[%s4] sm:$0x1]
  %v149 = vlaneseq
  %v150 = vshrl.u32 %v149, 7
  %v151 = vsub.s32 0, %v150
  %v152 = vrot.slane %v147, %v151
  %v155 = vsel %vm41, %v139, 0
  %v158 = vsel %vm41, %v140, 0
  %v161 = vsel %vm41, %v141, 0
  %v164 = vsel %vm41, %v142, 0
  %166 = vmatprep.subr.mxu0 0.0
  %167 = vmatpush1.msra.mxu0 %v143
  %168 = vmatprep.subr.mxu0 0.0
  %169 = vmatpush1.msra.mxu0 %v144
  %170 = vmatprep.subr.mxu0 0.0
  %171 = vmatpush1.msra.mxu0 %v145
  %172 = vmatprep.subr.mxu0 0.0
  %173 = vmatpush1.msra.mxu0 %v146
  %174 = vmatprep.subr.mxu0 0.0
  %175 = vmatpush1.msra.mxu0 0.0
  %176 = vmatprep.subr.mxu0 0.0
  %177 = vmatpush1.msra.mxu0 0.0
  %178 = vmatprep.subr.mxu0 0.0
  %179 = vmatpush1.msra.mxu0 0.0
  %180 = vmatprep.subr.mxu0 0.0
  %181 = vmatpush1.msra.mxu0 0.0
  %182 = vmatprep.subr.mxu0 0.0
  %183 = vmatpush1.msra.mxu0 0.0
  %184 = vmatprep.subr.mxu0 0.0
  %185 = vmatpush1.msra.mxu0 0.0
  %186 = vmatprep.subr.mxu0 0.0
  %187 = vmatpush1.msra.mxu0 0.0
  %188 = vmatprep.subr.mxu0 0.0
  %189 = vmatpush1.msra.mxu0 0.0
  %190 = vmatprep.subr.mxu0 0.0
  %191 = vmatpush1.msra.mxu0 0.0
  %192 = vmatprep.subr.mxu0 0.0
  %193 = vmatpush1.msra.mxu0 0.0
  %194 = vmatprep.subr.mxu0 0.0
  %195 = vmatpush1.msra.mxu0 0.0
  %196 = vmatprep.subr.mxu0 0.0
  %197 = vmatpush1.msra.mxu0 0.0
  %198 = vmatprep.subr.mxu0 0.0
  %199 = vmatpush1.msra.mxu0 0.0
  %200 = vmatprep.subr.mxu0 0.0
  %201 = vmatpush1.msra.mxu0 0.0
  %202 = vmatprep.subr.mxu0 0.0
  %203 = vmatpush1.msra.mxu0 0.0
  %204 = vmatprep.subr.mxu0 0.0
  %205 = vmatpush1.msra.mxu0 0.0
  %206 = vmatprep.subr.mxu0 0.0
  %207 = vmatpush1.msra.mxu0 0.0
  %208 = vmatprep.subr.mxu0 0.0
  %209 = vmatpush1.msra.mxu0 0.0
  %210 = vmatprep.subr.mxu0 0.0
  %211 = vmatpush1.msra.mxu0 0.0
  %212 = vmatprep.subr.mxu0 0.0
  %213 = vmatpush1.msra.mxu0 0.0
  %214 = vmatprep.subr.mxu0 0.0
  %215 = vmatpush1.msra.mxu0 0.0
  %216 = vmatprep.subr.mxu0 0.0
  %217 = vmatpush1.msra.mxu0 0.0
  %218 = vmatprep.subr.mxu0 0.0
  %219 = vmatpush1.msra.mxu0 0.0
  %220 = vmatprep.subr.mxu0 0.0
  %221 = vmatpush1.msra.mxu0 0.0
  %222 = vmatprep.subr.mxu0 0.0
  %223 = vmatpush1.msra.mxu0 0.0
  %224 = vmatprep.subr.mxu0 0.0
  %225 = vmatpush1.msra.mxu0 0.0
  %226 = vmatprep.subr.mxu0 0.0
  %227 = vmatpush1.msra.mxu0 0.0
  %228 = vmatprep.subr.mxu0 0.0
  %229 = vmatpush1.msra.mxu0 0.0
  %230 = vmatprep.mubr.f32.mxu0 0.0
  %231 = vmatmul.mubr.f32.gmra.mrb[0].mxu0 %v155
  %v232 = vpop.f32.mrb[0].mxu0
  %v233 = vadd.f32 %v152, %v232
  %v234 = vpop.f32.mrb[0].mxu0
  %235 = vmatprep.mubr.f32.mxu0 0.0
  %236 = vmatmul.mubr.f32.gmra.mrb[0].mxu0 %v158
  %v237 = vpop.f32.mrb[0].mxu0
  %v238 = vadd.f32 %v152, %v237
  %v239 = vpop.f32.mrb[0].mxu0
  %240 = vmatprep.mubr.f32.mxu0 0.0
  %241 = vmatmul.mubr.f32.gmra.mrb[0].mxu0 %v161
  %v242 = vpop.f32.mrb[0].mxu0
  %v243 = vadd.f32 %v152, %v242
  %v244 = vpop.f32.mrb[0].mxu0
  %245 = vmatprep.mubr.f32.mxu0 0.0
  %246 = vmatmul.mubr.f32.gmra.mrb[0].mxu0 %v164
  %v247 = vpop.f32.mrb[0].mxu0
  %v248 = vadd.f32 %v152, %v247
  %v249 = vpop.f32.mrb[0].mxu0
  %250 = vdwg.mxu0
  %v251 = vmax.f32 %v233, 0.0
  %v252 = vmax.f32 %v238, 0.0
  %v253 = vmax.f32 %v243, 0.0
  %v254 = vmax.f32 %v248, 0.0
  %v255 = vld [vmem:[%s5] sm:$0xff]
  %v256 = vld [vmem:[%s5 + $0x8] sm:$0xff]
  %v257 = vld [vmem:[%s5 + $0x10] sm:$0xff]
  %v258 = vld [vmem:[%s5 + $0x18] sm:$0xff]
  %v259 = vld [vmem:[%s6] sm:$0x1]
  %v261 = vlaneseq
  %v262 = vshrl.u32 %v261, 7
  %v263 = vsub.s32 0, %v262
  %v264 = vrot.slane %v259, %v263
  %v267 = vsel %vm41, %v251, 0
  %v270 = vsel %vm41, %v252, 0
  %v273 = vsel %vm41, %v253, 0
  %v276 = vsel %vm41, %v254, 0
  %278 = vmatprep.subr.mxu0 0.0
  %279 = vmatpush1.msra.mxu0 %v255
  %280 = vmatprep.subr.mxu0 0.0
  %281 = vmatpush1.msra.mxu0 %v256
  %282 = vmatprep.subr.mxu0 0.0
  %283 = vmatpush1.msra.mxu0 %v257
  %284 = vmatprep.subr.mxu0 0.0
  %285 = vmatpush1.msra.mxu0 %v258
  %286 = vmatprep.subr.mxu0 0.0
  %287 = vmatpush1.msra.mxu0 0.0
  %288 = vmatprep.subr.mxu0 0.0
  %289 = vmatpush1.msra.mxu0 0.0
  %290 = vmatprep.subr.mxu0 0.0
  %291 = vmatpush1.msra.mxu0 0.0
  %292 = vmatprep.subr.mxu0 0.0
  %293 = vmatpush1.msra.mxu0 0.0
  %294 = vmatprep.subr.mxu0 0.0
  %295 = vmatpush1.msra.mxu0 0.0
  %296 = vmatprep.subr.mxu0 0.0
  %297 = vmatpush1.msra.mxu0 0.0
  %298 = vmatprep.subr.mxu0 0.0
  %299 = vmatpush1.msra.mxu0 0.0
  %300 = vmatprep.subr.mxu0 0.0
  %301 = vmatpush1.msra.mxu0 0.0
  %302 = vmatprep.subr.mxu0 0.0
  %303 = vmatpush1.msra.mxu0 0.0
  %304 = vmatprep.subr.mxu0 0.0
  %305 = vmatpush1.msra.mxu0 0.0
  %306 = vmatprep.subr.mxu0 0.0
  %307 = vmatpush1.msra.mxu0 0.0
  %308 = vmatprep.subr.mxu0 0.0
  %309 = vmatpush1.msra.mxu0 0.0
  %310 = vmatprep.subr.mxu0 0.0
  %311 = vmatpush1.msra.mxu0 0.0
  %312 = vmatprep.subr.mxu0 0.0
  %313 = vmatpush1.msra.mxu0 0.0
  %314 = vmatprep.subr.mxu0 0.0
  %315 = vmatpush1.msra.mxu0 0.0
  %316 = vmatprep.subr.mxu0 0.0
  %317 = vmatpush1.msra.mxu0 0.0
  %318 = vmatprep.subr.mxu0 0.0
  %319 = vmatpush1.msra.mxu0 0.0
  %320 = vmatprep.subr.mxu0 0.0
  %321 = vmatpush1.msra.mxu0 0.0
  %322 = vmatprep.subr.mxu0 0.0
  %323 = vmatpush1.msra.mxu0 0.0
  %324 = vmatprep.subr.mxu0 0.0
  %325 = vmatpush1.msra.mxu0 0.0
  %326 = vmatprep.subr.mxu0 0.0
  %327 = vmatpush1.msra.mxu0 0.0
  %328 = vmatprep.subr.mxu0 0.0
  %329 = vmatpush1.msra.mxu0 0.0
  %330 = vmatprep.subr.mxu0 0.0
  %331 = vmatpush1.msra.mxu0 0.0
  %332 = vmatprep.subr.mxu0 0.0
  %333 = vmatpush1.msra.mxu0 0.0
  %334 = vmatprep.subr.mxu0 0.0
  %335 = vmatpush1.msra.mxu0 0.0
  %336 = vmatprep.subr.mxu0 0.0
  %337 = vmatpush1.msra.mxu0 0.0
  %338 = vmatprep.subr.mxu0 0.0
  %339 = vmatpush1.msra.mxu0 0.0
  %340 = vmatprep.subr.mxu0 0.0
  %341 = vmatpush1.msra.mxu0 0.0
  %342 = vmatprep.mubr.f32.mxu0 0.0
  %343 = vmatmul.mubr.f32.gmra.mrb[0].mxu0 %v267
  %v344 = vpop.f32.mrb[0].mxu0
  %v345 = vadd.f32 %v264, %v344
  %v346 = vpop.f32.mrb[0].mxu0
  %347 = vmatprep.mubr.f32.mxu0 0.0
  %348 = vmatmul.mubr.f32.gmra.mrb[0].mxu0 %v270
  %v349 = vpop.f32.mrb[0].mxu0
  %v350 = vadd.f32 %v264, %v349
  %v351 = vpop.f32.mrb[0].mxu0
  %352 = vmatprep.mubr.f32.mxu0 0.0
  %353 = vmatmul.mubr.f32.gmra.mrb[0].mxu0 %v273
  %v354 = vpop.f32.mrb[0].mxu0
  %v355 = vadd.f32 %v264, %v354
  %v356 = vpop.f32.mrb[0].mxu0
  %357 = vmatprep.mubr.f32.mxu0 0.0
  %358 = vmatmul.mubr.f32.gmra.mrb[0].mxu0 %v276
  %v359 = vpop.f32.mrb[0].mxu0
  %v360 = vadd.f32 %v264, %v359
  %v361 = vpop.f32.mrb[0].mxu0
  %362 = vdwg.mxu0
  %v363 = vmax.f32 %v345, 0.0
  %v364 = vmax.f32 %v350, 0.0
  %v365 = vmax.f32 %v355, 0.0
  %v366 = vmax.f32 %v360, 0.0
  %367 = vst.msk [vmem:[%s7] sm:$0xff] %vm41, %v363
  %368 = vst.msk [vmem:[%s7 + $0x8] sm:$0xff] %vm41, %v364
  %369 = vst.msk [vmem:[%s7 + $0x10] sm:$0xff] %vm41, %v365
  %370 = vst.msk [vmem:[%s7 + $0x18] sm:$0xff] %vm41, %v366
  // Predicated region
  $region30: #{_lambda_.10} parent=0 // pred_check
    _
  $region31: #{_lambda_.10} parent=0 // pred_check_branch
    %372 = sbr.rel (0) target = $region33
  $region32: #{_lambda_.10} parent=0 // pred_region
    _
  $region33: #{_lambda_.10} parent=0 // pred_fallthru
    _
  // Predicated region
  $region34: #{_lambda_.10} parent=0 // pred_check
    _
  $region35: #{_lambda_.10} parent=0 // pred_check_branch
    %374 = sbr.rel (0) target = $region37
  $region36: #{_lambda_.10} parent=0 // pred_region
    _
  $region37: #{_lambda_.10} parent=0 // pred_fallthru
    _

// kernel: _lambda_.11
$region0: #{_lambda_.11}
  #allocation0 [shape = 'u32[]', space=smem, size = 0x4, offset = 0x4, fixed_abs, tag = 'smem constant byte address 0x4 - core index']
  #allocation1 [shape = 'u32[144,128]{1,0:T(1,128)}', space=vmem, size = 0x12000, scoped, tag = 'internal scratch']
  %s0 = inlined_call_operand.vmem [shape: f32[16,3], index: 0, kind: input, shape index: {}]
  %s1 = inlined_call_operand.vmem [shape: f32[3,16], index: 1, kind: input, shape index: {}]
  %s2 = inlined_call_operand.vmem [shape: f32[16,32], index: 2, kind: input, shape index: {}]
  %s3 = inlined_call_operand.vmem [shape: f32[16,32], index: 3, kind: input, shape index: {}]
  %s4 = inlined_call_operand.vmem [shape: f32[1,32], index: 4, kind: input, shape index: {}, may-alias: {4,6}]
  %s5 = inlined_call_operand.vmem [shape: f32[32,32], index: 5, kind: input, shape index: {}]
  %s6 = inlined_call_operand.vmem [shape: f32[1,32], index: 6, kind: input, shape index: {}, may-alias: {4,6}]
  %s7 = inlined_call_operand.vmem [shape: f32[16,32], index: 7, kind: output, shape index: {}]
  %s8 = sld [smem:[#allocation0]]
  $region38: #{_lambda_.11} parent=0
    _
  %s10 = ssub.s32 1, %s8
  %s11 = scalar_select 0, %s10, %s8
  // Predicated region
  $region2: #{_lambda_.11} parent=0 // pred_check
    _
  $region3: #{_lambda_.11} parent=0 // pred_check_branch
    %13 = sbr.rel (0) target = $region5
  $region4: #{_lambda_.11} parent=0 // pred_region
    _
  $region5: #{_lambda_.11} parent=0 // pred_fallthru
    _
  // Predicated region
  $region6: #{_lambda_.11} parent=0 // pred_check
    _
  $region7: #{_lambda_.11} parent=0 // pred_check_branch
    %15 = sbr.rel (0) target = $region9
  $region8: #{_lambda_.11} parent=0 // pred_region
    _
  $region9: #{_lambda_.11} parent=0 // pred_fallthru
    _
  // Predicated region
  $region10: #{_lambda_.11} parent=0 // pred_check
    _
  $region11: #{_lambda_.11} parent=0 // pred_check_branch
    %17 = sbr.rel (0) target = $region13
  $region12: #{_lambda_.11} parent=0 // pred_region
    _
  $region13: #{_lambda_.11} parent=0 // pred_fallthru
    _
  // Predicated region
  $region14: #{_lambda_.11} parent=0 // pred_check
    _
  $region15: #{_lambda_.11} parent=0 // pred_check_branch
    %19 = sbr.rel (0) target = $region17
  $region16: #{_lambda_.11} parent=0 // pred_region
    _
  $region17: #{_lambda_.11} parent=0 // pred_fallthru
    _
  // Predicated region
  $region18: #{_lambda_.11} parent=0 // pred_check
    _
  $region19: #{_lambda_.11} parent=0 // pred_check_branch
    %21 = sbr.rel (0) target = $region21
  $region20: #{_lambda_.11} parent=0 // pred_region
    _
  $region21: #{_lambda_.11} parent=0 // pred_fallthru
    _
  // Predicated region
  $region22: #{_lambda_.11} parent=0 // pred_check
    _
  $region23: #{_lambda_.11} parent=0 // pred_check_branch
    %23 = sbr.rel (0) target = $region25
  $region24: #{_lambda_.11} parent=0 // pred_region
    _
  $region25: #{_lambda_.11} parent=0 // pred_fallthru
    _
  // Predicated region
  $region26: #{_lambda_.11} parent=0 // pred_check
    _
  $region27: #{_lambda_.11} parent=0 // pred_check_branch
    %25 = sbr.rel (0) target = $region29
  $region28: #{_lambda_.11} parent=0 // pred_region
    _
  $region29: #{_lambda_.11} parent=0 // pred_fallthru
    _
  %v26 = vld [vmem:[%s0] sm:$0xff]
  %v27 = vld [vmem:[%s0 + $0x8] sm:$0xff]
  %v28 = vld [vmem:[%s1] sm:$0x7]
  %vm29 = vcmask 23552
  %v31 = vsel %vm29, %v26, 0
  %v34 = vsel %vm29, %v27, 0
  %vm36 = vcmask 1042432
  %v38 = vsel %vm36, %v28, 0
  %40 = vmatprep.subr.mxu0 0.0
  %41 = vmatpush1.msra.mxu0 %v38
  %42 = vmatprep.subr.mxu0 0.0
  %43 = vmatpush1.msra.mxu0 0.0
  %44 = vmatprep.subr.mxu0 0.0
  %45 = vmatpush1.msra.mxu0 0.0
  %46 = vmatprep.subr.mxu0 0.0
  %47 = vmatpush1.msra.mxu0 0.0
  %48 = vmatprep.subr.mxu0 0.0
  %49 = vmatpush1.msra.mxu0 0.0
  %50 = vmatprep.subr.mxu0 0.0
  %51 = vmatpush1.msra.mxu0 0.0
  %52 = vmatprep.subr.mxu0 0.0
  %53 = vmatpush1.msra.mxu0 0.0
  %54 = vmatprep.subr.mxu0 0.0
  %55 = vmatpush1.msra.mxu0 0.0
  %56 = vmatprep.subr.mxu0 0.0
  %57 = vmatpush1.msra.mxu0 0.0
  %58 = vmatprep.subr.mxu0 0.0
  %59 = vmatpush1.msra.mxu0 0.0
  %60 = vmatprep.subr.mxu0 0.0
  %61 = vmatpush1.msra.mxu0 0.0
  %62 = vmatprep.subr.mxu0 0.0
  %63 = vmatpush1.msra.mxu0 0.0
  %64 = vmatprep.subr.mxu0 0.0
  %65 = vmatpush1.msra.mxu0 0.0
  %66 = vmatprep.subr.mxu0 0.0
  %67 = vmatpush1.msra.mxu0 0.0
  %68 = vmatprep.subr.mxu0 0.0
  %69 = vmatpush1.msra.mxu0 0.0
  %70 = vmatprep.subr.mxu0 0.0
  %71 = vmatpush1.msra.mxu0 0.0
  %72 = vmatprep.subr.mxu0 0.0
  %73 = vmatpush1.msra.mxu0 0.0
  %74 = vmatprep.subr.mxu0 0.0
  %75 = vmatpush1.msra.mxu0 0.0
  %76 = vmatprep.subr.mxu0 0.0
  %77 = vmatpush1.msra.mxu0 0.0
  %78 = vmatprep.subr.mxu0 0.0
  %79 = vmatpush1.msra.mxu0 0.0
  %80 = vmatprep.subr.mxu0 0.0
  %81 = vmatpush1.msra.mxu0 0.0
  %82 = vmatprep.subr.mxu0 0.0
  %83 = vmatpush1.msra.mxu0 0.0
  %84 = vmatprep.subr.mxu0 0.0
  %85 = vmatpush1.msra.mxu0 0.0
  %86 = vmatprep.subr.mxu0 0.0
  %87 = vmatpush1.msra.mxu0 0.0
  %88 = vmatprep.subr.mxu0 0.0
  %89 = vmatpush1.msra.mxu0 0.0
  %90 = vmatprep.subr.mxu0 0.0
  %91 = vmatpush1.msra.mxu0 0.0
  %92 = vmatprep.subr.mxu0 0.0
  %93 = vmatpush1.msra.mxu0 0.0
  %94 = vmatprep.subr.mxu0 0.0
  %95 = vmatpush1.msra.mxu0 0.0
  %96 = vmatprep.subr.mxu0 0.0
  %97 = vmatpush1.msra.mxu0 0.0
  %98 = vmatprep.subr.mxu0 0.0
  %99 = vmatpush1.msra.mxu0 0.0
  %100 = vmatprep.subr.mxu0 0.0
  %101 = vmatpush1.msra.mxu0 0.0
  %102 = vmatprep.subr.mxu0 0.0
  %103 = vmatpush1.msra.mxu0 0.0
  %104 = vmatprep.mubr.f32.mxu0 0.0
  %105 = vmatmul.mubr.f32.gmra.mrb[0].mxu0 %v31
  %v106 = vpop.f32.mrb[0].mxu0
  %v107 = vadd.f32 0.0, %v106
  %v108 = vpop.f32.mrb[0].mxu0
  %109 = vmatprep.mubr.f32.mxu0 0.0
  %110 = vmatmul.mubr.f32.gmra.mrb[0].mxu0 %v34
  %v111 = vpop.f32.mrb[0].mxu0
  %v112 = vadd.f32 0.0, %v111
  %v113 = vpop.f32.mrb[0].mxu0
  %114 = vdwg.mxu0
  %v115 = vand.u32 2147483647, %v107
  %vm116 = vcmp.le.f32.partialorder %v115, 0.7853982
  %vm117 = vcmp.lt.s32.totalorder %v107, 0
  %v118 = vand.u32 %v107, 2139095040
  %v119 = vshrl.u32 %v118, 23
  %v120 = vsub.s32 %v119, 127
  %v121 = vand.u32 2147483647, %v107
  %v122 = vand.u32 %v121, 8388607
  %v123 = vor.u32 %v122, 8388608
  %v124 = vsub.s32 0, %v123
  %v125 = vadd.s32 %v120, 1
  %vm126 = vcmp.gt.s32.totalorder %v125, 0
  %v127 = vsel %vm126, %v125, 0
  %v128 = vshrl.u32 %v127, 5
  %v129 = vand.u32 %v127, 31
  %v130 = vsub.s32 32, %v129
  %v131 = vshrl.u32 683565275, %v130
  %v132 = vshll.u32 683565275, %v129
  %v133 = vshrl.u32 2475754826, %v130
  %v134 = vor.u32 %v132, %v133
  %v135 = vshll.u32 2475754826, %v129
  %v136 = vshrl.u32 2131351028, %v130
  %v137 = vor.u32 %v135, %v136
  %v138 = vshll.u32 2131351028, %v129
  %v139 = vshrl.u32 2102212464, %v130
  %v140 = vor.u32 %v138, %v139
  %v141 = vshll.u32 2102212464, %v129
  %v142 = vshrl.u32 920167782, %v130
  %v143 = vor.u32 %v141, %v142
  %v144 = vshll.u32 920167782, %v129
  %v145 = vshrl.u32 1326507024, %v130
  %v146 = vor.u32 %v144, %v145
  %vm147 = vcmp.lt.s32.totalorder %v128, 1
  %vm148 = vcmp.lt.s32.totalorder %v128, 2
  %vm149 = vcmp.lt.s32.totalorder %v128, 3
  %vm150 = vcmp.lt.s32.totalorder %v128, 4
  %v151 = vsel %vm147, %v131, %v134
  %v152 = vsel %vm150, %v140, 2102212464
  %v153 = vsel %vm149, %v137, %v152
  %v154 = vsel %vm148, %v151, %v153
  %v155 = vsel %vm147, %v134, %v137
  %v156 = vsel %vm150, %v143, 920167782
  %v157 = vsel %vm149, %v140, %v156
  %v158 = vsel %vm148, %v155, %v157
  %v159 = vsel %vm147, %v137, %v140
  %v160 = vsel %vm150, %v146, 1326507024
  %v161 = vsel %vm149, %v143, %v160
  %v162 = vsel %vm148, %v159, %v161
  %v163 = vshll.u32 %v123, 8
  %v164 = vmul.u32.u64.compose %v163, %v162
  %v165 = vextract.low.u32 %v164
  %v166 = vextract.high.u32 %v164
  %v167 = vmul.u32.u64.compose %v163, %v158
  %v168 = vextract.low.u32 %v167
  %v169 = vextract.high.u32 %v167
  %v170 = vmul.u32 %v163, %v154
  %v171 = vadd.s32 %v166, %v168
  %vm172 = vc.u32 %v166, %v168
  %v173 = vadd.s32 %v169, 1
  %v174 = vsel %vm172, %v173, %v169
  %v175 = vadd.s32 %v170, %v174
  %v176 = vadd.s32 %v175, 536870912
  %v177 = vshrl.u32 %v176, 30
  %v178 = vshll.u32 %v177, 30
  %v179 = vsub.s32 %v175, %v178
  %vm180 = vcmp.lt.s32.totalorder %v179, 0
  %v181 = vsub.s32 0, %v179
  %v182 = vsel %vm180, %v181, %v179
  %v183 = vclz %v182
  %v184 = vsub.s32 %v183, 2
  %vm185 = vcmp.gt.s32.totalorder 0, %v184
  %v186 = vsel %vm185, 0, %v184
  %v187 = vsub.s32 32, %v186
  %v188 = vshll.u32 %v179, %v186
  %v189 = vshrl.u32 %v171, %v187
  %v190 = vor.u32 %v188, %v189
  %v191 = vsub.s32 4294967266, %v186
  %v192 = vadd.s32 %v191, 127
  %v193 = vshll.u32 %v192, 23
  %v194 = vor.u32 4788187, %v193
  %v195 = vand.u32 2147483647, %v194
  %v197 = vcvt.s32.f32 %v190
  %v198 = vmul.f32 %v197, %v195
  %v199 = vxor.u32 %v198, 2147483648
  %v200 = vsel %vm117, %v199, %v198
  %v201 = vsub.s32 4, %v177
  %v202 = vsel %vm117, %v201, %v177
  %v203 = vsel %vm116, %v107, %v200
  %v204 = vsel %vm116, 0, %v202
  %v205 = vcosq.f32.pop %v203
  %v206 = vsinq.f32.pop %v203
  %vm207 = vweird.f32 %v107
  %v208 = vadd.s32 %v204, 3
  %v209 = vand.u32 %v208, 3
  %vm210 = vcmp.lt.s32.totalorder %v209, 2
  %vm211 = vcmp.eq.s32.totalorder %v209, 0
  %v212 = vxor.u32 %v206, 2147483648
  %v213 = vsel %vm211, %v205, %v212
  %vm214 = vcmp.eq.s32.totalorder %v209, 2
  %v215 = vxor.u32 %v205, 2147483648
  %v216 = vsel %vm214, %v215, %v206
  %v217 = vsel %vm210, %v213, %v216
  %v218 = vsel %vm207, nan, %v217
  %v219 = vand.u32 2147483647, %v112
  %vm220 = vcmp.le.f32.partialorder %v219, 0.7853982
  %vm221 = vcmp.lt.s32.totalorder %v112, 0
  %v222 = vand.u32 %v112, 2139095040
  %v223 = vshrl.u32 %v222, 23
  %v224 = vsub.s32 %v223, 127
  %v225 = vand.u32 2147483647, %v112
  %v226 = vand.u32 %v225, 8388607
  %v227 = vor.u32 %v226, 8388608
  %v228 = vsub.s32 0, %v227
  %v229 = vadd.s32 %v224, 1
  %vm230 = vcmp.gt.s32.totalorder %v229, 0
  %v231 = vsel %vm230, %v229, 0
  %v232 = vshrl.u32 %v231, 5
  %v233 = vand.u32 %v231, 31
  %v234 = vsub.s32 32, %v233
  %v235 = vshrl.u32 683565275, %v234
  %v236 = vshll.u32 683565275, %v233
  %v237 = vshrl.u32 2475754826, %v234
  %v238 = vor.u32 %v236, %v237
  %v239 = vshll.u32 2475754826, %v233
  %v240 = vshrl.u32 2131351028, %v234
  %v241 = vor.u32 %v239, %v240
  %v242 = vshll.u32 2131351028, %v233
  %v243 = vshrl.u32 2102212464, %v234
  %v244 = vor.u32 %v242, %v243
  %v245 = vshll.u32 2102212464, %v233
  %v246 = vshrl.u32 920167782, %v234
  %v247 = vor.u32 %v245, %v246
  %v248 = vshll.u32 920167782, %v233
  %v249 = vshrl.u32 1326507024, %v234
  %v250 = vor.u32 %v248, %v249
  %vm251 = vcmp.lt.s32.totalorder %v232, 1
  %vm252 = vcmp.lt.s32.totalorder %v232, 2
  %vm253 = vcmp.lt.s32.totalorder %v232, 3
  %vm254 = vcmp.lt.s32.totalorder %v232, 4
  %v255 = vsel %vm251, %v235, %v238
  %v256 = vsel %vm254, %v244, 2102212464
  %v257 = vsel %vm253, %v241, %v256
  %v258 = vsel %vm252, %v255, %v257
  %v259 = vsel %vm251, %v238, %v241
  %v260 = vsel %vm254, %v247, 920167782
  %v261 = vsel %vm253, %v244, %v260
  %v262 = vsel %vm252, %v259, %v261
  %v263 = vsel %vm251, %v241, %v244
  %v264 = vsel %vm254, %v250, 1326507024
  %v265 = vsel %vm253, %v247, %v264
  %v266 = vsel %vm252, %v263, %v265
  %v267 = vshll.u32 %v227, 8
  %v268 = vmul.u32.u64.compose %v267, %v266
  %v269 = vextract.low.u32 %v268
  %v270 = vextract.high.u32 %v268
  %v271 = vmul.u32.u64.compose %v267, %v262
  %v272 = vextract.low.u32 %v271
  %v273 = vextract.high.u32 %v271
  %v274 = vmul.u32 %v267, %v258
  %v275 = vadd.s32 %v270, %v272
  %vm276 = vc.u32 %v270, %v272
  %v277 = vadd.s32 %v273, 1
  %v278 = vsel %vm276, %v277, %v273
  %v279 = vadd.s32 %v274, %v278
  %v280 = vadd.s32 %v279, 536870912
  %v281 = vshrl.u32 %v280, 30
  %v282 = vshll.u32 %v281, 30
  %v283 = vsub.s32 %v279, %v282
  %vm284 = vcmp.lt.s32.totalorder %v283, 0
  %v285 = vsub.s32 0, %v283
  %v286 = vsel %vm284, %v285, %v283
  %v287 = vclz %v286
  %v288 = vsub.s32 %v287, 2
  %vm289 = vcmp.gt.s32.totalorder 0, %v288
  %v290 = vsel %vm289, 0, %v288
  %v291 = vsub.s32 32, %v290
  %v292 = vshll.u32 %v283, %v290
  %v293 = vshrl.u32 %v275, %v291
  %v294 = vor.u32 %v292, %v293
  %v295 = vsub.s32 4294967266, %v290
  %v296 = vadd.s32 %v295, 127
  %v297 = vshll.u32 %v296, 23
  %v298 = vor.u32 4788187, %v297
  %v299 = vand.u32 2147483647, %v298
  %v301 = vcvt.s32.f32 %v294
  %v302 = vmul.f32 %v301, %v299
  %v303 = vxor.u32 %v302, 2147483648
  %v304 = vsel %vm221, %v303, %v302
  %v305 = vsub.s32 4, %v281
  %v306 = vsel %vm221, %v305, %v281
  %v307 = vsel %vm220, %v112, %v304
  %v308 = vsel %vm220, 0, %v306
  %v309 = vcosq.f32.pop %v307
  %v310 = vsinq.f32.pop %v307
  %vm311 = vweird.f32 %v112
  %v312 = vadd.s32 %v308, 3
  %v313 = vand.u32 %v312, 3
  %vm314 = vcmp.lt.s32.totalorder %v313, 2
  %vm315 = vcmp.eq.s32.totalorder %v313, 0
  %v316 = vxor.u32 %v310, 2147483648
  %v317 = vsel %vm315, %v309, %v316
  %vm318 = vcmp.eq.s32.totalorder %v313, 2
  %v319 = vxor.u32 %v309, 2147483648
  %v320 = vsel %vm318, %v319, %v310
  %v321 = vsel %vm314, %v317, %v320
  %v322 = vsel %vm311, nan, %v321
  %v323 = vld [vmem:[%s2] sm:$0xff]
  %v324 = vld [vmem:[%s2 + $0x8] sm:$0xff]
  %v325 = vand.u32 2147483647, %v107
  %vm326 = vcmp.le.f32.partialorder %v325, 0.7853982
  %vm327 = vcmp.lt.s32.totalorder %v107, 0
  %v328 = vand.u32 %v107, 2139095040
  %v329 = vshrl.u32 %v328, 23
  %v330 = vsub.s32 %v329, 127
  %v331 = vand.u32 2147483647, %v107
  %v332 = vand.u32 %v331, 8388607
  %v333 = vor.u32 %v332, 8388608
  %v334 = vsub.s32 0, %v333
  %v335 = vadd.s32 %v330, 1
  %vm336 = vcmp.gt.s32.totalorder %v335, 0
  %v337 = vsel %vm336, %v335, 0
  %v338 = vshrl.u32 %v337, 5
  %v339 = vand.u32 %v337, 31
  %v340 = vsub.s32 32, %v339
  %v341 = vshrl.u32 683565275, %v340
  %v342 = vshll.u32 683565275, %v339
  %v343 = vshrl.u32 2475754826, %v340
  %v344 = vor.u32 %v342, %v343
  %v345 = vshll.u32 2475754826, %v339
  %v346 = vshrl.u32 2131351028, %v340
  %v347 = vor.u32 %v345, %v346
  %v348 = vshll.u32 2131351028, %v339
  %v349 = vshrl.u32 2102212464, %v340
  %v350 = vor.u32 %v348, %v349
  %v351 = vshll.u32 2102212464, %v339
  %v352 = vshrl.u32 920167782, %v340
  %v353 = vor.u32 %v351, %v352
  %v354 = vshll.u32 920167782, %v339
  %v355 = vshrl.u32 1326507024, %v340
  %v356 = vor.u32 %v354, %v355
  %vm357 = vcmp.lt.s32.totalorder %v338, 1
  %vm358 = vcmp.lt.s32.totalorder %v338, 2
  %vm359 = vcmp.lt.s32.totalorder %v338, 3
  %vm360 = vcmp.lt.s32.totalorder %v338, 4
  %v361 = vsel %vm357, %v341, %v344
  %v362 = vsel %vm360, %v350, 2102212464
  %v363 = vsel %vm359, %v347, %v362
  %v364 = vsel %vm358, %v361, %v363
  %v365 = vsel %vm357, %v344, %v347
  %v366 = vsel %vm360, %v353, 920167782
  %v367 = vsel %vm359, %v350, %v366
  %v368 = vsel %vm358, %v365, %v367
  %v369 = vsel %vm357, %v347, %v350
  %v370 = vsel %vm360, %v356, 1326507024
  %v371 = vsel %vm359, %v353, %v370
  %v372 = vsel %vm358, %v369, %v371
  %v373 = vshll.u32 %v333, 8
  %v374 = vmul.u32.u64.compose %v373, %v372
  %v375 = vextract.low.u32 %v374
  %v376 = vextract.high.u32 %v374
  %v377 = vmul.u32.u64.compose %v373, %v368
  %v378 = vextract.low.u32 %v377
  %v379 = vextract.high.u32 %v377
  %v380 = vmul.u32 %v373, %v364
  %v381 = vadd.s32 %v376, %v378
  %vm382 = vc.u32 %v376, %v378
  %v383 = vadd.s32 %v379, 1
  %v384 = vsel %vm382, %v383, %v379
  %v385 = vadd.s32 %v380, %v384
  %v386 = vadd.s32 %v385, 536870912
  %v387 = vshrl.u32 %v386, 30
  %v388 = vshll.u32 %v387, 30
  %v389 = vsub.s32 %v385, %v388
  %vm390 = vcmp.lt.s32.totalorder %v389, 0
  %v391 = vsub.s32 0, %v389
  %v392 = vsel %vm390, %v391, %v389
  %v393 = vclz %v392
  %v394 = vsub.s32 %v393, 2
  %vm395 = vcmp.gt.s32.totalorder 0, %v394
  %v396 = vsel %vm395, 0, %v394
  %v397 = vsub.s32 32, %v396
  %v398 = vshll.u32 %v389, %v396
  %v399 = vshrl.u32 %v381, %v397
  %v400 = vor.u32 %v398, %v399
  %v401 = vsub.s32 4294967266, %v396
  %v402 = vadd.s32 %v401, 127
  %v403 = vshll.u32 %v402, 23
  %v404 = vor.u32 4788187, %v403
  %v405 = vand.u32 2147483647, %v404
  %v407 = vcvt.s32.f32 %v400
  %v408 = vmul.f32 %v407, %v405
  %v409 = vxor.u32 %v408, 2147483648
  %v410 = vsel %vm327, %v409, %v408
  %v411 = vsub.s32 4, %v387
  %v412 = vsel %vm327, %v411, %v387
  %v413 = vsel %vm326, %v107, %v410
  %v414 = vsel %vm326, 0, %v412
  %v415 = vcosq.f32.pop %v413
  %v416 = vsinq.f32.pop %v413
  %vm417 = vweird.f32 %v107
  %v418 = vand.u32 %v414, 3
  %vm419 = vcmp.lt.s32.totalorder %v418, 2
  %vm420 = vcmp.eq.s32.totalorder %v418, 0
  %v421 = vxor.u32 %v416, 2147483648
  %v422 = vsel %vm420, %v415, %v421
  %vm423 = vcmp.eq.s32.totalorder %v418, 2
  %v424 = vxor.u32 %v415, 2147483648
  %v425 = vsel %vm423, %v424, %v416
  %v426 = vsel %vm419, %v422, %v425
  %v427 = vsel %vm417, nan, %v426
  %v428 = vand.u32 2147483647, %v112
  %vm429 = vcmp.le.f32.partialorder %v428, 0.7853982
  %vm430 = vcmp.lt.s32.totalorder %v112, 0
  %v431 = vand.u32 %v112, 2139095040
  %v432 = vshrl.u32 %v431, 23
  %v433 = vsub.s32 %v432, 127
  %v434 = vand.u32 2147483647, %v112
  %v435 = vand.u32 %v434, 8388607
  %v436 = vor.u32 %v435, 8388608
  %v437 = vsub.s32 0, %v436
  %v438 = vadd.s32 %v433, 1
  %vm439 = vcmp.gt.s32.totalorder %v438, 0
  %v440 = vsel %vm439, %v438, 0
  %v441 = vshrl.u32 %v440, 5
  %v442 = vand.u32 %v440, 31
  %v443 = vsub.s32 32, %v442
  %v444 = vshrl.u32 683565275, %v443
  %v445 = vshll.u32 683565275, %v442
  %v446 = vshrl.u32 2475754826, %v443
  %v447 = vor.u32 %v445, %v446
  %v448 = vshll.u32 2475754826, %v442
  %v449 = vshrl.u32 2131351028, %v443
  %v450 = vor.u32 %v448, %v449
  %v451 = vshll.u32 2131351028, %v442
  %v452 = vshrl.u32 2102212464, %v443
  %v453 = vor.u32 %v451, %v452
  %v454 = vshll.u32 2102212464, %v442
  %v455 = vshrl.u32 920167782, %v443
  %v456 = vor.u32 %v454, %v455
  %v457 = vshll.u32 920167782, %v442
  %v458 = vshrl.u32 1326507024, %v443
  %v459 = vor.u32 %v457, %v458
  %vm460 = vcmp.lt.s32.totalorder %v441, 1
  %vm461 = vcmp.lt.s32.totalorder %v441, 2
  %vm462 = vcmp.lt.s32.totalorder %v441, 3
  %vm463 = vcmp.lt.s32.totalorder %v441, 4
  %v464 = vsel %vm460, %v444, %v447
  %v465 = vsel %vm463, %v453, 2102212464
  %v466 = vsel %vm462, %v450, %v465
  %v467 = vsel %vm461, %v464, %v466
  %v468 = vsel %vm460, %v447, %v450
  %v469 = vsel %vm463, %v456, 920167782
  %v470 = vsel %vm462, %v453, %v469
  %v471 = vsel %vm461, %v468, %v470
  %v472 = vsel %vm460, %v450, %v453
  %v473 = vsel %vm463, %v459, 1326507024
  %v474 = vsel %vm462, %v456, %v473
  %v475 = vsel %vm461, %v472, %v474
  %v476 = vshll.u32 %v436, 8
  %v477 = vmul.u32.u64.compose %v476, %v475
  %v478 = vextract.low.u32 %v477
  %v479 = vextract.high.u32 %v477
  %v480 = vmul.u32.u64.compose %v476, %v471
  %v481 = vextract.low.u32 %v480
  %v482 = vextract.high.u32 %v480
  %v483 = vmul.u32 %v476, %v467
  %v484 = vadd.s32 %v479, %v481
  %vm485 = vc.u32 %v479, %v481
  %v486 = vadd.s32 %v482, 1
  %v487 = vsel %vm485, %v486, %v482
  %v488 = vadd.s32 %v483, %v487
  %v489 = vadd.s32 %v488, 536870912
  %v490 = vshrl.u32 %v489, 30
  %v491 = vshll.u32 %v490, 30
  %v492 = vsub.s32 %v488, %v491
  %vm493 = vcmp.lt.s32.totalorder %v492, 0
  %v494 = vsub.s32 0, %v492
  %v495 = vsel %vm493, %v494, %v492
  %v496 = vclz %v495
  %v497 = vsub.s32 %v496, 2
  %vm498 = vcmp.gt.s32.totalorder 0, %v497
  %v499 = vsel %vm498, 0, %v497
  %v500 = vsub.s32 32, %v499
  %v501 = vshll.u32 %v492, %v499
  %v502 = vshrl.u32 %v484, %v500
  %v503 = vor.u32 %v501, %v502
  %v504 = vsub.s32 4294967266, %v499
  %v505 = vadd.s32 %v504, 127
  %v506 = vshll.u32 %v505, 23
  %v507 = vor.u32 4788187, %v506
  %v508 = vand.u32 2147483647, %v507
  %v510 = vcvt.s32.f32 %v503
  %v511 = vmul.f32 %v510, %v508
  %v512 = vxor.u32 %v511, 2147483648
  %v513 = vsel %vm430, %v512, %v511
  %v514 = vsub.s32 4, %v490
  %v515 = vsel %vm430, %v514, %v490
  %v516 = vsel %vm429, %v112, %v513
  %v517 = vsel %vm429, 0, %v515
  %v518 = vcosq.f32.pop %v516
  %v519 = vsinq.f32.pop %v516
  %vm520 = vweird.f32 %v112
  %v521 = vand.u32 %v517, 3
  %vm522 = vcmp.lt.s32.totalorder %v521, 2
  %vm523 = vcmp.eq.s32.totalorder %v521, 0
  %v524 = vxor.u32 %v519, 2147483648
  %v525 = vsel %vm523, %v518, %v524
  %vm526 = vcmp.eq.s32.totalorder %v521, 2
  %v527 = vxor.u32 %v518, 2147483648
  %v528 = vsel %vm526, %v527, %v519
  %v529 = vsel %vm522, %v525, %v528
  %v530 = vsel %vm520, nan, %v529
  %v531 = vld [vmem:[%s3] sm:$0xff]
  %v532 = vld [vmem:[%s3 + $0x8] sm:$0xff]
  %vm533 = vcmask 130048
  %v535 = vsel %vm533, %v427, 0
  %v538 = vsel %vm533, %v530, 0
  %540 = vmatprep.subr.mxu0 0.0
  %541 = vmatpush1.msra.mxu0 %v531
  %542 = vmatprep.subr.mxu0 0.0
  %543 = vmatpush1.msra.mxu0 %v532
  %544 = vmatprep.subr.mxu0 0.0
  %545 = vmatpush1.msra.mxu0 0.0
  %546 = vmatprep.subr.mxu0 0.0
  %547 = vmatpush1.msra.mxu0 0.0
  %548 = vmatprep.subr.mxu0 0.0
  %549 = vmatpush1.msra.mxu0 0.0
  %550 = vmatprep.subr.mxu0 0.0
  %551 = vmatpush1.msra.mxu0 0.0
  %552 = vmatprep.subr.mxu0 0.0
  %553 = vmatpush1.msra.mxu0 0.0
  %554 = vmatprep.subr.mxu0 0.0
  %555 = vmatpush1.msra.mxu0 0.0
  %556 = vmatprep.subr.mxu0 0.0
  %557 = vmatpush1.msra.mxu0 0.0
  %558 = vmatprep.subr.mxu0 0.0
  %559 = vmatpush1.msra.mxu0 0.0
  %560 = vmatprep.subr.mxu0 0.0
  %561 = vmatpush1.msra.mxu0 0.0
  %562 = vmatprep.subr.mxu0 0.0
  %563 = vmatpush1.msra.mxu0 0.0
  %564 = vmatprep.subr.mxu0 0.0
  %565 = vmatpush1.msra.mxu0 0.0
  %566 = vmatprep.subr.mxu0 0.0
  %567 = vmatpush1.msra.mxu0 0.0
  %568 = vmatprep.subr.mxu0 0.0
  %569 = vmatpush1.msra.mxu0 0.0
  %570 = vmatprep.subr.mxu0 0.0
  %571 = vmatpush1.msra.mxu0 0.0
  %572 = vmatprep.subr.mxu0 0.0
  %573 = vmatpush1.msra.mxu0 0.0
  %574 = vmatprep.subr.mxu0 0.0
  %575 = vmatpush1.msra.mxu0 0.0
  %576 = vmatprep.subr.mxu0 0.0
  %577 = vmatpush1.msra.mxu0 0.0
  %578 = vmatprep.subr.mxu0 0.0
  %579 = vmatpush1.msra.mxu0 0.0
  %580 = vmatprep.subr.mxu0 0.0
  %581 = vmatpush1.msra.mxu0 0.0
  %582 = vmatprep.subr.mxu0 0.0
  %583 = vmatpush1.msra.mxu0 0.0
  %584 = vmatprep.subr.mxu0 0.0
  %585 = vmatpush1.msra.mxu0 0.0
  %586 = vmatprep.subr.mxu0 0.0
  %587 = vmatpush1.msra.mxu0 0.0
  %588 = vmatprep.subr.mxu0 0.0
  %589 = vmatpush1.msra.mxu0 0.0
  %590 = vmatprep.subr.mxu0 0.0
  %591 = vmatpush1.msra.mxu0 0.0
  %592 = vmatprep.subr.mxu0 0.0
  %593 = vmatpush1.msra.mxu0 0.0
  %594 = vmatprep.subr.mxu0 0.0
  %595 = vmatpush1.msra.mxu0 0.0
  %596 = vmatprep.subr.mxu0 0.0
  %597 = vmatpush1.msra.mxu0 0.0
  %598 = vmatprep.subr.mxu0 0.0
  %599 = vmatpush1.msra.mxu0 0.0
  %600 = vmatprep.subr.mxu0 0.0
  %601 = vmatpush1.msra.mxu0 0.0
  %602 = vmatprep.subr.mxu0 0.0
  %603 = vmatpush1.msra.mxu0 0.0
  %604 = vmatprep.mubr.f32.mxu0 0.0
  %605 = vmatmul.mubr.f32.gmra.mrb[0].mxu0 %v535
  %v606 = vpop.f32.mrb[0].mxu0
  %v607 = vadd.f32 0.0, %v606
  %v608 = vpop.f32.mrb[0].mxu0
  %609 = vmatprep.mubr.f32.mxu0 0.0
  %610 = vmatmul.mubr.f32.gmra.mrb[0].mxu0 %v538
  %v611 = vpop.f32.mrb[0].mxu0
  %v612 = vadd.f32 0.0, %v611
  %v613 = vpop.f32.mrb[0].mxu0
  %614 = vdwg.mxu0
  %v616 = vsel %vm533, %v218, 0
  %v619 = vsel %vm533, %v322, 0
  %621 = vmatprep.subr.mxu0 0.0
  %622 = vmatpush1.msra.mxu0 %v323
  %623 = vmatprep.subr.mxu0 0.0
  %624 = vmatpush1.msra.mxu0 %v324
  %625 = vmatprep.subr.mxu0 0.0
  %626 = vmatpush1.msra.mxu0 0.0
  %627 = vmatprep.subr.mxu0 0.0
  %628 = vmatpush1.msra.mxu0 0.0
  %629 = vmatprep.subr.mxu0 0.0
  %630 = vmatpush1.msra.mxu0 0.0
  %631 = vmatprep.subr.mxu0 0.0
  %632 = vmatpush1.msra.mxu0 0.0
  %633 = vmatprep.subr.mxu0 0.0
  %634 = vmatpush1.msra.mxu0 0.0
  %635 = vmatprep.subr.mxu0 0.0
  %636 = vmatpush1.msra.mxu0 0.0
  %637 = vmatprep.subr.mxu0 0.0
  %638 = vmatpush1.msra.mxu0 0.0
  %639 = vmatprep.subr.mxu0 0.0
  %640 = vmatpush1.msra.mxu0 0.0
  %641 = vmatprep.subr.mxu0 0.0
  %642 = vmatpush1.msra.mxu0 0.0
  %643 = vmatprep.subr.mxu0 0.0
  %644 = vmatpush1.msra.mxu0 0.0
  %645 = vmatprep.subr.mxu0 0.0
  %646 = vmatpush1.msra.mxu0 0.0
  %647 = vmatprep.subr.mxu0 0.0
  %648 = vmatpush1.msra.mxu0 0.0
  %649 = vmatprep.subr.mxu0 0.0
  %650 = vmatpush1.msra.mxu0 0.0
  %651 = vmatprep.subr.mxu0 0.0
  %652 = vmatpush1.msra.mxu0 0.0
  %653 = vmatprep.subr.mxu0 0.0
  %654 = vmatpush1.msra.mxu0 0.0
  %655 = vmatprep.subr.mxu0 0.0
  %656 = vmatpush1.msra.mxu0 0.0
  %657 = vmatprep.subr.mxu0 0.0
  %658 = vmatpush1.msra.mxu0 0.0
  %659 = vmatprep.subr.mxu0 0.0
  %660 = vmatpush1.msra.mxu0 0.0
  %661 = vmatprep.subr.mxu0 0.0
  %662 = vmatpush1.msra.mxu0 0.0
  %663 = vmatprep.subr.mxu0 0.0
  %664 = vmatpush1.msra.mxu0 0.0
  %665 = vmatprep.subr.mxu0 0.0
  %666 = vmatpush1.msra.mxu0 0.0
  %667 = vmatprep.subr.mxu0 0.0
  %668 = vmatpush1.msra.mxu0 0.0
  %669 = vmatprep.subr.mxu0 0.0
  %670 = vmatpush1.msra.mxu0 0.0
  %671 = vmatprep.subr.mxu0 0.0
  %672 = vmatpush1.msra.mxu0 0.0
  %673 = vmatprep.subr.mxu0 0.0
  %674 = vmatpush1.msra.mxu0 0.0
  %675 = vmatprep.subr.mxu0 0.0
  %676 = vmatpush1.msra.mxu0 0.0
  %677 = vmatprep.subr.mxu0 0.0
  %678 = vmatpush1.msra.mxu0 0.0
  %679 = vmatprep.subr.mxu0 0.0
  %680 = vmatpush1.msra.mxu0 0.0
  %681 = vmatprep.subr.mxu0 0.0
  %682 = vmatpush1.msra.mxu0 0.0
  %683 = vmatprep.subr.mxu0 0.0
  %684 = vmatpush1.msra.mxu0 0.0
  %685 = vmatprep.mubr.f32.mxu0 0.0
  %686 = vmatmul.mubr.f32.gmra.mrb[0].mxu0 %v616
  %v687 = vpop.f32.mrb[0].mxu0
  %v688 = vadd.f32 %v607, %v687
  %v689 = vpop.f32.mrb[0].mxu0
  %690 = vmatprep.mubr.f32.mxu0 0.0
  %691 = vmatmul.mubr.f32.gmra.mrb[0].mxu0 %v619
  %v692 = vpop.f32.mrb[0].mxu0
  %v693 = vadd.f32 %v612, %v692
  %v694 = vpop.f32.mrb[0].mxu0
  %695 = vdwg.mxu0
  %v696 = vld [vmem:[%s4] sm:$0x1]
  %v698 = vlaneseq
  %v699 = vshrl.u32 %v698, 7
  %v700 = vsub.s32 0, %v699
  %v701 = vrot.slane %v696, %v700
  %v703 = vadd.f32 %v688, %v701
  %v704 = vadd.f32 %v693, %v701
  %v705 = vmax.f32 %v703, 0.0
  %v706 = vmax.f32 %v704, 0.0
  %v707 = vld [vmem:[%s5] sm:$0xff]
  %v708 = vld [vmem:[%s5 + $0x8] sm:$0xff]
  %v709 = vld [vmem:[%s5 + $0x10] sm:$0xff]
  %v710 = vld [vmem:[%s5 + $0x18] sm:$0xff]
  %v711 = vld [vmem:[%s6] sm:$0x1]
  %v713 = vlaneseq
  %v714 = vshrl.u32 %v713, 7
  %v715 = vsub.s32 0, %v714
  %v716 = vrot.slane %v711, %v715
  %vm718 = vcmask 261120
  %v720 = vsel %vm718, %v705, 0
  %v723 = vsel %vm718, %v706, 0
  %725 = vmatprep.subr.mxu0 0.0
  %726 = vmatpush1.msra.mxu0 %v707
  %727 = vmatprep.subr.mxu0 0.0
  %728 = vmatpush1.msra.mxu0 %v708
  %729 = vmatprep.subr.mxu0 0.0
  %730 = vmatpush1.msra.mxu0 %v709
  %731 = vmatprep.subr.mxu0 0.0
  %732 = vmatpush1.msra.mxu0 %v710
  %733 = vmatprep.subr.mxu0 0.0
  %734 = vmatpush1.msra.mxu0 0.0
  %735 = vmatprep.subr.mxu0 0.0
  %736 = vmatpush1.msra.mxu0 0.0
  %737 = vmatprep.subr.mxu0 0.0
  %738 = vmatpush1.msra.mxu0 0.0
  %739 = vmatprep.subr.mxu0 0.0
  %740 = vmatpush1.msra.mxu0 0.0
  %741 = vmatprep.subr.mxu0 0.0
  %742 = vmatpush1.msra.mxu0 0.0
  %743 = vmatprep.subr.mxu0 0.0
  %744 = vmatpush1.msra.mxu0 0.0
  %745 = vmatprep.subr.mxu0 0.0
  %746 = vmatpush1.msra.mxu0 0.0
  %747 = vmatprep.subr.mxu0 0.0
  %748 = vmatpush1.msra.mxu0 0.0
  %749 = vmatprep.subr.mxu0 0.0
  %750 = vmatpush1.msra.mxu0 0.0
  %751 = vmatprep.subr.mxu0 0.0
  %752 = vmatpush1.msra.mxu0 0.0
  %753 = vmatprep.subr.mxu0 0.0
  %754 = vmatpush1.msra.mxu0 0.0
  %755 = vmatprep.subr.mxu0 0.0
  %756 = vmatpush1.msra.mxu0 0.0
  %757 = vmatprep.subr.mxu0 0.0
  %758 = vmatpush1.msra.mxu0 0.0
  %759 = vmatprep.subr.mxu0 0.0
  %760 = vmatpush1.msra.mxu0 0.0
  %761 = vmatprep.subr.mxu0 0.0
  %762 = vmatpush1.msra.mxu0 0.0
  %763 = vmatprep.subr.mxu0 0.0
  %764 = vmatpush1.msra.mxu0 0.0
  %765 = vmatprep.subr.mxu0 0.0
  %766 = vmatpush1.msra.mxu0 0.0
  %767 = vmatprep.subr.mxu0 0.0
  %768 = vmatpush1.msra.mxu0 0.0
  %769 = vmatprep.subr.mxu0 0.0
  %770 = vmatpush1.msra.mxu0 0.0
  %771 = vmatprep.subr.mxu0 0.0
  %772 = vmatpush1.msra.mxu0 0.0
  %773 = vmatprep.subr.mxu0 0.0
  %774 = vmatpush1.msra.mxu0 0.0
  %775 = vmatprep.subr.mxu0 0.0
  %776 = vmatpush1.msra.mxu0 0.0
  %777 = vmatprep.subr.mxu0 0.0
  %778 = vmatpush1.msra.mxu0 0.0
  %779 = vmatprep.subr.mxu0 0.0
  %780 = vmatpush1.msra.mxu0 0.0
  %781 = vmatprep.subr.mxu0 0.0
  %782 = vmatpush1.msra.mxu0 0.0
  %783 = vmatprep.subr.mxu0 0.0
  %784 = vmatpush1.msra.mxu0 0.0
  %785 = vmatprep.subr.mxu0 0.0
  %786 = vmatpush1.msra.mxu0 0.0
  %787 = vmatprep.subr.mxu0 0.0
  %788 = vmatpush1.msra.mxu0 0.0
  %789 = vmatprep.mubr.f32.mxu0 0.0
  %790 = vmatmul.mubr.f32.gmra.mrb[0].mxu0 %v720
  %v791 = vpop.f32.mrb[0].mxu0
  %v792 = vadd.f32 %v716, %v791
  %v793 = vpop.f32.mrb[0].mxu0
  %794 = vmatprep.mubr.f32.mxu0 0.0
  %795 = vmatmul.mubr.f32.gmra.mrb[0].mxu0 %v723
  %v796 = vpop.f32.mrb[0].mxu0
  %v797 = vadd.f32 %v716, %v796
  %v798 = vpop.f32.mrb[0].mxu0
  %799 = vdwg.mxu0
  %v800 = vmax.f32 %v792, 0.0
  %v801 = vmax.f32 %v797, 0.0
  %802 = vst.msk [vmem:[%s7] sm:$0xff] %vm718, %v800
  %803 = vst.msk [vmem:[%s7 + $0x8] sm:$0xff] %vm718, %v801
  // Predicated region
  $region30: #{_lambda_.11} parent=0 // pred_check
    _
  $region31: #{_lambda_.11} parent=0 // pred_check_branch
    %805 = sbr.rel (0) target = $region33
  $region32: #{_lambda_.11} parent=0 // pred_region
    _
  $region33: #{_lambda_.11} parent=0 // pred_fallthru
    _
  // Predicated region
  $region34: #{_lambda_.11} parent=0 // pred_check
    _
  $region35: #{_lambda_.11} parent=0 // pred_check_branch
    %807 = sbr.rel (0) target = $region37
  $region36: #{_lambda_.11} parent=0 // pred_region
    _
  $region37: #{_lambda_.11} parent=0 // pred_fallthru
    _

// kernel: _lambda_.9
$region0: #{_lambda_.9}
  #allocation0 [shape = 'u32[]', space=smem, size = 0x4, offset = 0x4, fixed_abs, tag = 'smem constant byte address 0x4 - core index']
  #allocation1 [shape = 'u32[144,128]{1,0:T(1,128)}', space=vmem, size = 0x12000, scoped, tag = 'internal scratch']
  %s0 = inlined_call_operand.vmem [shape: f32[2,16,32], index: 0, kind: input, shape index: {}]
  %s1 = inlined_call_operand.vmem [shape: f32[4,32,32], index: 1, kind: input, shape index: {}]
  %s2 = inlined_call_operand.vmem [shape: f32[4,1,32], index: 2, kind: input, shape index: {}]
  %s3 = inlined_call_operand.vmem [shape: f32[2,1,32], index: 3, kind: input, shape index: {}]
  %s4 = inlined_call_operand.vmem [shape: f32[2,1,32], index: 4, kind: input, shape index: {}]
  %s5 = inlined_call_operand.vmem [shape: f32[32,64], index: 5, kind: input, shape index: {}]
  %s6 = inlined_call_operand.vmem [shape: f32[1,64], index: 6, kind: input, shape index: {}]
  %s7 = inlined_call_operand.vmem [shape: f32[64,32], index: 7, kind: input, shape index: {}]
  %s8 = inlined_call_operand.vmem [shape: f32[1,32], index: 8, kind: input, shape index: {}]
  %s9 = inlined_call_operand.vmem [shape: f32[2,16,32], index: 9, kind: output, shape index: {}]
  %s10 = sld [smem:[#allocation0]]
  $region69: #{_lambda_.9} parent=0
    _
  %s12 = ssub.s32 1, %s10
  %s13 = scalar_select 0, %s12, %s10
  loop: start=0, step=1, limit=4
  $region2: #{_lambda_.9} parent=0 // loop_pre_header
    _
  $region3: #{_lambda_.9} parent=0 // loop_header
    %s15 = sphi 0, %s19
    %p16 = scmp.ge.s32.totalorder %s15, 4
    %s25 = sphi 0, %s27
    %s28 = sphi 0, %s25
    %s29 = sphi 0, %s28
    %s45 = sphi 0, %s29
    %s49 = sphi 0, %s49
    %s51 = sphi 0, %s49
    %s52 = sphi 0, %s51
    %s66 = sphi 0, %s52
    %s70 = sphi 0, %s70
    %s72 = sphi 0, %s70
    %s73 = sphi 0, %s72
    %s87 = sphi 0, %s73
    %s91 = sphi 0, %s91
    %s93 = sphi 0, %s91
    %s94 = sphi 0, %s93
    %s108 = sphi 0, %s94
    %s112 = sphi 0, %s112
    %s114 = sphi 0, %s112
    %s115 = sphi 0, %s114
    %s129 = sphi 0, %s115
    %s133 = sphi 0, %s133
    %s135 = sphi 0, %s133
    %s136 = sphi 0, %s135
    %s150 = sphi 0, %s136
    %s154 = sphi 0, %s154
    %s156 = sphi 0, %s154
    %s157 = sphi 0, %s156
    %s171 = sphi 0, %s157
    %s175 = sphi 0, %s175
    %s177 = sphi 0, %s175
    %s178 = sphi 0, %s177
    %s192 = sphi 0, %s178
    %s196 = sphi 0, %s196
    %s198 = sphi 0, %s196
    %s199 = sphi 0, %s198
    %s213 = sphi 0, %s199
    %s219 = sphi 0, %s221
    %s222 = sphi 0, %s219
    %s223 = sphi 0, %s222
    %s239 = sphi 0, %s223
  $region4: #{_lambda_.9} parent=0 // loop_header_branch
    %18 = sbr.rel (%p16) target = $region8
  $region5: #{_lambda_.9} parent=0 // loop_body
    %s20 = ssub.s32 %s15, 1
    %s21 = ssub.s32 %s15, 2
    %s22 = sadd.s32 %s15, 1
    %s23 = ssub.s32 %s15, %s22
    %p24 = scmp.eq.s32.totalorder %s23, 0
    %s26 = sadd.s32 %s25, 1
    %s27 = scalar_select %p24, %s25, %s26
    %p30 = pneg %p24
    %p31 = scmp.eq.s32.totalorder %s15, 1
    %p32 = por %p30, %p31
    %p33 = scmp.ne.s32.totalorder %s25, %s28
    %p34 = scmp.eq.s32.totalorder %s15, 0
    %p35 = por %p33, %p34
    %p36 = scmp.ne.s32.totalorder %s25, %s28
    %p37 = scmp.eq.s32.totalorder %s20, 1
    %p38 = por %p36, %p37
    %p39 = scmp.ne.s32.totalorder %s28, %s29
    %p40 = scmp.eq.s32.totalorder %s20, 0
    %p41 = por %p39, %p40
    %p42 = scmp.ne.s32.totalorder %s28, %s29
    %p43 = scmp.eq.s32.totalorder %s21, 1
    %p44 = por %p42, %p43
    %p46 = scmp.ne.s32.totalorder %s29, %s45
    %p47 = scmp.eq.s32.totalorder %s21, 0
    %p48 = por %p46, %p47
    %s50 = sadd.s32 %s49, 1
    %p53 = scmp.eq.s32.totalorder %s15, 1
    %p54 = scmp.ne.s32.totalorder %s49, %s51
    %p55 = scmp.eq.s32.totalorder %s15, 0
    %p56 = por %p54, %p55
    %p57 = scmp.ne.s32.totalorder %s49, %s51
    %p58 = scmp.eq.s32.totalorder %s20, 1
    %p59 = por %p57, %p58
    %p60 = scmp.ne.s32.totalorder %s51, %s52
    %p61 = scmp.eq.s32.totalorder %s20, 0
    %p62 = por %p60, %p61
    %p63 = scmp.ne.s32.totalorder %s51, %s52
    %p64 = scmp.eq.s32.totalorder %s21, 1
    %p65 = por %p63, %p64
    %p67 = scmp.ne.s32.totalorder %s52, %s66
    %p68 = scmp.eq.s32.totalorder %s21, 0
    %p69 = por %p67, %p68
    %s71 = sadd.s32 %s70, 1
    %p74 = scmp.eq.s32.totalorder %s15, 1
    %p75 = scmp.ne.s32.totalorder %s70, %s72
    %p76 = scmp.eq.s32.totalorder %s15, 0
    %p77 = por %p75, %p76
    %p78 = scmp.ne.s32.totalorder %s70, %s72
    %p79 = scmp.eq.s32.totalorder %s20, 1
    %p80 = por %p78, %p79
    %p81 = scmp.ne.s32.totalorder %s72, %s73
    %p82 = scmp.eq.s32.totalorder %s20, 0
    %p83 = por %p81, %p82
    %p84 = scmp.ne.s32.totalorder %s72, %s73
    %p85 = scmp.eq.s32.totalorder %s21, 1
    %p86 = por %p84, %p85
    %p88 = scmp.ne.s32.totalorder %s73, %s87
    %p89 = scmp.eq.s32.totalorder %s21, 0
    %p90 = por %p88, %p89
    %s92 = sadd.s32 %s91, 1
    %p95 = scmp.eq.s32.totalorder %s15, 1
    %p96 = scmp.ne.s32.totalorder %s91, %s93
    %p97 = scmp.eq.s32.totalorder %s15, 0
    %p98 = por %p96, %p97
    %p99 = scmp.ne.s32.totalorder %s91, %s93
    %p100 = scmp.eq.s32.totalorder %s20, 1
    %p101 = por %p99, %p100
    %p102 = scmp.ne.s32.totalorder %s93, %s94
    %p103 = scmp.eq.s32.totalorder %s20, 0
    %p104 = por %p102, %p103
    %p105 = scmp.ne.s32.totalorder %s93, %s94
    %p106 = scmp.eq.s32.totalorder %s21, 1
    %p107 = por %p105, %p106
    %p109 = scmp.ne.s32.totalorder %s94, %s108
    %p110 = scmp.eq.s32.totalorder %s21, 0
    %p111 = por %p109, %p110
    %s113 = sadd.s32 %s112, 1
    %p116 = scmp.eq.s32.totalorder %s15, 1
    %p117 = scmp.ne.s32.totalorder %s112, %s114
    %p118 = scmp.eq.s32.totalorder %s15, 0
    %p119 = por %p117, %p118
    %p120 = scmp.ne.s32.totalorder %s112, %s114
    %p121 = scmp.eq.s32.totalorder %s20, 1
    %p122 = por %p120, %p121
    %p123 = scmp.ne.s32.totalorder %s114, %s115
    %p124 = scmp.eq.s32.totalorder %s20, 0
    %p125 = por %p123, %p124
    %p126 = scmp.ne.s32.totalorder %s114, %s115
    %p127 = scmp.eq.s32.totalorder %s21, 1
    %p128 = por %p126, %p127
    %p130 = scmp.ne.s32.totalorder %s115, %s129
    %p131 = scmp.eq.s32.totalorder %s21, 0
    %p132 = por %p130, %p131
    %s134 = sadd.s32 %s133, 1
    %p137 = scmp.eq.s32.totalorder %s15, 1
    %p138 = scmp.ne.s32.totalorder %s133, %s135
    %p139 = scmp.eq.s32.totalorder %s15, 0
    %p140 = por %p138, %p139
    %p141 = scmp.ne.s32.totalorder %s133, %s135
    %p142 = scmp.eq.s32.totalorder %s20, 1
    %p143 = por %p141, %p142
    %p144 = scmp.ne.s32.totalorder %s135, %s136
    %p145 = scmp.eq.s32.totalorder %s20, 0
    %p146 = por %p144, %p145
    %p147 = scmp.ne.s32.totalorder %s135, %s136
    %p148 = scmp.eq.s32.totalorder %s21, 1
    %p149 = por %p147, %p148
    %p151 = scmp.ne.s32.totalorder %s136, %s150
    %p152 = scmp.eq.s32.totalorder %s21, 0
    %p153 = por %p151, %p152
    %s155 = sadd.s32 %s154, 1
    %p158 = scmp.eq.s32.totalorder %s15, 1
    %p159 = scmp.ne.s32.totalorder %s154, %s156
    %p160 = scmp.eq.s32.totalorder %s15, 0
    %p161 = por %p159, %p160
    %p162 = scmp.ne.s32.totalorder %s154, %s156
    %p163 = scmp.eq.s32.totalorder %s20, 1
    %p164 = por %p162, %p163
    %p165 = scmp.ne.s32.totalorder %s156, %s157
    %p166 = scmp.eq.s32.totalorder %s20, 0
    %p167 = por %p165, %p166
    %p168 = scmp.ne.s32.totalorder %s156, %s157
    %p169 = scmp.eq.s32.totalorder %s21, 1
    %p170 = por %p168, %p169
    %p172 = scmp.ne.s32.totalorder %s157, %s171
    %p173 = scmp.eq.s32.totalorder %s21, 0
    %p174 = por %p172, %p173
    %s176 = sadd.s32 %s175, 1
    %p179 = scmp.eq.s32.totalorder %s15, 1
    %p180 = scmp.ne.s32.totalorder %s175, %s177
    %p181 = scmp.eq.s32.totalorder %s15, 0
    %p182 = por %p180, %p181
    %p183 = scmp.ne.s32.totalorder %s175, %s177
    %p184 = scmp.eq.s32.totalorder %s20, 1
    %p185 = por %p183, %p184
    %p186 = scmp.ne.s32.totalorder %s177, %s178
    %p187 = scmp.eq.s32.totalorder %s20, 0
    %p188 = por %p186, %p187
    %p189 = scmp.ne.s32.totalorder %s177, %s178
    %p190 = scmp.eq.s32.totalorder %s21, 1
    %p191 = por %p189, %p190
    %p193 = scmp.ne.s32.totalorder %s178, %s192
    %p194 = scmp.eq.s32.totalorder %s21, 0
    %p195 = por %p193, %p194
    %s197 = sadd.s32 %s196, 1
    %p200 = scmp.eq.s32.totalorder %s15, 1
    %p201 = scmp.ne.s32.totalorder %s196, %s198
    %p202 = scmp.eq.s32.totalorder %s15, 0
    %p203 = por %p201, %p202
    %p204 = scmp.ne.s32.totalorder %s196, %s198
    %p205 = scmp.eq.s32.totalorder %s20, 1
    %p206 = por %p204, %p205
    %p207 = scmp.ne.s32.totalorder %s198, %s199
    %p208 = scmp.eq.s32.totalorder %s20, 0
    %p209 = por %p207, %p208
    %p210 = scmp.ne.s32.totalorder %s198, %s199
    %p211 = scmp.eq.s32.totalorder %s21, 1
    %p212 = por %p210, %p211
    %p214 = scmp.ne.s32.totalorder %s199, %s213
    %p215 = scmp.eq.s32.totalorder %s21, 0
    %p216 = por %p214, %p215
    %s217 = ssub.s32 %s15, %s22
    %p218 = scmp.eq.s32.totalorder %s217, 0
    %s220 = sadd.s32 %s219, 1
    %s221 = scalar_select %p218, %s219, %s220
    %p224 = pneg %p218
    %p225 = scmp.eq.s32.totalorder %s15, 1
    %p226 = por %p224, %p225
    %p227 = scmp.ne.s32.totalorder %s219, %s222
    %p228 = scmp.eq.s32.totalorder %s15, 0
    %p229 = por %p227, %p228
    %p230 = scmp.ne.s32.totalorder %s219, %s222
    %p231 = scmp.eq.s32.totalorder %s20, 1
    %p232 = por %p230, %p231
    %p233 = scmp.ne.s32.totalorder %s222, %s223
    %p234 = scmp.eq.s32.totalorder %s20, 0
    %p235 = por %p233, %p234
    %p236 = scmp.ne.s32.totalorder %s222, %s223
    %p237 = scmp.eq.s32.totalorder %s21, 1
    %p238 = por %p236, %p237
    %p240 = scmp.ne.s32.totalorder %s223, %s239
    %p241 = scmp.eq.s32.totalorder %s21, 0
    %p242 = por %p240, %p241
    %p243 = scmp.le.s32.totalorder 1, %s15
    %p244 = scmp.lt.s32.totalorder %s15, 3
    %p245 = pnand %p243, %p244
    %p246 = pneg %p245
    // Predicated region
    $region9: #{_lambda_.9} parent=5 // pred_check
      _
    $region10: #{_lambda_.9} parent=5 // pred_check_branch
      %248 = sbr.rel (%p245) target = $region12
    $region11: #{_lambda_.9} parent=5 // pred_region
      %s249 = ssub.s32 %s15, 1
      // Predicated region
      $region13: #{_lambda_.9} parent=11 // pred_check
        %p250 = pneg %p62
      $region14: #{_lambda_.9} parent=11 // pred_check_branch
        %252 = sbr.rel (%p250) target = $region16
      $region15: #{_lambda_.9} parent=11 // pred_region
        _
      $region16: #{_lambda_.9} parent=11 // pred_fallthru
        _
      // Predicated region
      $region17: #{_lambda_.9} parent=11 // pred_check
        %p253 = pneg %p83
      $region18: #{_lambda_.9} parent=11 // pred_check_branch
        %255 = sbr.rel (%p253) target = $region20
      $region19: #{_lambda_.9} parent=11 // pred_region
        _
      $region20: #{_lambda_.9} parent=11 // pred_fallthru
        _
      // Predicated region
      $region21: #{_lambda_.9} parent=11 // pred_check
        %p256 = pneg %p104
      $region22: #{_lambda_.9} parent=11 // pred_check_branch
        %258 = sbr.rel (%p256) target = $region24
      $region23: #{_lambda_.9} parent=11 // pred_region
        _
      $region24: #{_lambda_.9} parent=11 // pred_fallthru
        _
      // Predicated region
      $region25: #{_lambda_.9} parent=11 // pred_check
        %p259 = pneg %p125
      $region26: #{_lambda_.9} parent=11 // pred_check_branch
        %261 = sbr.rel (%p259) target = $region28
      $region27: #{_lambda_.9} parent=11 // pred_region
        _
      $region28: #{_lambda_.9} parent=11 // pred_fallthru
        _
      // Predicated region
      $region29: #{_lambda_.9} parent=11 // pred_check
        %p262 = pneg %p146
      $region30: #{_lambda_.9} parent=11 // pred_check_branch
        %264 = sbr.rel (%p262) target = $region32
      $region31: #{_lambda_.9} parent=11 // pred_region
        _
      $region32: #{_lambda_.9} parent=11 // pred_fallthru
        _
      // Predicated region
      $region33: #{_lambda_.9} parent=11 // pred_check
        %p265 = pneg %p167
      $region34: #{_lambda_.9} parent=11 // pred_check_branch
        %267 = sbr.rel (%p265) target = $region36
      $region35: #{_lambda_.9} parent=11 // pred_region
        _
      $region36: #{_lambda_.9} parent=11 // pred_fallthru
        _
      // Predicated region
      $region37: #{_lambda_.9} parent=11 // pred_check
        %p268 = pneg %p188
      $region38: #{_lambda_.9} parent=11 // pred_check_branch
        %270 = sbr.rel (%p268) target = $region40
      $region39: #{_lambda_.9} parent=11 // pred_region
        _
      $region40: #{_lambda_.9} parent=11 // pred_fallthru
        _
      // Predicated region
      $region41: #{_lambda_.9} parent=11 // pred_check
        %p271 = pneg %p209
      $region42: #{_lambda_.9} parent=11 // pred_check_branch
        %273 = sbr.rel (%p271) target = $region44
      $region43: #{_lambda_.9} parent=11 // pred_region
        _
      $region44: #{_lambda_.9} parent=11 // pred_fallthru
        _
    $region12: #{_lambda_.9} parent=5 // pred_fallthru
      _
    %p274 = scmp.lt.s32.totalorder %s15, 2
    // Predicated region
    $region45: #{_lambda_.9} parent=5 // pred_check
      %p275 = pneg %p274
    $region46: #{_lambda_.9} parent=5 // pred_check_branch
      %277 = sbr.rel (%p275) target = $region48
    $region47: #{_lambda_.9} parent=5 // pred_region
      // Predicated region
      $region49: #{_lambda_.9} parent=47 // pred_check
        %p278 = pneg %p35
      $region50: #{_lambda_.9} parent=47 // pred_check_branch
        %280 = sbr.rel (%p278) target = $region52
      $region51: #{_lambda_.9} parent=47 // pred_region
        %p281 = scmp.lt.s32.totalorder %s15, 1
        %s282 = scalar_select %p281, %s15, 1
        %s283 = smul.addr %s282, 2
        %s284 = smul.addr %s283, 8
        %s285 = scalar_lea.vmem %s0, %s284
      $region52: #{_lambda_.9} parent=47 // pred_fallthru
        _
    $region48: #{_lambda_.9} parent=5 // pred_fallthru
      _
    %p286 = scmp.le.s32.totalorder 1, %s15
    %p287 = scmp.lt.s32.totalorder %s15, 3
    %p288 = pnand %p286, %p287
    %p289 = pneg %p288
    // Predicated region
    $region53: #{_lambda_.9} parent=5 // pred_check
      _
    $region54: #{_lambda_.9} parent=5 // pred_check_branch
      %291 = sbr.rel (%p288) target = $region56
    $region55: #{_lambda_.9} parent=5 // pred_region
      %s292 = ssub.s32 %s15, 1
      %p293 = scmp.lt.s32.totalorder %s20, 1
      %s294 = scalar_select %p293, %s20, 1
      %s295 = smul.addr %s294, 2
      %s296 = smul.addr %s295, 8
      %s297 = scalar_lea.vmem %s0, %s296
      %p298 = pneg %p41
      %p299 = pneg %p38
      %p300 = pneg %p62
      %p301 = pneg %p59
      %p302 = pneg %p83
      %p303 = pneg %p80
      %p304 = pneg %p104
      %p305 = pneg %p101
      %p306 = pneg %p125
      %p307 = pneg %p122
      %p308 = pneg %p146
      %p309 = pneg %p143
      %p310 = pneg %p167
      %p311 = pneg %p164
      %p312 = pneg %p188
      %p313 = pneg %p185
      %p314 = pneg %p209
      %p315 = pneg %p206
      %p316 = pneg %p235
      %p317 = pneg %p232
      %p318 = scmp.lt.s32.totalorder %s20, 1
      %s319 = scalar_select %p318, %s20, 1
      %s320 = smul.addr %s319, 2
      %s321 = smul.addr %s320, 8
      %s322 = scalar_lea.vmem %s9, %s321
      %p323 = scmp.lt.s32.totalorder %s20, 1
      %s324 = scalar_select %p323, %s20, 1
      %s325 = smul.addr %s324, 2
      %s326 = smul.addr %s325, 8
      %s327 = scalar_lea.vmem %s0, %s326
      %p328 = scmp.lt.s32.totalorder %s20, 1
      %s329 = scalar_select %p328, %s20, 1
      %s330 = smul.addr %s329, 2
      %s331 = smul.addr %s330, 8
      %s332 = scalar_lea.vmem %s9, %s331
      %v333 = vld [vmem:[%s327] sm:$0xff]
      %v334 = vld [vmem:[%s327 + $0x8] sm:$0xff]
      %v335 = vld [vmem:[%s1] sm:$0xff]
      %v336 = vld [vmem:[%s1 + $0x8] sm:$0xff]
      %v337 = vld [vmem:[%s1 + $0x10] sm:$0xff]
      %v338 = vld [vmem:[%s1 + $0x18] sm:$0xff]
      %v339 = vld [vmem:[%s2] sm:$0x1]
      %v341 = vlaneseq
      %v342 = vshrl.u32 %v341, 7
      %v343 = vsub.s32 0, %v342
      %v344 = vrot.slane %v339, %v343
      %vm346 = vcmask 261120
      %v348 = vsel %vm346, %v333, 0
      %v351 = vsel %vm346, %v334, 0
      %353 = vmatprep.subr.mxu0 0.0
      %354 = vmatpush1.msra.mxu0 %v335
      %355 = vmatprep.subr.mxu0 0.0
      %356 = vmatpush1.msra.mxu0 %v336
      %357 = vmatprep.subr.mxu0 0.0
      %358 = vmatpush1.msra.mxu0 %v337
      %359 = vmatprep.subr.mxu0 0.0
      %360 = vmatpush1.msra.mxu0 %v338
      %361 = vmatprep.subr.mxu0 0.0
      %362 = vmatpush1.msra.mxu0 0.0
      %363 = vmatprep.subr.mxu0 0.0
      %364 = vmatpush1.msra.mxu0 0.0
      %365 = vmatprep.subr.mxu0 0.0
      %366 = vmatpush1.msra.mxu0 0.0
      %367 = vmatprep.subr.mxu0 0.0
      %368 = vmatpush1.msra.mxu0 0.0
      %369 = vmatprep.subr.mxu0 0.0
      %370 = vmatpush1.msra.mxu0 0.0
      %371 = vmatprep.subr.mxu0 0.0
      %372 = vmatpush1.msra.mxu0 0.0
      %373 = vmatprep.subr.mxu0 0.0
      %374 = vmatpush1.msra.mxu0 0.0
      %375 = vmatprep.subr.mxu0 0.0
      %376 = vmatpush1.msra.mxu0 0.0
      %377 = vmatprep.subr.mxu0 0.0
      %378 = vmatpush1.msra.mxu0 0.0
      %379 = vmatprep.subr.mxu0 0.0
      %380 = vmatpush1.msra.mxu0 0.0
      %381 = vmatprep.subr.mxu0 0.0
      %382 = vmatpush1.msra.mxu0 0.0
      %383 = vmatprep.subr.mxu0 0.0
      %384 = vmatpush1.msra.mxu0 0.0
      %385 = vmatprep.subr.mxu0 0.0
      %386 = vmatpush1.msra.mxu0 0.0
      %387 = vmatprep.subr.mxu0 0.0
      %388 = vmatpush1.msra.mxu0 0.0
      %389 = vmatprep.subr.mxu0 0.0
      %390 = vmatpush1.msra.mxu0 0.0
      %391 = vmatprep.subr.mxu0 0.0
      %392 = vmatpush1.msra.mxu0 0.0
      %393 = vmatprep.subr.mxu0 0.0
      %394 = vmatpush1.msra.mxu0 0.0
      %395 = vmatprep.subr.mxu0 0.0
      %396 = vmatpush1.msra.mxu0 0.0
      %397 = vmatprep.subr.mxu0 0.0
      %398 = vmatpush1.msra.mxu0 0.0
      %399 = vmatprep.subr.mxu0 0.0
      %400 = vmatpush1.msra.mxu0 0.0
      %401 = vmatprep.subr.mxu0 0.0
      %402 = vmatpush1.msra.mxu0 0.0
      %403 = vmatprep.subr.mxu0 0.0
      %404 = vmatpush1.msra.mxu0 0.0
      %405 = vmatprep.subr.mxu0 0.0
      %406 = vmatpush1.msra.mxu0 0.0
      %407 = vmatprep.subr.mxu0 0.0
      %408 = vmatpush1.msra.mxu0 0.0
      %409 = vmatprep.subr.mxu0 0.0
      %410 = vmatpush1.msra.mxu0 0.0
      %411 = vmatprep.subr.mxu0 0.0
      %412 = vmatpush1.msra.mxu0 0.0
      %413 = vmatprep.subr.mxu0 0.0
      %414 = vmatpush1.msra.mxu0 0.0
      %415 = vmatprep.subr.mxu0 0.0
      %416 = vmatpush1.msra.mxu0 0.0
      %417 = vmatprep.mubr.f32.mxu0 0.0
      %418 = vmatmul.mubr.f32.gmra.mrb[0].mxu0 %v348
      %v419 = vpop.f32.mrb[0].mxu0
      %v420 = vadd.f32 %v344, %v419
      %v421 = vpop.f32.mrb[0].mxu0
      %422 = vmatprep.mubr.f32.mxu0 0.0
      %423 = vmatmul.mubr.f32.gmra.mrb[0].mxu0 %v351
      %v424 = vpop.f32.mrb[0].mxu0
      %v425 = vadd.f32 %v344, %v424
      %v426 = vpop.f32.mrb[0].mxu0
      %427 = vdwg.mxu0
      %s428 = scalar_lea.vmem %s1, 32
      %v429 = vld [vmem:[%s428] sm:$0xff]
      %v430 = vld [vmem:[%s428 + $0x8] sm:$0xff]
      %v431 = vld [vmem:[%s428 + $0x10] sm:$0xff]
      %v432 = vld [vmem:[%s428 + $0x18] sm:$0xff]
      %s433 = scalar_lea.vmem %s2, 1
      %v434 = vld [vmem:[%s433] sm:$0x1]
      %v436 = vlaneseq
      %v437 = vshrl.u32 %v436, 7
      %v438 = vsub.s32 0, %v437
      %v439 = vrot.slane %v434, %v438
      %441 = vmatprep.subr.mxu0 0.0
      %442 = vmatpush1.msra.mxu0 %v429
      %443 = vmatprep.subr.mxu0 0.0
      %444 = vmatpush1.msra.mxu0 %v430
      %445 = vmatprep.subr.mxu0 0.0
      %446 = vmatpush1.msra.mxu0 %v431
      %447 = vmatprep.subr.mxu0 0.0
      %448 = vmatpush1.msra.mxu0 %v432
      %449 = vmatprep.subr.mxu0 0.0
      %450 = vmatpush1.msra.mxu0 0.0
      %451 = vmatprep.subr.mxu0 0.0
      %452 = vmatpush1.msra.mxu0 0.0
      %453 = vmatprep.subr.mxu0 0.0
      %454 = vmatpush1.msra.mxu0 0.0
      %455 = vmatprep.subr.mxu0 0.0
      %456 = vmatpush1.msra.mxu0 0.0
      %457 = vmatprep.subr.mxu0 0.0
      %458 = vmatpush1.msra.mxu0 0.0
      %459 = vmatprep.subr.mxu0 0.0
      %460 = vmatpush1.msra.mxu0 0.0
      %461 = vmatprep.subr.mxu0 0.0
      %462 = vmatpush1.msra.mxu0 0.0
      %463 = vmatprep.subr.mxu0 0.0
      %464 = vmatpush1.msra.mxu0 0.0
      %465 = vmatprep.subr.mxu0 0.0
      %466 = vmatpush1.msra.mxu0 0.0
      %467 = vmatprep.subr.mxu0 0.0
      %468 = vmatpush1.msra.mxu0 0.0
      %469 = vmatprep.subr.mxu0 0.0
      %470 = vmatpush1.msra.mxu0 0.0
      %471 = vmatprep.subr.mxu0 0.0
      %472 = vmatpush1.msra.mxu0 0.0
      %473 = vmatprep.subr.mxu0 0.0
      %474 = vmatpush1.msra.mxu0 0.0
      %475 = vmatprep.subr.mxu0 0.0
      %476 = vmatpush1.msra.mxu0 0.0
      %477 = vmatprep.subr.mxu0 0.0
      %478 = vmatpush1.msra.mxu0 0.0
      %479 = vmatprep.subr.mxu0 0.0
      %480 = vmatpush1.msra.mxu0 0.0
      %481 = vmatprep.subr.mxu0 0.0
      %482 = vmatpush1.msra.mxu0 0.0
      %483 = vmatprep.subr.mxu0 0.0
      %484 = vmatpush1.msra.mxu0 0.0
      %485 = vmatprep.subr.mxu0 0.0
      %486 = vmatpush1.msra.mxu0 0.0
      %487 = vmatprep.subr.mxu0 0.0
      %488 = vmatpush1.msra.mxu0 0.0
      %489 = vmatprep.subr.mxu0 0.0
      %490 = vmatpush1.msra.mxu0 0.0
      %491 = vmatprep.subr.mxu0 0.0
      %492 = vmatpush1.msra.mxu0 0.0
      %493 = vmatprep.subr.mxu0 0.0
      %494 = vmatpush1.msra.mxu0 0.0
      %495 = vmatprep.subr.mxu0 0.0
      %496 = vmatpush1.msra.mxu0 0.0
      %497 = vmatprep.subr.mxu0 0.0
      %498 = vmatpush1.msra.mxu0 0.0
      %499 = vmatprep.subr.mxu0 0.0
      %500 = vmatpush1.msra.mxu0 0.0
      %501 = vmatprep.subr.mxu0 0.0
      %502 = vmatpush1.msra.mxu0 0.0
      %503 = vmatprep.subr.mxu0 0.0
      %504 = vmatpush1.msra.mxu0 0.0
      %505 = vmatprep.mubr.f32.mxu0 0.0
      %506 = vmatmul.mubr.f32.gmra.mrb[0].mxu0 %v348
      %v507 = vpop.f32.mrb[0].mxu0
      %v508 = vadd.f32 %v439, %v507
      %v509 = vpop.f32.mrb[0].mxu0
      %510 = vmatprep.mubr.f32.mxu0 0.0
      %511 = vmatmul.mubr.f32.gmra.mrb[0].mxu0 %v351
      %v512 = vpop.f32.mrb[0].mxu0
      %v513 = vadd.f32 %v439, %v512
      %v514 = vpop.f32.mrb[0].mxu0
      %515 = vdwg.mxu0
      %s516 = scalar_lea.vmem %s1, 64
      %v517 = vld [vmem:[%s516] sm:$0xff]
      %v518 = vld [vmem:[%s516 + $0x8] sm:$0xff]
      %v519 = vld [vmem:[%s516 + $0x10] sm:$0xff]
      %v520 = vld [vmem:[%s516 + $0x18] sm:$0xff]
      %s521 = scalar_lea.vmem %s2, 2
      %v522 = vld [vmem:[%s521] sm:$0x1]
      %v524 = vlaneseq
      %v525 = vshrl.u32 %v524, 7
      %v526 = vsub.s32 0, %v525
      %v527 = vrot.slane %v522, %v526
      %529 = vmatprep.subr.mxu0 0.0
      %530 = vmatpush1.msra.mxu0 %v517
      %531 = vmatprep.subr.mxu0 0.0
      %532 = vmatpush1.msra.mxu0 %v518
      %533 = vmatprep.subr.mxu0 0.0
      %534 = vmatpush1.msra.mxu0 %v519
      %535 = vmatprep.subr.mxu0 0.0
      %536 = vmatpush1.msra.mxu0 %v520
      %537 = vmatprep.subr.mxu0 0.0
      %538 = vmatpush1.msra.mxu0 0.0
      %539 = vmatprep.subr.mxu0 0.0
      %540 = vmatpush1.msra.mxu0 0.0
      %541 = vmatprep.subr.mxu0 0.0
      %542 = vmatpush1.msra.mxu0 0.0
      %543 = vmatprep.subr.mxu0 0.0
      %544 = vmatpush1.msra.mxu0 0.0
      %545 = vmatprep.subr.mxu0 0.0
      %546 = vmatpush1.msra.mxu0 0.0
      %547 = vmatprep.subr.mxu0 0.0
      %548 = vmatpush1.msra.mxu0 0.0
      %549 = vmatprep.subr.mxu0 0.0
      %550 = vmatpush1.msra.mxu0 0.0
      %551 = vmatprep.subr.mxu0 0.0
      %552 = vmatpush1.msra.mxu0 0.0
      %553 = vmatprep.subr.mxu0 0.0
      %554 = vmatpush1.msra.mxu0 0.0
      %555 = vmatprep.subr.mxu0 0.0
      %556 = vmatpush1.msra.mxu0 0.0
      %557 = vmatprep.subr.mxu0 0.0
      %558 = vmatpush1.msra.mxu0 0.0
      %559 = vmatprep.subr.mxu0 0.0
      %560 = vmatpush1.msra.mxu0 0.0
      %561 = vmatprep.subr.mxu0 0.0
      %562 = vmatpush1.msra.mxu0 0.0
      %563 = vmatprep.subr.mxu0 0.0
      %564 = vmatpush1.msra.mxu0 0.0
      %565 = vmatprep.subr.mxu0 0.0
      %566 = vmatpush1.msra.mxu0 0.0
      %567 = vmatprep.subr.mxu0 0.0
      %568 = vmatpush1.msra.mxu0 0.0
      %569 = vmatprep.subr.mxu0 0.0
      %570 = vmatpush1.msra.mxu0 0.0
      %571 = vmatprep.subr.mxu0 0.0
      %572 = vmatpush1.msra.mxu0 0.0
      %573 = vmatprep.subr.mxu0 0.0
      %574 = vmatpush1.msra.mxu0 0.0
      %575 = vmatprep.subr.mxu0 0.0
      %576 = vmatpush1.msra.mxu0 0.0
      %577 = vmatprep.subr.mxu0 0.0
      %578 = vmatpush1.msra.mxu0 0.0
      %579 = vmatprep.subr.mxu0 0.0
      %580 = vmatpush1.msra.mxu0 0.0
      %581 = vmatprep.subr.mxu0 0.0
      %582 = vmatpush1.msra.mxu0 0.0
      %583 = vmatprep.subr.mxu0 0.0
      %584 = vmatpush1.msra.mxu0 0.0
      %585 = vmatprep.subr.mxu0 0.0
      %586 = vmatpush1.msra.mxu0 0.0
      %587 = vmatprep.subr.mxu0 0.0
      %588 = vmatpush1.msra.mxu0 0.0
      %589 = vmatprep.subr.mxu0 0.0
      %590 = vmatpush1.msra.mxu0 0.0
      %591 = vmatprep.subr.mxu0 0.0
      %592 = vmatpush1.msra.mxu0 0.0
      %593 = vmatprep.mubr.f32.mxu0 0.0
      %594 = vmatmul.mubr.f32.gmra.mrb[0].mxu0 %v348
      %v595 = vpop.f32.mrb[0].mxu0
      %v596 = vadd.f32 %v527, %v595
      %v597 = vpop.f32.mrb[0].mxu0
      %598 = vmatprep.mubr.f32.mxu0 0.0
      %599 = vmatmul.mubr.f32.gmra.mrb[0].mxu0 %v351
      %v600 = vpop.f32.mrb[0].mxu0
      %v601 = vadd.f32 %v527, %v600
      %v602 = vpop.f32.mrb[0].mxu0
      %603 = vdwg.mxu0
      %v605 = vsel %vm346, %v420, 0
      %v608 = vsel %vm346, %v425, 0
      %v611 = vsel %vm346, %v508, 0
      %v614 = vsel %vm346, %v513, 0
      %616 = vmatprep.subr.mxu0 0.0
      %617 = vmatpush1.xpose.msra.mxu0 %v611
      %618 = vmatprep.subr.mxu0 0.0
      %619 = vmatpush1.xpose.msra.mxu0 %v614
      %620 = vmatprep.subr.mxu0 0.0
      %621 = vmatpush1.xpose.msra.mxu0 0.0
      %622 = vmatprep.subr.mxu0 0.0
      %623 = vmatpush1.xpose.msra.mxu0 0.0
      %624 = vmatprep.subr.mxu0 0.0
      %625 = vmatpush1.xpose.msra.mxu0 0.0
      %626 = vmatprep.subr.mxu0 0.0
      %627 = vmatpush1.xpose.msra.mxu0 0.0
      %628 = vmatprep.subr.mxu0 0.0
      %629 = vmatpush1.xpose.msra.mxu0 0.0
      %630 = vmatprep.subr.mxu0 0.0
      %631 = vmatpush1.xpose.msra.mxu0 0.0
      %632 = vmatprep.subr.mxu0 0.0
      %633 = vmatpush1.xpose.msra.mxu0 0.0
      %634 = vmatprep.subr.mxu0 0.0
      %635 = vmatpush1.xpose.msra.mxu0 0.0
      %636 = vmatprep.subr.mxu0 0.0
      %637 = vmatpush1.xpose.msra.mxu0 0.0
      %638 = vmatprep.subr.mxu0 0.0
      %639 = vmatpush1.xpose.msra.mxu0 0.0
      %640 = vmatprep.subr.mxu0 0.0
      %641 = vmatpush1.xpose.msra.mxu0 0.0
      %642 = vmatprep.subr.mxu0 0.0
      %643 = vmatpush1.xpose.msra.mxu0 0.0
      %644 = vmatprep.subr.mxu0 0.0
      %645 = vmatpush1.xpose.msra.mxu0 0.0
      %646 = vmatprep.subr.mxu0 0.0
      %647 = vmatpush1.xpose.msra.mxu0 0.0
      %648 = vmatprep.subr.mxu0 0.0
      %649 = vmatpush1.xpose.msra.mxu0 0.0
      %650 = vmatprep.subr.mxu0 0.0
      %651 = vmatpush1.xpose.msra.mxu0 0.0
      %652 = vmatprep.subr.mxu0 0.0
      %653 = vmatpush1.xpose.msra.mxu0 0.0
      %654 = vmatprep.subr.mxu0 0.0
      %655 = vmatpush1.xpose.msra.mxu0 0.0
      %656 = vmatprep.subr.mxu0 0.0
      %657 = vmatpush1.xpose.msra.mxu0 0.0
      %658 = vmatprep.subr.mxu0 0.0
      %659 = vmatpush1.xpose.msra.mxu0 0.0
      %660 = vmatprep.subr.mxu0 0.0
      %661 = vmatpush1.xpose.msra.mxu0 0.0
      %662 = vmatprep.subr.mxu0 0.0
      %663 = vmatpush1.xpose.msra.mxu0 0.0
      %664 = vmatprep.subr.mxu0 0.0
      %665 = vmatpush1.xpose.msra.mxu0 0.0
      %666 = vmatprep.subr.mxu0 0.0
      %667 = vmatpush1.xpose.msra.mxu0 0.0
      %668 = vmatprep.subr.mxu0 0.0
      %669 = vmatpush1.xpose.msra.mxu0 0.0
      %670 = vmatprep.subr.mxu0 0.0
      %671 = vmatpush1.xpose.msra.mxu0 0.0
      %672 = vmatprep.subr.mxu0 0.0
      %673 = vmatpush1.xpose.msra.mxu0 0.0
      %674 = vmatprep.subr.mxu0 0.0
      %675 = vmatpush1.xpose.msra.mxu0 0.0
      %676 = vmatprep.subr.mxu0 0.0
      %677 = vmatpush1.xpose.msra.mxu0 0.0
      %678 = vmatprep.subr.mxu0 0.0
      %679 = vmatpush1.xpose.msra.mxu0 0.0
      %680 = vmatprep.mubr.f32.mxu0 0.0
      %681 = vmatmul.mubr.f32.gmra.mrb[0].mxu0 %v605
      %v682 = vpop.f32.mrb[0].mxu0
      %v683 = vadd.f32 0.0, %v682
      %v684 = vpop.f32.mrb[0].mxu0
      %685 = vmatprep.mubr.f32.mxu0 0.0
      %686 = vmatmul.mubr.f32.gmra.mrb[0].mxu0 %v608
      %v687 = vpop.f32.mrb[0].mxu0
      %v688 = vadd.f32 0.0, %v687
      %v689 = vpop.f32.mrb[0].mxu0
      %690 = vdwg.mxu0
      %v691 = vmul.f32 %v683, 0.17677669
      %v692 = vmul.f32 %v688, 0.17677669
      %vm693 = vcmask 130048
      %v694 = vsel %vm693, %v691, -inf
      %695 = vmax.xlane.f32.xlu0 %v694
      %v696 = vpop.xlane.xlu0 %695
      %v697 = vsel %vm693, %v692, -inf
      %698 = vmax.xlane.f32.xlu0 %v697
      %v699 = vpop.xlane.xlu0 %698
      %v700 = vsub.f32 %v691, %v696
      %v701 = vsub.f32 %v692, %v699
      %v702 = vmul.f32 %v700, 1.442695
      %v703 = vpow.pop %v702
      %v704 = vmul.f32 %v701, 1.442695
      %v705 = vpow.pop %v704
      %v706 = vsel %vm693, %v703, 0.0
      %707 = vadd.xlane.f32.xlu0 %v706
      %v708 = vpop.xlane.xlu0 %707
      %v709 = vsel %vm693, %v705, 0.0
      %710 = vadd.xlane.f32.xlu0 %v709
      %v711 = vpop.xlane.xlu0 %710
      %v712 = vrcp.pop %v708
      %v713 = vrcp.pop %v711
      %v714 = vmul.f32 %v703, %v712
      %v715 = vmul.f32 %v705, %v713
      %v717 = vsel %vm693, %v714, 0
      %v720 = vsel %vm693, %v715, 0
      %722 = vmatprep.subr.mxu0 0.0
      %723 = vmatpush1.msra.mxu0 %v596
      %724 = vmatprep.subr.mxu0 0.0
      %725 = vmatpush1.msra.mxu0 %v601
      %726 = vmatprep.subr.mxu0 0.0
      %727 = vmatpush1.msra.mxu0 0.0
      %728 = vmatprep.subr.mxu0 0.0
      %729 = vmatpush1.msra.mxu0 0.0
      %730 = vmatprep.subr.mxu0 0.0
      %731 = vmatpush1.msra.mxu0 0.0
      %732 = vmatprep.subr.mxu0 0.0
      %733 = vmatpush1.msra.mxu0 0.0
      %734 = vmatprep.subr.mxu0 0.0
      %735 = vmatpush1.msra.mxu0 0.0
      %736 = vmatprep.subr.mxu0 0.0
      %737 = vmatpush1.msra.mxu0 0.0
      %738 = vmatprep.subr.mxu0 0.0
      %739 = vmatpush1.msra.mxu0 0.0
      %740 = vmatprep.subr.mxu0 0.0
      %741 = vmatpush1.msra.mxu0 0.0
      %742 = vmatprep.subr.mxu0 0.0
      %743 = vmatpush1.msra.mxu0 0.0
      %744 = vmatprep.subr.mxu0 0.0
      %745 = vmatpush1.msra.mxu0 0.0
      %746 = vmatprep.subr.mxu0 0.0
      %747 = vmatpush1.msra.mxu0 0.0
      %748 = vmatprep.subr.mxu0 0.0
      %749 = vmatpush1.msra.mxu0 0.0
      %750 = vmatprep.subr.mxu0 0.0
      %751 = vmatpush1.msra.mxu0 0.0
      %752 = vmatprep.subr.mxu0 0.0
      %753 = vmatpush1.msra.mxu0 0.0
      %754 = vmatprep.subr.mxu0 0.0
      %755 = vmatpush1.msra.mxu0 0.0
      %756 = vmatprep.subr.mxu0 0.0
      %757 = vmatpush1.msra.mxu0 0.0
      %758 = vmatprep.subr.mxu0 0.0
      %759 = vmatpush1.msra.mxu0 0.0
      %760 = vmatprep.subr.mxu0 0.0
      %761 = vmatpush1.msra.mxu0 0.0
      %762 = vmatprep.subr.mxu0 0.0
      %763 = vmatpush1.msra.mxu0 0.0
      %764 = vmatprep.subr.mxu0 0.0
      %765 = vmatpush1.msra.mxu0 0.0
      %766 = vmatprep.subr.mxu0 0.0
      %767 = vmatpush1.msra.mxu0 0.0
      %768 = vmatprep.subr.mxu0 0.0
      %769 = vmatpush1.msra.mxu0 0.0
      %770 = vmatprep.subr.mxu0 0.0
      %771 = vmatpush1.msra.mxu0 0.0
      %772 = vmatprep.subr.mxu0 0.0
      %773 = vmatpush1.msra.mxu0 0.0
      %774 = vmatprep.subr.mxu0 0.0
      %775 = vmatpush1.msra.mxu0 0.0
      %776 = vmatprep.subr.mxu0 0.0
      %777 = vmatpush1.msra.mxu0 0.0
      %778 = vmatprep.subr.mxu0 0.0
      %779 = vmatpush1.msra.mxu0 0.0
      %780 = vmatprep.subr.mxu0 0.0
      %781 = vmatpush1.msra.mxu0 0.0
      %782 = vmatprep.subr.mxu0 0.0
      %783 = vmatpush1.msra.mxu0 0.0
      %784 = vmatprep.subr.mxu0 0.0
      %785 = vmatpush1.msra.mxu0 0.0
      %786 = vmatprep.mubr.f32.mxu0 0.0
      %787 = vmatmul.mubr.f32.gmra.mrb[0].mxu0 %v717
      %v788 = vpop.f32.mrb[0].mxu0
      %v789 = vadd.f32 0.0, %v788
      %v790 = vpop.f32.mrb[0].mxu0
      %791 = vmatprep.mubr.f32.mxu0 0.0
      %792 = vmatmul.mubr.f32.gmra.mrb[0].mxu0 %v720
      %v793 = vpop.f32.mrb[0].mxu0
      %v794 = vadd.f32 0.0, %v793
      %v795 = vpop.f32.mrb[0].mxu0
      %796 = vdwg.mxu0
      %s797 = scalar_lea.vmem %s1, 96
      %v798 = vld [vmem:[%s797] sm:$0xff]
      %v799 = vld [vmem:[%s797 + $0x8] sm:$0xff]
      %v800 = vld [vmem:[%s797 + $0x10] sm:$0xff]
      %v801 = vld [vmem:[%s797 + $0x18] sm:$0xff]
      %s802 = scalar_lea.vmem %s2, 3
      %v803 = vld [vmem:[%s802] sm:$0x1]
      %v805 = vlaneseq
      %v806 = vshrl.u32 %v805, 7
      %v807 = vsub.s32 0, %v806
      %v808 = vrot.slane %v803, %v807
      %v811 = vsel %vm346, %v789, 0
      %v814 = vsel %vm346, %v794, 0
      %816 = vmatprep.subr.mxu0 0.0
      %817 = vmatpush1.msra.mxu0 %v798
      %818 = vmatprep.subr.mxu0 0.0
      %819 = vmatpush1.msra.mxu0 %v799
      %820 = vmatprep.subr.mxu0 0.0
      %821 = vmatpush1.msra.mxu0 %v800
      %822 = vmatprep.subr.mxu0 0.0
      %823 = vmatpush1.msra.mxu0 %v801
      %824 = vmatprep.subr.mxu0 0.0
      %825 = vmatpush1.msra.mxu0 0.0
      %826 = vmatprep.subr.mxu0 0.0
      %827 = vmatpush1.msra.mxu0 0.0
      %828 = vmatprep.subr.mxu0 0.0
      %829 = vmatpush1.msra.mxu0 0.0
      %830 = vmatprep.subr.mxu0 0.0
      %831 = vmatpush1.msra.mxu0 0.0
      %832 = vmatprep.subr.mxu0 0.0
      %833 = vmatpush1.msra.mxu0 0.0
      %834 = vmatprep.subr.mxu0 0.0
      %835 = vmatpush1.msra.mxu0 0.0
      %836 = vmatprep.subr.mxu0 0.0
      %837 = vmatpush1.msra.mxu0 0.0
      %838 = vmatprep.subr.mxu0 0.0
      %839 = vmatpush1.msra.mxu0 0.0
      %840 = vmatprep.subr.mxu0 0.0
      %841 = vmatpush1.msra.mxu0 0.0
      %842 = vmatprep.subr.mxu0 0.0
      %843 = vmatpush1.msra.mxu0 0.0
      %844 = vmatprep.subr.mxu0 0.0
      %845 = vmatpush1.msra.mxu0 0.0
      %846 = vmatprep.subr.mxu0 0.0
      %847 = vmatpush1.msra.mxu0 0.0
      %848 = vmatprep.subr.mxu0 0.0
      %849 = vmatpush1.msra.mxu0 0.0
      %850 = vmatprep.subr.mxu0 0.0
      %851 = vmatpush1.msra.mxu0 0.0
      %852 = vmatprep.subr.mxu0 0.0
      %853 = vmatpush1.msra.mxu0 0.0
      %854 = vmatprep.subr.mxu0 0.0
      %855 = vmatpush1.msra.mxu0 0.0
      %856 = vmatprep.subr.mxu0 0.0
      %857 = vmatpush1.msra.mxu0 0.0
      %858 = vmatprep.subr.mxu0 0.0
      %859 = vmatpush1.msra.mxu0 0.0
      %860 = vmatprep.subr.mxu0 0.0
      %861 = vmatpush1.msra.mxu0 0.0
      %862 = vmatprep.subr.mxu0 0.0
      %863 = vmatpush1.msra.mxu0 0.0
      %864 = vmatprep.subr.mxu0 0.0
      %865 = vmatpush1.msra.mxu0 0.0
      %866 = vmatprep.subr.mxu0 0.0
      %867 = vmatpush1.msra.mxu0 0.0
      %868 = vmatprep.subr.mxu0 0.0
      %869 = vmatpush1.msra.mxu0 0.0
      %870 = vmatprep.subr.mxu0 0.0
      %871 = vmatpush1.msra.mxu0 0.0
      %872 = vmatprep.subr.mxu0 0.0
      %873 = vmatpush1.msra.mxu0 0.0
      %874 = vmatprep.subr.mxu0 0.0
      %875 = vmatpush1.msra.mxu0 0.0
      %876 = vmatprep.subr.mxu0 0.0
      %877 = vmatpush1.msra.mxu0 0.0
      %878 = vmatprep.subr.mxu0 0.0
      %879 = vmatpush1.msra.mxu0 0.0
      %880 = vmatprep.mubr.f32.mxu0 0.0
      %881 = vmatmul.mubr.f32.gmra.mrb[0].mxu0 %v811
      %v882 = vpop.f32.mrb[0].mxu0
      %v883 = vadd.f32 %v808, %v882
      %v884 = vpop.f32.mrb[0].mxu0
      %885 = vmatprep.mubr.f32.mxu0 0.0
      %886 = vmatmul.mubr.f32.gmra.mrb[0].mxu0 %v814
      %v887 = vpop.f32.mrb[0].mxu0
      %v888 = vadd.f32 %v808, %v887
      %v889 = vpop.f32.mrb[0].mxu0
      %890 = vdwg.mxu0
      %v891 = vadd.f32 %v333, %v883
      %v892 = vadd.f32 %v334, %v888
      %v893 = vld [vmem:[%s3] sm:$0x1]
      %v894 = vld [vmem:[%s4] sm:$0x1]
      %v895 = vsel %vm346, %v891, 0.0
      %896 = vadd.xlane.f32.xlu0 %v895
      %v897 = vpop.xlane.xlu0 %896
      %v898 = vsel %vm346, %v892, 0.0
      %899 = vadd.xlane.f32.xlu0 %v898
      %v900 = vpop.xlane.xlu0 %899
      %v901 = vrcp.pop 32.0
      %v902 = vmul.f32 %v897, %v901
      %v903 = vmul.f32 %v900, %v901
      %v904 = vsub.f32 %v891, %v902
      %v905 = vsub.f32 %v892, %v903
      %v906 = vmul.f32 %v904, %v904
      %v907 = vmul.f32 %v905, %v905
      %v908 = vsel %vm346, %v906, 0.0
      %909 = vadd.xlane.f32.xlu0 %v908
      %v910 = vpop.xlane.xlu0 %909
      %v911 = vsel %vm346, %v907, 0.0
      %912 = vadd.xlane.f32.xlu0 %v911
      %v913 = vpop.xlane.xlu0 %912
      %v914 = vmul.f32 %v910, %v901
      %v915 = vmul.f32 %v913, %v901
      %v916 = vadd.f32 %v914, 1e-05
      %v917 = vadd.f32 %v915, 1e-05
      %v918 = vrsqrt.pop %v916
      %v919 = vrsqrt.pop %v917
      %v920 = vmul.f32 %v904, %v918
      %v921 = vmul.f32 %v905, %v919
      %v923 = vlaneseq
      %v924 = vshrl.u32 %v923, 7
      %v925 = vsub.s32 0, %v924
      %v926 = vrot.slane %v893, %v925
      %v928 = vmul.f32 %v920, %v926
      %v929 = vmul.f32 %v921, %v926
      %v931 = vlaneseq
      %v932 = vshrl.u32 %v931, 7
      %v933 = vsub.s32 0, %v932
      %v934 = vrot.slane %v894, %v933
      %v936 = vadd.f32 %v928, %v934
      %v937 = vadd.f32 %v929, %v934
      %v938 = vld [vmem:[%s5] sm:$0xff]
      %v939 = vld [vmem:[%s5 + $0x8] sm:$0xff]
      %v940 = vld [vmem:[%s5 + $0x10] sm:$0xff]
      %v941 = vld [vmem:[%s5 + $0x18] sm:$0xff]
      %v942 = vld [vmem:[%s6] sm:$0x1]
      %v944 = vlaneseq
      %v945 = vshrl.u32 %v944, 7
      %v946 = vsub.s32 0, %v945
      %v947 = vrot.slane %v942, %v946
      %v950 = vsel %vm346, %v936, 0
      %v953 = vsel %vm346, %v937, 0
      %955 = vmatprep.subr.mxu0 0.0
      %956 = vmatpush1.msra.mxu0 %v938
      %957 = vmatprep.subr.mxu0 0.0
      %958 = vmatpush1.msra.mxu0 %v939
      %959 = vmatprep.subr.mxu0 0.0
      %960 = vmatpush1.msra.mxu0 %v940
      %961 = vmatprep.subr.mxu0 0.0
      %962 = vmatpush1.msra.mxu0 %v941
      %963 = vmatprep.subr.mxu0 0.0
      %964 = vmatpush1.msra.mxu0 0.0
      %965 = vmatprep.subr.mxu0 0.0
      %966 = vmatpush1.msra.mxu0 0.0
      %967 = vmatprep.subr.mxu0 0.0
      %968 = vmatpush1.msra.mxu0 0.0
      %969 = vmatprep.subr.mxu0 0.0
      %970 = vmatpush1.msra.mxu0 0.0
      %971 = vmatprep.subr.mxu0 0.0
      %972 = vmatpush1.msra.mxu0 0.0
      %973 = vmatprep.subr.mxu0 0.0
      %974 = vmatpush1.msra.mxu0 0.0
      %975 = vmatprep.subr.mxu0 0.0
      %976 = vmatpush1.msra.mxu0 0.0
      %977 = vmatprep.subr.mxu0 0.0
      %978 = vmatpush1.msra.mxu0 0.0
      %979 = vmatprep.subr.mxu0 0.0
      %980 = vmatpush1.msra.mxu0 0.0
      %981 = vmatprep.subr.mxu0 0.0
      %982 = vmatpush1.msra.mxu0 0.0
      %983 = vmatprep.subr.mxu0 0.0
      %984 = vmatpush1.msra.mxu0 0.0
      %985 = vmatprep.subr.mxu0 0.0
      %986 = vmatpush1.msra.mxu0 0.0
      %987 = vmatprep.subr.mxu0 0.0
      %988 = vmatpush1.msra.mxu0 0.0
      %989 = vmatprep.subr.mxu0 0.0
      %990 = vmatpush1.msra.mxu0 0.0
      %991 = vmatprep.subr.mxu0 0.0
      %992 = vmatpush1.msra.mxu0 0.0
      %993 = vmatprep.subr.mxu0 0.0
      %994 = vmatpush1.msra.mxu0 0.0
      %995 = vmatprep.subr.mxu0 0.0
      %996 = vmatpush1.msra.mxu0 0.0
      %997 = vmatprep.subr.mxu0 0.0
      %998 = vmatpush1.msra.mxu0 0.0
      %999 = vmatprep.subr.mxu0 0.0
      %1000 = vmatpush1.msra.mxu0 0.0
      %1001 = vmatprep.subr.mxu0 0.0
      %1002 = vmatpush1.msra.mxu0 0.0
      %1003 = vmatprep.subr.mxu0 0.0
      %1004 = vmatpush1.msra.mxu0 0.0
      %1005 = vmatprep.subr.mxu0 0.0
      %1006 = vmatpush1.msra.mxu0 0.0
      %1007 = vmatprep.subr.mxu0 0.0
      %1008 = vmatpush1.msra.mxu0 0.0
      %1009 = vmatprep.subr.mxu0 0.0
      %1010 = vmatpush1.msra.mxu0 0.0
      %1011 = vmatprep.subr.mxu0 0.0
      %1012 = vmatpush1.msra.mxu0 0.0
      %1013 = vmatprep.subr.mxu0 0.0
      %1014 = vmatpush1.msra.mxu0 0.0
      %1015 = vmatprep.subr.mxu0 0.0
      %1016 = vmatpush1.msra.mxu0 0.0
      %1017 = vmatprep.subr.mxu0 0.0
      %1018 = vmatpush1.msra.mxu0 0.0
      %1019 = vmatprep.mubr.f32.mxu0 0.0
      %1020 = vmatmul.mubr.f32.gmra.mrb[0].mxu0 %v950
      %v1021 = vpop.f32.mrb[0].mxu0
      %v1022 = vadd.f32 %v947, %v1021
      %v1023 = vpop.f32.mrb[0].mxu0
      %1024 = vmatprep.mubr.f32.mxu0 0.0
      %1025 = vmatmul.mubr.f32.gmra.mrb[0].mxu0 %v953
      %v1026 = vpop.f32.mrb[0].mxu0
      %v1027 = vadd.f32 %v947, %v1026
      %v1028 = vpop.f32.mrb[0].mxu0
      %1029 = vdwg.mxu0
      %v1030 = vmax.f32 %v1022, 0.0
      %v1031 = vmax.f32 %v1027, 0.0
      %v1032 = vld [vmem:[%s7] sm:$0xff]
      %v1033 = vld [vmem:[%s7 + $0x8] sm:$0xff]
      %v1034 = vld [vmem:[%s7 + $0x10] sm:$0xff]
      %v1035 = vld [vmem:[%s7 + $0x18] sm:$0xff]
      %v1036 = vld [vmem:[%s7 + $0x20] sm:$0xff]
      %v1037 = vld [vmem:[%s7 + $0x28] sm:$0xff]
      %v1038 = vld [vmem:[%s7 + $0x30] sm:$0xff]
      %v1039 = vld [vmem:[%s7 + $0x38] sm:$0xff]
      %v1040 = vld [vmem:[%s8] sm:$0x1]
      %v1042 = vlaneseq
      %v1043 = vshrl.u32 %v1042, 7
      %v1044 = vsub.s32 0, %v1043
      %v1045 = vrot.slane %v1040, %v1044
      %vm1047 = vcmask 523264
      %v1049 = vsel %vm1047, %v1030, 0
      %v1052 = vsel %vm1047, %v1031, 0
      %1054 = vmatprep.subr.mxu0 0.0
      %1055 = vmatpush1.msra.mxu0 %v1032
      %1056 = vmatprep.subr.mxu0 0.0
      %1057 = vmatpush1.msra.mxu0 %v1033
      %1058 = vmatprep.subr.mxu0 0.0
      %1059 = vmatpush1.msra.mxu0 %v1034
      %1060 = vmatprep.subr.mxu0 0.0
      %1061 = vmatpush1.msra.mxu0 %v1035
      %1062 = vmatprep.subr.mxu0 0.0
      %1063 = vmatpush1.msra.mxu0 %v1036
      %1064 = vmatprep.subr.mxu0 0.0
      %1065 = vmatpush1.msra.mxu0 %v1037
      %1066 = vmatprep.subr.mxu0 0.0
      %1067 = vmatpush1.msra.mxu0 %v1038
      %1068 = vmatprep.subr.mxu0 0.0
      %1069 = vmatpush1.msra.mxu0 %v1039
      %1070 = vmatprep.subr.mxu0 0.0
      %1071 = vmatpush1.msra.mxu0 0.0
      %1072 = vmatprep.subr.mxu0 0.0
      %1073 = vmatpush1.msra.mxu0 0.0
      %1074 = vmatprep.subr.mxu0 0.0
      %1075 = vmatpush1.msra.mxu0 0.0
      %1076 = vmatprep.subr.mxu0 0.0
      %1077 = vmatpush1.msra.mxu0 0.0
      %1078 = vmatprep.subr.mxu0 0.0
      %1079 = vmatpush1.msra.mxu0 0.0
      %1080 = vmatprep.subr.mxu0 0.0
      %1081 = vmatpush1.msra.mxu0 0.0
      %1082 = vmatprep.subr.mxu0 0.0
      %1083 = vmatpush1.msra.mxu0 0.0
      %1084 = vmatprep.subr.mxu0 0.0
      %1085 = vmatpush1.msra.mxu0 0.0
      %1086 = vmatprep.subr.mxu0 0.0
      %1087 = vmatpush1.msra.mxu0 0.0
      %1088 = vmatprep.subr.mxu0 0.0
      %1089 = vmatpush1.msra.mxu0 0.0
      %1090 = vmatprep.subr.mxu0 0.0
      %1091 = vmatpush1.msra.mxu0 0.0
      %1092 = vmatprep.subr.mxu0 0.0
      %1093 = vmatpush1.msra.mxu0 0.0
      %1094 = vmatprep.subr.mxu0 0.0
      %1095 = vmatpush1.msra.mxu0 0.0
      %1096 = vmatprep.subr.mxu0 0.0
      %1097 = vmatpush1.msra.mxu0 0.0
      %1098 = vmatprep.subr.mxu0 0.0
      %1099 = vmatpush1.msra.mxu0 0.0
      %1100 = vmatprep.subr.mxu0 0.0
      %1101 = vmatpush1.msra.mxu0 0.0
      %1102 = vmatprep.subr.mxu0 0.0
      %1103 = vmatpush1.msra.mxu0 0.0
      %1104 = vmatprep.subr.mxu0 0.0
      %1105 = vmatpush1.msra.mxu0 0.0
      %1106 = vmatprep.subr.mxu0 0.0
      %1107 = vmatpush1.msra.mxu0 0.0
      %1108 = vmatprep.subr.mxu0 0.0
      %1109 = vmatpush1.msra.mxu0 0.0
      %1110 = vmatprep.subr.mxu0 0.0
      %1111 = vmatpush1.msra.mxu0 0.0
      %1112 = vmatprep.subr.mxu0 0.0
      %1113 = vmatpush1.msra.mxu0 0.0
      %1114 = vmatprep.subr.mxu0 0.0
      %1115 = vmatpush1.msra.mxu0 0.0
      %1116 = vmatprep.subr.mxu0 0.0
      %1117 = vmatpush1.msra.mxu0 0.0
      %1118 = vmatprep.mubr.f32.mxu0 0.0
      %1119 = vmatmul.mubr.f32.gmra.mrb[0].mxu0 %v1049
      %v1120 = vpop.f32.mrb[0].mxu0
      %v1121 = vadd.f32 %v1045, %v1120
      %v1122 = vpop.f32.mrb[0].mxu0
      %1123 = vmatprep.mubr.f32.mxu0 0.0
      %1124 = vmatmul.mubr.f32.gmra.mrb[0].mxu0 %v1052
      %v1125 = vpop.f32.mrb[0].mxu0
      %v1126 = vadd.f32 %v1045, %v1125
      %v1127 = vpop.f32.mrb[0].mxu0
      %1128 = vdwg.mxu0
      %v1129 = vadd.f32 %v936, %v1121
      %v1130 = vadd.f32 %v937, %v1126
      %s1131 = scalar_lea.vmem %s3, 1
      %v1132 = vld [vmem:[%s1131] sm:$0x1]
      %s1133 = scalar_lea.vmem %s4, 1
      %v1134 = vld [vmem:[%s1133] sm:$0x1]
      %v1135 = vsel %vm346, %v1129, 0.0
      %1136 = vadd.xlane.f32.xlu0 %v1135
      %v1137 = vpop.xlane.xlu0 %1136
      %v1138 = vsel %vm346, %v1130, 0.0
      %1139 = vadd.xlane.f32.xlu0 %v1138
      %v1140 = vpop.xlane.xlu0 %1139
      %v1141 = vmul.f32 %v1137, %v901
      %v1142 = vmul.f32 %v1140, %v901
      %v1143 = vsub.f32 %v1129, %v1141
      %v1144 = vsub.f32 %v1130, %v1142
      %v1145 = vmul.f32 %v1143, %v1143
      %v1146 = vmul.f32 %v1144, %v1144
      %v1147 = vsel %vm346, %v1145, 0.0
      %1148 = vadd.xlane.f32.xlu0 %v1147
      %v1149 = vpop.xlane.xlu0 %1148
      %v1150 = vsel %vm346, %v1146, 0.0
      %1151 = vadd.xlane.f32.xlu0 %v1150
      %v1152 = vpop.xlane.xlu0 %1151
      %v1153 = vmul.f32 %v1149, %v901
      %v1154 = vmul.f32 %v1152, %v901
      %v1155 = vadd.f32 %v1153, 1e-05
      %v1156 = vadd.f32 %v1154, 1e-05
      %v1157 = vrsqrt.pop %v1155
      %v1158 = vrsqrt.pop %v1156
      %v1159 = vmul.f32 %v1143, %v1157
      %v1160 = vmul.f32 %v1144, %v1158
      %v1162 = vlaneseq
      %v1163 = vshrl.u32 %v1162, 7
      %v1164 = vsub.s32 0, %v1163
      %v1165 = vrot.slane %v1132, %v1164
      %v1167 = vmul.f32 %v1159, %v1165
      %v1168 = vmul.f32 %v1160, %v1165
      %v1170 = vlaneseq
      %v1171 = vshrl.u32 %v1170, 7
      %v1172 = vsub.s32 0, %v1171
      %v1173 = vrot.slane %v1134, %v1172
      %v1175 = vadd.f32 %v1167, %v1173
      %v1176 = vadd.f32 %v1168, %v1173
      %1177 = vst.msk [vmem:[%s332] sm:$0xff] %vm346, %v1175
      %1178 = vst.msk [vmem:[%s332 + $0x8] sm:$0xff] %vm346, %v1176
      %p1179 = scmp.lt.s32.totalorder %s20, 1
      %s1180 = scalar_select %p1179, %s20, 1
      %s1181 = smul.addr %s1180, 2
      %s1182 = smul.addr %s1181, 8
      %s1183 = scalar_lea.vmem %s9, %s1182
      // Predicated region
      $region57: #{_lambda_.9} parent=55 // pred_check
        %p1184 = pneg %p232
      $region58: #{_lambda_.9} parent=55 // pred_check_branch
        %1186 = sbr.rel (%p1184) target = $region60
      $region59: #{_lambda_.9} parent=55 // pred_region
        _
      $region60: #{_lambda_.9} parent=55 // pred_fallthru
        _
    $region56: #{_lambda_.9} parent=5 // pred_fallthru
      _
    %p1187 = scmp.le.s32.totalorder 2, %s15
    // Predicated region
    $region61: #{_lambda_.9} parent=5 // pred_check
      %p1188 = pneg %p1187
    $region62: #{_lambda_.9} parent=5 // pred_check_branch
      %1190 = sbr.rel (%p1188) target = $region64
    $region63: #{_lambda_.9} parent=5 // pred_region
      %s1191 = ssub.s32 %s15, 2
      // Predicated region
      $region65: #{_lambda_.9} parent=63 // pred_check
        %p1192 = pneg %p238
      $region66: #{_lambda_.9} parent=63 // pred_check_branch
        %1194 = sbr.rel (%p1192) target = $region68
      $region67: #{_lambda_.9} parent=63 // pred_region
        %p1195 = scmp.lt.s32.totalorder %s21, 1
        %s1196 = scalar_select %p1195, %s21, 1
        %s1197 = smul.addr %s1196, 2
        %s1198 = smul.addr %s1197, 8
        %s1199 = scalar_lea.vmem %s9, %s1198
      $region68: #{_lambda_.9} parent=63 // pred_fallthru
        _
    $region64: #{_lambda_.9} parent=5 // pred_fallthru
      _
  $region6: #{_lambda_.9} parent=0 // loop_footer
    %s19 = sadd.s32 1, %s15
  $region7: #{_lambda_.9} parent=0 // loop_footer_branch
    %14 = sbr.rel target = $region3
  $region8: #{_lambda_.9} parent=0 // loop_exit
    _

// kernel: _lambda_.12
$region0: #{_lambda_.12}
  #allocation0 [shape = 'u32[]', space=smem, size = 0x4, offset = 0x4, fixed_abs, tag = 'smem constant byte address 0x4 - core index']
  #allocation1 [shape = 'u32[144,128]{1,0:T(1,128)}', space=vmem, size = 0x12000, scoped, tag = 'internal scratch']
  %s0 = inlined_call_operand.vmem [shape: f32[32,3], index: 0, kind: input, shape index: {}]
  %s1 = inlined_call_operand.vmem [shape: f32[3,16], index: 1, kind: input, shape index: {}]
  %s2 = inlined_call_operand.vmem [shape: f32[32,32], index: 2, kind: output, shape index: {}]
  %s3 = sld [smem:[#allocation0]]
  $region18: #{_lambda_.12} parent=0
    _
  %s5 = ssub.s32 1, %s3
  %s6 = scalar_select 0, %s5, %s3
  // Predicated region
  $region2: #{_lambda_.12} parent=0 // pred_check
    _
  $region3: #{_lambda_.12} parent=0 // pred_check_branch
    %8 = sbr.rel (0) target = $region5
  $region4: #{_lambda_.12} parent=0 // pred_region
    _
  $region5: #{_lambda_.12} parent=0 // pred_fallthru
    _
  // Predicated region
  $region6: #{_lambda_.12} parent=0 // pred_check
    _
  $region7: #{_lambda_.12} parent=0 // pred_check_branch
    %10 = sbr.rel (0) target = $region9
  $region8: #{_lambda_.12} parent=0 // pred_region
    _
  $region9: #{_lambda_.12} parent=0 // pred_fallthru
    _
  %v11 = vld [vmem:[%s0] sm:$0xff]
  %v12 = vld [vmem:[%s0 + $0x8] sm:$0xff]
  %v13 = vld [vmem:[%s0 + $0x10] sm:$0xff]
  %v14 = vld [vmem:[%s0 + $0x18] sm:$0xff]
  %v15 = vld [vmem:[%s1] sm:$0x7]
  %vm16 = vcmask 23552
  %v18 = vsel %vm16, %v11, 0
  %v21 = vsel %vm16, %v12, 0
  %v24 = vsel %vm16, %v13, 0
  %v27 = vsel %vm16, %v14, 0
  %vm29 = vcmask 1042432
  %v31 = vsel %vm29, %v15, 0
  %33 = vmatprep.subr.mxu0 0.0
  %34 = vmatpush1.msra.mxu0 %v31
  %35 = vmatprep.subr.mxu0 0.0
  %36 = vmatpush1.msra.mxu0 0.0
  %37 = vmatprep.subr.mxu0 0.0
  %38 = vmatpush1.msra.mxu0 0.0
  %39 = vmatprep.subr.mxu0 0.0
  %40 = vmatpush1.msra.mxu0 0.0
  %41 = vmatprep.subr.mxu0 0.0
  %42 = vmatpush1.msra.mxu0 0.0
  %43 = vmatprep.subr.mxu0 0.0
  %44 = vmatpush1.msra.mxu0 0.0
  %45 = vmatprep.subr.mxu0 0.0
  %46 = vmatpush1.msra.mxu0 0.0
  %47 = vmatprep.subr.mxu0 0.0
  %48 = vmatpush1.msra.mxu0 0.0
  %49 = vmatprep.subr.mxu0 0.0
  %50 = vmatpush1.msra.mxu0 0.0
  %51 = vmatprep.subr.mxu0 0.0
  %52 = vmatpush1.msra.mxu0 0.0
  %53 = vmatprep.subr.mxu0 0.0
  %54 = vmatpush1.msra.mxu0 0.0
  %55 = vmatprep.subr.mxu0 0.0
  %56 = vmatpush1.msra.mxu0 0.0
  %57 = vmatprep.subr.mxu0 0.0
  %58 = vmatpush1.msra.mxu0 0.0
  %59 = vmatprep.subr.mxu0 0.0
  %60 = vmatpush1.msra.mxu0 0.0
  %61 = vmatprep.subr.mxu0 0.0
  %62 = vmatpush1.msra.mxu0 0.0
  %63 = vmatprep.subr.mxu0 0.0
  %64 = vmatpush1.msra.mxu0 0.0
  %65 = vmatprep.subr.mxu0 0.0
  %66 = vmatpush1.msra.mxu0 0.0
  %67 = vmatprep.subr.mxu0 0.0
  %68 = vmatpush1.msra.mxu0 0.0
  %69 = vmatprep.subr.mxu0 0.0
  %70 = vmatpush1.msra.mxu0 0.0
  %71 = vmatprep.subr.mxu0 0.0
  %72 = vmatpush1.msra.mxu0 0.0
  %73 = vmatprep.subr.mxu0 0.0
  %74 = vmatpush1.msra.mxu0 0.0
  %75 = vmatprep.subr.mxu0 0.0
  %76 = vmatpush1.msra.mxu0 0.0
  %77 = vmatprep.subr.mxu0 0.0
  %78 = vmatpush1.msra.mxu0 0.0
  %79 = vmatprep.subr.mxu0 0.0
  %80 = vmatpush1.msra.mxu0 0.0
  %81 = vmatprep.subr.mxu0 0.0
  %82 = vmatpush1.msra.mxu0 0.0
  %83 = vmatprep.subr.mxu0 0.0
  %84 = vmatpush1.msra.mxu0 0.0
  %85 = vmatprep.subr.mxu0 0.0
  %86 = vmatpush1.msra.mxu0 0.0
  %87 = vmatprep.subr.mxu0 0.0
  %88 = vmatpush1.msra.mxu0 0.0
  %89 = vmatprep.subr.mxu0 0.0
  %90 = vmatpush1.msra.mxu0 0.0
  %91 = vmatprep.subr.mxu0 0.0
  %92 = vmatpush1.msra.mxu0 0.0
  %93 = vmatprep.subr.mxu0 0.0
  %94 = vmatpush1.msra.mxu0 0.0
  %95 = vmatprep.subr.mxu0 0.0
  %96 = vmatpush1.msra.mxu0 0.0
  %97 = vmatprep.mubr.f32.mxu0 0.0
  %98 = vmatmul.mubr.f32.gmra.mrb[0].mxu0 %v18
  %v99 = vpop.f32.mrb[0].mxu0
  %v100 = vadd.f32 0.0, %v99
  %v101 = vpop.f32.mrb[0].mxu0
  %102 = vmatprep.mubr.f32.mxu0 0.0
  %103 = vmatmul.mubr.f32.gmra.mrb[0].mxu0 %v21
  %v104 = vpop.f32.mrb[0].mxu0
  %v105 = vadd.f32 0.0, %v104
  %v106 = vpop.f32.mrb[0].mxu0
  %107 = vmatprep.mubr.f32.mxu0 0.0
  %108 = vmatmul.mubr.f32.gmra.mrb[0].mxu0 %v24
  %v109 = vpop.f32.mrb[0].mxu0
  %v110 = vadd.f32 0.0, %v109
  %v111 = vpop.f32.mrb[0].mxu0
  %112 = vmatprep.mubr.f32.mxu0 0.0
  %113 = vmatmul.mubr.f32.gmra.mrb[0].mxu0 %v27
  %v114 = vpop.f32.mrb[0].mxu0
  %v115 = vadd.f32 0.0, %v114
  %v116 = vpop.f32.mrb[0].mxu0
  %117 = vdwg.mxu0
  %v118 = vand.u32 2147483647, %v100
  %vm119 = vcmp.le.f32.partialorder %v118, 0.7853982
  %vm120 = vcmp.lt.s32.totalorder %v100, 0
  %v121 = vand.u32 %v100, 2139095040
  %v122 = vshrl.u32 %v121, 23
  %v123 = vsub.s32 %v122, 127
  %v124 = vand.u32 2147483647, %v100
  %v125 = vand.u32 %v124, 8388607
  %v126 = vor.u32 %v125, 8388608
  %v127 = vsub.s32 0, %v126
  %v128 = vadd.s32 %v123, 1
  %vm129 = vcmp.gt.s32.totalorder %v128, 0
  %v130 = vsel %vm129, %v128, 0
  %v131 = vshrl.u32 %v130, 5
  %v132 = vand.u32 %v130, 31
  %v133 = vsub.s32 32, %v132
  %v134 = vshrl.u32 683565275, %v133
  %v135 = vshll.u32 683565275, %v132
  %v136 = vshrl.u32 2475754826, %v133
  %v137 = vor.u32 %v135, %v136
  %v138 = vshll.u32 2475754826, %v132
  %v139 = vshrl.u32 2131351028, %v133
  %v140 = vor.u32 %v138, %v139
  %v141 = vshll.u32 2131351028, %v132
  %v142 = vshrl.u32 2102212464, %v133
  %v143 = vor.u32 %v141, %v142
  %v144 = vshll.u32 2102212464, %v132
  %v145 = vshrl.u32 920167782, %v133
  %v146 = vor.u32 %v144, %v145
  %v147 = vshll.u32 920167782, %v132
  %v148 = vshrl.u32 1326507024, %v133
  %v149 = vor.u32 %v147, %v148
  %vm150 = vcmp.lt.s32.totalorder %v131, 1
  %vm151 = vcmp.lt.s32.totalorder %v131, 2
  %vm152 = vcmp.lt.s32.totalorder %v131, 3
  %vm153 = vcmp.lt.s32.totalorder %v131, 4
  %v154 = vsel %vm150, %v134, %v137
  %v155 = vsel %vm153, %v143, 2102212464
  %v156 = vsel %vm152, %v140, %v155
  %v157 = vsel %vm151, %v154, %v156
  %v158 = vsel %vm150, %v137, %v140
  %v159 = vsel %vm153, %v146, 920167782
  %v160 = vsel %vm152, %v143, %v159
  %v161 = vsel %vm151, %v158, %v160
  %v162 = vsel %vm150, %v140, %v143
  %v163 = vsel %vm153, %v149, 1326507024
  %v164 = vsel %vm152, %v146, %v163
  %v165 = vsel %vm151, %v162, %v164
  %v166 = vshll.u32 %v126, 8
  %v167 = vmul.u32.u64.compose %v166, %v165
  %v168 = vextract.low.u32 %v167
  %v169 = vextract.high.u32 %v167
  %v170 = vmul.u32.u64.compose %v166, %v161
  %v171 = vextract.low.u32 %v170
  %v172 = vextract.high.u32 %v170
  %v173 = vmul.u32 %v166, %v157
  %v174 = vadd.s32 %v169, %v171
  %vm175 = vc.u32 %v169, %v171
  %v176 = vadd.s32 %v172, 1
  %v177 = vsel %vm175, %v176, %v172
  %v178 = vadd.s32 %v173, %v177
  %v179 = vadd.s32 %v178, 536870912
  %v180 = vshrl.u32 %v179, 30
  %v181 = vshll.u32 %v180, 30
  %v182 = vsub.s32 %v178, %v181
  %vm183 = vcmp.lt.s32.totalorder %v182, 0
  %v184 = vsub.s32 0, %v182
  %v185 = vsel %vm183, %v184, %v182
  %v186 = vclz %v185
  %v187 = vsub.s32 %v186, 2
  %vm188 = vcmp.gt.s32.totalorder 0, %v187
  %v189 = vsel %vm188, 0, %v187
  %v190 = vsub.s32 32, %v189
  %v191 = vshll.u32 %v182, %v189
  %v192 = vshrl.u32 %v174, %v190
  %v193 = vor.u32 %v191, %v192
  %v194 = vsub.s32 4294967266, %v189
  %v195 = vadd.s32 %v194, 127
  %v196 = vshll.u32 %v195, 23
  %v197 = vor.u32 4788187, %v196
  %v198 = vand.u32 2147483647, %v197
  %v200 = vcvt.s32.f32 %v193
  %v201 = vmul.f32 %v200, %v198
  %v202 = vxor.u32 %v201, 2147483648
  %v203 = vsel %vm120, %v202, %v201
  %v204 = vsub.s32 4, %v180
  %v205 = vsel %vm120, %v204, %v180
  %v206 = vsel %vm119, %v100, %v203
  %v207 = vsel %vm119, 0, %v205
  %v208 = vcosq.f32.pop %v206
  %v209 = vsinq.f32.pop %v206
  %vm210 = vweird.f32 %v100
  %v211 = vadd.s32 %v207, 3
  %v212 = vand.u32 %v211, 3
  %vm213 = vcmp.lt.s32.totalorder %v212, 2
  %vm214 = vcmp.eq.s32.totalorder %v212, 0
  %v215 = vxor.u32 %v209, 2147483648
  %v216 = vsel %vm214, %v208, %v215
  %vm217 = vcmp.eq.s32.totalorder %v212, 2
  %v218 = vxor.u32 %v208, 2147483648
  %v219 = vsel %vm217, %v218, %v209
  %v220 = vsel %vm213, %v216, %v219
  %v221 = vsel %vm210, nan, %v220
  %v222 = vand.u32 2147483647, %v105
  %vm223 = vcmp.le.f32.partialorder %v222, 0.7853982
  %vm224 = vcmp.lt.s32.totalorder %v105, 0
  %v225 = vand.u32 %v105, 2139095040
  %v226 = vshrl.u32 %v225, 23
  %v227 = vsub.s32 %v226, 127
  %v228 = vand.u32 2147483647, %v105
  %v229 = vand.u32 %v228, 8388607
  %v230 = vor.u32 %v229, 8388608
  %v231 = vsub.s32 0, %v230
  %v232 = vadd.s32 %v227, 1
  %vm233 = vcmp.gt.s32.totalorder %v232, 0
  %v234 = vsel %vm233, %v232, 0
  %v235 = vshrl.u32 %v234, 5
  %v236 = vand.u32 %v234, 31
  %v237 = vsub.s32 32, %v236
  %v238 = vshrl.u32 683565275, %v237
  %v239 = vshll.u32 683565275, %v236
  %v240 = vshrl.u32 2475754826, %v237
  %v241 = vor.u32 %v239, %v240
  %v242 = vshll.u32 2475754826, %v236
  %v243 = vshrl.u32 2131351028, %v237
  %v244 = vor.u32 %v242, %v243
  %v245 = vshll.u32 2131351028, %v236
  %v246 = vshrl.u32 2102212464, %v237
  %v247 = vor.u32 %v245, %v246
  %v248 = vshll.u32 2102212464, %v236
  %v249 = vshrl.u32 920167782, %v237
  %v250 = vor.u32 %v248, %v249
  %v251 = vshll.u32 920167782, %v236
  %v252 = vshrl.u32 1326507024, %v237
  %v253 = vor.u32 %v251, %v252
  %vm254 = vcmp.lt.s32.totalorder %v235, 1
  %vm255 = vcmp.lt.s32.totalorder %v235, 2
  %vm256 = vcmp.lt.s32.totalorder %v235, 3
  %vm257 = vcmp.lt.s32.totalorder %v235, 4
  %v258 = vsel %vm254, %v238, %v241
  %v259 = vsel %vm257, %v247, 2102212464
  %v260 = vsel %vm256, %v244, %v259
  %v261 = vsel %vm255, %v258, %v260
  %v262 = vsel %vm254, %v241, %v244
  %v263 = vsel %vm257, %v250, 920167782
  %v264 = vsel %vm256, %v247, %v263
  %v265 = vsel %vm255, %v262, %v264
  %v266 = vsel %vm254, %v244, %v247
  %v267 = vsel %vm257, %v253, 1326507024
  %v268 = vsel %vm256, %v250, %v267
  %v269 = vsel %vm255, %v266, %v268
  %v270 = vshll.u32 %v230, 8
  %v271 = vmul.u32.u64.compose %v270, %v269
  %v272 = vextract.low.u32 %v271
  %v273 = vextract.high.u32 %v271
  %v274 = vmul.u32.u64.compose %v270, %v265
  %v275 = vextract.low.u32 %v274
  %v276 = vextract.high.u32 %v274
  %v277 = vmul.u32 %v270, %v261
  %v278 = vadd.s32 %v273, %v275
  %vm279 = vc.u32 %v273, %v275
  %v280 = vadd.s32 %v276, 1
  %v281 = vsel %vm279, %v280, %v276
  %v282 = vadd.s32 %v277, %v281
  %v283 = vadd.s32 %v282, 536870912
  %v284 = vshrl.u32 %v283, 30
  %v285 = vshll.u32 %v284, 30
  %v286 = vsub.s32 %v282, %v285
  %vm287 = vcmp.lt.s32.totalorder %v286, 0
  %v288 = vsub.s32 0, %v286
  %v289 = vsel %vm287, %v288, %v286
  %v290 = vclz %v289
  %v291 = vsub.s32 %v290, 2
  %vm292 = vcmp.gt.s32.totalorder 0, %v291
  %v293 = vsel %vm292, 0, %v291
  %v294 = vsub.s32 32, %v293
  %v295 = vshll.u32 %v286, %v293
  %v296 = vshrl.u32 %v278, %v294
  %v297 = vor.u32 %v295, %v296
  %v298 = vsub.s32 4294967266, %v293
  %v299 = vadd.s32 %v298, 127
  %v300 = vshll.u32 %v299, 23
  %v301 = vor.u32 4788187, %v300
  %v302 = vand.u32 2147483647, %v301
  %v304 = vcvt.s32.f32 %v297
  %v305 = vmul.f32 %v304, %v302
  %v306 = vxor.u32 %v305, 2147483648
  %v307 = vsel %vm224, %v306, %v305
  %v308 = vsub.s32 4, %v284
  %v309 = vsel %vm224, %v308, %v284
  %v310 = vsel %vm223, %v105, %v307
  %v311 = vsel %vm223, 0, %v309
  %v312 = vcosq.f32.pop %v310
  %v313 = vsinq.f32.pop %v310
  %vm314 = vweird.f32 %v105
  %v315 = vadd.s32 %v311, 3
  %v316 = vand.u32 %v315, 3
  %vm317 = vcmp.lt.s32.totalorder %v316, 2
  %vm318 = vcmp.eq.s32.totalorder %v316, 0
  %v319 = vxor.u32 %v313, 2147483648
  %v320 = vsel %vm318, %v312, %v319
  %vm321 = vcmp.eq.s32.totalorder %v316, 2
  %v322 = vxor.u32 %v312, 2147483648
  %v323 = vsel %vm321, %v322, %v313
  %v324 = vsel %vm317, %v320, %v323
  %v325 = vsel %vm314, nan, %v324
  %v326 = vand.u32 2147483647, %v110
  %vm327 = vcmp.le.f32.partialorder %v326, 0.7853982
  %vm328 = vcmp.lt.s32.totalorder %v110, 0
  %v329 = vand.u32 %v110, 2139095040
  %v330 = vshrl.u32 %v329, 23
  %v331 = vsub.s32 %v330, 127
  %v332 = vand.u32 2147483647, %v110
  %v333 = vand.u32 %v332, 8388607
  %v334 = vor.u32 %v333, 8388608
  %v335 = vsub.s32 0, %v334
  %v336 = vadd.s32 %v331, 1
  %vm337 = vcmp.gt.s32.totalorder %v336, 0
  %v338 = vsel %vm337, %v336, 0
  %v339 = vshrl.u32 %v338, 5
  %v340 = vand.u32 %v338, 31
  %v341 = vsub.s32 32, %v340
  %v342 = vshrl.u32 683565275, %v341
  %v343 = vshll.u32 683565275, %v340
  %v344 = vshrl.u32 2475754826, %v341
  %v345 = vor.u32 %v343, %v344
  %v346 = vshll.u32 2475754826, %v340
  %v347 = vshrl.u32 2131351028, %v341
  %v348 = vor.u32 %v346, %v347
  %v349 = vshll.u32 2131351028, %v340
  %v350 = vshrl.u32 2102212464, %v341
  %v351 = vor.u32 %v349, %v350
  %v352 = vshll.u32 2102212464, %v340
  %v353 = vshrl.u32 920167782, %v341
  %v354 = vor.u32 %v352, %v353
  %v355 = vshll.u32 920167782, %v340
  %v356 = vshrl.u32 1326507024, %v341
  %v357 = vor.u32 %v355, %v356
  %vm358 = vcmp.lt.s32.totalorder %v339, 1
  %vm359 = vcmp.lt.s32.totalorder %v339, 2
  %vm360 = vcmp.lt.s32.totalorder %v339, 3
  %vm361 = vcmp.lt.s32.totalorder %v339, 4
  %v362 = vsel %vm358, %v342, %v345
  %v363 = vsel %vm361, %v351, 2102212464
  %v364 = vsel %vm360, %v348, %v363
  %v365 = vsel %vm359, %v362, %v364
  %v366 = vsel %vm358, %v345, %v348
  %v367 = vsel %vm361, %v354, 920167782
  %v368 = vsel %vm360, %v351, %v367
  %v369 = vsel %vm359, %v366, %v368
  %v370 = vsel %vm358, %v348, %v351
  %v371 = vsel %vm361, %v357, 1326507024
  %v372 = vsel %vm360, %v354, %v371
  %v373 = vsel %vm359, %v370, %v372
  %v374 = vshll.u32 %v334, 8
  %v375 = vmul.u32.u64.compose %v374, %v373
  %v376 = vextract.low.u32 %v375
  %v377 = vextract.high.u32 %v375
  %v378 = vmul.u32.u64.compose %v374, %v369
  %v379 = vextract.low.u32 %v378
  %v380 = vextract.high.u32 %v378
  %v381 = vmul.u32 %v374, %v365
  %v382 = vadd.s32 %v377, %v379
  %vm383 = vc.u32 %v377, %v379
  %v384 = vadd.s32 %v380, 1
  %v385 = vsel %vm383, %v384, %v380
  %v386 = vadd.s32 %v381, %v385
  %v387 = vadd.s32 %v386, 536870912
  %v388 = vshrl.u32 %v387, 30
  %v389 = vshll.u32 %v388, 30
  %v390 = vsub.s32 %v386, %v389
  %vm391 = vcmp.lt.s32.totalorder %v390, 0
  %v392 = vsub.s32 0, %v390
  %v393 = vsel %vm391, %v392, %v390
  %v394 = vclz %v393
  %v395 = vsub.s32 %v394, 2
  %vm396 = vcmp.gt.s32.totalorder 0, %v395
  %v397 = vsel %vm396, 0, %v395
  %v398 = vsub.s32 32, %v397
  %v399 = vshll.u32 %v390, %v397
  %v400 = vshrl.u32 %v382, %v398
  %v401 = vor.u32 %v399, %v400
  %v402 = vsub.s32 4294967266, %v397
  %v403 = vadd.s32 %v402, 127
  %v404 = vshll.u32 %v403, 23
  %v405 = vor.u32 4788187, %v404
  %v406 = vand.u32 2147483647, %v405
  %v408 = vcvt.s32.f32 %v401
  %v409 = vmul.f32 %v408, %v406
  %v410 = vxor.u32 %v409, 2147483648
  %v411 = vsel %vm328, %v410, %v409
  %v412 = vsub.s32 4, %v388
  %v413 = vsel %vm328, %v412, %v388
  %v414 = vsel %vm327, %v110, %v411
  %v415 = vsel %vm327, 0, %v413
  %v416 = vcosq.f32.pop %v414
  %v417 = vsinq.f32.pop %v414
  %vm418 = vweird.f32 %v110
  %v419 = vadd.s32 %v415, 3
  %v420 = vand.u32 %v419, 3
  %vm421 = vcmp.lt.s32.totalorder %v420, 2
  %vm422 = vcmp.eq.s32.totalorder %v420, 0
  %v423 = vxor.u32 %v417, 2147483648
  %v424 = vsel %vm422, %v416, %v423
  %vm425 = vcmp.eq.s32.totalorder %v420, 2
  %v426 = vxor.u32 %v416, 2147483648
  %v427 = vsel %vm425, %v426, %v417
  %v428 = vsel %vm421, %v424, %v427
  %v429 = vsel %vm418, nan, %v428
  %v430 = vand.u32 2147483647, %v115
  %vm431 = vcmp.le.f32.partialorder %v430, 0.7853982
  %vm432 = vcmp.lt.s32.totalorder %v115, 0
  %v433 = vand.u32 %v115, 2139095040
  %v434 = vshrl.u32 %v433, 23
  %v435 = vsub.s32 %v434, 127
  %v436 = vand.u32 2147483647, %v115
  %v437 = vand.u32 %v436, 8388607
  %v438 = vor.u32 %v437, 8388608
  %v439 = vsub.s32 0, %v438
  %v440 = vadd.s32 %v435, 1
  %vm441 = vcmp.gt.s32.totalorder %v440, 0
  %v442 = vsel %vm441, %v440, 0
  %v443 = vshrl.u32 %v442, 5
  %v444 = vand.u32 %v442, 31
  %v445 = vsub.s32 32, %v444
  %v446 = vshrl.u32 683565275, %v445
  %v447 = vshll.u32 683565275, %v444
  %v448 = vshrl.u32 2475754826, %v445
  %v449 = vor.u32 %v447, %v448
  %v450 = vshll.u32 2475754826, %v444
  %v451 = vshrl.u32 2131351028, %v445
  %v452 = vor.u32 %v450, %v451
  %v453 = vshll.u32 2131351028, %v444
  %v454 = vshrl.u32 2102212464, %v445
  %v455 = vor.u32 %v453, %v454
  %v456 = vshll.u32 2102212464, %v444
  %v457 = vshrl.u32 920167782, %v445
  %v458 = vor.u32 %v456, %v457
  %v459 = vshll.u32 920167782, %v444
  %v460 = vshrl.u32 1326507024, %v445
  %v461 = vor.u32 %v459, %v460
  %vm462 = vcmp.lt.s32.totalorder %v443, 1
  %vm463 = vcmp.lt.s32.totalorder %v443, 2
  %vm464 = vcmp.lt.s32.totalorder %v443, 3
  %vm465 = vcmp.lt.s32.totalorder %v443, 4
  %v466 = vsel %vm462, %v446, %v449
  %v467 = vsel %vm465, %v455, 2102212464
  %v468 = vsel %vm464, %v452, %v467
  %v469 = vsel %vm463, %v466, %v468
  %v470 = vsel %vm462, %v449, %v452
  %v471 = vsel %vm465, %v458, 920167782
  %v472 = vsel %vm464, %v455, %v471
  %v473 = vsel %vm463, %v470, %v472
  %v474 = vsel %vm462, %v452, %v455
  %v475 = vsel %vm465, %v461, 1326507024
  %v476 = vsel %vm464, %v458, %v475
  %v477 = vsel %vm463, %v474, %v476
  %v478 = vshll.u32 %v438, 8
  %v479 = vmul.u32.u64.compose %v478, %v477
  %v480 = vextract.low.u32 %v479
  %v481 = vextract.high.u32 %v479
  %v482 = vmul.u32.u64.compose %v478, %v473
  %v483 = vextract.low.u32 %v482
  %v484 = vextract.high.u32 %v482
  %v485 = vmul.u32 %v478, %v469
  %v486 = vadd.s32 %v481, %v483
  %vm487 = vc.u32 %v481, %v483
  %v488 = vadd.s32 %v484, 1
  %v489 = vsel %vm487, %v488, %v484
  %v490 = vadd.s32 %v485, %v489
  %v491 = vadd.s32 %v490, 536870912
  %v492 = vshrl.u32 %v491, 30
  %v493 = vshll.u32 %v492, 30
  %v494 = vsub.s32 %v490, %v493
  %vm495 = vcmp.lt.s32.totalorder %v494, 0
  %v496 = vsub.s32 0, %v494
  %v497 = vsel %vm495, %v496, %v494
  %v498 = vclz %v497
  %v499 = vsub.s32 %v498, 2
  %vm500 = vcmp.gt.s32.totalorder 0, %v499
  %v501 = vsel %vm500, 0, %v499
  %v502 = vsub.s32 32, %v501
  %v503 = vshll.u32 %v494, %v501
  %v504 = vshrl.u32 %v486, %v502
  %v505 = vor.u32 %v503, %v504
  %v506 = vsub.s32 4294967266, %v501
  %v507 = vadd.s32 %v506, 127
  %v508 = vshll.u32 %v507, 23
  %v509 = vor.u32 4788187, %v508
  %v510 = vand.u32 2147483647, %v509
  %v512 = vcvt.s32.f32 %v505
  %v513 = vmul.f32 %v512, %v510
  %v514 = vxor.u32 %v513, 2147483648
  %v515 = vsel %vm432, %v514, %v513
  %v516 = vsub.s32 4, %v492
  %v517 = vsel %vm432, %v516, %v492
  %v518 = vsel %vm431, %v115, %v515
  %v519 = vsel %vm431, 0, %v517
  %v520 = vcosq.f32.pop %v518
  %v521 = vsinq.f32.pop %v518
  %vm522 = vweird.f32 %v115
  %v523 = vadd.s32 %v519, 3
  %v524 = vand.u32 %v523, 3
  %vm525 = vcmp.lt.s32.totalorder %v524, 2
  %vm526 = vcmp.eq.s32.totalorder %v524, 0
  %v527 = vxor.u32 %v521, 2147483648
  %v528 = vsel %vm526, %v520, %v527
  %vm529 = vcmp.eq.s32.totalorder %v524, 2
  %v530 = vxor.u32 %v520, 2147483648
  %v531 = vsel %vm529, %v530, %v521
  %v532 = vsel %vm525, %v528, %v531
  %v533 = vsel %vm522, nan, %v532
  %v534 = vand.u32 2147483647, %v100
  %vm535 = vcmp.le.f32.partialorder %v534, 0.7853982
  %vm536 = vcmp.lt.s32.totalorder %v100, 0
  %v537 = vand.u32 %v100, 2139095040
  %v538 = vshrl.u32 %v537, 23
  %v539 = vsub.s32 %v538, 127
  %v540 = vand.u32 2147483647, %v100
  %v541 = vand.u32 %v540, 8388607
  %v542 = vor.u32 %v541, 8388608
  %v543 = vsub.s32 0, %v542
  %v544 = vadd.s32 %v539, 1
  %vm545 = vcmp.gt.s32.totalorder %v544, 0
  %v546 = vsel %vm545, %v544, 0
  %v547 = vshrl.u32 %v546, 5
  %v548 = vand.u32 %v546, 31
  %v549 = vsub.s32 32, %v548
  %v550 = vshrl.u32 683565275, %v549
  %v551 = vshll.u32 683565275, %v548
  %v552 = vshrl.u32 2475754826, %v549
  %v553 = vor.u32 %v551, %v552
  %v554 = vshll.u32 2475754826, %v548
  %v555 = vshrl.u32 2131351028, %v549
  %v556 = vor.u32 %v554, %v555
  %v557 = vshll.u32 2131351028, %v548
  %v558 = vshrl.u32 2102212464, %v549
  %v559 = vor.u32 %v557, %v558
  %v560 = vshll.u32 2102212464, %v548
  %v561 = vshrl.u32 920167782, %v549
  %v562 = vor.u32 %v560, %v561
  %v563 = vshll.u32 920167782, %v548
  %v564 = vshrl.u32 1326507024, %v549
  %v565 = vor.u32 %v563, %v564
  %vm566 = vcmp.lt.s32.totalorder %v547, 1
  %vm567 = vcmp.lt.s32.totalorder %v547, 2
  %vm568 = vcmp.lt.s32.totalorder %v547, 3
  %vm569 = vcmp.lt.s32.totalorder %v547, 4
  %v570 = vsel %vm566, %v550, %v553
  %v571 = vsel %vm569, %v559, 2102212464
  %v572 = vsel %vm568, %v556, %v571
  %v573 = vsel %vm567, %v570, %v572
  %v574 = vsel %vm566, %v553, %v556
  %v575 = vsel %vm569, %v562, 920167782
  %v576 = vsel %vm568, %v559, %v575
  %v577 = vsel %vm567, %v574, %v576
  %v578 = vsel %vm566, %v556, %v559
  %v579 = vsel %vm569, %v565, 1326507024
  %v580 = vsel %vm568, %v562, %v579
  %v581 = vsel %vm567, %v578, %v580
  %v582 = vshll.u32 %v542, 8
  %v583 = vmul.u32.u64.compose %v582, %v581
  %v584 = vextract.low.u32 %v583
  %v585 = vextract.high.u32 %v583
  %v586 = vmul.u32.u64.compose %v582, %v577
  %v587 = vextract.low.u32 %v586
  %v588 = vextract.high.u32 %v586
  %v589 = vmul.u32 %v582, %v573
  %v590 = vadd.s32 %v585, %v587
  %vm591 = vc.u32 %v585, %v587
  %v592 = vadd.s32 %v588, 1
  %v593 = vsel %vm591, %v592, %v588
  %v594 = vadd.s32 %v589, %v593
  %v595 = vadd.s32 %v594, 536870912
  %v596 = vshrl.u32 %v595, 30
  %v597 = vshll.u32 %v596, 30
  %v598 = vsub.s32 %v594, %v597
  %vm599 = vcmp.lt.s32.totalorder %v598, 0
  %v600 = vsub.s32 0, %v598
  %v601 = vsel %vm599, %v600, %v598
  %v602 = vclz %v601
  %v603 = vsub.s32 %v602, 2
  %vm604 = vcmp.gt.s32.totalorder 0, %v603
  %v605 = vsel %vm604, 0, %v603
  %v606 = vsub.s32 32, %v605
  %v607 = vshll.u32 %v598, %v605
  %v608 = vshrl.u32 %v590, %v606
  %v609 = vor.u32 %v607, %v608
  %v610 = vsub.s32 4294967266, %v605
  %v611 = vadd.s32 %v610, 127
  %v612 = vshll.u32 %v611, 23
  %v613 = vor.u32 4788187, %v612
  %v614 = vand.u32 2147483647, %v613
  %v616 = vcvt.s32.f32 %v609
  %v617 = vmul.f32 %v616, %v614
  %v618 = vxor.u32 %v617, 2147483648
  %v619 = vsel %vm536, %v618, %v617
  %v620 = vsub.s32 4, %v596
  %v621 = vsel %vm536, %v620, %v596
  %v622 = vsel %vm535, %v100, %v619
  %v623 = vsel %vm535, 0, %v621
  %v624 = vcosq.f32.pop %v622
  %v625 = vsinq.f32.pop %v622
  %vm626 = vweird.f32 %v100
  %v627 = vand.u32 %v623, 3
  %vm628 = vcmp.lt.s32.totalorder %v627, 2
  %vm629 = vcmp.eq.s32.totalorder %v627, 0
  %v630 = vxor.u32 %v625, 2147483648
  %v631 = vsel %vm629, %v624, %v630
  %vm632 = vcmp.eq.s32.totalorder %v627, 2
  %v633 = vxor.u32 %v624, 2147483648
  %v634 = vsel %vm632, %v633, %v625
  %v635 = vsel %vm628, %v631, %v634
  %v636 = vsel %vm626, nan, %v635
  %v637 = vand.u32 2147483647, %v105
  %vm638 = vcmp.le.f32.partialorder %v637, 0.7853982
  %vm639 = vcmp.lt.s32.totalorder %v105, 0
  %v640 = vand.u32 %v105, 2139095040
  %v641 = vshrl.u32 %v640, 23
  %v642 = vsub.s32 %v641, 127
  %v643 = vand.u32 2147483647, %v105
  %v644 = vand.u32 %v643, 8388607
  %v645 = vor.u32 %v644, 8388608
  %v646 = vsub.s32 0, %v645
  %v647 = vadd.s32 %v642, 1
  %vm648 = vcmp.gt.s32.totalorder %v647, 0
  %v649 = vsel %vm648, %v647, 0
  %v650 = vshrl.u32 %v649, 5
  %v651 = vand.u32 %v649, 31
  %v652 = vsub.s32 32, %v651
  %v653 = vshrl.u32 683565275, %v652
  %v654 = vshll.u32 683565275, %v651
  %v655 = vshrl.u32 2475754826, %v652
  %v656 = vor.u32 %v654, %v655
  %v657 = vshll.u32 2475754826, %v651
  %v658 = vshrl.u32 2131351028, %v652
  %v659 = vor.u32 %v657, %v658
  %v660 = vshll.u32 2131351028, %v651
  %v661 = vshrl.u32 2102212464, %v652
  %v662 = vor.u32 %v660, %v661
  %v663 = vshll.u32 2102212464, %v651
  %v664 = vshrl.u32 920167782, %v652
  %v665 = vor.u32 %v663, %v664
  %v666 = vshll.u32 920167782, %v651
  %v667 = vshrl.u32 1326507024, %v652
  %v668 = vor.u32 %v666, %v667
  %vm669 = vcmp.lt.s32.totalorder %v650, 1
  %vm670 = vcmp.lt.s32.totalorder %v650, 2
  %vm671 = vcmp.lt.s32.totalorder %v650, 3
  %vm672 = vcmp.lt.s32.totalorder %v650, 4
  %v673 = vsel %vm669, %v653, %v656
  %v674 = vsel %vm672, %v662, 2102212464
  %v675 = vsel %vm671, %v659, %v674
  %v676 = vsel %vm670, %v673, %v675
  %v677 = vsel %vm669, %v656, %v659
  %v678 = vsel %vm672, %v665, 920167782
  %v679 = vsel %vm671, %v662, %v678
  %v680 = vsel %vm670, %v677, %v679
  %v681 = vsel %vm669, %v659, %v662
  %v682 = vsel %vm672, %v668, 1326507024
  %v683 = vsel %vm671, %v665, %v682
  %v684 = vsel %vm670, %v681, %v683
  %v685 = vshll.u32 %v645, 8
  %v686 = vmul.u32.u64.compose %v685, %v684
  %v687 = vextract.low.u32 %v686
  %v688 = vextract.high.u32 %v686
  %v689 = vmul.u32.u64.compose %v685, %v680
  %v690 = vextract.low.u32 %v689
  %v691 = vextract.high.u32 %v689
  %v692 = vmul.u32 %v685, %v676
  %v693 = vadd.s32 %v688, %v690
  %vm694 = vc.u32 %v688, %v690
  %v695 = vadd.s32 %v691, 1
  %v696 = vsel %vm694, %v695, %v691
  %v697 = vadd.s32 %v692, %v696
  %v698 = vadd.s32 %v697, 536870912
  %v699 = vshrl.u32 %v698, 30
  %v700 = vshll.u32 %v699, 30
  %v701 = vsub.s32 %v697, %v700
  %vm702 = vcmp.lt.s32.totalorder %v701, 0
  %v703 = vsub.s32 0, %v701
  %v704 = vsel %vm702, %v703, %v701
  %v705 = vclz %v704
  %v706 = vsub.s32 %v705, 2
  %vm707 = vcmp.gt.s32.totalorder 0, %v706
  %v708 = vsel %vm707, 0, %v706
  %v709 = vsub.s32 32, %v708
  %v710 = vshll.u32 %v701, %v708
  %v711 = vshrl.u32 %v693, %v709
  %v712 = vor.u32 %v710, %v711
  %v713 = vsub.s32 4294967266, %v708
  %v714 = vadd.s32 %v713, 127
  %v715 = vshll.u32 %v714, 23
  %v716 = vor.u32 4788187, %v715
  %v717 = vand.u32 2147483647, %v716
  %v719 = vcvt.s32.f32 %v712
  %v720 = vmul.f32 %v719, %v717
  %v721 = vxor.u32 %v720, 2147483648
  %v722 = vsel %vm639, %v721, %v720
  %v723 = vsub.s32 4, %v699
  %v724 = vsel %vm639, %v723, %v699
  %v725 = vsel %vm638, %v105, %v722
  %v726 = vsel %vm638, 0, %v724
  %v727 = vcosq.f32.pop %v725
  %v728 = vsinq.f32.pop %v725
  %vm729 = vweird.f32 %v105
  %v730 = vand.u32 %v726, 3
  %vm731 = vcmp.lt.s32.totalorder %v730, 2
  %vm732 = vcmp.eq.s32.totalorder %v730, 0
  %v733 = vxor.u32 %v728, 2147483648
  %v734 = vsel %vm732, %v727, %v733
  %vm735 = vcmp.eq.s32.totalorder %v730, 2
  %v736 = vxor.u32 %v727, 2147483648
  %v737 = vsel %vm735, %v736, %v728
  %v738 = vsel %vm731, %v734, %v737
  %v739 = vsel %vm729, nan, %v738
  %v740 = vand.u32 2147483647, %v110
  %vm741 = vcmp.le.f32.partialorder %v740, 0.7853982
  %vm742 = vcmp.lt.s32.totalorder %v110, 0
  %v743 = vand.u32 %v110, 2139095040
  %v744 = vshrl.u32 %v743, 23
  %v745 = vsub.s32 %v744, 127
  %v746 = vand.u32 2147483647, %v110
  %v747 = vand.u32 %v746, 8388607
  %v748 = vor.u32 %v747, 8388608
  %v749 = vsub.s32 0, %v748
  %v750 = vadd.s32 %v745, 1
  %vm751 = vcmp.gt.s32.totalorder %v750, 0
  %v752 = vsel %vm751, %v750, 0
  %v753 = vshrl.u32 %v752, 5
  %v754 = vand.u32 %v752, 31
  %v755 = vsub.s32 32, %v754
  %v756 = vshrl.u32 683565275, %v755
  %v757 = vshll.u32 683565275, %v754
  %v758 = vshrl.u32 2475754826, %v755
  %v759 = vor.u32 %v757, %v758
  %v760 = vshll.u32 2475754826, %v754
  %v761 = vshrl.u32 2131351028, %v755
  %v762 = vor.u32 %v760, %v761
  %v763 = vshll.u32 2131351028, %v754
  %v764 = vshrl.u32 2102212464, %v755
  %v765 = vor.u32 %v763, %v764
  %v766 = vshll.u32 2102212464, %v754
  %v767 = vshrl.u32 920167782, %v755
  %v768 = vor.u32 %v766, %v767
  %v769 = vshll.u32 920167782, %v754
  %v770 = vshrl.u32 1326507024, %v755
  %v771 = vor.u32 %v769, %v770
  %vm772 = vcmp.lt.s32.totalorder %v753, 1
  %vm773 = vcmp.lt.s32.totalorder %v753, 2
  %vm774 = vcmp.lt.s32.totalorder %v753, 3
  %vm775 = vcmp.lt.s32.totalorder %v753, 4
  %v776 = vsel %vm772, %v756, %v759
  %v777 = vsel %vm775, %v765, 2102212464
  %v778 = vsel %vm774, %v762, %v777
  %v779 = vsel %vm773, %v776, %v778
  %v780 = vsel %vm772, %v759, %v762
  %v781 = vsel %vm775, %v768, 920167782
  %v782 = vsel %vm774, %v765, %v781
  %v783 = vsel %vm773, %v780, %v782
  %v784 = vsel %vm772, %v762, %v765
  %v785 = vsel %vm775, %v771, 1326507024
  %v786 = vsel %vm774, %v768, %v785
  %v787 = vsel %vm773, %v784, %v786
  %v788 = vshll.u32 %v748, 8
  %v789 = vmul.u32.u64.compose %v788, %v787
  %v790 = vextract.low.u32 %v789
  %v791 = vextract.high.u32 %v789
  %v792 = vmul.u32.u64.compose %v788, %v783
  %v793 = vextract.low.u32 %v792
  %v794 = vextract.high.u32 %v792
  %v795 = vmul.u32 %v788, %v779
  %v796 = vadd.s32 %v791, %v793
  %vm797 = vc.u32 %v791, %v793
  %v798 = vadd.s32 %v794, 1
  %v799 = vsel %vm797, %v798, %v794
  %v800 = vadd.s32 %v795, %v799
  %v801 = vadd.s32 %v800, 536870912
  %v802 = vshrl.u32 %v801, 30
  %v803 = vshll.u32 %v802, 30
  %v804 = vsub.s32 %v800, %v803
  %vm805 = vcmp.lt.s32.totalorder %v804, 0
  %v806 = vsub.s32 0, %v804
  %v807 = vsel %vm805, %v806, %v804
  %v808 = vclz %v807
  %v809 = vsub.s32 %v808, 2
  %vm810 = vcmp.gt.s32.totalorder 0, %v809
  %v811 = vsel %vm810, 0, %v809
  %v812 = vsub.s32 32, %v811
  %v813 = vshll.u32 %v804, %v811
  %v814 = vshrl.u32 %v796, %v812
  %v815 = vor.u32 %v813, %v814
  %v816 = vsub.s32 4294967266, %v811
  %v817 = vadd.s32 %v816, 127
  %v818 = vshll.u32 %v817, 23
  %v819 = vor.u32 4788187, %v818
  %v820 = vand.u32 2147483647, %v819
  %v822 = vcvt.s32.f32 %v815
  %v823 = vmul.f32 %v822, %v820
  %v824 = vxor.u32 %v823, 2147483648
  %v825 = vsel %vm742, %v824, %v823
  %v826 = vsub.s32 4, %v802
  %v827 = vsel %vm742, %v826, %v802
  %v828 = vsel %vm741, %v110, %v825
  %v829 = vsel %vm741, 0, %v827
  %v830 = vcosq.f32.pop %v828
  %v831 = vsinq.f32.pop %v828
  %vm832 = vweird.f32 %v110
  %v833 = vand.u32 %v829, 3
  %vm834 = vcmp.lt.s32.totalorder %v833, 2
  %vm835 = vcmp.eq.s32.totalorder %v833, 0
  %v836 = vxor.u32 %v831, 2147483648
  %v837 = vsel %vm835, %v830, %v836
  %vm838 = vcmp.eq.s32.totalorder %v833, 2
  %v839 = vxor.u32 %v830, 2147483648
  %v840 = vsel %vm838, %v839, %v831
  %v841 = vsel %vm834, %v837, %v840
  %v842 = vsel %vm832, nan, %v841
  %v843 = vand.u32 2147483647, %v115
  %vm844 = vcmp.le.f32.partialorder %v843, 0.7853982
  %vm845 = vcmp.lt.s32.totalorder %v115, 0
  %v846 = vand.u32 %v115, 2139095040
  %v847 = vshrl.u32 %v846, 23
  %v848 = vsub.s32 %v847, 127
  %v849 = vand.u32 2147483647, %v115
  %v850 = vand.u32 %v849, 8388607
  %v851 = vor.u32 %v850, 8388608
  %v852 = vsub.s32 0, %v851
  %v853 = vadd.s32 %v848, 1
  %vm854 = vcmp.gt.s32.totalorder %v853, 0
  %v855 = vsel %vm854, %v853, 0
  %v856 = vshrl.u32 %v855, 5
  %v857 = vand.u32 %v855, 31
  %v858 = vsub.s32 32, %v857
  %v859 = vshrl.u32 683565275, %v858
  %v860 = vshll.u32 683565275, %v857
  %v861 = vshrl.u32 2475754826, %v858
  %v862 = vor.u32 %v860, %v861
  %v863 = vshll.u32 2475754826, %v857
  %v864 = vshrl.u32 2131351028, %v858
  %v865 = vor.u32 %v863, %v864
  %v866 = vshll.u32 2131351028, %v857
  %v867 = vshrl.u32 2102212464, %v858
  %v868 = vor.u32 %v866, %v867
  %v869 = vshll.u32 2102212464, %v857
  %v870 = vshrl.u32 920167782, %v858
  %v871 = vor.u32 %v869, %v870
  %v872 = vshll.u32 920167782, %v857
  %v873 = vshrl.u32 1326507024, %v858
  %v874 = vor.u32 %v872, %v873
  %vm875 = vcmp.lt.s32.totalorder %v856, 1
  %vm876 = vcmp.lt.s32.totalorder %v856, 2
  %vm877 = vcmp.lt.s32.totalorder %v856, 3
  %vm878 = vcmp.lt.s32.totalorder %v856, 4
  %v879 = vsel %vm875, %v859, %v862
  %v880 = vsel %vm878, %v868, 2102212464
  %v881 = vsel %vm877, %v865, %v880
  %v882 = vsel %vm876, %v879, %v881
  %v883 = vsel %vm875, %v862, %v865
  %v884 = vsel %vm878, %v871, 920167782
  %v885 = vsel %vm877, %v868, %v884
  %v886 = vsel %vm876, %v883, %v885
  %v887 = vsel %vm875, %v865, %v868
  %v888 = vsel %vm878, %v874, 1326507024
  %v889 = vsel %vm877, %v871, %v888
  %v890 = vsel %vm876, %v887, %v889
  %v891 = vshll.u32 %v851, 8
  %v892 = vmul.u32.u64.compose %v891, %v890
  %v893 = vextract.low.u32 %v892
  %v894 = vextract.high.u32 %v892
  %v895 = vmul.u32.u64.compose %v891, %v886
  %v896 = vextract.low.u32 %v895
  %v897 = vextract.high.u32 %v895
  %v898 = vmul.u32 %v891, %v882
  %v899 = vadd.s32 %v894, %v896
  %vm900 = vc.u32 %v894, %v896
  %v901 = vadd.s32 %v897, 1
  %v902 = vsel %vm900, %v901, %v897
  %v903 = vadd.s32 %v898, %v902
  %v904 = vadd.s32 %v903, 536870912
  %v905 = vshrl.u32 %v904, 30
  %v906 = vshll.u32 %v905, 30
  %v907 = vsub.s32 %v903, %v906
  %vm908 = vcmp.lt.s32.totalorder %v907, 0
  %v909 = vsub.s32 0, %v907
  %v910 = vsel %vm908, %v909, %v907
  %v911 = vclz %v910
  %v912 = vsub.s32 %v911, 2
  %vm913 = vcmp.gt.s32.totalorder 0, %v912
  %v914 = vsel %vm913, 0, %v912
  %v915 = vsub.s32 32, %v914
  %v916 = vshll.u32 %v907, %v914
  %v917 = vshrl.u32 %v899, %v915
  %v918 = vor.u32 %v916, %v917
  %v919 = vsub.s32 4294967266, %v914
  %v920 = vadd.s32 %v919, 127
  %v921 = vshll.u32 %v920, 23
  %v922 = vor.u32 4788187, %v921
  %v923 = vand.u32 2147483647, %v922
  %v925 = vcvt.s32.f32 %v918
  %v926 = vmul.f32 %v925, %v923
  %v927 = vxor.u32 %v926, 2147483648
  %v928 = vsel %vm845, %v927, %v926
  %v929 = vsub.s32 4, %v905
  %v930 = vsel %vm845, %v929, %v905
  %v931 = vsel %vm844, %v115, %v928
  %v932 = vsel %vm844, 0, %v930
  %v933 = vcosq.f32.pop %v931
  %v934 = vsinq.f32.pop %v931
  %vm935 = vweird.f32 %v115
  %v936 = vand.u32 %v932, 3
  %vm937 = vcmp.lt.s32.totalorder %v936, 2
  %vm938 = vcmp.eq.s32.totalorder %v936, 0
  %v939 = vxor.u32 %v934, 2147483648
  %v940 = vsel %vm938, %v933, %v939
  %vm941 = vcmp.eq.s32.totalorder %v936, 2
  %v942 = vxor.u32 %v933, 2147483648
  %v943 = vsel %vm941, %v942, %v934
  %v944 = vsel %vm937, %v940, %v943
  %v945 = vsel %vm935, nan, %v944
  %950 = vrot.lane.b32.xlu0 %v636, 16
  %v951 = vpop.permute.xlu0 %950
  %952 = vrot.lane.b32.xlu0 %v739, 16
  %v953 = vpop.permute.xlu0 %952
  %954 = vrot.lane.b32.xlu0 %v842, 16
  %v955 = vpop.permute.xlu0 %954
  %956 = vrot.lane.b32.xlu0 %v945, 16
  %v957 = vpop.permute.xlu0 %956
  %vm962 = vcmask 130048
  %v963 = vsel %vm962, %v221, %v951
  %v964 = vsel %vm962, %v325, %v953
  %v965 = vsel %vm962, %v429, %v955
  %v966 = vsel %vm962, %v533, %v957
  %vm967 = vcmask 261120
  %968 = vst.msk [vmem:[%s2] sm:$0xff] %vm967, %v963
  %969 = vst.msk [vmem:[%s2 + $0x8] sm:$0xff] %vm967, %v964
  %970 = vst.msk [vmem:[%s2 + $0x10] sm:$0xff] %vm967, %v965
  %971 = vst.msk [vmem:[%s2 + $0x18] sm:$0xff] %vm967, %v966
  // Predicated region
  $region10: #{_lambda_.12} parent=0 // pred_check
    _
  $region11: #{_lambda_.12} parent=0 // pred_check_branch
    %973 = sbr.rel (0) target = $region13
  $region12: #{_lambda_.12} parent=0 // pred_region
    _
  $region13: #{_lambda_.12} parent=0 // pred_fallthru
    _
  // Predicated region
  $region14: #{_lambda_.12} parent=0 // pred_check
    _
  $region15: #{_lambda_.12} parent=0 // pred_check_branch
    %975 = sbr.rel (0) target = $region17
  $region16: #{_lambda_.12} parent=0 // pred_region
    _
  $region17: #{_lambda_.12} parent=0 // pred_fallthru
    _

// kernel: _lambda_.15
$region0: #{_lambda_.15}
  #allocation0 [shape = 'u32[]', space=smem, size = 0x4, offset = 0x4, fixed_abs, tag = 'smem constant byte address 0x4 - core index']
  #allocation1 [shape = 'u32[144,128]{1,0:T(1,128)}', space=vmem, size = 0x12000, scoped, tag = 'internal scratch']
  %s0 = inlined_call_operand.vmem [shape: f32[32,32], index: 0, kind: input, shape index: {}]
  %s1 = inlined_call_operand.vmem [shape: f32[32,96], index: 1, kind: input, shape index: {}]
  %s2 = inlined_call_operand.vmem [shape: f32[96,96], index: 2, kind: input, shape index: {}]
  %s3 = inlined_call_operand.vmem [shape: f32[96,128], index: 3, kind: input, shape index: {}]
  %s4 = inlined_call_operand.vmem [shape: f32[1,128], index: 4, kind: input, shape index: {}]
  %s5 = inlined_call_operand.vmem [shape: f32[32,128], index: 5, kind: output, shape index: {}]
  %s6 = sld [smem:[#allocation0]]
  $region30: #{_lambda_.15} parent=0
    _
  %s8 = ssub.s32 1, %s6
  %s9 = scalar_select 0, %s8, %s6
  // Predicated region
  $region2: #{_lambda_.15} parent=0 // pred_check
    _
  $region3: #{_lambda_.15} parent=0 // pred_check_branch
    %11 = sbr.rel (0) target = $region5
  $region4: #{_lambda_.15} parent=0 // pred_region
    _
  $region5: #{_lambda_.15} parent=0 // pred_fallthru
    _
  // Predicated region
  $region6: #{_lambda_.15} parent=0 // pred_check
    _
  $region7: #{_lambda_.15} parent=0 // pred_check_branch
    %13 = sbr.rel (0) target = $region9
  $region8: #{_lambda_.15} parent=0 // pred_region
    _
  $region9: #{_lambda_.15} parent=0 // pred_fallthru
    _
  // Predicated region
  $region10: #{_lambda_.15} parent=0 // pred_check
    _
  $region11: #{_lambda_.15} parent=0 // pred_check_branch
    %15 = sbr.rel (0) target = $region13
  $region12: #{_lambda_.15} parent=0 // pred_region
    _
  $region13: #{_lambda_.15} parent=0 // pred_fallthru
    _
  // Predicated region
  $region14: #{_lambda_.15} parent=0 // pred_check
    _
  $region15: #{_lambda_.15} parent=0 // pred_check_branch
    %17 = sbr.rel (0) target = $region17
  $region16: #{_lambda_.15} parent=0 // pred_region
    _
  $region17: #{_lambda_.15} parent=0 // pred_fallthru
    _
  // Predicated region
  $region18: #{_lambda_.15} parent=0 // pred_check
    _
  $region19: #{_lambda_.15} parent=0 // pred_check_branch
    %19 = sbr.rel (0) target = $region21
  $region20: #{_lambda_.15} parent=0 // pred_region
    _
  $region21: #{_lambda_.15} parent=0 // pred_fallthru
    _
  %v20 = vld [vmem:[%s0] sm:$0xff]
  %v21 = vld [vmem:[%s0 + $0x8] sm:$0xff]
  %v22 = vld [vmem:[%s0 + $0x10] sm:$0xff]
  %v23 = vld [vmem:[%s0 + $0x18] sm:$0xff]
  %v24 = vld [vmem:[%s1] sm:$0xff]
  %v25 = vld [vmem:[%s1 + $0x8] sm:$0xff]
  %v26 = vld [vmem:[%s1 + $0x10] sm:$0xff]
  %v27 = vld [vmem:[%s1 + $0x18] sm:$0xff]
  %vm28 = vcmask 261120
  %v30 = vsel %vm28, %v20, 0
  %v33 = vsel %vm28, %v21, 0
  %v36 = vsel %vm28, %v22, 0
  %v39 = vsel %vm28, %v23, 0
  %41 = vmatprep.subr.mxu0 0.0
  %42 = vmatpush1.msra.mxu0 %v24
  %43 = vmatprep.subr.mxu0 0.0
  %44 = vmatpush1.msra.mxu0 %v25
  %45 = vmatprep.subr.mxu0 0.0
  %46 = vmatpush1.msra.mxu0 %v26
  %47 = vmatprep.subr.mxu0 0.0
  %48 = vmatpush1.msra.mxu0 %v27
  %49 = vmatprep.subr.mxu0 0.0
  %50 = vmatpush1.msra.mxu0 0.0
  %51 = vmatprep.subr.mxu0 0.0
  %52 = vmatpush1.msra.mxu0 0.0
  %53 = vmatprep.subr.mxu0 0.0
  %54 = vmatpush1.msra.mxu0 0.0
  %55 = vmatprep.subr.mxu0 0.0
  %56 = vmatpush1.msra.mxu0 0.0
  %57 = vmatprep.subr.mxu0 0.0
  %58 = vmatpush1.msra.mxu0 0.0
  %59 = vmatprep.subr.mxu0 0.0
  %60 = vmatpush1.msra.mxu0 0.0
  %61 = vmatprep.subr.mxu0 0.0
  %62 = vmatpush1.msra.mxu0 0.0
  %63 = vmatprep.subr.mxu0 0.0
  %64 = vmatpush1.msra.mxu0 0.0
  %65 = vmatprep.subr.mxu0 0.0
  %66 = vmatpush1.msra.mxu0 0.0
  %67 = vmatprep.subr.mxu0 0.0
  %68 = vmatpush1.msra.mxu0 0.0
  %69 = vmatprep.subr.mxu0 0.0
  %70 = vmatpush1.msra.mxu0 0.0
  %71 = vmatprep.subr.mxu0 0.0
  %72 = vmatpush1.msra.mxu0 0.0
  %73 = vmatprep.subr.mxu0 0.0
  %74 = vmatpush1.msra.mxu0 0.0
  %75 = vmatprep.subr.mxu0 0.0
  %76 = vmatpush1.msra.mxu0 0.0
  %77 = vmatprep.subr.mxu0 0.0
  %78 = vmatpush1.msra.mxu0 0.0
  %79 = vmatprep.subr.mxu0 0.0
  %80 = vmatpush1.msra.mxu0 0.0
  %81 = vmatprep.subr.mxu0 0.0
  %82 = vmatpush1.msra.mxu0 0.0
  %83 = vmatprep.subr.mxu0 0.0
  %84 = vmatpush1.msra.mxu0 0.0
  %85 = vmatprep.subr.mxu0 0.0
  %86 = vmatpush1.msra.mxu0 0.0
  %87 = vmatprep.subr.mxu0 0.0
  %88 = vmatpush1.msra.mxu0 0.0
  %89 = vmatprep.subr.mxu0 0.0
  %90 = vmatpush1.msra.mxu0 0.0
  %91 = vmatprep.subr.mxu0 0.0
  %92 = vmatpush1.msra.mxu0 0.0
  %93 = vmatprep.subr.mxu0 0.0
  %94 = vmatpush1.msra.mxu0 0.0
  %95 = vmatprep.subr.mxu0 0.0
  %96 = vmatpush1.msra.mxu0 0.0
  %97 = vmatprep.subr.mxu0 0.0
  %98 = vmatpush1.msra.mxu0 0.0
  %99 = vmatprep.subr.mxu0 0.0
  %100 = vmatpush1.msra.mxu0 0.0
  %101 = vmatprep.subr.mxu0 0.0
  %102 = vmatpush1.msra.mxu0 0.0
  %103 = vmatprep.subr.mxu0 0.0
  %104 = vmatpush1.msra.mxu0 0.0
  %105 = vmatprep.mubr.f32.mxu0 0.0
  %106 = vmatmul.mubr.f32.gmra.mrb[0].mxu0 %v30
  %v107 = vpop.f32.mrb[0].mxu0
  %v108 = vadd.f32 0.0, %v107
  %v109 = vpop.f32.mrb[0].mxu0
  %110 = vmatprep.mubr.f32.mxu0 0.0
  %111 = vmatmul.mubr.f32.gmra.mrb[0].mxu0 %v33
  %v112 = vpop.f32.mrb[0].mxu0
  %v113 = vadd.f32 0.0, %v112
  %v114 = vpop.f32.mrb[0].mxu0
  %115 = vmatprep.mubr.f32.mxu0 0.0
  %116 = vmatmul.mubr.f32.gmra.mrb[0].mxu0 %v36
  %v117 = vpop.f32.mrb[0].mxu0
  %v118 = vadd.f32 0.0, %v117
  %v119 = vpop.f32.mrb[0].mxu0
  %120 = vmatprep.mubr.f32.mxu0 0.0
  %121 = vmatmul.mubr.f32.gmra.mrb[0].mxu0 %v39
  %v122 = vpop.f32.mrb[0].mxu0
  %v123 = vadd.f32 0.0, %v122
  %v124 = vpop.f32.mrb[0].mxu0
  %125 = vdwg.mxu0
  %v126 = vmax.f32 %v108, 0.0
  %v127 = vmax.f32 %v113, 0.0
  %v128 = vmax.f32 %v118, 0.0
  %v129 = vmax.f32 %v123, 0.0
  %v130 = vld [vmem:[%s2] sm:$0xff]
  %v131 = vld [vmem:[%s2 + $0x8] sm:$0xff]
  %v132 = vld [vmem:[%s2 + $0x10] sm:$0xff]
  %v133 = vld [vmem:[%s2 + $0x18] sm:$0xff]
  %v134 = vld [vmem:[%s2 + $0x20] sm:$0xff]
  %v135 = vld [vmem:[%s2 + $0x28] sm:$0xff]
  %v136 = vld [vmem:[%s2 + $0x30] sm:$0xff]
  %v137 = vld [vmem:[%s2 + $0x38] sm:$0xff]
  %v138 = vld [vmem:[%s2 + $0x40] sm:$0xff]
  %v139 = vld [vmem:[%s2 + $0x48] sm:$0xff]
  %v140 = vld [vmem:[%s2 + $0x50] sm:$0xff]
  %v141 = vld [vmem:[%s2 + $0x58] sm:$0xff]
  %vm142 = vcmask 785408
  %v144 = vsel %vm142, %v126, 0
  %v147 = vsel %vm142, %v127, 0
  %v150 = vsel %vm142, %v128, 0
  %v153 = vsel %vm142, %v129, 0
  %155 = vmatprep.subr.mxu0 0.0
  %156 = vmatpush1.msra.mxu0 %v130
  %157 = vmatprep.subr.mxu0 0.0
  %158 = vmatpush1.msra.mxu0 %v131
  %159 = vmatprep.subr.mxu0 0.0
  %160 = vmatpush1.msra.mxu0 %v132
  %161 = vmatprep.subr.mxu0 0.0
  %162 = vmatpush1.msra.mxu0 %v133
  %163 = vmatprep.subr.mxu0 0.0
  %164 = vmatpush1.msra.mxu0 %v134
  %165 = vmatprep.subr.mxu0 0.0
  %166 = vmatpush1.msra.mxu0 %v135
  %167 = vmatprep.subr.mxu0 0.0
  %168 = vmatpush1.msra.mxu0 %v136
  %169 = vmatprep.subr.mxu0 0.0
  %170 = vmatpush1.msra.mxu0 %v137
  %171 = vmatprep.subr.mxu0 0.0
  %172 = vmatpush1.msra.mxu0 %v138
  %173 = vmatprep.subr.mxu0 0.0
  %174 = vmatpush1.msra.mxu0 %v139
  %175 = vmatprep.subr.mxu0 0.0
  %176 = vmatpush1.msra.mxu0 %v140
  %177 = vmatprep.subr.mxu0 0.0
  %178 = vmatpush1.msra.mxu0 %v141
  %179 = vmatprep.subr.mxu0 0.0
  %180 = vmatpush1.msra.mxu0 0.0
  %181 = vmatprep.subr.mxu0 0.0
  %182 = vmatpush1.msra.mxu0 0.0
  %183 = vmatprep.subr.mxu0 0.0
  %184 = vmatpush1.msra.mxu0 0.0
  %185 = vmatprep.subr.mxu0 0.0
  %186 = vmatpush1.msra.mxu0 0.0
  %187 = vmatprep.subr.mxu0 0.0
  %188 = vmatpush1.msra.mxu0 0.0
  %189 = vmatprep.subr.mxu0 0.0
  %190 = vmatpush1.msra.mxu0 0.0
  %191 = vmatprep.subr.mxu0 0.0
  %192 = vmatpush1.msra.mxu0 0.0
  %193 = vmatprep.subr.mxu0 0.0
  %194 = vmatpush1.msra.mxu0 0.0
  %195 = vmatprep.subr.mxu0 0.0
  %196 = vmatpush1.msra.mxu0 0.0
  %197 = vmatprep.subr.mxu0 0.0
  %198 = vmatpush1.msra.mxu0 0.0
  %199 = vmatprep.subr.mxu0 0.0
  %200 = vmatpush1.msra.mxu0 0.0
  %201 = vmatprep.subr.mxu0 0.0
  %202 = vmatpush1.msra.mxu0 0.0
  %203 = vmatprep.subr.mxu0 0.0
  %204 = vmatpush1.msra.mxu0 0.0
  %205 = vmatprep.subr.mxu0 0.0
  %206 = vmatpush1.msra.mxu0 0.0
  %207 = vmatprep.subr.mxu0 0.0
  %208 = vmatpush1.msra.mxu0 0.0
  %209 = vmatprep.subr.mxu0 0.0
  %210 = vmatpush1.msra.mxu0 0.0
  %211 = vmatprep.subr.mxu0 0.0
  %212 = vmatpush1.msra.mxu0 0.0
  %213 = vmatprep.subr.mxu0 0.0
  %214 = vmatpush1.msra.mxu0 0.0
  %215 = vmatprep.subr.mxu0 0.0
  %216 = vmatpush1.msra.mxu0 0.0
  %217 = vmatprep.subr.mxu0 0.0
  %218 = vmatpush1.msra.mxu0 0.0
  %219 = vmatprep.mubr.f32.mxu0 0.0
  %220 = vmatmul.mubr.f32.gmra.mrb[0].mxu0 %v144
  %v221 = vpop.f32.mrb[0].mxu0
  %v222 = vadd.f32 0.0, %v221
  %v223 = vpop.f32.mrb[0].mxu0
  %224 = vmatprep.mubr.f32.mxu0 0.0
  %225 = vmatmul.mubr.f32.gmra.mrb[0].mxu0 %v147
  %v226 = vpop.f32.mrb[0].mxu0
  %v227 = vadd.f32 0.0, %v226
  %v228 = vpop.f32.mrb[0].mxu0
  %229 = vmatprep.mubr.f32.mxu0 0.0
  %230 = vmatmul.mubr.f32.gmra.mrb[0].mxu0 %v150
  %v231 = vpop.f32.mrb[0].mxu0
  %v232 = vadd.f32 0.0, %v231
  %v233 = vpop.f32.mrb[0].mxu0
  %234 = vmatprep.mubr.f32.mxu0 0.0
  %235 = vmatmul.mubr.f32.gmra.mrb[0].mxu0 %v153
  %v236 = vpop.f32.mrb[0].mxu0
  %v237 = vadd.f32 0.0, %v236
  %v238 = vpop.f32.mrb[0].mxu0
  %239 = vdwg.mxu0
  %v240 = vmax.f32 %v222, 0.0
  %v241 = vmax.f32 %v227, 0.0
  %v242 = vmax.f32 %v232, 0.0
  %v243 = vmax.f32 %v237, 0.0
  %v244 = vld [vmem:[%s3] sm:$0xff]
  %v245 = vld [vmem:[%s3 + $0x8] sm:$0xff]
  %v246 = vld [vmem:[%s3 + $0x10] sm:$0xff]
  %v247 = vld [vmem:[%s3 + $0x18] sm:$0xff]
  %v248 = vld [vmem:[%s3 + $0x20] sm:$0xff]
  %v249 = vld [vmem:[%s3 + $0x28] sm:$0xff]
  %v250 = vld [vmem:[%s3 + $0x30] sm:$0xff]
  %v251 = vld [vmem:[%s3 + $0x38] sm:$0xff]
  %v252 = vld [vmem:[%s3 + $0x40] sm:$0xff]
  %v253 = vld [vmem:[%s3 + $0x48] sm:$0xff]
  %v254 = vld [vmem:[%s3 + $0x50] sm:$0xff]
  %v255 = vld [vmem:[%s3 + $0x58] sm:$0xff]
  %v256 = vld [vmem:[%s4] sm:$0x1]
  %v258 = vlaneseq
  %v259 = vshrl.u32 %v258, 7
  %v260 = vsub.s32 0, %v259
  %v261 = vrot.slane %v256, %v260
  %v264 = vsel %vm142, %v240, 0
  %v267 = vsel %vm142, %v241, 0
  %v270 = vsel %vm142, %v242, 0
  %v273 = vsel %vm142, %v243, 0
  %275 = vmatprep.subr.mxu0 0.0
  %276 = vmatpush1.msra.mxu0 %v244
  %277 = vmatprep.subr.mxu0 0.0
  %278 = vmatpush1.msra.mxu0 %v245
  %279 = vmatprep.subr.mxu0 0.0
  %280 = vmatpush1.msra.mxu0 %v246
  %281 = vmatprep.subr.mxu0 0.0
  %282 = vmatpush1.msra.mxu0 %v247
  %283 = vmatprep.subr.mxu0 0.0
  %284 = vmatpush1.msra.mxu0 %v248
  %285 = vmatprep.subr.mxu0 0.0
  %286 = vmatpush1.msra.mxu0 %v249
  %287 = vmatprep.subr.mxu0 0.0
  %288 = vmatpush1.msra.mxu0 %v250
  %289 = vmatprep.subr.mxu0 0.0
  %290 = vmatpush1.msra.mxu0 %v251
  %291 = vmatprep.subr.mxu0 0.0
  %292 = vmatpush1.msra.mxu0 %v252
  %293 = vmatprep.subr.mxu0 0.0
  %294 = vmatpush1.msra.mxu0 %v253
  %295 = vmatprep.subr.mxu0 0.0
  %296 = vmatpush1.msra.mxu0 %v254
  %297 = vmatprep.subr.mxu0 0.0
  %298 = vmatpush1.msra.mxu0 %v255
  %299 = vmatprep.subr.mxu0 0.0
  %300 = vmatpush1.msra.mxu0 0.0
  %301 = vmatprep.subr.mxu0 0.0
  %302 = vmatpush1.msra.mxu0 0.0
  %303 = vmatprep.subr.mxu0 0.0
  %304 = vmatpush1.msra.mxu0 0.0
  %305 = vmatprep.subr.mxu0 0.0
  %306 = vmatpush1.msra.mxu0 0.0
  %307 = vmatprep.subr.mxu0 0.0
  %308 = vmatpush1.msra.mxu0 0.0
  %309 = vmatprep.subr.mxu0 0.0
  %310 = vmatpush1.msra.mxu0 0.0
  %311 = vmatprep.subr.mxu0 0.0
  %312 = vmatpush1.msra.mxu0 0.0
  %313 = vmatprep.subr.mxu0 0.0
  %314 = vmatpush1.msra.mxu0 0.0
  %315 = vmatprep.subr.mxu0 0.0
  %316 = vmatpush1.msra.mxu0 0.0
  %317 = vmatprep.subr.mxu0 0.0
  %318 = vmatpush1.msra.mxu0 0.0
  %319 = vmatprep.subr.mxu0 0.0
  %320 = vmatpush1.msra.mxu0 0.0
  %321 = vmatprep.subr.mxu0 0.0
  %322 = vmatpush1.msra.mxu0 0.0
  %323 = vmatprep.subr.mxu0 0.0
  %324 = vmatpush1.msra.mxu0 0.0
  %325 = vmatprep.subr.mxu0 0.0
  %326 = vmatpush1.msra.mxu0 0.0
  %327 = vmatprep.subr.mxu0 0.0
  %328 = vmatpush1.msra.mxu0 0.0
  %329 = vmatprep.subr.mxu0 0.0
  %330 = vmatpush1.msra.mxu0 0.0
  %331 = vmatprep.subr.mxu0 0.0
  %332 = vmatpush1.msra.mxu0 0.0
  %333 = vmatprep.subr.mxu0 0.0
  %334 = vmatpush1.msra.mxu0 0.0
  %335 = vmatprep.subr.mxu0 0.0
  %336 = vmatpush1.msra.mxu0 0.0
  %337 = vmatprep.subr.mxu0 0.0
  %338 = vmatpush1.msra.mxu0 0.0
  %339 = vmatprep.mubr.f32.mxu0 0.0
  %340 = vmatmul.mubr.f32.gmra.mrb[0].mxu0 %v264
  %v341 = vpop.f32.mrb[0].mxu0
  %v342 = vadd.f32 %v261, %v341
  %v343 = vpop.f32.mrb[0].mxu0
  %344 = vmatprep.mubr.f32.mxu0 0.0
  %345 = vmatmul.mubr.f32.gmra.mrb[0].mxu0 %v267
  %v346 = vpop.f32.mrb[0].mxu0
  %v347 = vadd.f32 %v261, %v346
  %v348 = vpop.f32.mrb[0].mxu0
  %349 = vmatprep.mubr.f32.mxu0 0.0
  %350 = vmatmul.mubr.f32.gmra.mrb[0].mxu0 %v270
  %v351 = vpop.f32.mrb[0].mxu0
  %v352 = vadd.f32 %v261, %v351
  %v353 = vpop.f32.mrb[0].mxu0
  %354 = vmatprep.mubr.f32.mxu0 0.0
  %355 = vmatmul.mubr.f32.gmra.mrb[0].mxu0 %v273
  %v356 = vpop.f32.mrb[0].mxu0
  %v357 = vadd.f32 %v261, %v356
  %v358 = vpop.f32.mrb[0].mxu0
  %359 = vdwg.mxu0
  %360 = vst [vmem:[%s5] sm:$0xff] %v342
  %361 = vst [vmem:[%s5 + $0x8] sm:$0xff] %v347
  %362 = vst [vmem:[%s5 + $0x10] sm:$0xff] %v352
  %363 = vst [vmem:[%s5 + $0x18] sm:$0xff] %v357
  // Predicated region
  $region22: #{_lambda_.15} parent=0 // pred_check
    _
  $region23: #{_lambda_.15} parent=0 // pred_check_branch
    %365 = sbr.rel (0) target = $region25
  $region24: #{_lambda_.15} parent=0 // pred_region
    _
  $region25: #{_lambda_.15} parent=0 // pred_fallthru
    _
  // Predicated region
  $region26: #{_lambda_.15} parent=0 // pred_check
    _
  $region27: #{_lambda_.15} parent=0 // pred_check_branch
    %367 = sbr.rel (0) target = $region29
  $region28: #{_lambda_.15} parent=0 // pred_region
    _
  $region29: #{_lambda_.15} parent=0 // pred_fallthru
    _

// kernel: _lambda_.13
$region0: #{_lambda_.13}
  #allocation0 [shape = 'u32[]', space=smem, size = 0x4, offset = 0x4, fixed_abs, tag = 'smem constant byte address 0x4 - core index']
  #allocation1 [shape = 'u32[144,128]{1,0:T(1,128)}', space=vmem, size = 0x12000, scoped, tag = 'internal scratch']
  %s0 = inlined_call_operand.vmem [shape: f32[2,8,32], index: 0, kind: input, shape index: {}]
  %s1 = inlined_call_operand.vmem [shape: f32[2,8,32], index: 1, kind: input, shape index: {}]
  %s2 = inlined_call_operand.vmem [shape: f32[2,16,32], index: 2, kind: input, shape index: {}]
  %s3 = inlined_call_operand.vmem [shape: f32[2,16,32], index: 3, kind: input, shape index: {}]
  %s4 = inlined_call_operand.vmem [shape: f32[4,32,32], index: 4, kind: input, shape index: {}]
  %s5 = inlined_call_operand.vmem [shape: f32[4,1,32], index: 5, kind: input, shape index: {}, may-alias: {5,7}]
  %s6 = inlined_call_operand.vmem [shape: f32[4,32,32], index: 6, kind: input, shape index: {}]
  %s7 = inlined_call_operand.vmem [shape: f32[4,1,32], index: 7, kind: input, shape index: {}, may-alias: {5,7}]
  %s8 = inlined_call_operand.vmem [shape: f32[3,1,32], index: 8, kind: input, shape index: {}]
  %s9 = inlined_call_operand.vmem [shape: f32[3,1,32], index: 9, kind: input, shape index: {}]
  %s10 = inlined_call_operand.vmem [shape: f32[32,64], index: 10, kind: input, shape index: {}]
  %s11 = inlined_call_operand.vmem [shape: f32[1,64], index: 11, kind: input, shape index: {}]
  %s12 = inlined_call_operand.vmem [shape: f32[64,32], index: 12, kind: input, shape index: {}]
  %s13 = inlined_call_operand.vmem [shape: f32[1,32], index: 13, kind: input, shape index: {}, may-alias: {13,15}]
  %s14 = inlined_call_operand.vmem [shape: f32[1,32], index: 14, kind: input, shape index: {}]
  %s15 = inlined_call_operand.vmem [shape: f32[1,32], index: 15, kind: input, shape index: {}, may-alias: {13,15}]
  %s16 = inlined_call_operand.vmem [shape: f32[2,8,32], index: 16, kind: output, shape index: {0}]
  %s17 = inlined_call_operand.vmem [shape: f32[2,8,32], index: 17, kind: output, shape index: {1}]
  %18 = xla_tuple %s16, %s17
  %s19 = sld [smem:[#allocation0]]
  $region105: #{_lambda_.13} parent=0
    _
  %s21 = ssub.s32 1, %s19
  %s22 = scalar_select 0, %s21, %s19
  loop: start=0, step=1, limit=4
  $region2: #{_lambda_.13} parent=0 // loop_pre_header
    _
  $region3: #{_lambda_.13} parent=0 // loop_header
    %s24 = sphi 0, %s28
    %p25 = scmp.ge.s32.totalorder %s24, 4
    %s34 = sphi 0, %s36
    %s37 = sphi 0, %s34
    %s38 = sphi 0, %s37
    %s54 = sphi 0, %s38
    %s60 = sphi 0, %s62
    %s63 = sphi 0, %s60
    %s64 = sphi 0, %s63
    %s80 = sphi 0, %s64
    %s86 = sphi 0, %s88
    %s89 = sphi 0, %s86
    %s90 = sphi 0, %s89
    %s106 = sphi 0, %s90
    %s112 = sphi 0, %s114
    %s115 = sphi 0, %s112
    %s116 = sphi 0, %s115
    %s132 = sphi 0, %s116
    %s136 = sphi 0, %s136
    %s138 = sphi 0, %s136
    %s139 = sphi 0, %s138
    %s153 = sphi 0, %s139
    %s157 = sphi 0, %s157
    %s159 = sphi 0, %s157
    %s160 = sphi 0, %s159
    %s174 = sphi 0, %s160
    %s178 = sphi 0, %s178
    %s180 = sphi 0, %s178
    %s181 = sphi 0, %s180
    %s195 = sphi 0, %s181
    %s199 = sphi 0, %s199
    %s201 = sphi 0, %s199
    %s202 = sphi 0, %s201
    %s216 = sphi 0, %s202
    %s220 = sphi 0, %s220
    %s222 = sphi 0, %s220
    %s223 = sphi 0, %s222
    %s237 = sphi 0, %s223
    %s241 = sphi 0, %s241
    %s243 = sphi 0, %s241
    %s244 = sphi 0, %s243
    %s258 = sphi 0, %s244
    %s262 = sphi 0, %s262
    %s264 = sphi 0, %s262
    %s265 = sphi 0, %s264
    %s279 = sphi 0, %s265
    %s283 = sphi 0, %s283
    %s285 = sphi 0, %s283
    %s286 = sphi 0, %s285
    %s300 = sphi 0, %s286
    %s304 = sphi 0, %s304
    %s306 = sphi 0, %s304
    %s307 = sphi 0, %s306
    %s321 = sphi 0, %s307
    %s325 = sphi 0, %s325
    %s327 = sphi 0, %s325
    %s328 = sphi 0, %s327
    %s342 = sphi 0, %s328
    %s346 = sphi 0, %s346
    %s348 = sphi 0, %s346
    %s349 = sphi 0, %s348
    %s363 = sphi 0, %s349
    %s367 = sphi 0, %s367
    %s369 = sphi 0, %s367
    %s370 = sphi 0, %s369
    %s384 = sphi 0, %s370
    %s390 = sphi 0, %s392
    %s393 = sphi 0, %s390
    %s394 = sphi 0, %s393
    %s410 = sphi 0, %s394
    %s416 = sphi 0, %s418
    %s419 = sphi 0, %s416
    %s420 = sphi 0, %s419
    %s436 = sphi 0, %s420
  $region4: #{_lambda_.13} parent=0 // loop_header_branch
    %27 = sbr.rel (%p25) target = $region8
  $region5: #{_lambda_.13} parent=0 // loop_body
    %s29 = ssub.s32 %s24, 1
    %s30 = ssub.s32 %s24, 2
    %s31 = sadd.s32 %s24, 1
    %s32 = ssub.s32 %s24, %s31
    %p33 = scmp.eq.s32.totalorder %s32, 0
    %s35 = sadd.s32 %s34, 1
    %s36 = scalar_select %p33, %s34, %s35
    %p39 = pneg %p33
    %p40 = scmp.eq.s32.totalorder %s24, 1
    %p41 = por %p39, %p40
    %p42 = scmp.ne.s32.totalorder %s34, %s37
    %p43 = scmp.eq.s32.totalorder %s24, 0
    %p44 = por %p42, %p43
    %p45 = scmp.ne.s32.totalorder %s34, %s37
    %p46 = scmp.eq.s32.totalorder %s29, 1
    %p47 = por %p45, %p46
    %p48 = scmp.ne.s32.totalorder %s37, %s38
    %p49 = scmp.eq.s32.totalorder %s29, 0
    %p50 = por %p48, %p49
    %p51 = scmp.ne.s32.totalorder %s37, %s38
    %p52 = scmp.eq.s32.totalorder %s30, 1
    %p53 = por %p51, %p52
    %p55 = scmp.ne.s32.totalorder %s38, %s54
    %p56 = scmp.eq.s32.totalorder %s30, 0
    %p57 = por %p55, %p56
    %s58 = ssub.s32 %s24, %s31
    %p59 = scmp.eq.s32.totalorder %s58, 0
    %s61 = sadd.s32 %s60, 1
    %s62 = scalar_select %p59, %s60, %s61
    %p65 = pneg %p59
    %p66 = scmp.eq.s32.totalorder %s24, 1
    %p67 = por %p65, %p66
    %p68 = scmp.ne.s32.totalorder %s60, %s63
    %p69 = scmp.eq.s32.totalorder %s24, 0
    %p70 = por %p68, %p69
    %p71 = scmp.ne.s32.totalorder %s60, %s63
    %p72 = scmp.eq.s32.totalorder %s29, 1
    %p73 = por %p71, %p72
    %p74 = scmp.ne.s32.totalorder %s63, %s64
    %p75 = scmp.eq.s32.totalorder %s29, 0
    %p76 = por %p74, %p75
    %p77 = scmp.ne.s32.totalorder %s63, %s64
    %p78 = scmp.eq.s32.totalorder %s30, 1
    %p79 = por %p77, %p78
    %p81 = scmp.ne.s32.totalorder %s64, %s80
    %p82 = scmp.eq.s32.totalorder %s30, 0
    %p83 = por %p81, %p82
    %s84 = ssub.s32 %s24, %s31
    %p85 = scmp.eq.s32.totalorder %s84, 0
    %s87 = sadd.s32 %s86, 1
    %s88 = scalar_select %p85, %s86, %s87
    %p91 = pneg %p85
    %p92 = scmp.eq.s32.totalorder %s24, 1
    %p93 = por %p91, %p92
    %p94 = scmp.ne.s32.totalorder %s86, %s89
    %p95 = scmp.eq.s32.totalorder %s24, 0
    %p96 = por %p94, %p95
    %p97 = scmp.ne.s32.totalorder %s86, %s89
    %p98 = scmp.eq.s32.totalorder %s29, 1
    %p99 = por %p97, %p98
    %p100 = scmp.ne.s32.totalorder %s89, %s90
    %p101 = scmp.eq.s32.totalorder %s29, 0
    %p102 = por %p100, %p101
    %p103 = scmp.ne.s32.totalorder %s89, %s90
    %p104 = scmp.eq.s32.totalorder %s30, 1
    %p105 = por %p103, %p104
    %p107 = scmp.ne.s32.totalorder %s90, %s106
    %p108 = scmp.eq.s32.totalorder %s30, 0
    %p109 = por %p107, %p108
    %s110 = ssub.s32 %s24, %s31
    %p111 = scmp.eq.s32.totalorder %s110, 0
    %s113 = sadd.s32 %s112, 1
    %s114 = scalar_select %p111, %s112, %s113
    %p117 = pneg %p111
    %p118 = scmp.eq.s32.totalorder %s24, 1
    %p119 = por %p117, %p118
    %p120 = scmp.ne.s32.totalorder %s112, %s115
    %p121 = scmp.eq.s32.totalorder %s24, 0
    %p122 = por %p120, %p121
    %p123 = scmp.ne.s32.totalorder %s112, %s115
    %p124 = scmp.eq.s32.totalorder %s29, 1
    %p125 = por %p123, %p124
    %p126 = scmp.ne.s32.totalorder %s115, %s116
    %p127 = scmp.eq.s32.totalorder %s29, 0
    %p128 = por %p126, %p127
    %p129 = scmp.ne.s32.totalorder %s115, %s116
    %p130 = scmp.eq.s32.totalorder %s30, 1
    %p131 = por %p129, %p130
    %p133 = scmp.ne.s32.totalorder %s116, %s132
    %p134 = scmp.eq.s32.totalorder %s30, 0
    %p135 = por %p133, %p134
    %s137 = sadd.s32 %s136, 1
    %p140 = scmp.eq.s32.totalorder %s24, 1
    %p141 = scmp.ne.s32.totalorder %s136, %s138
    %p142 = scmp.eq.s32.totalorder %s24, 0
    %p143 = por %p141, %p142
    %p144 = scmp.ne.s32.totalorder %s136, %s138
    %p145 = scmp.eq.s32.totalorder %s29, 1
    %p146 = por %p144, %p145
    %p147 = scmp.ne.s32.totalorder %s138, %s139
    %p148 = scmp.eq.s32.totalorder %s29, 0
    %p149 = por %p147, %p148
    %p150 = scmp.ne.s32.totalorder %s138, %s139
    %p151 = scmp.eq.s32.totalorder %s30, 1
    %p152 = por %p150, %p151
    %p154 = scmp.ne.s32.totalorder %s139, %s153
    %p155 = scmp.eq.s32.totalorder %s30, 0
    %p156 = por %p154, %p155
    %s158 = sadd.s32 %s157, 1
    %p161 = scmp.eq.s32.totalorder %s24, 1
    %p162 = scmp.ne.s32.totalorder %s157, %s159
    %p163 = scmp.eq.s32.totalorder %s24, 0
    %p164 = por %p162, %p163
    %p165 = scmp.ne.s32.totalorder %s157, %s159
    %p166 = scmp.eq.s32.totalorder %s29, 1
    %p167 = por %p165, %p166
    %p168 = scmp.ne.s32.totalorder %s159, %s160
    %p169 = scmp.eq.s32.totalorder %s29, 0
    %p170 = por %p168, %p169
    %p171 = scmp.ne.s32.totalorder %s159, %s160
    %p172 = scmp.eq.s32.totalorder %s30, 1
    %p173 = por %p171, %p172
    %p175 = scmp.ne.s32.totalorder %s160, %s174
    %p176 = scmp.eq.s32.totalorder %s30, 0
    %p177 = por %p175, %p176
    %s179 = sadd.s32 %s178, 1
    %p182 = scmp.eq.s32.totalorder %s24, 1
    %p183 = scmp.ne.s32.totalorder %s178, %s180
    %p184 = scmp.eq.s32.totalorder %s24, 0
    %p185 = por %p183, %p184
    %p186 = scmp.ne.s32.totalorder %s178, %s180
    %p187 = scmp.eq.s32.totalorder %s29, 1
    %p188 = por %p186, %p187
    %p189 = scmp.ne.s32.totalorder %s180, %s181
    %p190 = scmp.eq.s32.totalorder %s29, 0
    %p191 = por %p189, %p190
    %p192 = scmp.ne.s32.totalorder %s180, %s181
    %p193 = scmp.eq.s32.totalorder %s30, 1
    %p194 = por %p192, %p193
    %p196 = scmp.ne.s32.totalorder %s181, %s195
    %p197 = scmp.eq.s32.totalorder %s30, 0
    %p198 = por %p196, %p197
    %s200 = sadd.s32 %s199, 1
    %p203 = scmp.eq.s32.totalorder %s24, 1
    %p204 = scmp.ne.s32.totalorder %s199, %s201
    %p205 = scmp.eq.s32.totalorder %s24, 0
    %p206 = por %p204, %p205
    %p207 = scmp.ne.s32.totalorder %s199, %s201
    %p208 = scmp.eq.s32.totalorder %s29, 1
    %p209 = por %p207, %p208
    %p210 = scmp.ne.s32.totalorder %s201, %s202
    %p211 = scmp.eq.s32.totalorder %s29, 0
    %p212 = por %p210, %p211
    %p213 = scmp.ne.s32.totalorder %s201, %s202
    %p214 = scmp.eq.s32.totalorder %s30, 1
    %p215 = por %p213, %p214
    %p217 = scmp.ne.s32.totalorder %s202, %s216
    %p218 = scmp.eq.s32.totalorder %s30, 0
    %p219 = por %p217, %p218
    %s221 = sadd.s32 %s220, 1
    %p224 = scmp.eq.s32.totalorder %s24, 1
    %p225 = scmp.ne.s32.totalorder %s220, %s222
    %p226 = scmp.eq.s32.totalorder %s24, 0
    %p227 = por %p225, %p226
    %p228 = scmp.ne.s32.totalorder %s220, %s222
    %p229 = scmp.eq.s32.totalorder %s29, 1
    %p230 = por %p228, %p229
    %p231 = scmp.ne.s32.totalorder %s222, %s223
    %p232 = scmp.eq.s32.totalorder %s29, 0
    %p233 = por %p231, %p232
    %p234 = scmp.ne.s32.totalorder %s222, %s223
    %p235 = scmp.eq.s32.totalorder %s30, 1
    %p236 = por %p234, %p235
    %p238 = scmp.ne.s32.totalorder %s223, %s237
    %p239 = scmp.eq.s32.totalorder %s30, 0
    %p240 = por %p238, %p239
    %s242 = sadd.s32 %s241, 1
    %p245 = scmp.eq.s32.totalorder %s24, 1
    %p246 = scmp.ne.s32.totalorder %s241, %s243
    %p247 = scmp.eq.s32.totalorder %s24, 0
    %p248 = por %p246, %p247
    %p249 = scmp.ne.s32.totalorder %s241, %s243
    %p250 = scmp.eq.s32.totalorder %s29, 1
    %p251 = por %p249, %p250
    %p252 = scmp.ne.s32.totalorder %s243, %s244
    %p253 = scmp.eq.s32.totalorder %s29, 0
    %p254 = por %p252, %p253
    %p255 = scmp.ne.s32.totalorder %s243, %s244
    %p256 = scmp.eq.s32.totalorder %s30, 1
    %p257 = por %p255, %p256
    %p259 = scmp.ne.s32.totalorder %s244, %s258
    %p260 = scmp.eq.s32.totalorder %s30, 0
    %p261 = por %p259, %p260
    %s263 = sadd.s32 %s262, 1
    %p266 = scmp.eq.s32.totalorder %s24, 1
    %p267 = scmp.ne.s32.totalorder %s262, %s264
    %p268 = scmp.eq.s32.totalorder %s24, 0
    %p269 = por %p267, %p268
    %p270 = scmp.ne.s32.totalorder %s262, %s264
    %p271 = scmp.eq.s32.totalorder %s29, 1
    %p272 = por %p270, %p271
    %p273 = scmp.ne.s32.totalorder %s264, %s265
    %p274 = scmp.eq.s32.totalorder %s29, 0
    %p275 = por %p273, %p274
    %p276 = scmp.ne.s32.totalorder %s264, %s265
    %p277 = scmp.eq.s32.totalorder %s30, 1
    %p278 = por %p276, %p277
    %p280 = scmp.ne.s32.totalorder %s265, %s279
    %p281 = scmp.eq.s32.totalorder %s30, 0
    %p282 = por %p280, %p281
    %s284 = sadd.s32 %s283, 1
    %p287 = scmp.eq.s32.totalorder %s24, 1
    %p288 = scmp.ne.s32.totalorder %s283, %s285
    %p289 = scmp.eq.s32.totalorder %s24, 0
    %p290 = por %p288, %p289
    %p291 = scmp.ne.s32.totalorder %s283, %s285
    %p292 = scmp.eq.s32.totalorder %s29, 1
    %p293 = por %p291, %p292
    %p294 = scmp.ne.s32.totalorder %s285, %s286
    %p295 = scmp.eq.s32.totalorder %s29, 0
    %p296 = por %p294, %p295
    %p297 = scmp.ne.s32.totalorder %s285, %s286
    %p298 = scmp.eq.s32.totalorder %s30, 1
    %p299 = por %p297, %p298
    %p301 = scmp.ne.s32.totalorder %s286, %s300
    %p302 = scmp.eq.s32.totalorder %s30, 0
    %p303 = por %p301, %p302
    %s305 = sadd.s32 %s304, 1
    %p308 = scmp.eq.s32.totalorder %s24, 1
    %p309 = scmp.ne.s32.totalorder %s304, %s306
    %p310 = scmp.eq.s32.totalorder %s24, 0
    %p311 = por %p309, %p310
    %p312 = scmp.ne.s32.totalorder %s304, %s306
    %p313 = scmp.eq.s32.totalorder %s29, 1
    %p314 = por %p312, %p313
    %p315 = scmp.ne.s32.totalorder %s306, %s307
    %p316 = scmp.eq.s32.totalorder %s29, 0
    %p317 = por %p315, %p316
    %p318 = scmp.ne.s32.totalorder %s306, %s307
    %p319 = scmp.eq.s32.totalorder %s30, 1
    %p320 = por %p318, %p319
    %p322 = scmp.ne.s32.totalorder %s307, %s321
    %p323 = scmp.eq.s32.totalorder %s30, 0
    %p324 = por %p322, %p323
    %s326 = sadd.s32 %s325, 1
    %p329 = scmp.eq.s32.totalorder %s24, 1
    %p330 = scmp.ne.s32.totalorder %s325, %s327
    %p331 = scmp.eq.s32.totalorder %s24, 0
    %p332 = por %p330, %p331
    %p333 = scmp.ne.s32.totalorder %s325, %s327
    %p334 = scmp.eq.s32.totalorder %s29, 1
    %p335 = por %p333, %p334
    %p336 = scmp.ne.s32.totalorder %s327, %s328
    %p337 = scmp.eq.s32.totalorder %s29, 0
    %p338 = por %p336, %p337
    %p339 = scmp.ne.s32.totalorder %s327, %s328
    %p340 = scmp.eq.s32.totalorder %s30, 1
    %p341 = por %p339, %p340
    %p343 = scmp.ne.s32.totalorder %s328, %s342
    %p344 = scmp.eq.s32.totalorder %s30, 0
    %p345 = por %p343, %p344
    %s347 = sadd.s32 %s346, 1
    %p350 = scmp.eq.s32.totalorder %s24, 1
    %p351 = scmp.ne.s32.totalorder %s346, %s348
    %p352 = scmp.eq.s32.totalorder %s24, 0
    %p353 = por %p351, %p352
    %p354 = scmp.ne.s32.totalorder %s346, %s348
    %p355 = scmp.eq.s32.totalorder %s29, 1
    %p356 = por %p354, %p355
    %p357 = scmp.ne.s32.totalorder %s348, %s349
    %p358 = scmp.eq.s32.totalorder %s29, 0
    %p359 = por %p357, %p358
    %p360 = scmp.ne.s32.totalorder %s348, %s349
    %p361 = scmp.eq.s32.totalorder %s30, 1
    %p362 = por %p360, %p361
    %p364 = scmp.ne.s32.totalorder %s349, %s363
    %p365 = scmp.eq.s32.totalorder %s30, 0
    %p366 = por %p364, %p365
    %s368 = sadd.s32 %s367, 1
    %p371 = scmp.eq.s32.totalorder %s24, 1
    %p372 = scmp.ne.s32.totalorder %s367, %s369
    %p373 = scmp.eq.s32.totalorder %s24, 0
    %p374 = por %p372, %p373
    %p375 = scmp.ne.s32.totalorder %s367, %s369
    %p376 = scmp.eq.s32.totalorder %s29, 1
    %p377 = por %p375, %p376
    %p378 = scmp.ne.s32.totalorder %s369, %s370
    %p379 = scmp.eq.s32.totalorder %s29, 0
    %p380 = por %p378, %p379
    %p381 = scmp.ne.s32.totalorder %s369, %s370
    %p382 = scmp.eq.s32.totalorder %s30, 1
    %p383 = por %p381, %p382
    %p385 = scmp.ne.s32.totalorder %s370, %s384
    %p386 = scmp.eq.s32.totalorder %s30, 0
    %p387 = por %p385, %p386
    %s388 = ssub.s32 %s24, %s31
    %p389 = scmp.eq.s32.totalorder %s388, 0
    %s391 = sadd.s32 %s390, 1
    %s392 = scalar_select %p389, %s390, %s391
    %p395 = pneg %p389
    %p396 = scmp.eq.s32.totalorder %s24, 1
    %p397 = por %p395, %p396
    %p398 = scmp.ne.s32.totalorder %s390, %s393
    %p399 = scmp.eq.s32.totalorder %s24, 0
    %p400 = por %p398, %p399
    %p401 = scmp.ne.s32.totalorder %s390, %s393
    %p402 = scmp.eq.s32.totalorder %s29, 1
    %p403 = por %p401, %p402
    %p404 = scmp.ne.s32.totalorder %s393, %s394
    %p405 = scmp.eq.s32.totalorder %s29, 0
    %p406 = por %p404, %p405
    %p407 = scmp.ne.s32.totalorder %s393, %s394
    %p408 = scmp.eq.s32.totalorder %s30, 1
    %p409 = por %p407, %p408
    %p411 = scmp.ne.s32.totalorder %s394, %s410
    %p412 = scmp.eq.s32.totalorder %s30, 0
    %p413 = por %p411, %p412
    %s414 = ssub.s32 %s24, %s31
    %p415 = scmp.eq.s32.totalorder %s414, 0
    %s417 = sadd.s32 %s416, 1
    %s418 = scalar_select %p415, %s416, %s417
    %p421 = pneg %p415
    %p422 = scmp.eq.s32.totalorder %s24, 1
    %p423 = por %p421, %p422
    %p424 = scmp.ne.s32.totalorder %s416, %s419
    %p425 = scmp.eq.s32.totalorder %s24, 0
    %p426 = por %p424, %p425
    %p427 = scmp.ne.s32.totalorder %s416, %s419
    %p428 = scmp.eq.s32.totalorder %s29, 1
    %p429 = por %p427, %p428
    %p430 = scmp.ne.s32.totalorder %s419, %s420
    %p431 = scmp.eq.s32.totalorder %s29, 0
    %p432 = por %p430, %p431
    %p433 = scmp.ne.s32.totalorder %s419, %s420
    %p434 = scmp.eq.s32.totalorder %s30, 1
    %p435 = por %p433, %p434
    %p437 = scmp.ne.s32.totalorder %s420, %s436
    %p438 = scmp.eq.s32.totalorder %s30, 0
    %p439 = por %p437, %p438
    %p440 = scmp.le.s32.totalorder 1, %s24
    %p441 = scmp.lt.s32.totalorder %s24, 3
    %p442 = pnand %p440, %p441
    %p443 = pneg %p442
    // Predicated region
    $region9: #{_lambda_.13} parent=5 // pred_check
      _
    $region10: #{_lambda_.13} parent=5 // pred_check_branch
      %445 = sbr.rel (%p442) target = $region12
    $region11: #{_lambda_.13} parent=5 // pred_region
      %s446 = ssub.s32 %s24, 1
      // Predicated region
      $region13: #{_lambda_.13} parent=11 // pred_check
        %p447 = pneg %p149
      $region14: #{_lambda_.13} parent=11 // pred_check_branch
        %449 = sbr.rel (%p447) target = $region16
      $region15: #{_lambda_.13} parent=11 // pred_region
        _
      $region16: #{_lambda_.13} parent=11 // pred_fallthru
        _
      // Predicated region
      $region17: #{_lambda_.13} parent=11 // pred_check
        %p450 = pneg %p170
      $region18: #{_lambda_.13} parent=11 // pred_check_branch
        %452 = sbr.rel (%p450) target = $region20
      $region19: #{_lambda_.13} parent=11 // pred_region
        _
      $region20: #{_lambda_.13} parent=11 // pred_fallthru
        _
      // Predicated region
      $region21: #{_lambda_.13} parent=11 // pred_check
        %p453 = pneg %p191
      $region22: #{_lambda_.13} parent=11 // pred_check_branch
        %455 = sbr.rel (%p453) target = $region24
      $region23: #{_lambda_.13} parent=11 // pred_region
        _
      $region24: #{_lambda_.13} parent=11 // pred_fallthru
        _
      // Predicated region
      $region25: #{_lambda_.13} parent=11 // pred_check
        %p456 = pneg %p212
      $region26: #{_lambda_.13} parent=11 // pred_check_branch
        %458 = sbr.rel (%p456) target = $region28
      $region27: #{_lambda_.13} parent=11 // pred_region
        _
      $region28: #{_lambda_.13} parent=11 // pred_fallthru
        _
      // Predicated region
      $region29: #{_lambda_.13} parent=11 // pred_check
        %p459 = pneg %p233
      $region30: #{_lambda_.13} parent=11 // pred_check_branch
        %461 = sbr.rel (%p459) target = $region32
      $region31: #{_lambda_.13} parent=11 // pred_region
        _
      $region32: #{_lambda_.13} parent=11 // pred_fallthru
        _
      // Predicated region
      $region33: #{_lambda_.13} parent=11 // pred_check
        %p462 = pneg %p254
      $region34: #{_lambda_.13} parent=11 // pred_check_branch
        %464 = sbr.rel (%p462) target = $region36
      $region35: #{_lambda_.13} parent=11 // pred_region
        _
      $region36: #{_lambda_.13} parent=11 // pred_fallthru
        _
      // Predicated region
      $region37: #{_lambda_.13} parent=11 // pred_check
        %p465 = pneg %p275
      $region38: #{_lambda_.13} parent=11 // pred_check_branch
        %467 = sbr.rel (%p465) target = $region40
      $region39: #{_lambda_.13} parent=11 // pred_region
        _
      $region40: #{_lambda_.13} parent=11 // pred_fallthru
        _
      // Predicated region
      $region41: #{_lambda_.13} parent=11 // pred_check
        %p468 = pneg %p296
      $region42: #{_lambda_.13} parent=11 // pred_check_branch
        %470 = sbr.rel (%p468) target = $region44
      $region43: #{_lambda_.13} parent=11 // pred_region
        _
      $region44: #{_lambda_.13} parent=11 // pred_fallthru
        _
      // Predicated region
      $region45: #{_lambda_.13} parent=11 // pred_check
        %p471 = pneg %p317
      $region46: #{_lambda_.13} parent=11 // pred_check_branch
        %473 = sbr.rel (%p471) target = $region48
      $region47: #{_lambda_.13} parent=11 // pred_region
        _
      $region48: #{_lambda_.13} parent=11 // pred_fallthru
        _
      // Predicated region
      $region49: #{_lambda_.13} parent=11 // pred_check
        %p474 = pneg %p338
      $region50: #{_lambda_.13} parent=11 // pred_check_branch
        %476 = sbr.rel (%p474) target = $region52
      $region51: #{_lambda_.13} parent=11 // pred_region
        _
      $region52: #{_lambda_.13} parent=11 // pred_fallthru
        _
      // Predicated region
      $region53: #{_lambda_.13} parent=11 // pred_check
        %p477 = pneg %p359
      $region54: #{_lambda_.13} parent=11 // pred_check_branch
        %479 = sbr.rel (%p477) target = $region56
      $region55: #{_lambda_.13} parent=11 // pred_region
        _
      $region56: #{_lambda_.13} parent=11 // pred_fallthru
        _
      // Predicated region
      $region57: #{_lambda_.13} parent=11 // pred_check
        %p480 = pneg %p380
      $region58: #{_lambda_.13} parent=11 // pred_check_branch
        %482 = sbr.rel (%p480) target = $region60
      $region59: #{_lambda_.13} parent=11 // pred_region
        _
      $region60: #{_lambda_.13} parent=11 // pred_fallthru
        _
    $region12: #{_lambda_.13} parent=5 // pred_fallthru
      _
    %p483 = scmp.lt.s32.totalorder %s24, 2
    // Predicated region
    $region61: #{_lambda_.13} parent=5 // pred_check
      %p484 = pneg %p483
    $region62: #{_lambda_.13} parent=5 // pred_check_branch
      %486 = sbr.rel (%p484) target = $region64
    $region63: #{_lambda_.13} parent=5 // pred_region
      // Predicated region
      $region65: #{_lambda_.13} parent=63 // pred_check
        %p487 = pneg %p44
      $region66: #{_lambda_.13} parent=63 // pred_check_branch
        %489 = sbr.rel (%p487) target = $region68
      $region67: #{_lambda_.13} parent=63 // pred_region
        %p490 = scmp.lt.s32.totalorder %s24, 1
        %s491 = scalar_select %p490, %s24, 1
        %s492 = smul.addr %s491, 8
        %s493 = scalar_lea.vmem %s0, %s492
      $region68: #{_lambda_.13} parent=63 // pred_fallthru
        _
      // Predicated region
      $region69: #{_lambda_.13} parent=63 // pred_check
        %p494 = pneg %p70
      $region70: #{_lambda_.13} parent=63 // pred_check_branch
        %496 = sbr.rel (%p494) target = $region72
      $region71: #{_lambda_.13} parent=63 // pred_region
        %p497 = scmp.lt.s32.totalorder %s24, 1
        %s498 = scalar_select %p497, %s24, 1
        %s499 = smul.addr %s498, 8
        %s500 = scalar_lea.vmem %s1, %s499
      $region72: #{_lambda_.13} parent=63 // pred_fallthru
        _
      // Predicated region
      $region73: #{_lambda_.13} parent=63 // pred_check
        %p501 = pneg %p96
      $region74: #{_lambda_.13} parent=63 // pred_check_branch
        %503 = sbr.rel (%p501) target = $region76
      $region75: #{_lambda_.13} parent=63 // pred_region
        %p504 = scmp.lt.s32.totalorder %s24, 1
        %s505 = scalar_select %p504, %s24, 1
        %s506 = smul.addr %s505, 2
        %s507 = smul.addr %s506, 8
        %s508 = scalar_lea.vmem %s2, %s507
      $region76: #{_lambda_.13} parent=63 // pred_fallthru
        _
      // Predicated region
      $region77: #{_lambda_.13} parent=63 // pred_check
        %p509 = pneg %p122
      $region78: #{_lambda_.13} parent=63 // pred_check_branch
        %511 = sbr.rel (%p509) target = $region80
      $region79: #{_lambda_.13} parent=63 // pred_region
        %p512 = scmp.lt.s32.totalorder %s24, 1
        %s513 = scalar_select %p512, %s24, 1
        %s514 = smul.addr %s513, 2
        %s515 = smul.addr %s514, 8
        %s516 = scalar_lea.vmem %s3, %s515
      $region80: #{_lambda_.13} parent=63 // pred_fallthru
        _
    $region64: #{_lambda_.13} parent=5 // pred_fallthru
      _
    %p517 = scmp.le.s32.totalorder 1, %s24
    %p518 = scmp.lt.s32.totalorder %s24, 3
    %p519 = pnand %p517, %p518
    %p520 = pneg %p519
    // Predicated region
    $region81: #{_lambda_.13} parent=5 // pred_check
      _
    $region82: #{_lambda_.13} parent=5 // pred_check_branch
      %522 = sbr.rel (%p519) target = $region84
    $region83: #{_lambda_.13} parent=5 // pred_region
      %s523 = ssub.s32 %s24, 1
      %p524 = scmp.lt.s32.totalorder %s29, 1
      %s525 = scalar_select %p524, %s29, 1
      %s526 = smul.addr %s525, 8
      %s527 = scalar_lea.vmem %s0, %s526
      %p528 = pneg %p50
      %p529 = pneg %p47
      %p530 = scmp.lt.s32.totalorder %s29, 1
      %s531 = scalar_select %p530, %s29, 1
      %s532 = smul.addr %s531, 8
      %s533 = scalar_lea.vmem %s1, %s532
      %p534 = pneg %p76
      %p535 = pneg %p73
      %p536 = scmp.lt.s32.totalorder %s29, 1
      %s537 = scalar_select %p536, %s29, 1
      %s538 = smul.addr %s537, 2
      %s539 = smul.addr %s538, 8
      %s540 = scalar_lea.vmem %s2, %s539
      %p541 = pneg %p102
      %p542 = pneg %p99
      %p543 = scmp.lt.s32.totalorder %s29, 1
      %s544 = scalar_select %p543, %s29, 1
      %s545 = smul.addr %s544, 2
      %s546 = smul.addr %s545, 8
      %s547 = scalar_lea.vmem %s3, %s546
      %p548 = pneg %p128
      %p549 = pneg %p125
      %p550 = pneg %p149
      %p551 = pneg %p146
      %p552 = pneg %p170
      %p553 = pneg %p167
      %p554 = pneg %p191
      %p555 = pneg %p188
      %p556 = pneg %p212
      %p557 = pneg %p209
      %p558 = pneg %p233
      %p559 = pneg %p230
      %p560 = pneg %p254
      %p561 = pneg %p251
      %p562 = pneg %p275
      %p563 = pneg %p272
      %p564 = pneg %p296
      %p565 = pneg %p293
      %p566 = pneg %p317
      %p567 = pneg %p314
      %p568 = pneg %p338
      %p569 = pneg %p335
      %p570 = pneg %p359
      %p571 = pneg %p356
      %p572 = pneg %p380
      %p573 = pneg %p377
      %p574 = pneg %p406
      %p575 = pneg %p403
      %p576 = scmp.lt.s32.totalorder %s29, 1
      %s577 = scalar_select %p576, %s29, 1
      %s578 = smul.addr %s577, 8
      %s579 = scalar_lea.vmem %s16, %s578
      %p580 = pneg %p432
      %p581 = pneg %p429
      %p582 = scmp.lt.s32.totalorder %s29, 1
      %s583 = scalar_select %p582, %s29, 1
      %s584 = smul.addr %s583, 8
      %s585 = scalar_lea.vmem %s17, %s584
      %p586 = scmp.lt.s32.totalorder %s29, 1
      %s587 = scalar_select %p586, %s29, 1
      %s588 = smul.addr %s587, 8
      %s589 = scalar_lea.vmem %s0, %s588
      %p590 = scmp.lt.s32.totalorder %s29, 1
      %s591 = scalar_select %p590, %s29, 1
      %s592 = smul.addr %s591, 8
      %s593 = scalar_lea.vmem %s1, %s592
      %p594 = scmp.lt.s32.totalorder %s29, 1
      %s595 = scalar_select %p594, %s29, 1
      %s596 = smul.addr %s595, 2
      %s597 = smul.addr %s596, 8
      %s598 = scalar_lea.vmem %s2, %s597
      %p599 = scmp.lt.s32.totalorder %s29, 1
      %s600 = scalar_select %p599, %s29, 1
      %s601 = smul.addr %s600, 2
      %s602 = smul.addr %s601, 8
      %s603 = scalar_lea.vmem %s3, %s602
      %p604 = scmp.lt.s32.totalorder %s29, 1
      %s605 = scalar_select %p604, %s29, 1
      %s606 = smul.addr %s605, 8
      %s607 = scalar_lea.vmem %s16, %s606
      %p608 = scmp.lt.s32.totalorder %s29, 1
      %s609 = scalar_select %p608, %s29, 1
      %s610 = smul.addr %s609, 8
      %s611 = scalar_lea.vmem %s17, %s610
      %v612 = vld [vmem:[%s589] sm:$0xff]
      %v613 = vld [vmem:[%s593] sm:$0xff]
      %v614 = vld [vmem:[%s598] sm:$0xff]
      %v615 = vld [vmem:[%s598 + $0x8] sm:$0xff]
      %v616 = vld [vmem:[%s603] sm:$0xff]
      %v617 = vld [vmem:[%s603 + $0x8] sm:$0xff]
      %v618 = vadd.f32 %v612, %v613
      %v619 = vld [vmem:[%s4] sm:$0xff]
      %v620 = vld [vmem:[%s4 + $0x8] sm:$0xff]
      %v621 = vld [vmem:[%s4 + $0x10] sm:$0xff]
      %v622 = vld [vmem:[%s4 + $0x18] sm:$0xff]
      %v623 = vld [vmem:[%s5] sm:$0x1]
      %v625 = vlaneseq
      %v626 = vshrl.u32 %v625, 7
      %v627 = vsub.s32 0, %v626
      %v628 = vrot.slane %v623, %v627
      %vm630 = vcmask 261120
      %v632 = vsel %vm630, %v618, 0
      %634 = vmatprep.subr.mxu0 0.0
      %635 = vmatpush1.msra.mxu0 %v619
      %636 = vmatprep.subr.mxu0 0.0
      %637 = vmatpush1.msra.mxu0 %v620
      %638 = vmatprep.subr.mxu0 0.0
      %639 = vmatpush1.msra.mxu0 %v621
      %640 = vmatprep.subr.mxu0 0.0
      %641 = vmatpush1.msra.mxu0 %v622
      %642 = vmatprep.subr.mxu0 0.0
      %643 = vmatpush1.msra.mxu0 0.0
      %644 = vmatprep.subr.mxu0 0.0
      %645 = vmatpush1.msra.mxu0 0.0
      %646 = vmatprep.subr.mxu0 0.0
      %647 = vmatpush1.msra.mxu0 0.0
      %648 = vmatprep.subr.mxu0 0.0
      %649 = vmatpush1.msra.mxu0 0.0
      %650 = vmatprep.subr.mxu0 0.0
      %651 = vmatpush1.msra.mxu0 0.0
      %652 = vmatprep.subr.mxu0 0.0
      %653 = vmatpush1.msra.mxu0 0.0
      %654 = vmatprep.subr.mxu0 0.0
      %655 = vmatpush1.msra.mxu0 0.0
      %656 = vmatprep.subr.mxu0 0.0
      %657 = vmatpush1.msra.mxu0 0.0
      %658 = vmatprep.subr.mxu0 0.0
      %659 = vmatpush1.msra.mxu0 0.0
      %660 = vmatprep.subr.mxu0 0.0
      %661 = vmatpush1.msra.mxu0 0.0
      %662 = vmatprep.subr.mxu0 0.0
      %663 = vmatpush1.msra.mxu0 0.0
      %664 = vmatprep.subr.mxu0 0.0
      %665 = vmatpush1.msra.mxu0 0.0
      %666 = vmatprep.subr.mxu0 0.0
      %667 = vmatpush1.msra.mxu0 0.0
      %668 = vmatprep.subr.mxu0 0.0
      %669 = vmatpush1.msra.mxu0 0.0
      %670 = vmatprep.subr.mxu0 0.0
      %671 = vmatpush1.msra.mxu0 0.0
      %672 = vmatprep.subr.mxu0 0.0
      %673 = vmatpush1.msra.mxu0 0.0
      %674 = vmatprep.subr.mxu0 0.0
      %675 = vmatpush1.msra.mxu0 0.0
      %676 = vmatprep.subr.mxu0 0.0
      %677 = vmatpush1.msra.mxu0 0.0
      %678 = vmatprep.subr.mxu0 0.0
      %679 = vmatpush1.msra.mxu0 0.0
      %680 = vmatprep.subr.mxu0 0.0
      %681 = vmatpush1.msra.mxu0 0.0
      %682 = vmatprep.subr.mxu0 0.0
      %683 = vmatpush1.msra.mxu0 0.0
      %684 = vmatprep.subr.mxu0 0.0
      %685 = vmatpush1.msra.mxu0 0.0
      %686 = vmatprep.subr.mxu0 0.0
      %687 = vmatpush1.msra.mxu0 0.0
      %688 = vmatprep.subr.mxu0 0.0
      %689 = vmatpush1.msra.mxu0 0.0
      %690 = vmatprep.subr.mxu0 0.0
      %691 = vmatpush1.msra.mxu0 0.0
      %692 = vmatprep.subr.mxu0 0.0
      %693 = vmatpush1.msra.mxu0 0.0
      %694 = vmatprep.subr.mxu0 0.0
      %695 = vmatpush1.msra.mxu0 0.0
      %696 = vmatprep.subr.mxu0 0.0
      %697 = vmatpush1.msra.mxu0 0.0
      %698 = vmatprep.mubr.f32.mxu0 0.0
      %699 = vmatmul.mubr.f32.gmra.mrb[0].mxu0 %v632
      %v700 = vpop.f32.mrb[0].mxu0
      %v701 = vadd.f32 %v628, %v700
      %v702 = vpop.f32.mrb[0].mxu0
      %703 = vdwg.mxu0
      %s704 = scalar_lea.vmem %s4, 32
      %v705 = vld [vmem:[%s704] sm:$0xff]
      %v706 = vld [vmem:[%s704 + $0x8] sm:$0xff]
      %v707 = vld [vmem:[%s704 + $0x10] sm:$0xff]
      %v708 = vld [vmem:[%s704 + $0x18] sm:$0xff]
      %s709 = scalar_lea.vmem %s5, 1
      %v710 = vld [vmem:[%s709] sm:$0x1]
      %v712 = vlaneseq
      %v713 = vshrl.u32 %v712, 7
      %v714 = vsub.s32 0, %v713
      %v715 = vrot.slane %v710, %v714
      %717 = vmatprep.subr.mxu0 0.0
      %718 = vmatpush1.msra.mxu0 %v705
      %719 = vmatprep.subr.mxu0 0.0
      %720 = vmatpush1.msra.mxu0 %v706
      %721 = vmatprep.subr.mxu0 0.0
      %722 = vmatpush1.msra.mxu0 %v707
      %723 = vmatprep.subr.mxu0 0.0
      %724 = vmatpush1.msra.mxu0 %v708
      %725 = vmatprep.subr.mxu0 0.0
      %726 = vmatpush1.msra.mxu0 0.0
      %727 = vmatprep.subr.mxu0 0.0
      %728 = vmatpush1.msra.mxu0 0.0
      %729 = vmatprep.subr.mxu0 0.0
      %730 = vmatpush1.msra.mxu0 0.0
      %731 = vmatprep.subr.mxu0 0.0
      %732 = vmatpush1.msra.mxu0 0.0
      %733 = vmatprep.subr.mxu0 0.0
      %734 = vmatpush1.msra.mxu0 0.0
      %735 = vmatprep.subr.mxu0 0.0
      %736 = vmatpush1.msra.mxu0 0.0
      %737 = vmatprep.subr.mxu0 0.0
      %738 = vmatpush1.msra.mxu0 0.0
      %739 = vmatprep.subr.mxu0 0.0
      %740 = vmatpush1.msra.mxu0 0.0
      %741 = vmatprep.subr.mxu0 0.0
      %742 = vmatpush1.msra.mxu0 0.0
      %743 = vmatprep.subr.mxu0 0.0
      %744 = vmatpush1.msra.mxu0 0.0
      %745 = vmatprep.subr.mxu0 0.0
      %746 = vmatpush1.msra.mxu0 0.0
      %747 = vmatprep.subr.mxu0 0.0
      %748 = vmatpush1.msra.mxu0 0.0
      %749 = vmatprep.subr.mxu0 0.0
      %750 = vmatpush1.msra.mxu0 0.0
      %751 = vmatprep.subr.mxu0 0.0
      %752 = vmatpush1.msra.mxu0 0.0
      %753 = vmatprep.subr.mxu0 0.0
      %754 = vmatpush1.msra.mxu0 0.0
      %755 = vmatprep.subr.mxu0 0.0
      %756 = vmatpush1.msra.mxu0 0.0
      %757 = vmatprep.subr.mxu0 0.0
      %758 = vmatpush1.msra.mxu0 0.0
      %759 = vmatprep.subr.mxu0 0.0
      %760 = vmatpush1.msra.mxu0 0.0
      %761 = vmatprep.subr.mxu0 0.0
      %762 = vmatpush1.msra.mxu0 0.0
      %763 = vmatprep.subr.mxu0 0.0
      %764 = vmatpush1.msra.mxu0 0.0
      %765 = vmatprep.subr.mxu0 0.0
      %766 = vmatpush1.msra.mxu0 0.0
      %767 = vmatprep.subr.mxu0 0.0
      %768 = vmatpush1.msra.mxu0 0.0
      %769 = vmatprep.subr.mxu0 0.0
      %770 = vmatpush1.msra.mxu0 0.0
      %771 = vmatprep.subr.mxu0 0.0
      %772 = vmatpush1.msra.mxu0 0.0
      %773 = vmatprep.subr.mxu0 0.0
      %774 = vmatpush1.msra.mxu0 0.0
      %775 = vmatprep.subr.mxu0 0.0
      %776 = vmatpush1.msra.mxu0 0.0
      %777 = vmatprep.subr.mxu0 0.0
      %778 = vmatpush1.msra.mxu0 0.0
      %779 = vmatprep.subr.mxu0 0.0
      %780 = vmatpush1.msra.mxu0 0.0
      %781 = vmatprep.mubr.f32.mxu0 0.0
      %782 = vmatmul.mubr.f32.gmra.mrb[0].mxu0 %v632
      %v783 = vpop.f32.mrb[0].mxu0
      %v784 = vadd.f32 %v715, %v783
      %v785 = vpop.f32.mrb[0].mxu0
      %786 = vdwg.mxu0
      %s787 = scalar_lea.vmem %s4, 64
      %v788 = vld [vmem:[%s787] sm:$0xff]
      %v789 = vld [vmem:[%s787 + $0x8] sm:$0xff]
      %v790 = vld [vmem:[%s787 + $0x10] sm:$0xff]
      %v791 = vld [vmem:[%s787 + $0x18] sm:$0xff]
      %s792 = scalar_lea.vmem %s5, 2
      %v793 = vld [vmem:[%s792] sm:$0x1]
      %v795 = vlaneseq
      %v796 = vshrl.u32 %v795, 7
      %v797 = vsub.s32 0, %v796
      %v798 = vrot.slane %v793, %v797
      %v801 = vsel %vm630, %v612, 0
      %803 = vmatprep.subr.mxu0 0.0
      %804 = vmatpush1.msra.mxu0 %v788
      %805 = vmatprep.subr.mxu0 0.0
      %806 = vmatpush1.msra.mxu0 %v789
      %807 = vmatprep.subr.mxu0 0.0
      %808 = vmatpush1.msra.mxu0 %v790
      %809 = vmatprep.subr.mxu0 0.0
      %810 = vmatpush1.msra.mxu0 %v791
      %811 = vmatprep.subr.mxu0 0.0
      %812 = vmatpush1.msra.mxu0 0.0
      %813 = vmatprep.subr.mxu0 0.0
      %814 = vmatpush1.msra.mxu0 0.0
      %815 = vmatprep.subr.mxu0 0.0
      %816 = vmatpush1.msra.mxu0 0.0
      %817 = vmatprep.subr.mxu0 0.0
      %818 = vmatpush1.msra.mxu0 0.0
      %819 = vmatprep.subr.mxu0 0.0
      %820 = vmatpush1.msra.mxu0 0.0
      %821 = vmatprep.subr.mxu0 0.0
      %822 = vmatpush1.msra.mxu0 0.0
      %823 = vmatprep.subr.mxu0 0.0
      %824 = vmatpush1.msra.mxu0 0.0
      %825 = vmatprep.subr.mxu0 0.0
      %826 = vmatpush1.msra.mxu0 0.0
      %827 = vmatprep.subr.mxu0 0.0
      %828 = vmatpush1.msra.mxu0 0.0
      %829 = vmatprep.subr.mxu0 0.0
      %830 = vmatpush1.msra.mxu0 0.0
      %831 = vmatprep.subr.mxu0 0.0
      %832 = vmatpush1.msra.mxu0 0.0
      %833 = vmatprep.subr.mxu0 0.0
      %834 = vmatpush1.msra.mxu0 0.0
      %835 = vmatprep.subr.mxu0 0.0
      %836 = vmatpush1.msra.mxu0 0.0
      %837 = vmatprep.subr.mxu0 0.0
      %838 = vmatpush1.msra.mxu0 0.0
      %839 = vmatprep.subr.mxu0 0.0
      %840 = vmatpush1.msra.mxu0 0.0
      %841 = vmatprep.subr.mxu0 0.0
      %842 = vmatpush1.msra.mxu0 0.0
      %843 = vmatprep.subr.mxu0 0.0
      %844 = vmatpush1.msra.mxu0 0.0
      %845 = vmatprep.subr.mxu0 0.0
      %846 = vmatpush1.msra.mxu0 0.0
      %847 = vmatprep.subr.mxu0 0.0
      %848 = vmatpush1.msra.mxu0 0.0
      %849 = vmatprep.subr.mxu0 0.0
      %850 = vmatpush1.msra.mxu0 0.0
      %851 = vmatprep.subr.mxu0 0.0
      %852 = vmatpush1.msra.mxu0 0.0
      %853 = vmatprep.subr.mxu0 0.0
      %854 = vmatpush1.msra.mxu0 0.0
      %855 = vmatprep.subr.mxu0 0.0
      %856 = vmatpush1.msra.mxu0 0.0
      %857 = vmatprep.subr.mxu0 0.0
      %858 = vmatpush1.msra.mxu0 0.0
      %859 = vmatprep.subr.mxu0 0.0
      %860 = vmatpush1.msra.mxu0 0.0
      %861 = vmatprep.subr.mxu0 0.0
      %862 = vmatpush1.msra.mxu0 0.0
      %863 = vmatprep.subr.mxu0 0.0
      %864 = vmatpush1.msra.mxu0 0.0
      %865 = vmatprep.subr.mxu0 0.0
      %866 = vmatpush1.msra.mxu0 0.0
      %867 = vmatprep.mubr.f32.mxu0 0.0
      %868 = vmatmul.mubr.f32.gmra.mrb[0].mxu0 %v801
      %v869 = vpop.f32.mrb[0].mxu0
      %v870 = vadd.f32 %v798, %v869
      %v871 = vpop.f32.mrb[0].mxu0
      %872 = vdwg.mxu0
      %v874 = vsel %vm630, %v701, 0
      %v877 = vsel %vm630, %v784, 0
      %879 = vmatprep.subr.mxu0 0.0
      %880 = vmatpush1.xpose.msra.mxu0 %v877
      %881 = vmatprep.subr.mxu0 0.0
      %882 = vmatpush1.xpose.msra.mxu0 0.0
      %883 = vmatprep.subr.mxu0 0.0
      %884 = vmatpush1.xpose.msra.mxu0 0.0
      %885 = vmatprep.subr.mxu0 0.0
      %886 = vmatpush1.xpose.msra.mxu0 0.0
      %887 = vmatprep.subr.mxu0 0.0
      %888 = vmatpush1.xpose.msra.mxu0 0.0
      %889 = vmatprep.subr.mxu0 0.0
      %890 = vmatpush1.xpose.msra.mxu0 0.0
      %891 = vmatprep.subr.mxu0 0.0
      %892 = vmatpush1.xpose.msra.mxu0 0.0
      %893 = vmatprep.subr.mxu0 0.0
      %894 = vmatpush1.xpose.msra.mxu0 0.0
      %895 = vmatprep.subr.mxu0 0.0
      %896 = vmatpush1.xpose.msra.mxu0 0.0
      %897 = vmatprep.subr.mxu0 0.0
      %898 = vmatpush1.xpose.msra.mxu0 0.0
      %899 = vmatprep.subr.mxu0 0.0
      %900 = vmatpush1.xpose.msra.mxu0 0.0
      %901 = vmatprep.subr.mxu0 0.0
      %902 = vmatpush1.xpose.msra.mxu0 0.0
      %903 = vmatprep.subr.mxu0 0.0
      %904 = vmatpush1.xpose.msra.mxu0 0.0
      %905 = vmatprep.subr.mxu0 0.0
      %906 = vmatpush1.xpose.msra.mxu0 0.0
      %907 = vmatprep.subr.mxu0 0.0
      %908 = vmatpush1.xpose.msra.mxu0 0.0
      %909 = vmatprep.subr.mxu0 0.0
      %910 = vmatpush1.xpose.msra.mxu0 0.0
      %911 = vmatprep.subr.mxu0 0.0
      %912 = vmatpush1.xpose.msra.mxu0 0.0
      %913 = vmatprep.subr.mxu0 0.0
      %914 = vmatpush1.xpose.msra.mxu0 0.0
      %915 = vmatprep.subr.mxu0 0.0
      %916 = vmatpush1.xpose.msra.mxu0 0.0
      %917 = vmatprep.subr.mxu0 0.0
      %918 = vmatpush1.xpose.msra.mxu0 0.0
      %919 = vmatprep.subr.mxu0 0.0
      %920 = vmatpush1.xpose.msra.mxu0 0.0
      %921 = vmatprep.subr.mxu0 0.0
      %922 = vmatpush1.xpose.msra.mxu0 0.0
      %923 = vmatprep.subr.mxu0 0.0
      %924 = vmatpush1.xpose.msra.mxu0 0.0
      %925 = vmatprep.subr.mxu0 0.0
      %926 = vmatpush1.xpose.msra.mxu0 0.0
      %927 = vmatprep.subr.mxu0 0.0
      %928 = vmatpush1.xpose.msra.mxu0 0.0
      %929 = vmatprep.subr.mxu0 0.0
      %930 = vmatpush1.xpose.msra.mxu0 0.0
      %931 = vmatprep.subr.mxu0 0.0
      %932 = vmatpush1.xpose.msra.mxu0 0.0
      %933 = vmatprep.subr.mxu0 0.0
      %934 = vmatpush1.xpose.msra.mxu0 0.0
      %935 = vmatprep.subr.mxu0 0.0
      %936 = vmatpush1.xpose.msra.mxu0 0.0
      %937 = vmatprep.subr.mxu0 0.0
      %938 = vmatpush1.xpose.msra.mxu0 0.0
      %939 = vmatprep.subr.mxu0 0.0
      %940 = vmatpush1.xpose.msra.mxu0 0.0
      %941 = vmatprep.subr.mxu0 0.0
      %942 = vmatpush1.xpose.msra.mxu0 0.0
      %943 = vmatprep.mubr.f32.mxu0 0.0
      %944 = vmatmul.mubr.f32.gmra.mrb[0].mxu0 %v874
      %v945 = vpop.f32.mrb[0].mxu0
      %v946 = vadd.f32 0.0, %v945
      %v947 = vpop.f32.mrb[0].mxu0
      %948 = vdwg.mxu0
      %v949 = vmul.f32 %v946, 0.17677669
      %vm950 = vcmask 64512
      %v951 = vsel %vm950, %v949, -inf
      %952 = vmax.xlane.f32.xlu0 %v951
      %v953 = vpop.xlane.xlu0 %952
      %v954 = vsub.f32 %v949, %v953
      %v955 = vmul.f32 %v954, 1.442695
      %v956 = vpow.pop %v955
      %v957 = vsel %vm950, %v956, 0.0
      %958 = vadd.xlane.f32.xlu0 %v957
      %v959 = vpop.xlane.xlu0 %958
      %v960 = vrcp.pop %v959
      %v961 = vmul.f32 %v956, %v960
      %v963 = vsel %vm950, %v961, 0
      %965 = vmatprep.subr.mxu0 0.0
      %966 = vmatpush1.msra.mxu0 %v870
      %967 = vmatprep.subr.mxu0 0.0
      %968 = vmatpush1.msra.mxu0 0.0
      %969 = vmatprep.subr.mxu0 0.0
      %970 = vmatpush1.msra.mxu0 0.0
      %971 = vmatprep.subr.mxu0 0.0
      %972 = vmatpush1.msra.mxu0 0.0
      %973 = vmatprep.subr.mxu0 0.0
      %974 = vmatpush1.msra.mxu0 0.0
      %975 = vmatprep.subr.mxu0 0.0
      %976 = vmatpush1.msra.mxu0 0.0
      %977 = vmatprep.subr.mxu0 0.0
      %978 = vmatpush1.msra.mxu0 0.0
      %979 = vmatprep.subr.mxu0 0.0
      %980 = vmatpush1.msra.mxu0 0.0
      %981 = vmatprep.subr.mxu0 0.0
      %982 = vmatpush1.msra.mxu0 0.0
      %983 = vmatprep.subr.mxu0 0.0
      %984 = vmatpush1.msra.mxu0 0.0
      %985 = vmatprep.subr.mxu0 0.0
      %986 = vmatpush1.msra.mxu0 0.0
      %987 = vmatprep.subr.mxu0 0.0
      %988 = vmatpush1.msra.mxu0 0.0
      %989 = vmatprep.subr.mxu0 0.0
      %990 = vmatpush1.msra.mxu0 0.0
      %991 = vmatprep.subr.mxu0 0.0
      %992 = vmatpush1.msra.mxu0 0.0
      %993 = vmatprep.subr.mxu0 0.0
      %994 = vmatpush1.msra.mxu0 0.0
      %995 = vmatprep.subr.mxu0 0.0
      %996 = vmatpush1.msra.mxu0 0.0
      %997 = vmatprep.subr.mxu0 0.0
      %998 = vmatpush1.msra.mxu0 0.0
      %999 = vmatprep.subr.mxu0 0.0
      %1000 = vmatpush1.msra.mxu0 0.0
      %1001 = vmatprep.subr.mxu0 0.0
      %1002 = vmatpush1.msra.mxu0 0.0
      %1003 = vmatprep.subr.mxu0 0.0
      %1004 = vmatpush1.msra.mxu0 0.0
      %1005 = vmatprep.subr.mxu0 0.0
      %1006 = vmatpush1.msra.mxu0 0.0
      %1007 = vmatprep.subr.mxu0 0.0
      %1008 = vmatpush1.msra.mxu0 0.0
      %1009 = vmatprep.subr.mxu0 0.0
      %1010 = vmatpush1.msra.mxu0 0.0
      %1011 = vmatprep.subr.mxu0 0.0
      %1012 = vmatpush1.msra.mxu0 0.0
      %1013 = vmatprep.subr.mxu0 0.0
      %1014 = vmatpush1.msra.mxu0 0.0
      %1015 = vmatprep.subr.mxu0 0.0
      %1016 = vmatpush1.msra.mxu0 0.0
      %1017 = vmatprep.subr.mxu0 0.0
      %1018 = vmatpush1.msra.mxu0 0.0
      %1019 = vmatprep.subr.mxu0 0.0
      %1020 = vmatpush1.msra.mxu0 0.0
      %1021 = vmatprep.subr.mxu0 0.0
      %1022 = vmatpush1.msra.mxu0 0.0
      %1023 = vmatprep.subr.mxu0 0.0
      %1024 = vmatpush1.msra.mxu0 0.0
      %1025 = vmatprep.subr.mxu0 0.0
      %1026 = vmatpush1.msra.mxu0 0.0
      %1027 = vmatprep.subr.mxu0 0.0
      %1028 = vmatpush1.msra.mxu0 0.0
      %1029 = vmatprep.mubr.f32.mxu0 0.0
      %1030 = vmatmul.mubr.f32.gmra.mrb[0].mxu0 %v963
      %v1031 = vpop.f32.mrb[0].mxu0
      %v1032 = vadd.f32 0.0, %v1031
      %v1033 = vpop.f32.mrb[0].mxu0
      %1034 = vdwg.mxu0
      %s1035 = scalar_lea.vmem %s4, 96
      %v1036 = vld [vmem:[%s1035] sm:$0xff]
      %v1037 = vld [vmem:[%s1035 + $0x8] sm:$0xff]
      %v1038 = vld [vmem:[%s1035 + $0x10] sm:$0xff]
      %v1039 = vld [vmem:[%s1035 + $0x18] sm:$0xff]
      %s1040 = scalar_lea.vmem %s5, 3
      %v1041 = vld [vmem:[%s1040] sm:$0x1]
      %v1043 = vlaneseq
      %v1044 = vshrl.u32 %v1043, 7
      %v1045 = vsub.s32 0, %v1044
      %v1046 = vrot.slane %v1041, %v1045
      %v1049 = vsel %vm630, %v1032, 0
      %1051 = vmatprep.subr.mxu0 0.0
      %1052 = vmatpush1.msra.mxu0 %v1036
      %1053 = vmatprep.subr.mxu0 0.0
      %1054 = vmatpush1.msra.mxu0 %v1037
      %1055 = vmatprep.subr.mxu0 0.0
      %1056 = vmatpush1.msra.mxu0 %v1038
      %1057 = vmatprep.subr.mxu0 0.0
      %1058 = vmatpush1.msra.mxu0 %v1039
      %1059 = vmatprep.subr.mxu0 0.0
      %1060 = vmatpush1.msra.mxu0 0.0
      %1061 = vmatprep.subr.mxu0 0.0
      %1062 = vmatpush1.msra.mxu0 0.0
      %1063 = vmatprep.subr.mxu0 0.0
      %1064 = vmatpush1.msra.mxu0 0.0
      %1065 = vmatprep.subr.mxu0 0.0
      %1066 = vmatpush1.msra.mxu0 0.0
      %1067 = vmatprep.subr.mxu0 0.0
      %1068 = vmatpush1.msra.mxu0 0.0
      %1069 = vmatprep.subr.mxu0 0.0
      %1070 = vmatpush1.msra.mxu0 0.0
      %1071 = vmatprep.subr.mxu0 0.0
      %1072 = vmatpush1.msra.mxu0 0.0
      %1073 = vmatprep.subr.mxu0 0.0
      %1074 = vmatpush1.msra.mxu0 0.0
      %1075 = vmatprep.subr.mxu0 0.0
      %1076 = vmatpush1.msra.mxu0 0.0
      %1077 = vmatprep.subr.mxu0 0.0
      %1078 = vmatpush1.msra.mxu0 0.0
      %1079 = vmatprep.subr.mxu0 0.0
      %1080 = vmatpush1.msra.mxu0 0.0
      %1081 = vmatprep.subr.mxu0 0.0
      %1082 = vmatpush1.msra.mxu0 0.0
      %1083 = vmatprep.subr.mxu0 0.0
      %1084 = vmatpush1.msra.mxu0 0.0
      %1085 = vmatprep.subr.mxu0 0.0
      %1086 = vmatpush1.msra.mxu0 0.0
      %1087 = vmatprep.subr.mxu0 0.0
      %1088 = vmatpush1.msra.mxu0 0.0
      %1089 = vmatprep.subr.mxu0 0.0
      %1090 = vmatpush1.msra.mxu0 0.0
      %1091 = vmatprep.subr.mxu0 0.0
      %1092 = vmatpush1.msra.mxu0 0.0
      %1093 = vmatprep.subr.mxu0 0.0
      %1094 = vmatpush1.msra.mxu0 0.0
      %1095 = vmatprep.subr.mxu0 0.0
      %1096 = vmatpush1.msra.mxu0 0.0
      %1097 = vmatprep.subr.mxu0 0.0
      %1098 = vmatpush1.msra.mxu0 0.0
      %1099 = vmatprep.subr.mxu0 0.0
      %1100 = vmatpush1.msra.mxu0 0.0
      %1101 = vmatprep.subr.mxu0 0.0
      %1102 = vmatpush1.msra.mxu0 0.0
      %1103 = vmatprep.subr.mxu0 0.0
      %1104 = vmatpush1.msra.mxu0 0.0
      %1105 = vmatprep.subr.mxu0 0.0
      %1106 = vmatpush1.msra.mxu0 0.0
      %1107 = vmatprep.subr.mxu0 0.0
      %1108 = vmatpush1.msra.mxu0 0.0
      %1109 = vmatprep.subr.mxu0 0.0
      %1110 = vmatpush1.msra.mxu0 0.0
      %1111 = vmatprep.subr.mxu0 0.0
      %1112 = vmatpush1.msra.mxu0 0.0
      %1113 = vmatprep.subr.mxu0 0.0
      %1114 = vmatpush1.msra.mxu0 0.0
      %1115 = vmatprep.mubr.f32.mxu0 0.0
      %1116 = vmatmul.mubr.f32.gmra.mrb[0].mxu0 %v1049
      %v1117 = vpop.f32.mrb[0].mxu0
      %v1118 = vadd.f32 %v1046, %v1117
      %v1119 = vpop.f32.mrb[0].mxu0
      %1120 = vdwg.mxu0
      %v1121 = vadd.f32 %v612, %v1118
      %v1122 = vld [vmem:[%s8] sm:$0x1]
      %v1123 = vld [vmem:[%s9] sm:$0x1]
      %v1124 = vsel %vm630, %v1121, 0.0
      %1125 = vadd.xlane.f32.xlu0 %v1124
      %v1126 = vpop.xlane.xlu0 %1125
      %v1127 = vrcp.pop 32.0
      %v1128 = vmul.f32 %v1126, %v1127
      %v1129 = vsub.f32 %v1121, %v1128
      %v1130 = vmul.f32 %v1129, %v1129
      %v1131 = vsel %vm630, %v1130, 0.0
      %1132 = vadd.xlane.f32.xlu0 %v1131
      %v1133 = vpop.xlane.xlu0 %1132
      %v1134 = vmul.f32 %v1133, %v1127
      %v1135 = vadd.f32 %v1134, 1e-05
      %v1136 = vrsqrt.pop %v1135
      %v1137 = vmul.f32 %v1129, %v1136
      %v1139 = vlaneseq
      %v1140 = vshrl.u32 %v1139, 7
      %v1141 = vsub.s32 0, %v1140
      %v1142 = vrot.slane %v1122, %v1141
      %v1144 = vmul.f32 %v1137, %v1142
      %v1146 = vlaneseq
      %v1147 = vshrl.u32 %v1146, 7
      %v1148 = vsub.s32 0, %v1147
      %v1149 = vrot.slane %v1123, %v1148
      %v1151 = vadd.f32 %v1144, %v1149
      %v1152 = vadd.f32 %v1151, %v613
      %v1153 = vld [vmem:[%s6] sm:$0xff]
      %v1154 = vld [vmem:[%s6 + $0x8] sm:$0xff]
      %v1155 = vld [vmem:[%s6 + $0x10] sm:$0xff]
      %v1156 = vld [vmem:[%s6 + $0x18] sm:$0xff]
      %v1157 = vld [vmem:[%s7] sm:$0x1]
      %v1159 = vlaneseq
      %v1160 = vshrl.u32 %v1159, 7
      %v1161 = vsub.s32 0, %v1160
      %v1162 = vrot.slane %v1157, %v1161
      %v1165 = vsel %vm630, %v1152, 0
      %1167 = vmatprep.subr.mxu0 0.0
      %1168 = vmatpush1.msra.mxu0 %v1153
      %1169 = vmatprep.subr.mxu0 0.0
      %1170 = vmatpush1.msra.mxu0 %v1154
      %1171 = vmatprep.subr.mxu0 0.0
      %1172 = vmatpush1.msra.mxu0 %v1155
      %1173 = vmatprep.subr.mxu0 0.0
      %1174 = vmatpush1.msra.mxu0 %v1156
      %1175 = vmatprep.subr.mxu0 0.0
      %1176 = vmatpush1.msra.mxu0 0.0
      %1177 = vmatprep.subr.mxu0 0.0
      %1178 = vmatpush1.msra.mxu0 0.0
      %1179 = vmatprep.subr.mxu0 0.0
      %1180 = vmatpush1.msra.mxu0 0.0
      %1181 = vmatprep.subr.mxu0 0.0
      %1182 = vmatpush1.msra.mxu0 0.0
      %1183 = vmatprep.subr.mxu0 0.0
      %1184 = vmatpush1.msra.mxu0 0.0
      %1185 = vmatprep.subr.mxu0 0.0
      %1186 = vmatpush1.msra.mxu0 0.0
      %1187 = vmatprep.subr.mxu0 0.0
      %1188 = vmatpush1.msra.mxu0 0.0
      %1189 = vmatprep.subr.mxu0 0.0
      %1190 = vmatpush1.msra.mxu0 0.0
      %1191 = vmatprep.subr.mxu0 0.0
      %1192 = vmatpush1.msra.mxu0 0.0
      %1193 = vmatprep.subr.mxu0 0.0
      %1194 = vmatpush1.msra.mxu0 0.0
      %1195 = vmatprep.subr.mxu0 0.0
      %1196 = vmatpush1.msra.mxu0 0.0
      %1197 = vmatprep.subr.mxu0 0.0
      %1198 = vmatpush1.msra.mxu0 0.0
      %1199 = vmatprep.subr.mxu0 0.0
      %1200 = vmatpush1.msra.mxu0 0.0
      %1201 = vmatprep.subr.mxu0 0.0
      %1202 = vmatpush1.msra.mxu0 0.0
      %1203 = vmatprep.subr.mxu0 0.0
      %1204 = vmatpush1.msra.mxu0 0.0
      %1205 = vmatprep.subr.mxu0 0.0
      %1206 = vmatpush1.msra.mxu0 0.0
      %1207 = vmatprep.subr.mxu0 0.0
      %1208 = vmatpush1.msra.mxu0 0.0
      %1209 = vmatprep.subr.mxu0 0.0
      %1210 = vmatpush1.msra.mxu0 0.0
      %1211 = vmatprep.subr.mxu0 0.0
      %1212 = vmatpush1.msra.mxu0 0.0
      %1213 = vmatprep.subr.mxu0 0.0
      %1214 = vmatpush1.msra.mxu0 0.0
      %1215 = vmatprep.subr.mxu0 0.0
      %1216 = vmatpush1.msra.mxu0 0.0
      %1217 = vmatprep.subr.mxu0 0.0
      %1218 = vmatpush1.msra.mxu0 0.0
      %1219 = vmatprep.subr.mxu0 0.0
      %1220 = vmatpush1.msra.mxu0 0.0
      %1221 = vmatprep.subr.mxu0 0.0
      %1222 = vmatpush1.msra.mxu0 0.0
      %1223 = vmatprep.subr.mxu0 0.0
      %1224 = vmatpush1.msra.mxu0 0.0
      %1225 = vmatprep.subr.mxu0 0.0
      %1226 = vmatpush1.msra.mxu0 0.0
      %1227 = vmatprep.subr.mxu0 0.0
      %1228 = vmatpush1.msra.mxu0 0.0
      %1229 = vmatprep.subr.mxu0 0.0
      %1230 = vmatpush1.msra.mxu0 0.0
      %1231 = vmatprep.mubr.f32.mxu0 0.0
      %1232 = vmatmul.mubr.f32.gmra.mrb[0].mxu0 %v1165
      %v1233 = vpop.f32.mrb[0].mxu0
      %v1234 = vadd.f32 %v1162, %v1233
      %v1235 = vpop.f32.mrb[0].mxu0
      %1236 = vdwg.mxu0
      %v1237 = vadd.f32 %v614, %v616
      %v1238 = vadd.f32 %v615, %v617
      %s1239 = scalar_lea.vmem %s6, 32
      %v1240 = vld [vmem:[%s1239] sm:$0xff]
      %v1241 = vld [vmem:[%s1239 + $0x8] sm:$0xff]
      %v1242 = vld [vmem:[%s1239 + $0x10] sm:$0xff]
      %v1243 = vld [vmem:[%s1239 + $0x18] sm:$0xff]
      %s1244 = scalar_lea.vmem %s7, 1
      %v1245 = vld [vmem:[%s1244] sm:$0x1]
      %v1247 = vlaneseq
      %v1248 = vshrl.u32 %v1247, 7
      %v1249 = vsub.s32 0, %v1248
      %v1250 = vrot.slane %v1245, %v1249
      %v1253 = vsel %vm630, %v1237, 0
      %v1256 = vsel %vm630, %v1238, 0
      %1258 = vmatprep.subr.mxu0 0.0
      %1259 = vmatpush1.msra.mxu0 %v1240
      %1260 = vmatprep.subr.mxu0 0.0
      %1261 = vmatpush1.msra.mxu0 %v1241
      %1262 = vmatprep.subr.mxu0 0.0
      %1263 = vmatpush1.msra.mxu0 %v1242
      %1264 = vmatprep.subr.mxu0 0.0
      %1265 = vmatpush1.msra.mxu0 %v1243
      %1266 = vmatprep.subr.mxu0 0.0
      %1267 = vmatpush1.msra.mxu0 0.0
      %1268 = vmatprep.subr.mxu0 0.0
      %1269 = vmatpush1.msra.mxu0 0.0
      %1270 = vmatprep.subr.mxu0 0.0
      %1271 = vmatpush1.msra.mxu0 0.0
      %1272 = vmatprep.subr.mxu0 0.0
      %1273 = vmatpush1.msra.mxu0 0.0
      %1274 = vmatprep.subr.mxu0 0.0
      %1275 = vmatpush1.msra.mxu0 0.0
      %1276 = vmatprep.subr.mxu0 0.0
      %1277 = vmatpush1.msra.mxu0 0.0
      %1278 = vmatprep.subr.mxu0 0.0
      %1279 = vmatpush1.msra.mxu0 0.0
      %1280 = vmatprep.subr.mxu0 0.0
      %1281 = vmatpush1.msra.mxu0 0.0
      %1282 = vmatprep.subr.mxu0 0.0
      %1283 = vmatpush1.msra.mxu0 0.0
      %1284 = vmatprep.subr.mxu0 0.0
      %1285 = vmatpush1.msra.mxu0 0.0
      %1286 = vmatprep.subr.mxu0 0.0
      %1287 = vmatpush1.msra.mxu0 0.0
      %1288 = vmatprep.subr.mxu0 0.0
      %1289 = vmatpush1.msra.mxu0 0.0
      %1290 = vmatprep.subr.mxu0 0.0
      %1291 = vmatpush1.msra.mxu0 0.0
      %1292 = vmatprep.subr.mxu0 0.0
      %1293 = vmatpush1.msra.mxu0 0.0
      %1294 = vmatprep.subr.mxu0 0.0
      %1295 = vmatpush1.msra.mxu0 0.0
      %1296 = vmatprep.subr.mxu0 0.0
      %1297 = vmatpush1.msra.mxu0 0.0
      %1298 = vmatprep.subr.mxu0 0.0
      %1299 = vmatpush1.msra.mxu0 0.0
      %1300 = vmatprep.subr.mxu0 0.0
      %1301 = vmatpush1.msra.mxu0 0.0
      %1302 = vmatprep.subr.mxu0 0.0
      %1303 = vmatpush1.msra.mxu0 0.0
      %1304 = vmatprep.subr.mxu0 0.0
      %1305 = vmatpush1.msra.mxu0 0.0
      %1306 = vmatprep.subr.mxu0 0.0
      %1307 = vmatpush1.msra.mxu0 0.0
      %1308 = vmatprep.subr.mxu0 0.0
      %1309 = vmatpush1.msra.mxu0 0.0
      %1310 = vmatprep.subr.mxu0 0.0
      %1311 = vmatpush1.msra.mxu0 0.0
      %1312 = vmatprep.subr.mxu0 0.0
      %1313 = vmatpush1.msra.mxu0 0.0
      %1314 = vmatprep.subr.mxu0 0.0
      %1315 = vmatpush1.msra.mxu0 0.0
      %1316 = vmatprep.subr.mxu0 0.0
      %1317 = vmatpush1.msra.mxu0 0.0
      %1318 = vmatprep.subr.mxu0 0.0
      %1319 = vmatpush1.msra.mxu0 0.0
      %1320 = vmatprep.subr.mxu0 0.0
      %1321 = vmatpush1.msra.mxu0 0.0
      %1322 = vmatprep.mubr.f32.mxu0 0.0
      %1323 = vmatmul.mubr.f32.gmra.mrb[0].mxu0 %v1253
      %v1324 = vpop.f32.mrb[0].mxu0
      %v1325 = vadd.f32 %v1250, %v1324
      %v1326 = vpop.f32.mrb[0].mxu0
      %1327 = vmatprep.mubr.f32.mxu0 0.0
      %1328 = vmatmul.mubr.f32.gmra.mrb[0].mxu0 %v1256
      %v1329 = vpop.f32.mrb[0].mxu0
      %v1330 = vadd.f32 %v1250, %v1329
      %v1331 = vpop.f32.mrb[0].mxu0
      %1332 = vdwg.mxu0
      %s1333 = scalar_lea.vmem %s6, 64
      %v1334 = vld [vmem:[%s1333] sm:$0xff]
      %v1335 = vld [vmem:[%s1333 + $0x8] sm:$0xff]
      %v1336 = vld [vmem:[%s1333 + $0x10] sm:$0xff]
      %v1337 = vld [vmem:[%s1333 + $0x18] sm:$0xff]
      %s1338 = scalar_lea.vmem %s7, 2
      %v1339 = vld [vmem:[%s1338] sm:$0x1]
      %v1341 = vlaneseq
      %v1342 = vshrl.u32 %v1341, 7
      %v1343 = vsub.s32 0, %v1342
      %v1344 = vrot.slane %v1339, %v1343
      %v1347 = vsel %vm630, %v614, 0
      %v1350 = vsel %vm630, %v615, 0
      %1352 = vmatprep.subr.mxu0 0.0
      %1353 = vmatpush1.msra.mxu0 %v1334
      %1354 = vmatprep.subr.mxu0 0.0
      %1355 = vmatpush1.msra.mxu0 %v1335
      %1356 = vmatprep.subr.mxu0 0.0
      %1357 = vmatpush1.msra.mxu0 %v1336
      %1358 = vmatprep.subr.mxu0 0.0
      %1359 = vmatpush1.msra.mxu0 %v1337
      %1360 = vmatprep.subr.mxu0 0.0
      %1361 = vmatpush1.msra.mxu0 0.0
      %1362 = vmatprep.subr.mxu0 0.0
      %1363 = vmatpush1.msra.mxu0 0.0
      %1364 = vmatprep.subr.mxu0 0.0
      %1365 = vmatpush1.msra.mxu0 0.0
      %1366 = vmatprep.subr.mxu0 0.0
      %1367 = vmatpush1.msra.mxu0 0.0
      %1368 = vmatprep.subr.mxu0 0.0
      %1369 = vmatpush1.msra.mxu0 0.0
      %1370 = vmatprep.subr.mxu0 0.0
      %1371 = vmatpush1.msra.mxu0 0.0
      %1372 = vmatprep.subr.mxu0 0.0
      %1373 = vmatpush1.msra.mxu0 0.0
      %1374 = vmatprep.subr.mxu0 0.0
      %1375 = vmatpush1.msra.mxu0 0.0
      %1376 = vmatprep.subr.mxu0 0.0
      %1377 = vmatpush1.msra.mxu0 0.0
      %1378 = vmatprep.subr.mxu0 0.0
      %1379 = vmatpush1.msra.mxu0 0.0
      %1380 = vmatprep.subr.mxu0 0.0
      %1381 = vmatpush1.msra.mxu0 0.0
      %1382 = vmatprep.subr.mxu0 0.0
      %1383 = vmatpush1.msra.mxu0 0.0
      %1384 = vmatprep.subr.mxu0 0.0
      %1385 = vmatpush1.msra.mxu0 0.0
      %1386 = vmatprep.subr.mxu0 0.0
      %1387 = vmatpush1.msra.mxu0 0.0
      %1388 = vmatprep.subr.mxu0 0.0
      %1389 = vmatpush1.msra.mxu0 0.0
      %1390 = vmatprep.subr.mxu0 0.0
      %1391 = vmatpush1.msra.mxu0 0.0
      %1392 = vmatprep.subr.mxu0 0.0
      %1393 = vmatpush1.msra.mxu0 0.0
      %1394 = vmatprep.subr.mxu0 0.0
      %1395 = vmatpush1.msra.mxu0 0.0
      %1396 = vmatprep.subr.mxu0 0.0
      %1397 = vmatpush1.msra.mxu0 0.0
      %1398 = vmatprep.subr.mxu0 0.0
      %1399 = vmatpush1.msra.mxu0 0.0
      %1400 = vmatprep.subr.mxu0 0.0
      %1401 = vmatpush1.msra.mxu0 0.0
      %1402 = vmatprep.subr.mxu0 0.0
      %1403 = vmatpush1.msra.mxu0 0.0
      %1404 = vmatprep.subr.mxu0 0.0
      %1405 = vmatpush1.msra.mxu0 0.0
      %1406 = vmatprep.subr.mxu0 0.0
      %1407 = vmatpush1.msra.mxu0 0.0
      %1408 = vmatprep.subr.mxu0 0.0
      %1409 = vmatpush1.msra.mxu0 0.0
      %1410 = vmatprep.subr.mxu0 0.0
      %1411 = vmatpush1.msra.mxu0 0.0
      %1412 = vmatprep.subr.mxu0 0.0
      %1413 = vmatpush1.msra.mxu0 0.0
      %1414 = vmatprep.subr.mxu0 0.0
      %1415 = vmatpush1.msra.mxu0 0.0
      %1416 = vmatprep.mubr.f32.mxu0 0.0
      %1417 = vmatmul.mubr.f32.gmra.mrb[0].mxu0 %v1347
      %v1418 = vpop.f32.mrb[0].mxu0
      %v1419 = vadd.f32 %v1344, %v1418
      %v1420 = vpop.f32.mrb[0].mxu0
      %1421 = vmatprep.mubr.f32.mxu0 0.0
      %1422 = vmatmul.mubr.f32.gmra.mrb[0].mxu0 %v1350
      %v1423 = vpop.f32.mrb[0].mxu0
      %v1424 = vadd.f32 %v1344, %v1423
      %v1425 = vpop.f32.mrb[0].mxu0
      %1426 = vdwg.mxu0
      %v1428 = vsel %vm630, %v1234, 0
      %v1431 = vsel %vm630, %v1325, 0
      %v1434 = vsel %vm630, %v1330, 0
      %1436 = vmatprep.subr.mxu0 0.0
      %1437 = vmatpush1.xpose.msra.mxu0 %v1431
      %1438 = vmatprep.subr.mxu0 0.0
      %1439 = vmatpush1.xpose.msra.mxu0 %v1434
      %1440 = vmatprep.subr.mxu0 0.0
      %1441 = vmatpush1.xpose.msra.mxu0 0.0
      %1442 = vmatprep.subr.mxu0 0.0
      %1443 = vmatpush1.xpose.msra.mxu0 0.0
      %1444 = vmatprep.subr.mxu0 0.0
      %1445 = vmatpush1.xpose.msra.mxu0 0.0
      %1446 = vmatprep.subr.mxu0 0.0
      %1447 = vmatpush1.xpose.msra.mxu0 0.0
      %1448 = vmatprep.subr.mxu0 0.0
      %1449 = vmatpush1.xpose.msra.mxu0 0.0
      %1450 = vmatprep.subr.mxu0 0.0
      %1451 = vmatpush1.xpose.msra.mxu0 0.0
      %1452 = vmatprep.subr.mxu0 0.0
      %1453 = vmatpush1.xpose.msra.mxu0 0.0
      %1454 = vmatprep.subr.mxu0 0.0
      %1455 = vmatpush1.xpose.msra.mxu0 0.0
      %1456 = vmatprep.subr.mxu0 0.0
      %1457 = vmatpush1.xpose.msra.mxu0 0.0
      %1458 = vmatprep.subr.mxu0 0.0
      %1459 = vmatpush1.xpose.msra.mxu0 0.0
      %1460 = vmatprep.subr.mxu0 0.0
      %1461 = vmatpush1.xpose.msra.mxu0 0.0
      %1462 = vmatprep.subr.mxu0 0.0
      %1463 = vmatpush1.xpose.msra.mxu0 0.0
      %1464 = vmatprep.subr.mxu0 0.0
      %1465 = vmatpush1.xpose.msra.mxu0 0.0
      %1466 = vmatprep.subr.mxu0 0.0
      %1467 = vmatpush1.xpose.msra.mxu0 0.0
      %1468 = vmatprep.subr.mxu0 0.0
      %1469 = vmatpush1.xpose.msra.mxu0 0.0
      %1470 = vmatprep.subr.mxu0 0.0
      %1471 = vmatpush1.xpose.msra.mxu0 0.0
      %1472 = vmatprep.subr.mxu0 0.0
      %1473 = vmatpush1.xpose.msra.mxu0 0.0
      %1474 = vmatprep.subr.mxu0 0.0
      %1475 = vmatpush1.xpose.msra.mxu0 0.0
      %1476 = vmatprep.subr.mxu0 0.0
      %1477 = vmatpush1.xpose.msra.mxu0 0.0
      %1478 = vmatprep.subr.mxu0 0.0
      %1479 = vmatpush1.xpose.msra.mxu0 0.0
      %1480 = vmatprep.subr.mxu0 0.0
      %1481 = vmatpush1.xpose.msra.mxu0 0.0
      %1482 = vmatprep.subr.mxu0 0.0
      %1483 = vmatpush1.xpose.msra.mxu0 0.0
      %1484 = vmatprep.subr.mxu0 0.0
      %1485 = vmatpush1.xpose.msra.mxu0 0.0
      %1486 = vmatprep.subr.mxu0 0.0
      %1487 = vmatpush1.xpose.msra.mxu0 0.0
      %1488 = vmatprep.subr.mxu0 0.0
      %1489 = vmatpush1.xpose.msra.mxu0 0.0
      %1490 = vmatprep.subr.mxu0 0.0
      %1491 = vmatpush1.xpose.msra.mxu0 0.0
      %1492 = vmatprep.subr.mxu0 0.0
      %1493 = vmatpush1.xpose.msra.mxu0 0.0
      %1494 = vmatprep.subr.mxu0 0.0
      %1495 = vmatpush1.xpose.msra.mxu0 0.0
      %1496 = vmatprep.subr.mxu0 0.0
      %1497 = vmatpush1.xpose.msra.mxu0 0.0
      %1498 = vmatprep.subr.mxu0 0.0
      %1499 = vmatpush1.xpose.msra.mxu0 0.0
      %1500 = vmatprep.mubr.f32.mxu0 0.0
      %1501 = vmatmul.mubr.f32.gmra.mrb[0].mxu0 %v1428
      %v1502 = vpop.f32.mrb[0].mxu0
      %v1503 = vadd.f32 0.0, %v1502
      %v1504 = vpop.f32.mrb[0].mxu0
      %1505 = vdwg.mxu0
      %v1506 = vmul.f32 %v1503, 0.17677669
      %vm1507 = vcmask 130048
      %v1508 = vsel %vm1507, %v1506, -inf
      %1509 = vmax.xlane.f32.xlu0 %v1508
      %v1510 = vpop.xlane.xlu0 %1509
      %v1511 = vsub.f32 %v1506, %v1510
      %v1512 = vmul.f32 %v1511, 1.442695
      %v1513 = vpow.pop %v1512
      %v1514 = vsel %vm1507, %v1513, 0.0
      %1515 = vadd.xlane.f32.xlu0 %v1514
      %v1516 = vpop.xlane.xlu0 %1515
      %v1517 = vrcp.pop %v1516
      %v1518 = vmul.f32 %v1513, %v1517
      %v1520 = vsel %vm1507, %v1518, 0
      %1522 = vmatprep.subr.mxu0 0.0
      %1523 = vmatpush1.msra.mxu0 %v1419
      %1524 = vmatprep.subr.mxu0 0.0
      %1525 = vmatpush1.msra.mxu0 %v1424
      %1526 = vmatprep.subr.mxu0 0.0
      %1527 = vmatpush1.msra.mxu0 0.0
      %1528 = vmatprep.subr.mxu0 0.0
      %1529 = vmatpush1.msra.mxu0 0.0
      %1530 = vmatprep.subr.mxu0 0.0
      %1531 = vmatpush1.msra.mxu0 0.0
      %1532 = vmatprep.subr.mxu0 0.0
      %1533 = vmatpush1.msra.mxu0 0.0
      %1534 = vmatprep.subr.mxu0 0.0
      %1535 = vmatpush1.msra.mxu0 0.0
      %1536 = vmatprep.subr.mxu0 0.0
      %1537 = vmatpush1.msra.mxu0 0.0
      %1538 = vmatprep.subr.mxu0 0.0
      %1539 = vmatpush1.msra.mxu0 0.0
      %1540 = vmatprep.subr.mxu0 0.0
      %1541 = vmatpush1.msra.mxu0 0.0
      %1542 = vmatprep.subr.mxu0 0.0
      %1543 = vmatpush1.msra.mxu0 0.0
      %1544 = vmatprep.subr.mxu0 0.0
      %1545 = vmatpush1.msra.mxu0 0.0
      %1546 = vmatprep.subr.mxu0 0.0
      %1547 = vmatpush1.msra.mxu0 0.0
      %1548 = vmatprep.subr.mxu0 0.0
      %1549 = vmatpush1.msra.mxu0 0.0
      %1550 = vmatprep.subr.mxu0 0.0
      %1551 = vmatpush1.msra.mxu0 0.0
      %1552 = vmatprep.subr.mxu0 0.0
      %1553 = vmatpush1.msra.mxu0 0.0
      %1554 = vmatprep.subr.mxu0 0.0
      %1555 = vmatpush1.msra.mxu0 0.0
      %1556 = vmatprep.subr.mxu0 0.0
      %1557 = vmatpush1.msra.mxu0 0.0
      %1558 = vmatprep.subr.mxu0 0.0
      %1559 = vmatpush1.msra.mxu0 0.0
      %1560 = vmatprep.subr.mxu0 0.0
      %1561 = vmatpush1.msra.mxu0 0.0
      %1562 = vmatprep.subr.mxu0 0.0
      %1563 = vmatpush1.msra.mxu0 0.0
      %1564 = vmatprep.subr.mxu0 0.0
      %1565 = vmatpush1.msra.mxu0 0.0
      %1566 = vmatprep.subr.mxu0 0.0
      %1567 = vmatpush1.msra.mxu0 0.0
      %1568 = vmatprep.subr.mxu0 0.0
      %1569 = vmatpush1.msra.mxu0 0.0
      %1570 = vmatprep.subr.mxu0 0.0
      %1571 = vmatpush1.msra.mxu0 0.0
      %1572 = vmatprep.subr.mxu0 0.0
      %1573 = vmatpush1.msra.mxu0 0.0
      %1574 = vmatprep.subr.mxu0 0.0
      %1575 = vmatpush1.msra.mxu0 0.0
      %1576 = vmatprep.subr.mxu0 0.0
      %1577 = vmatpush1.msra.mxu0 0.0
      %1578 = vmatprep.subr.mxu0 0.0
      %1579 = vmatpush1.msra.mxu0 0.0
      %1580 = vmatprep.subr.mxu0 0.0
      %1581 = vmatpush1.msra.mxu0 0.0
      %1582 = vmatprep.subr.mxu0 0.0
      %1583 = vmatpush1.msra.mxu0 0.0
      %1584 = vmatprep.subr.mxu0 0.0
      %1585 = vmatpush1.msra.mxu0 0.0
      %1586 = vmatprep.mubr.f32.mxu0 0.0
      %1587 = vmatmul.mubr.f32.gmra.mrb[0].mxu0 %v1520
      %v1588 = vpop.f32.mrb[0].mxu0
      %v1589 = vadd.f32 0.0, %v1588
      %v1590 = vpop.f32.mrb[0].mxu0
      %1591 = vdwg.mxu0
      %s1592 = scalar_lea.vmem %s6, 96
      %v1593 = vld [vmem:[%s1592] sm:$0xff]
      %v1594 = vld [vmem:[%s1592 + $0x8] sm:$0xff]
      %v1595 = vld [vmem:[%s1592 + $0x10] sm:$0xff]
      %v1596 = vld [vmem:[%s1592 + $0x18] sm:$0xff]
      %s1597 = scalar_lea.vmem %s7, 3
      %v1598 = vld [vmem:[%s1597] sm:$0x1]
      %v1600 = vlaneseq
      %v1601 = vshrl.u32 %v1600, 7
      %v1602 = vsub.s32 0, %v1601
      %v1603 = vrot.slane %v1598, %v1602
      %v1606 = vsel %vm630, %v1589, 0
      %1608 = vmatprep.subr.mxu0 0.0
      %1609 = vmatpush1.msra.mxu0 %v1593
      %1610 = vmatprep.subr.mxu0 0.0
      %1611 = vmatpush1.msra.mxu0 %v1594
      %1612 = vmatprep.subr.mxu0 0.0
      %1613 = vmatpush1.msra.mxu0 %v1595
      %1614 = vmatprep.subr.mxu0 0.0
      %1615 = vmatpush1.msra.mxu0 %v1596
      %1616 = vmatprep.subr.mxu0 0.0
      %1617 = vmatpush1.msra.mxu0 0.0
      %1618 = vmatprep.subr.mxu0 0.0
      %1619 = vmatpush1.msra.mxu0 0.0
      %1620 = vmatprep.subr.mxu0 0.0
      %1621 = vmatpush1.msra.mxu0 0.0
      %1622 = vmatprep.subr.mxu0 0.0
      %1623 = vmatpush1.msra.mxu0 0.0
      %1624 = vmatprep.subr.mxu0 0.0
      %1625 = vmatpush1.msra.mxu0 0.0
      %1626 = vmatprep.subr.mxu0 0.0
      %1627 = vmatpush1.msra.mxu0 0.0
      %1628 = vmatprep.subr.mxu0 0.0
      %1629 = vmatpush1.msra.mxu0 0.0
      %1630 = vmatprep.subr.mxu0 0.0
      %1631 = vmatpush1.msra.mxu0 0.0
      %1632 = vmatprep.subr.mxu0 0.0
      %1633 = vmatpush1.msra.mxu0 0.0
      %1634 = vmatprep.subr.mxu0 0.0
      %1635 = vmatpush1.msra.mxu0 0.0
      %1636 = vmatprep.subr.mxu0 0.0
      %1637 = vmatpush1.msra.mxu0 0.0
      %1638 = vmatprep.subr.mxu0 0.0
      %1639 = vmatpush1.msra.mxu0 0.0
      %1640 = vmatprep.subr.mxu0 0.0
      %1641 = vmatpush1.msra.mxu0 0.0
      %1642 = vmatprep.subr.mxu0 0.0
      %1643 = vmatpush1.msra.mxu0 0.0
      %1644 = vmatprep.subr.mxu0 0.0
      %1645 = vmatpush1.msra.mxu0 0.0
      %1646 = vmatprep.subr.mxu0 0.0
      %1647 = vmatpush1.msra.mxu0 0.0
      %1648 = vmatprep.subr.mxu0 0.0
      %1649 = vmatpush1.msra.mxu0 0.0
      %1650 = vmatprep.subr.mxu0 0.0
      %1651 = vmatpush1.msra.mxu0 0.0
      %1652 = vmatprep.subr.mxu0 0.0
      %1653 = vmatpush1.msra.mxu0 0.0
      %1654 = vmatprep.subr.mxu0 0.0
      %1655 = vmatpush1.msra.mxu0 0.0
      %1656 = vmatprep.subr.mxu0 0.0
      %1657 = vmatpush1.msra.mxu0 0.0
      %1658 = vmatprep.subr.mxu0 0.0
      %1659 = vmatpush1.msra.mxu0 0.0
      %1660 = vmatprep.subr.mxu0 0.0
      %1661 = vmatpush1.msra.mxu0 0.0
      %1662 = vmatprep.subr.mxu0 0.0
      %1663 = vmatpush1.msra.mxu0 0.0
      %1664 = vmatprep.subr.mxu0 0.0
      %1665 = vmatpush1.msra.mxu0 0.0
      %1666 = vmatprep.subr.mxu0 0.0
      %1667 = vmatpush1.msra.mxu0 0.0
      %1668 = vmatprep.subr.mxu0 0.0
      %1669 = vmatpush1.msra.mxu0 0.0
      %1670 = vmatprep.subr.mxu0 0.0
      %1671 = vmatpush1.msra.mxu0 0.0
      %1672 = vmatprep.mubr.f32.mxu0 0.0
      %1673 = vmatmul.mubr.f32.gmra.mrb[0].mxu0 %v1606
      %v1674 = vpop.f32.mrb[0].mxu0
      %v1675 = vadd.f32 %v1603, %v1674
      %v1676 = vpop.f32.mrb[0].mxu0
      %1677 = vdwg.mxu0
      %v1678 = vadd.f32 %v1151, %v1675
      %s1679 = scalar_lea.vmem %s8, 1
      %v1680 = vld [vmem:[%s1679] sm:$0x1]
      %s1681 = scalar_lea.vmem %s9, 1
      %v1682 = vld [vmem:[%s1681] sm:$0x1]
      %v1683 = vsel %vm630, %v1678, 0.0
      %1684 = vadd.xlane.f32.xlu0 %v1683
      %v1685 = vpop.xlane.xlu0 %1684
      %v1686 = vmul.f32 %v1685, %v1127
      %v1687 = vsub.f32 %v1678, %v1686
      %v1688 = vmul.f32 %v1687, %v1687
      %v1689 = vsel %vm630, %v1688, 0.0
      %1690 = vadd.xlane.f32.xlu0 %v1689
      %v1691 = vpop.xlane.xlu0 %1690
      %v1692 = vmul.f32 %v1691, %v1127
      %v1693 = vadd.f32 %v1692, 1e-05
      %v1694 = vrsqrt.pop %v1693
      %v1695 = vmul.f32 %v1687, %v1694
      %v1697 = vlaneseq
      %v1698 = vshrl.u32 %v1697, 7
      %v1699 = vsub.s32 0, %v1698
      %v1700 = vrot.slane %v1680, %v1699
      %v1702 = vmul.f32 %v1695, %v1700
      %v1704 = vlaneseq
      %v1705 = vshrl.u32 %v1704, 7
      %v1706 = vsub.s32 0, %v1705
      %v1707 = vrot.slane %v1682, %v1706
      %v1709 = vadd.f32 %v1702, %v1707
      %v1710 = vld [vmem:[%s10] sm:$0xff]
      %v1711 = vld [vmem:[%s10 + $0x8] sm:$0xff]
      %v1712 = vld [vmem:[%s10 + $0x10] sm:$0xff]
      %v1713 = vld [vmem:[%s10 + $0x18] sm:$0xff]
      %v1714 = vld [vmem:[%s11] sm:$0x1]
      %v1716 = vlaneseq
      %v1717 = vshrl.u32 %v1716, 7
      %v1718 = vsub.s32 0, %v1717
      %v1719 = vrot.slane %v1714, %v1718
      %v1722 = vsel %vm630, %v1709, 0
      %1724 = vmatprep.subr.mxu0 0.0
      %1725 = vmatpush1.msra.mxu0 %v1710
      %1726 = vmatprep.subr.mxu0 0.0
      %1727 = vmatpush1.msra.mxu0 %v1711
      %1728 = vmatprep.subr.mxu0 0.0
      %1729 = vmatpush1.msra.mxu0 %v1712
      %1730 = vmatprep.subr.mxu0 0.0
      %1731 = vmatpush1.msra.mxu0 %v1713
      %1732 = vmatprep.subr.mxu0 0.0
      %1733 = vmatpush1.msra.mxu0 0.0
      %1734 = vmatprep.subr.mxu0 0.0
      %1735 = vmatpush1.msra.mxu0 0.0
      %1736 = vmatprep.subr.mxu0 0.0
      %1737 = vmatpush1.msra.mxu0 0.0
      %1738 = vmatprep.subr.mxu0 0.0
      %1739 = vmatpush1.msra.mxu0 0.0
      %1740 = vmatprep.subr.mxu0 0.0
      %1741 = vmatpush1.msra.mxu0 0.0
      %1742 = vmatprep.subr.mxu0 0.0
      %1743 = vmatpush1.msra.mxu0 0.0
      %1744 = vmatprep.subr.mxu0 0.0
      %1745 = vmatpush1.msra.mxu0 0.0
      %1746 = vmatprep.subr.mxu0 0.0
      %1747 = vmatpush1.msra.mxu0 0.0
      %1748 = vmatprep.subr.mxu0 0.0
      %1749 = vmatpush1.msra.mxu0 0.0
      %1750 = vmatprep.subr.mxu0 0.0
      %1751 = vmatpush1.msra.mxu0 0.0
      %1752 = vmatprep.subr.mxu0 0.0
      %1753 = vmatpush1.msra.mxu0 0.0
      %1754 = vmatprep.subr.mxu0 0.0
      %1755 = vmatpush1.msra.mxu0 0.0
      %1756 = vmatprep.subr.mxu0 0.0
      %1757 = vmatpush1.msra.mxu0 0.0
      %1758 = vmatprep.subr.mxu0 0.0
      %1759 = vmatpush1.msra.mxu0 0.0
      %1760 = vmatprep.subr.mxu0 0.0
      %1761 = vmatpush1.msra.mxu0 0.0
      %1762 = vmatprep.subr.mxu0 0.0
      %1763 = vmatpush1.msra.mxu0 0.0
      %1764 = vmatprep.subr.mxu0 0.0
      %1765 = vmatpush1.msra.mxu0 0.0
      %1766 = vmatprep.subr.mxu0 0.0
      %1767 = vmatpush1.msra.mxu0 0.0
      %1768 = vmatprep.subr.mxu0 0.0
      %1769 = vmatpush1.msra.mxu0 0.0
      %1770 = vmatprep.subr.mxu0 0.0
      %1771 = vmatpush1.msra.mxu0 0.0
      %1772 = vmatprep.subr.mxu0 0.0
      %1773 = vmatpush1.msra.mxu0 0.0
      %1774 = vmatprep.subr.mxu0 0.0
      %1775 = vmatpush1.msra.mxu0 0.0
      %1776 = vmatprep.subr.mxu0 0.0
      %1777 = vmatpush1.msra.mxu0 0.0
      %1778 = vmatprep.subr.mxu0 0.0
      %1779 = vmatpush1.msra.mxu0 0.0
      %1780 = vmatprep.subr.mxu0 0.0
      %1781 = vmatpush1.msra.mxu0 0.0
      %1782 = vmatprep.subr.mxu0 0.0
      %1783 = vmatpush1.msra.mxu0 0.0
      %1784 = vmatprep.subr.mxu0 0.0
      %1785 = vmatpush1.msra.mxu0 0.0
      %1786 = vmatprep.subr.mxu0 0.0
      %1787 = vmatpush1.msra.mxu0 0.0
      %1788 = vmatprep.mubr.f32.mxu0 0.0
      %1789 = vmatmul.mubr.f32.gmra.mrb[0].mxu0 %v1722
      %v1790 = vpop.f32.mrb[0].mxu0
      %v1791 = vadd.f32 %v1719, %v1790
      %v1792 = vpop.f32.mrb[0].mxu0
      %1793 = vdwg.mxu0
      %v1794 = vmax.f32 %v1791, 0.0
      %v1795 = vld [vmem:[%s12] sm:$0xff]
      %v1796 = vld [vmem:[%s12 + $0x8] sm:$0xff]
      %v1797 = vld [vmem:[%s12 + $0x10] sm:$0xff]
      %v1798 = vld [vmem:[%s12 + $0x18] sm:$0xff]
      %v1799 = vld [vmem:[%s12 + $0x20] sm:$0xff]
      %v1800 = vld [vmem:[%s12 + $0x28] sm:$0xff]
      %v1801 = vld [vmem:[%s12 + $0x30] sm:$0xff]
      %v1802 = vld [vmem:[%s12 + $0x38] sm:$0xff]
      %v1803 = vld [vmem:[%s13] sm:$0x1]
      %v1805 = vlaneseq
      %v1806 = vshrl.u32 %v1805, 7
      %v1807 = vsub.s32 0, %v1806
      %v1808 = vrot.slane %v1803, %v1807
      %vm1810 = vcmask 523264
      %v1812 = vsel %vm1810, %v1794, 0
      %1814 = vmatprep.subr.mxu0 0.0
      %1815 = vmatpush1.msra.mxu0 %v1795
      %1816 = vmatprep.subr.mxu0 0.0
      %1817 = vmatpush1.msra.mxu0 %v1796
      %1818 = vmatprep.subr.mxu0 0.0
      %1819 = vmatpush1.msra.mxu0 %v1797
      %1820 = vmatprep.subr.mxu0 0.0
      %1821 = vmatpush1.msra.mxu0 %v1798
      %1822 = vmatprep.subr.mxu0 0.0
      %1823 = vmatpush1.msra.mxu0 %v1799
      %1824 = vmatprep.subr.mxu0 0.0
      %1825 = vmatpush1.msra.mxu0 %v1800
      %1826 = vmatprep.subr.mxu0 0.0
      %1827 = vmatpush1.msra.mxu0 %v1801
      %1828 = vmatprep.subr.mxu0 0.0
      %1829 = vmatpush1.msra.mxu0 %v1802
      %1830 = vmatprep.subr.mxu0 0.0
      %1831 = vmatpush1.msra.mxu0 0.0
      %1832 = vmatprep.subr.mxu0 0.0
      %1833 = vmatpush1.msra.mxu0 0.0
      %1834 = vmatprep.subr.mxu0 0.0
      %1835 = vmatpush1.msra.mxu0 0.0
      %1836 = vmatprep.subr.mxu0 0.0
      %1837 = vmatpush1.msra.mxu0 0.0
      %1838 = vmatprep.subr.mxu0 0.0
      %1839 = vmatpush1.msra.mxu0 0.0
      %1840 = vmatprep.subr.mxu0 0.0
      %1841 = vmatpush1.msra.mxu0 0.0
      %1842 = vmatprep.subr.mxu0 0.0
      %1843 = vmatpush1.msra.mxu0 0.0
      %1844 = vmatprep.subr.mxu0 0.0
      %1845 = vmatpush1.msra.mxu0 0.0
      %1846 = vmatprep.subr.mxu0 0.0
      %1847 = vmatpush1.msra.mxu0 0.0
      %1848 = vmatprep.subr.mxu0 0.0
      %1849 = vmatpush1.msra.mxu0 0.0
      %1850 = vmatprep.subr.mxu0 0.0
      %1851 = vmatpush1.msra.mxu0 0.0
      %1852 = vmatprep.subr.mxu0 0.0
      %1853 = vmatpush1.msra.mxu0 0.0
      %1854 = vmatprep.subr.mxu0 0.0
      %1855 = vmatpush1.msra.mxu0 0.0
      %1856 = vmatprep.subr.mxu0 0.0
      %1857 = vmatpush1.msra.mxu0 0.0
      %1858 = vmatprep.subr.mxu0 0.0
      %1859 = vmatpush1.msra.mxu0 0.0
      %1860 = vmatprep.subr.mxu0 0.0
      %1861 = vmatpush1.msra.mxu0 0.0
      %1862 = vmatprep.subr.mxu0 0.0
      %1863 = vmatpush1.msra.mxu0 0.0
      %1864 = vmatprep.subr.mxu0 0.0
      %1865 = vmatpush1.msra.mxu0 0.0
      %1866 = vmatprep.subr.mxu0 0.0
      %1867 = vmatpush1.msra.mxu0 0.0
      %1868 = vmatprep.subr.mxu0 0.0
      %1869 = vmatpush1.msra.mxu0 0.0
      %1870 = vmatprep.subr.mxu0 0.0
      %1871 = vmatpush1.msra.mxu0 0.0
      %1872 = vmatprep.subr.mxu0 0.0
      %1873 = vmatpush1.msra.mxu0 0.0
      %1874 = vmatprep.subr.mxu0 0.0
      %1875 = vmatpush1.msra.mxu0 0.0
      %1876 = vmatprep.subr.mxu0 0.0
      %1877 = vmatpush1.msra.mxu0 0.0
      %1878 = vmatprep.mubr.f32.mxu0 0.0
      %1879 = vmatmul.mubr.f32.gmra.mrb[0].mxu0 %v1812
      %v1880 = vpop.f32.mrb[0].mxu0
      %v1881 = vadd.f32 %v1808, %v1880
      %v1882 = vpop.f32.mrb[0].mxu0
      %1883 = vdwg.mxu0
      %v1884 = vadd.f32 %v1709, %v1881
      %s1885 = scalar_lea.vmem %s8, 2
      %v1886 = vld [vmem:[%s1885] sm:$0x1]
      %s1887 = scalar_lea.vmem %s9, 2
      %v1888 = vld [vmem:[%s1887] sm:$0x1]
      %v1889 = vsel %vm630, %v1884, 0.0
      %1890 = vadd.xlane.f32.xlu0 %v1889
      %v1891 = vpop.xlane.xlu0 %1890
      %v1892 = vmul.f32 %v1891, %v1127
      %v1893 = vsub.f32 %v1884, %v1892
      %v1894 = vmul.f32 %v1893, %v1893
      %v1895 = vsel %vm630, %v1894, 0.0
      %1896 = vadd.xlane.f32.xlu0 %v1895
      %v1897 = vpop.xlane.xlu0 %1896
      %v1898 = vmul.f32 %v1897, %v1127
      %v1899 = vadd.f32 %v1898, 1e-05
      %v1900 = vrsqrt.pop %v1899
      %v1901 = vmul.f32 %v1893, %v1900
      %v1903 = vlaneseq
      %v1904 = vshrl.u32 %v1903, 7
      %v1905 = vsub.s32 0, %v1904
      %v1906 = vrot.slane %v1886, %v1905
      %v1908 = vmul.f32 %v1901, %v1906
      %v1910 = vlaneseq
      %v1911 = vshrl.u32 %v1910, 7
      %v1912 = vsub.s32 0, %v1911
      %v1913 = vrot.slane %v1888, %v1912
      %v1915 = vadd.f32 %v1908, %v1913
      %1916 = vst.msk [vmem:[%s607] sm:$0xff] %vm630, %v1915
      %v1917 = vld [vmem:[%s14] sm:$0x1]
      %v1918 = vld [vmem:[%s15] sm:$0x1]
      %v1919 = vsel %vm630, %v1915, 0.0
      %1920 = vadd.xlane.f32.xlu0 %v1919
      %v1921 = vpop.xlane.xlu0 %1920
      %v1922 = vmul.f32 %v1921, %v1127
      %v1923 = vsub.f32 %v1915, %v1922
      %v1924 = vmul.f32 %v1923, %v1923
      %v1925 = vsel %vm630, %v1924, 0.0
      %1926 = vadd.xlane.f32.xlu0 %v1925
      %v1927 = vpop.xlane.xlu0 %1926
      %v1928 = vmul.f32 %v1927, %v1127
      %v1929 = vadd.f32 %v1928, 1e-05
      %v1930 = vrsqrt.pop %v1929
      %v1931 = vmul.f32 %v1923, %v1930
      %v1933 = vlaneseq
      %v1934 = vshrl.u32 %v1933, 7
      %v1935 = vsub.s32 0, %v1934
      %v1936 = vrot.slane %v1917, %v1935
      %v1938 = vmul.f32 %v1931, %v1936
      %v1940 = vlaneseq
      %v1941 = vshrl.u32 %v1940, 7
      %v1942 = vsub.s32 0, %v1941
      %v1943 = vrot.slane %v1918, %v1942
      %v1945 = vadd.f32 %v1938, %v1943
      %1946 = vst.msk [vmem:[%s611] sm:$0xff] %vm630, %v1945
      %p1947 = scmp.lt.s32.totalorder %s29, 1
      %s1948 = scalar_select %p1947, %s29, 1
      %s1949 = smul.addr %s1948, 8
      %s1950 = scalar_lea.vmem %s16, %s1949
      %p1951 = scmp.lt.s32.totalorder %s29, 1
      %s1952 = scalar_select %p1951, %s29, 1
      %s1953 = smul.addr %s1952, 8
      %s1954 = scalar_lea.vmem %s17, %s1953
      // Predicated region
      $region85: #{_lambda_.13} parent=83 // pred_check
        %p1955 = pneg %p403
      $region86: #{_lambda_.13} parent=83 // pred_check_branch
        %1957 = sbr.rel (%p1955) target = $region88
      $region87: #{_lambda_.13} parent=83 // pred_region
        _
      $region88: #{_lambda_.13} parent=83 // pred_fallthru
        _
      // Predicated region
      $region89: #{_lambda_.13} parent=83 // pred_check
        %p1958 = pneg %p429
      $region90: #{_lambda_.13} parent=83 // pred_check_branch
        %1960 = sbr.rel (%p1958) target = $region92
      $region91: #{_lambda_.13} parent=83 // pred_region
        _
      $region92: #{_lambda_.13} parent=83 // pred_fallthru
        _
    $region84: #{_lambda_.13} parent=5 // pred_fallthru
      _
    %p1961 = scmp.le.s32.totalorder 2, %s24
    // Predicated region
    $region93: #{_lambda_.13} parent=5 // pred_check
      %p1962 = pneg %p1961
    $region94: #{_lambda_.13} parent=5 // pred_check_branch
      %1964 = sbr.rel (%p1962) target = $region96
    $region95: #{_lambda_.13} parent=5 // pred_region
      %s1965 = ssub.s32 %s24, 2
      // Predicated region
      $region97: #{_lambda_.13} parent=95 // pred_check
        %p1966 = pneg %p409
      $region98: #{_lambda_.13} parent=95 // pred_check_branch
        %1968 = sbr.rel (%p1966) target = $region100
      $region99: #{_lambda_.13} parent=95 // pred_region
        %p1969 = scmp.lt.s32.totalorder %s30, 1
        %s1970 = scalar_select %p1969, %s30, 1
        %s1971 = smul.addr %s1970, 8
        %s1972 = scalar_lea.vmem %s16, %s1971
      $region100: #{_lambda_.13} parent=95 // pred_fallthru
        _
      // Predicated region
      $region101: #{_lambda_.13} parent=95 // pred_check
        %p1973 = pneg %p435
      $region102: #{_lambda_.13} parent=95 // pred_check_branch
        %1975 = sbr.rel (%p1973) target = $region104
      $region103: #{_lambda_.13} parent=95 // pred_region
        %p1976 = scmp.lt.s32.totalorder %s30, 1
        %s1977 = scalar_select %p1976, %s30, 1
        %s1978 = smul.addr %s1977, 8
        %s1979 = scalar_lea.vmem %s17, %s1978
      $region104: #{_lambda_.13} parent=95 // pred_fallthru
        _
    $region96: #{_lambda_.13} parent=5 // pred_fallthru
      _
  $region6: #{_lambda_.13} parent=0 // loop_footer
    %s28 = sadd.s32 1, %s24
  $region7: #{_lambda_.13} parent=0 // loop_footer_branch
    %23 = sbr.rel target = $region3
  $region8: #{_lambda_.13} parent=0 // loop_exit
    _

// kernel: _lambda_.14
$region0: #{_lambda_.14}
  #allocation0 [shape = 'u32[]', space=smem, size = 0x4, offset = 0x4, fixed_abs, tag = 'smem constant byte address 0x4 - core index']
  #allocation1 [shape = 'u32[144,128]{1,0:T(1,128)}', space=vmem, size = 0x12000, scoped, tag = 'internal scratch']
  %s0 = inlined_call_operand.vmem [shape: f32[2,8,32], index: 0, kind: input, shape index: {}]
  %s1 = inlined_call_operand.vmem [shape: f32[2,8,32], index: 1, kind: input, shape index: {}]
  %s2 = inlined_call_operand.vmem [shape: f32[2,16,32], index: 2, kind: input, shape index: {}]
  %s3 = inlined_call_operand.vmem [shape: f32[2,16,32], index: 3, kind: input, shape index: {}]
  %s4 = inlined_call_operand.vmem [shape: f32[4,32,32], index: 4, kind: input, shape index: {}]
  %s5 = inlined_call_operand.vmem [shape: f32[4,1,32], index: 5, kind: input, shape index: {}, may-alias: {5,7}]
  %s6 = inlined_call_operand.vmem [shape: f32[4,32,32], index: 6, kind: input, shape index: {}]
  %s7 = inlined_call_operand.vmem [shape: f32[4,1,32], index: 7, kind: input, shape index: {}, may-alias: {5,7}]
  %s8 = inlined_call_operand.vmem [shape: f32[3,1,32], index: 8, kind: input, shape index: {}]
  %s9 = inlined_call_operand.vmem [shape: f32[3,1,32], index: 9, kind: input, shape index: {}]
  %s10 = inlined_call_operand.vmem [shape: f32[32,64], index: 10, kind: input, shape index: {}]
  %s11 = inlined_call_operand.vmem [shape: f32[1,64], index: 11, kind: input, shape index: {}]
  %s12 = inlined_call_operand.vmem [shape: f32[64,32], index: 12, kind: input, shape index: {}]
  %s13 = inlined_call_operand.vmem [shape: f32[1,32], index: 13, kind: input, shape index: {}, may-alias: {13,15}]
  %s14 = inlined_call_operand.vmem [shape: f32[1,32], index: 14, kind: input, shape index: {}]
  %s15 = inlined_call_operand.vmem [shape: f32[1,32], index: 15, kind: input, shape index: {}, may-alias: {13,15}]
  %s16 = inlined_call_operand.hbm [shape: f32[2,8,32], index: 16, kind: output, shape index: {0}]
  %s17 = inlined_call_operand.vmem [shape: f32[2,8,32], index: 17, kind: output, shape index: {1}]
  %18 = xla_tuple %s16, %s17
  %s19 = sld [smem:[#allocation0]]
  $region105: #{_lambda_.14} parent=0
    _
  %s21 = ssub.s32 1, %s19
  %s22 = scalar_select 0, %s21, %s19
  $region1: #{_lambda_.14} parent=0
    #allocation2 [shape = 'u8[8192]{0}', space=vmem, size = 0x2000, scoped, tag = 'output window, operand 0']
    #allocation3 [shape = 's32[2]{0}', space=sflag, size = 0x8, scoped, tag = 'scoped memory for _lambda_.14']
    %23 = vsyncpa [#allocation3], 0
    %s24 = scalar_lea.sflag [#allocation3], 1
    %25 = vsyncpa %s24, 0
    loop: start=0, step=1, limit=4
    $region2: #{_lambda_.14} parent=1 // loop_pre_header
      _
    $region3: #{_lambda_.14} parent=1 // loop_header
      %s27 = sphi 0, %s31
      %p28 = scmp.ge.s32.totalorder %s27, 4
      %s37 = sphi 0, %s39
      %s40 = sphi 0, %s37
      %s41 = sphi 0, %s40
      %s57 = sphi 0, %s41
      %s63 = sphi 0, %s65
      %s66 = sphi 0, %s63
      %s67 = sphi 0, %s66
      %s83 = sphi 0, %s67
      %s89 = sphi 0, %s91
      %s92 = sphi 0, %s89
      %s93 = sphi 0, %s92
      %s109 = sphi 0, %s93
      %s115 = sphi 0, %s117
      %s118 = sphi 0, %s115
      %s119 = sphi 0, %s118
      %s135 = sphi 0, %s119
      %s139 = sphi 0, %s139
      %s141 = sphi 0, %s139
      %s142 = sphi 0, %s141
      %s156 = sphi 0, %s142
      %s160 = sphi 0, %s160
      %s162 = sphi 0, %s160
      %s163 = sphi 0, %s162
      %s177 = sphi 0, %s163
      %s181 = sphi 0, %s181
      %s183 = sphi 0, %s181
      %s184 = sphi 0, %s183
      %s198 = sphi 0, %s184
      %s202 = sphi 0, %s202
      %s204 = sphi 0, %s202
      %s205 = sphi 0, %s204
      %s219 = sphi 0, %s205
      %s223 = sphi 0, %s223
      %s225 = sphi 0, %s223
      %s226 = sphi 0, %s225
      %s240 = sphi 0, %s226
      %s244 = sphi 0, %s244
      %s246 = sphi 0, %s244
      %s247 = sphi 0, %s246
      %s261 = sphi 0, %s247
      %s265 = sphi 0, %s265
      %s267 = sphi 0, %s265
      %s268 = sphi 0, %s267
      %s282 = sphi 0, %s268
      %s286 = sphi 0, %s286
      %s288 = sphi 0, %s286
      %s289 = sphi 0, %s288
      %s303 = sphi 0, %s289
      %s307 = sphi 0, %s307
      %s309 = sphi 0, %s307
      %s310 = sphi 0, %s309
      %s324 = sphi 0, %s310
      %s328 = sphi 0, %s328
      %s330 = sphi 0, %s328
      %s331 = sphi 0, %s330
      %s345 = sphi 0, %s331
      %s349 = sphi 0, %s349
      %s351 = sphi 0, %s349
      %s352 = sphi 0, %s351
      %s366 = sphi 0, %s352
      %s370 = sphi 0, %s370
      %s372 = sphi 0, %s370
      %s373 = sphi 0, %s372
      %s387 = sphi 0, %s373
      %s393 = sphi 0, %s395
      %s396 = sphi 0, %s393
      %s397 = sphi 0, %s396
      %s413 = sphi 0, %s397
      %s419 = sphi 0, %s421
      %s422 = sphi 0, %s419
      %s423 = sphi 0, %s422
      %s439 = sphi 0, %s423
    $region4: #{_lambda_.14} parent=1 // loop_header_branch
      %30 = sbr.rel (%p28) target = $region8
    $region5: #{_lambda_.14} parent=1 // loop_body
      %s32 = ssub.s32 %s27, 1
      %s33 = ssub.s32 %s27, 2
      %s34 = sadd.s32 %s27, 1
      %s35 = ssub.s32 %s27, %s34
      %p36 = scmp.eq.s32.totalorder %s35, 0
      %s38 = sadd.s32 %s37, 1
      %s39 = scalar_select %p36, %s37, %s38
      %p42 = pneg %p36
      %p43 = scmp.eq.s32.totalorder %s27, 1
      %p44 = por %p42, %p43
      %p45 = scmp.ne.s32.totalorder %s37, %s40
      %p46 = scmp.eq.s32.totalorder %s27, 0
      %p47 = por %p45, %p46
      %p48 = scmp.ne.s32.totalorder %s37, %s40
      %p49 = scmp.eq.s32.totalorder %s32, 1
      %p50 = por %p48, %p49
      %p51 = scmp.ne.s32.totalorder %s40, %s41
      %p52 = scmp.eq.s32.totalorder %s32, 0
      %p53 = por %p51, %p52
      %p54 = scmp.ne.s32.totalorder %s40, %s41
      %p55 = scmp.eq.s32.totalorder %s33, 1
      %p56 = por %p54, %p55
      %p58 = scmp.ne.s32.totalorder %s41, %s57
      %p59 = scmp.eq.s32.totalorder %s33, 0
      %p60 = por %p58, %p59
      %s61 = ssub.s32 %s27, %s34
      %p62 = scmp.eq.s32.totalorder %s61, 0
      %s64 = sadd.s32 %s63, 1
      %s65 = scalar_select %p62, %s63, %s64
      %p68 = pneg %p62
      %p69 = scmp.eq.s32.totalorder %s27, 1
      %p70 = por %p68, %p69
      %p71 = scmp.ne.s32.totalorder %s63, %s66
      %p72 = scmp.eq.s32.totalorder %s27, 0
      %p73 = por %p71, %p72
      %p74 = scmp.ne.s32.totalorder %s63, %s66
      %p75 = scmp.eq.s32.totalorder %s32, 1
      %p76 = por %p74, %p75
      %p77 = scmp.ne.s32.totalorder %s66, %s67
      %p78 = scmp.eq.s32.totalorder %s32, 0
      %p79 = por %p77, %p78
      %p80 = scmp.ne.s32.totalorder %s66, %s67
      %p81 = scmp.eq.s32.totalorder %s33, 1
      %p82 = por %p80, %p81
      %p84 = scmp.ne.s32.totalorder %s67, %s83
      %p85 = scmp.eq.s32.totalorder %s33, 0
      %p86 = por %p84, %p85
      %s87 = ssub.s32 %s27, %s34
      %p88 = scmp.eq.s32.totalorder %s87, 0
      %s90 = sadd.s32 %s89, 1
      %s91 = scalar_select %p88, %s89, %s90
      %p94 = pneg %p88
      %p95 = scmp.eq.s32.totalorder %s27, 1
      %p96 = por %p94, %p95
      %p97 = scmp.ne.s32.totalorder %s89, %s92
      %p98 = scmp.eq.s32.totalorder %s27, 0
      %p99 = por %p97, %p98
      %p100 = scmp.ne.s32.totalorder %s89, %s92
      %p101 = scmp.eq.s32.totalorder %s32, 1
      %p102 = por %p100, %p101
      %p103 = scmp.ne.s32.totalorder %s92, %s93
      %p104 = scmp.eq.s32.totalorder %s32, 0
      %p105 = por %p103, %p104
      %p106 = scmp.ne.s32.totalorder %s92, %s93
      %p107 = scmp.eq.s32.totalorder %s33, 1
      %p108 = por %p106, %p107
      %p110 = scmp.ne.s32.totalorder %s93, %s109
      %p111 = scmp.eq.s32.totalorder %s33, 0
      %p112 = por %p110, %p111
      %s113 = ssub.s32 %s27, %s34
      %p114 = scmp.eq.s32.totalorder %s113, 0
      %s116 = sadd.s32 %s115, 1
      %s117 = scalar_select %p114, %s115, %s116
      %p120 = pneg %p114
      %p121 = scmp.eq.s32.totalorder %s27, 1
      %p122 = por %p120, %p121
      %p123 = scmp.ne.s32.totalorder %s115, %s118
      %p124 = scmp.eq.s32.totalorder %s27, 0
      %p125 = por %p123, %p124
      %p126 = scmp.ne.s32.totalorder %s115, %s118
      %p127 = scmp.eq.s32.totalorder %s32, 1
      %p128 = por %p126, %p127
      %p129 = scmp.ne.s32.totalorder %s118, %s119
      %p130 = scmp.eq.s32.totalorder %s32, 0
      %p131 = por %p129, %p130
      %p132 = scmp.ne.s32.totalorder %s118, %s119
      %p133 = scmp.eq.s32.totalorder %s33, 1
      %p134 = por %p132, %p133
      %p136 = scmp.ne.s32.totalorder %s119, %s135
      %p137 = scmp.eq.s32.totalorder %s33, 0
      %p138 = por %p136, %p137
      %s140 = sadd.s32 %s139, 1
      %p143 = scmp.eq.s32.totalorder %s27, 1
      %p144 = scmp.ne.s32.totalorder %s139, %s141
      %p145 = scmp.eq.s32.totalorder %s27, 0
      %p146 = por %p144, %p145
      %p147 = scmp.ne.s32.totalorder %s139, %s141
      %p148 = scmp.eq.s32.totalorder %s32, 1
      %p149 = por %p147, %p148
      %p150 = scmp.ne.s32.totalorder %s141, %s142
      %p151 = scmp.eq.s32.totalorder %s32, 0
      %p152 = por %p150, %p151
      %p153 = scmp.ne.s32.totalorder %s141, %s142
      %p154 = scmp.eq.s32.totalorder %s33, 1
      %p155 = por %p153, %p154
      %p157 = scmp.ne.s32.totalorder %s142, %s156
      %p158 = scmp.eq.s32.totalorder %s33, 0
      %p159 = por %p157, %p158
      %s161 = sadd.s32 %s160, 1
      %p164 = scmp.eq.s32.totalorder %s27, 1
      %p165 = scmp.ne.s32.totalorder %s160, %s162
      %p166 = scmp.eq.s32.totalorder %s27, 0
      %p167 = por %p165, %p166
      %p168 = scmp.ne.s32.totalorder %s160, %s162
      %p169 = scmp.eq.s32.totalorder %s32, 1
      %p170 = por %p168, %p169
      %p171 = scmp.ne.s32.totalorder %s162, %s163
      %p172 = scmp.eq.s32.totalorder %s32, 0
      %p173 = por %p171, %p172
      %p174 = scmp.ne.s32.totalorder %s162, %s163
      %p175 = scmp.eq.s32.totalorder %s33, 1
      %p176 = por %p174, %p175
      %p178 = scmp.ne.s32.totalorder %s163, %s177
      %p179 = scmp.eq.s32.totalorder %s33, 0
      %p180 = por %p178, %p179
      %s182 = sadd.s32 %s181, 1
      %p185 = scmp.eq.s32.totalorder %s27, 1
      %p186 = scmp.ne.s32.totalorder %s181, %s183
      %p187 = scmp.eq.s32.totalorder %s27, 0
      %p188 = por %p186, %p187
      %p189 = scmp.ne.s32.totalorder %s181, %s183
      %p190 = scmp.eq.s32.totalorder %s32, 1
      %p191 = por %p189, %p190
      %p192 = scmp.ne.s32.totalorder %s183, %s184
      %p193 = scmp.eq.s32.totalorder %s32, 0
      %p194 = por %p192, %p193
      %p195 = scmp.ne.s32.totalorder %s183, %s184
      %p196 = scmp.eq.s32.totalorder %s33, 1
      %p197 = por %p195, %p196
      %p199 = scmp.ne.s32.totalorder %s184, %s198
      %p200 = scmp.eq.s32.totalorder %s33, 0
      %p201 = por %p199, %p200
      %s203 = sadd.s32 %s202, 1
      %p206 = scmp.eq.s32.totalorder %s27, 1
      %p207 = scmp.ne.s32.totalorder %s202, %s204
      %p208 = scmp.eq.s32.totalorder %s27, 0
      %p209 = por %p207, %p208
      %p210 = scmp.ne.s32.totalorder %s202, %s204
      %p211 = scmp.eq.s32.totalorder %s32, 1
      %p212 = por %p210, %p211
      %p213 = scmp.ne.s32.totalorder %s204, %s205
      %p214 = scmp.eq.s32.totalorder %s32, 0
      %p215 = por %p213, %p214
      %p216 = scmp.ne.s32.totalorder %s204, %s205
      %p217 = scmp.eq.s32.totalorder %s33, 1
      %p218 = por %p216, %p217
      %p220 = scmp.ne.s32.totalorder %s205, %s219
      %p221 = scmp.eq.s32.totalorder %s33, 0
      %p222 = por %p220, %p221
      %s224 = sadd.s32 %s223, 1
      %p227 = scmp.eq.s32.totalorder %s27, 1
      %p228 = scmp.ne.s32.totalorder %s223, %s225
      %p229 = scmp.eq.s32.totalorder %s27, 0
      %p230 = por %p228, %p229
      %p231 = scmp.ne.s32.totalorder %s223, %s225
      %p232 = scmp.eq.s32.totalorder %s32, 1
      %p233 = por %p231, %p232
      %p234 = scmp.ne.s32.totalorder %s225, %s226
      %p235 = scmp.eq.s32.totalorder %s32, 0
      %p236 = por %p234, %p235
      %p237 = scmp.ne.s32.totalorder %s225, %s226
      %p238 = scmp.eq.s32.totalorder %s33, 1
      %p239 = por %p237, %p238
      %p241 = scmp.ne.s32.totalorder %s226, %s240
      %p242 = scmp.eq.s32.totalorder %s33, 0
      %p243 = por %p241, %p242
      %s245 = sadd.s32 %s244, 1
      %p248 = scmp.eq.s32.totalorder %s27, 1
      %p249 = scmp.ne.s32.totalorder %s244, %s246
      %p250 = scmp.eq.s32.totalorder %s27, 0
      %p251 = por %p249, %p250
      %p252 = scmp.ne.s32.totalorder %s244, %s246
      %p253 = scmp.eq.s32.totalorder %s32, 1
      %p254 = por %p252, %p253
      %p255 = scmp.ne.s32.totalorder %s246, %s247
      %p256 = scmp.eq.s32.totalorder %s32, 0
      %p257 = por %p255, %p256
      %p258 = scmp.ne.s32.totalorder %s246, %s247
      %p259 = scmp.eq.s32.totalorder %s33, 1
      %p260 = por %p258, %p259
      %p262 = scmp.ne.s32.totalorder %s247, %s261
      %p263 = scmp.eq.s32.totalorder %s33, 0
      %p264 = por %p262, %p263
      %s266 = sadd.s32 %s265, 1
      %p269 = scmp.eq.s32.totalorder %s27, 1
      %p270 = scmp.ne.s32.totalorder %s265, %s267
      %p271 = scmp.eq.s32.totalorder %s27, 0
      %p272 = por %p270, %p271
      %p273 = scmp.ne.s32.totalorder %s265, %s267
      %p274 = scmp.eq.s32.totalorder %s32, 1
      %p275 = por %p273, %p274
      %p276 = scmp.ne.s32.totalorder %s267, %s268
      %p277 = scmp.eq.s32.totalorder %s32, 0
      %p278 = por %p276, %p277
      %p279 = scmp.ne.s32.totalorder %s267, %s268
      %p280 = scmp.eq.s32.totalorder %s33, 1
      %p281 = por %p279, %p280
      %p283 = scmp.ne.s32.totalorder %s268, %s282
      %p284 = scmp.eq.s32.totalorder %s33, 0
      %p285 = por %p283, %p284
      %s287 = sadd.s32 %s286, 1
      %p290 = scmp.eq.s32.totalorder %s27, 1
      %p291 = scmp.ne.s32.totalorder %s286, %s288
      %p292 = scmp.eq.s32.totalorder %s27, 0
      %p293 = por %p291, %p292
      %p294 = scmp.ne.s32.totalorder %s286, %s288
      %p295 = scmp.eq.s32.totalorder %s32, 1
      %p296 = por %p294, %p295
      %p297 = scmp.ne.s32.totalorder %s288, %s289
      %p298 = scmp.eq.s32.totalorder %s32, 0
      %p299 = por %p297, %p298
      %p300 = scmp.ne.s32.totalorder %s288, %s289
      %p301 = scmp.eq.s32.totalorder %s33, 1
      %p302 = por %p300, %p301
      %p304 = scmp.ne.s32.totalorder %s289, %s303
      %p305 = scmp.eq.s32.totalorder %s33, 0
      %p306 = por %p304, %p305
      %s308 = sadd.s32 %s307, 1
      %p311 = scmp.eq.s32.totalorder %s27, 1
      %p312 = scmp.ne.s32.totalorder %s307, %s309
      %p313 = scmp.eq.s32.totalorder %s27, 0
      %p314 = por %p312, %p313
      %p315 = scmp.ne.s32.totalorder %s307, %s309
      %p316 = scmp.eq.s32.totalorder %s32, 1
      %p317 = por %p315, %p316
      %p318 = scmp.ne.s32.totalorder %s309, %s310
      %p319 = scmp.eq.s32.totalorder %s32, 0
      %p320 = por %p318, %p319
      %p321 = scmp.ne.s32.totalorder %s309, %s310
      %p322 = scmp.eq.s32.totalorder %s33, 1
      %p323 = por %p321, %p322
      %p325 = scmp.ne.s32.totalorder %s310, %s324
      %p326 = scmp.eq.s32.totalorder %s33, 0
      %p327 = por %p325, %p326
      %s329 = sadd.s32 %s328, 1
      %p332 = scmp.eq.s32.totalorder %s27, 1
      %p333 = scmp.ne.s32.totalorder %s328, %s330
      %p334 = scmp.eq.s32.totalorder %s27, 0
      %p335 = por %p333, %p334
      %p336 = scmp.ne.s32.totalorder %s328, %s330
      %p337 = scmp.eq.s32.totalorder %s32, 1
      %p338 = por %p336, %p337
      %p339 = scmp.ne.s32.totalorder %s330, %s331
      %p340 = scmp.eq.s32.totalorder %s32, 0
      %p341 = por %p339, %p340
      %p342 = scmp.ne.s32.totalorder %s330, %s331
      %p343 = scmp.eq.s32.totalorder %s33, 1
      %p344 = por %p342, %p343
      %p346 = scmp.ne.s32.totalorder %s331, %s345
      %p347 = scmp.eq.s32.totalorder %s33, 0
      %p348 = por %p346, %p347
      %s350 = sadd.s32 %s349, 1
      %p353 = scmp.eq.s32.totalorder %s27, 1
      %p354 = scmp.ne.s32.totalorder %s349, %s351
      %p355 = scmp.eq.s32.totalorder %s27, 0
      %p356 = por %p354, %p355
      %p357 = scmp.ne.s32.totalorder %s349, %s351
      %p358 = scmp.eq.s32.totalorder %s32, 1
      %p359 = por %p357, %p358
      %p360 = scmp.ne.s32.totalorder %s351, %s352
      %p361 = scmp.eq.s32.totalorder %s32, 0
      %p362 = por %p360, %p361
      %p363 = scmp.ne.s32.totalorder %s351, %s352
      %p364 = scmp.eq.s32.totalorder %s33, 1
      %p365 = por %p363, %p364
      %p367 = scmp.ne.s32.totalorder %s352, %s366
      %p368 = scmp.eq.s32.totalorder %s33, 0
      %p369 = por %p367, %p368
      %s371 = sadd.s32 %s370, 1
      %p374 = scmp.eq.s32.totalorder %s27, 1
      %p375 = scmp.ne.s32.totalorder %s370, %s372
      %p376 = scmp.eq.s32.totalorder %s27, 0
      %p377 = por %p375, %p376
      %p378 = scmp.ne.s32.totalorder %s370, %s372
      %p379 = scmp.eq.s32.totalorder %s32, 1
      %p380 = por %p378, %p379
      %p381 = scmp.ne.s32.totalorder %s372, %s373
      %p382 = scmp.eq.s32.totalorder %s32, 0
      %p383 = por %p381, %p382
      %p384 = scmp.ne.s32.totalorder %s372, %s373
      %p385 = scmp.eq.s32.totalorder %s33, 1
      %p386 = por %p384, %p385
      %p388 = scmp.ne.s32.totalorder %s373, %s387
      %p389 = scmp.eq.s32.totalorder %s33, 0
      %p390 = por %p388, %p389
      %s391 = ssub.s32 %s27, %s34
      %p392 = scmp.eq.s32.totalorder %s391, 0
      %s394 = sadd.s32 %s393, 1
      %s395 = scalar_select %p392, %s393, %s394
      %p398 = pneg %p392
      %p399 = scmp.eq.s32.totalorder %s27, 1
      %p400 = por %p398, %p399
      %p401 = scmp.ne.s32.totalorder %s393, %s396
      %p402 = scmp.eq.s32.totalorder %s27, 0
      %p403 = por %p401, %p402
      %p404 = scmp.ne.s32.totalorder %s393, %s396
      %p405 = scmp.eq.s32.totalorder %s32, 1
      %p406 = por %p404, %p405
      %p407 = scmp.ne.s32.totalorder %s396, %s397
      %p408 = scmp.eq.s32.totalorder %s32, 0
      %p409 = por %p407, %p408
      %p410 = scmp.ne.s32.totalorder %s396, %s397
      %p411 = scmp.eq.s32.totalorder %s33, 1
      %p412 = por %p410, %p411
      %p414 = scmp.ne.s32.totalorder %s397, %s413
      %p415 = scmp.eq.s32.totalorder %s33, 0
      %p416 = por %p414, %p415
      %s417 = ssub.s32 %s27, %s34
      %p418 = scmp.eq.s32.totalorder %s417, 0
      %s420 = sadd.s32 %s419, 1
      %s421 = scalar_select %p418, %s419, %s420
      %p424 = pneg %p418
      %p425 = scmp.eq.s32.totalorder %s27, 1
      %p426 = por %p424, %p425
      %p427 = scmp.ne.s32.totalorder %s419, %s422
      %p428 = scmp.eq.s32.totalorder %s27, 0
      %p429 = por %p427, %p428
      %p430 = scmp.ne.s32.totalorder %s419, %s422
      %p431 = scmp.eq.s32.totalorder %s32, 1
      %p432 = por %p430, %p431
      %p433 = scmp.ne.s32.totalorder %s422, %s423
      %p434 = scmp.eq.s32.totalorder %s32, 0
      %p435 = por %p433, %p434
      %p436 = scmp.ne.s32.totalorder %s422, %s423
      %p437 = scmp.eq.s32.totalorder %s33, 1
      %p438 = por %p436, %p437
      %p440 = scmp.ne.s32.totalorder %s423, %s439
      %p441 = scmp.eq.s32.totalorder %s33, 0
      %p442 = por %p440, %p441
      %p443 = scmp.le.s32.totalorder 1, %s27
      %p444 = scmp.lt.s32.totalorder %s27, 3
      %p445 = pnand %p443, %p444
      %p446 = pneg %p445
      // Predicated region
      $region9: #{_lambda_.14} parent=5 // pred_check
        _
      $region10: #{_lambda_.14} parent=5 // pred_check_branch
        %448 = sbr.rel (%p445) target = $region12
      $region11: #{_lambda_.14} parent=5 // pred_region
        %s449 = ssub.s32 %s27, 1
        // Predicated region
        $region13: #{_lambda_.14} parent=11 // pred_check
          %p450 = pneg %p152
        $region14: #{_lambda_.14} parent=11 // pred_check_branch
          %452 = sbr.rel (%p450) target = $region16
        $region15: #{_lambda_.14} parent=11 // pred_region
          _
        $region16: #{_lambda_.14} parent=11 // pred_fallthru
          _
        // Predicated region
        $region17: #{_lambda_.14} parent=11 // pred_check
          %p453 = pneg %p173
        $region18: #{_lambda_.14} parent=11 // pred_check_branch
          %455 = sbr.rel (%p453) target = $region20
        $region19: #{_lambda_.14} parent=11 // pred_region
          _
        $region20: #{_lambda_.14} parent=11 // pred_fallthru
          _
        // Predicated region
        $region21: #{_lambda_.14} parent=11 // pred_check
          %p456 = pneg %p194
        $region22: #{_lambda_.14} parent=11 // pred_check_branch
          %458 = sbr.rel (%p456) target = $region24
        $region23: #{_lambda_.14} parent=11 // pred_region
          _
        $region24: #{_lambda_.14} parent=11 // pred_fallthru
          _
        // Predicated region
        $region25: #{_lambda_.14} parent=11 // pred_check
          %p459 = pneg %p215
        $region26: #{_lambda_.14} parent=11 // pred_check_branch
          %461 = sbr.rel (%p459) target = $region28
        $region27: #{_lambda_.14} parent=11 // pred_region
          _
        $region28: #{_lambda_.14} parent=11 // pred_fallthru
          _
        // Predicated region
        $region29: #{_lambda_.14} parent=11 // pred_check
          %p462 = pneg %p236
        $region30: #{_lambda_.14} parent=11 // pred_check_branch
          %464 = sbr.rel (%p462) target = $region32
        $region31: #{_lambda_.14} parent=11 // pred_region
          _
        $region32: #{_lambda_.14} parent=11 // pred_fallthru
          _
        // Predicated region
        $region33: #{_lambda_.14} parent=11 // pred_check
          %p465 = pneg %p257
        $region34: #{_lambda_.14} parent=11 // pred_check_branch
          %467 = sbr.rel (%p465) target = $region36
        $region35: #{_lambda_.14} parent=11 // pred_region
          _
        $region36: #{_lambda_.14} parent=11 // pred_fallthru
          _
        // Predicated region
        $region37: #{_lambda_.14} parent=11 // pred_check
          %p468 = pneg %p278
        $region38: #{_lambda_.14} parent=11 // pred_check_branch
          %470 = sbr.rel (%p468) target = $region40
        $region39: #{_lambda_.14} parent=11 // pred_region
          _
        $region40: #{_lambda_.14} parent=11 // pred_fallthru
          _
        // Predicated region
        $region41: #{_lambda_.14} parent=11 // pred_check
          %p471 = pneg %p299
        $region42: #{_lambda_.14} parent=11 // pred_check_branch
          %473 = sbr.rel (%p471) target = $region44
        $region43: #{_lambda_.14} parent=11 // pred_region
          _
        $region44: #{_lambda_.14} parent=11 // pred_fallthru
          _
        // Predicated region
        $region45: #{_lambda_.14} parent=11 // pred_check
          %p474 = pneg %p320
        $region46: #{_lambda_.14} parent=11 // pred_check_branch
          %476 = sbr.rel (%p474) target = $region48
        $region47: #{_lambda_.14} parent=11 // pred_region
          _
        $region48: #{_lambda_.14} parent=11 // pred_fallthru
          _
        // Predicated region
        $region49: #{_lambda_.14} parent=11 // pred_check
          %p477 = pneg %p341
        $region50: #{_lambda_.14} parent=11 // pred_check_branch
          %479 = sbr.rel (%p477) target = $region52
        $region51: #{_lambda_.14} parent=11 // pred_region
          _
        $region52: #{_lambda_.14} parent=11 // pred_fallthru
          _
        // Predicated region
        $region53: #{_lambda_.14} parent=11 // pred_check
          %p480 = pneg %p362
        $region54: #{_lambda_.14} parent=11 // pred_check_branch
          %482 = sbr.rel (%p480) target = $region56
        $region55: #{_lambda_.14} parent=11 // pred_region
          _
        $region56: #{_lambda_.14} parent=11 // pred_fallthru
          _
        // Predicated region
        $region57: #{_lambda_.14} parent=11 // pred_check
          %p483 = pneg %p383
        $region58: #{_lambda_.14} parent=11 // pred_check_branch
          %485 = sbr.rel (%p483) target = $region60
        $region59: #{_lambda_.14} parent=11 // pred_region
          _
        $region60: #{_lambda_.14} parent=11 // pred_fallthru
          _
      $region12: #{_lambda_.14} parent=5 // pred_fallthru
        _
      %p486 = scmp.lt.s32.totalorder %s27, 2
      // Predicated region
      $region61: #{_lambda_.14} parent=5 // pred_check
        %p487 = pneg %p486
      $region62: #{_lambda_.14} parent=5 // pred_check_branch
        %489 = sbr.rel (%p487) target = $region64
      $region63: #{_lambda_.14} parent=5 // pred_region
        // Predicated region
        $region65: #{_lambda_.14} parent=63 // pred_check
          %p490 = pneg %p47
        $region66: #{_lambda_.14} parent=63 // pred_check_branch
          %492 = sbr.rel (%p490) target = $region68
        $region67: #{_lambda_.14} parent=63 // pred_region
          %p493 = scmp.lt.s32.totalorder %s27, 1
          %s494 = scalar_select %p493, %s27, 1
          %s495 = smul.addr %s494, 8
          %s496 = scalar_lea.vmem %s0, %s495
        $region68: #{_lambda_.14} parent=63 // pred_fallthru
          _
        // Predicated region
        $region69: #{_lambda_.14} parent=63 // pred_check
          %p497 = pneg %p73
        $region70: #{_lambda_.14} parent=63 // pred_check_branch
          %499 = sbr.rel (%p497) target = $region72
        $region71: #{_lambda_.14} parent=63 // pred_region
          %p500 = scmp.lt.s32.totalorder %s27, 1
          %s501 = scalar_select %p500, %s27, 1
          %s502 = smul.addr %s501, 8
          %s503 = scalar_lea.vmem %s1, %s502
        $region72: #{_lambda_.14} parent=63 // pred_fallthru
          _
        // Predicated region
        $region73: #{_lambda_.14} parent=63 // pred_check
          %p504 = pneg %p99
        $region74: #{_lambda_.14} parent=63 // pred_check_branch
          %506 = sbr.rel (%p504) target = $region76
        $region75: #{_lambda_.14} parent=63 // pred_region
          %p507 = scmp.lt.s32.totalorder %s27, 1
          %s508 = scalar_select %p507, %s27, 1
          %s509 = smul.addr %s508, 2
          %s510 = smul.addr %s509, 8
          %s511 = scalar_lea.vmem %s2, %s510
        $region76: #{_lambda_.14} parent=63 // pred_fallthru
          _
        // Predicated region
        $region77: #{_lambda_.14} parent=63 // pred_check
          %p512 = pneg %p125
        $region78: #{_lambda_.14} parent=63 // pred_check_branch
          %514 = sbr.rel (%p512) target = $region80
        $region79: #{_lambda_.14} parent=63 // pred_region
          %p515 = scmp.lt.s32.totalorder %s27, 1
          %s516 = scalar_select %p515, %s27, 1
          %s517 = smul.addr %s516, 2
          %s518 = smul.addr %s517, 8
          %s519 = scalar_lea.vmem %s3, %s518
        $region80: #{_lambda_.14} parent=63 // pred_fallthru
          _
      $region64: #{_lambda_.14} parent=5 // pred_fallthru
        _
      %p520 = scmp.le.s32.totalorder 1, %s27
      %p521 = scmp.lt.s32.totalorder %s27, 3
      %p522 = pnand %p520, %p521
      %p523 = pneg %p522
      // Predicated region
      $region81: #{_lambda_.14} parent=5 // pred_check
        _
      $region82: #{_lambda_.14} parent=5 // pred_check_branch
        %525 = sbr.rel (%p522) target = $region84
      $region83: #{_lambda_.14} parent=5 // pred_region
        %s526 = ssub.s32 %s27, 1
        %p527 = scmp.lt.s32.totalorder %s32, 1
        %s528 = scalar_select %p527, %s32, 1
        %s529 = smul.addr %s528, 8
        %s530 = scalar_lea.vmem %s0, %s529
        %p531 = pneg %p53
        %p532 = pneg %p50
        %p533 = scmp.lt.s32.totalorder %s32, 1
        %s534 = scalar_select %p533, %s32, 1
        %s535 = smul.addr %s534, 8
        %s536 = scalar_lea.vmem %s1, %s535
        %p537 = pneg %p79
        %p538 = pneg %p76
        %p539 = scmp.lt.s32.totalorder %s32, 1
        %s540 = scalar_select %p539, %s32, 1
        %s541 = smul.addr %s540, 2
        %s542 = smul.addr %s541, 8
        %s543 = scalar_lea.vmem %s2, %s542
        %p544 = pneg %p105
        %p545 = pneg %p102
        %p546 = scmp.lt.s32.totalorder %s32, 1
        %s547 = scalar_select %p546, %s32, 1
        %s548 = smul.addr %s547, 2
        %s549 = smul.addr %s548, 8
        %s550 = scalar_lea.vmem %s3, %s549
        %p551 = pneg %p131
        %p552 = pneg %p128
        %p553 = pneg %p152
        %p554 = pneg %p149
        %p555 = pneg %p173
        %p556 = pneg %p170
        %p557 = pneg %p194
        %p558 = pneg %p191
        %p559 = pneg %p215
        %p560 = pneg %p212
        %p561 = pneg %p236
        %p562 = pneg %p233
        %p563 = pneg %p257
        %p564 = pneg %p254
        %p565 = pneg %p278
        %p566 = pneg %p275
        %p567 = pneg %p299
        %p568 = pneg %p296
        %p569 = pneg %p320
        %p570 = pneg %p317
        %p571 = pneg %p341
        %p572 = pneg %p338
        %p573 = pneg %p362
        %p574 = pneg %p359
        %p575 = pneg %p383
        %p576 = pneg %p380
        %p577 = pneg %p409
        %p578 = pneg %p406
        %s579 = sand.u32 %s396, 1
        %s580 = scalar_lea.sflag [#allocation3], %s579
        %s581 = sand.u32 %s396, 1
        %s582 = smul.addr %s581, 8
        %s583 = scalar_lea.vmem [#allocation2], %s582
        %p584 = pneg %p435
        %p585 = pneg %p432
        %p586 = scmp.lt.s32.totalorder %s32, 1
        %s587 = scalar_select %p586, %s32, 1
        %s588 = smul.addr %s587, 8
        %s589 = scalar_lea.vmem %s17, %s588
        %p590 = scmp.lt.s32.totalorder %s32, 1
        %s591 = scalar_select %p590, %s32, 1
        %s592 = smul.addr %s591, 8
        %s593 = scalar_lea.vmem %s0, %s592
        %p594 = scmp.lt.s32.totalorder %s32, 1
        %s595 = scalar_select %p594, %s32, 1
        %s596 = smul.addr %s595, 8
        %s597 = scalar_lea.vmem %s1, %s596
        %p598 = scmp.lt.s32.totalorder %s32, 1
        %s599 = scalar_select %p598, %s32, 1
        %s600 = smul.addr %s599, 2
        %s601 = smul.addr %s600, 8
        %s602 = scalar_lea.vmem %s2, %s601
        %p603 = scmp.lt.s32.totalorder %s32, 1
        %s604 = scalar_select %p603, %s32, 1
        %s605 = smul.addr %s604, 2
        %s606 = smul.addr %s605, 8
        %s607 = scalar_lea.vmem %s3, %s606
        %p608 = scmp.lt.s32.totalorder %s32, 1
        %s609 = scalar_select %p608, %s32, 1
        %s610 = smul.addr %s609, 8
        %s611 = scalar_lea.vmem %s17, %s610
        %v612 = vld [vmem:[%s593] sm:$0xff]
        %v613 = vld [vmem:[%s597] sm:$0xff]
        %v614 = vld [vmem:[%s602] sm:$0xff]
        %v615 = vld [vmem:[%s602 + $0x8] sm:$0xff]
        %v616 = vld [vmem:[%s607] sm:$0xff]
        %v617 = vld [vmem:[%s607 + $0x8] sm:$0xff]
        %v618 = vadd.f32 %v612, %v613
        %v619 = vld [vmem:[%s4] sm:$0xff]
        %v620 = vld [vmem:[%s4 + $0x8] sm:$0xff]
        %v621 = vld [vmem:[%s4 + $0x10] sm:$0xff]
        %v622 = vld [vmem:[%s4 + $0x18] sm:$0xff]
        %v623 = vld [vmem:[%s5] sm:$0x1]
        %v625 = vlaneseq
        %v626 = vshrl.u32 %v625, 7
        %v627 = vsub.s32 0, %v626
        %v628 = vrot.slane %v623, %v627
        %vm630 = vcmask 261120
        %v632 = vsel %vm630, %v618, 0
        %634 = vmatprep.subr.mxu0 0.0
        %635 = vmatpush1.msra.mxu0 %v619
        %636 = vmatprep.subr.mxu0 0.0
        %637 = vmatpush1.msra.mxu0 %v620
        %638 = vmatprep.subr.mxu0 0.0
        %639 = vmatpush1.msra.mxu0 %v621
        %640 = vmatprep.subr.mxu0 0.0
        %641 = vmatpush1.msra.mxu0 %v622
        %642 = vmatprep.subr.mxu0 0.0
        %643 = vmatpush1.msra.mxu0 0.0
        %644 = vmatprep.subr.mxu0 0.0
        %645 = vmatpush1.msra.mxu0 0.0
        %646 = vmatprep.subr.mxu0 0.0
        %647 = vmatpush1.msra.mxu0 0.0
        %648 = vmatprep.subr.mxu0 0.0
        %649 = vmatpush1.msra.mxu0 0.0
        %650 = vmatprep.subr.mxu0 0.0
        %651 = vmatpush1.msra.mxu0 0.0
        %652 = vmatprep.subr.mxu0 0.0
        %653 = vmatpush1.msra.mxu0 0.0
        %654 = vmatprep.subr.mxu0 0.0
        %655 = vmatpush1.msra.mxu0 0.0
        %656 = vmatprep.subr.mxu0 0.0
        %657 = vmatpush1.msra.mxu0 0.0
        %658 = vmatprep.subr.mxu0 0.0
        %659 = vmatpush1.msra.mxu0 0.0
        %660 = vmatprep.subr.mxu0 0.0
        %661 = vmatpush1.msra.mxu0 0.0
        %662 = vmatprep.subr.mxu0 0.0
        %663 = vmatpush1.msra.mxu0 0.0
        %664 = vmatprep.subr.mxu0 0.0
        %665 = vmatpush1.msra.mxu0 0.0
        %666 = vmatprep.subr.mxu0 0.0
        %667 = vmatpush1.msra.mxu0 0.0
        %668 = vmatprep.subr.mxu0 0.0
        %669 = vmatpush1.msra.mxu0 0.0
        %670 = vmatprep.subr.mxu0 0.0
        %671 = vmatpush1.msra.mxu0 0.0
        %672 = vmatprep.subr.mxu0 0.0
        %673 = vmatpush1.msra.mxu0 0.0
        %674 = vmatprep.subr.mxu0 0.0
        %675 = vmatpush1.msra.mxu0 0.0
        %676 = vmatprep.subr.mxu0 0.0
        %677 = vmatpush1.msra.mxu0 0.0
        %678 = vmatprep.subr.mxu0 0.0
        %679 = vmatpush1.msra.mxu0 0.0
        %680 = vmatprep.subr.mxu0 0.0
        %681 = vmatpush1.msra.mxu0 0.0
        %682 = vmatprep.subr.mxu0 0.0
        %683 = vmatpush1.msra.mxu0 0.0
        %684 = vmatprep.subr.mxu0 0.0
        %685 = vmatpush1.msra.mxu0 0.0
        %686 = vmatprep.subr.mxu0 0.0
        %687 = vmatpush1.msra.mxu0 0.0
        %688 = vmatprep.subr.mxu0 0.0
        %689 = vmatpush1.msra.mxu0 0.0
        %690 = vmatprep.subr.mxu0 0.0
        %691 = vmatpush1.msra.mxu0 0.0
        %692 = vmatprep.subr.mxu0 0.0
        %693 = vmatpush1.msra.mxu0 0.0
        %694 = vmatprep.subr.mxu0 0.0
        %695 = vmatpush1.msra.mxu0 0.0
        %696 = vmatprep.subr.mxu0 0.0
        %697 = vmatpush1.msra.mxu0 0.0
        %698 = vmatprep.mubr.f32.mxu0 0.0
        %699 = vmatmul.mubr.f32.gmra.mrb[0].mxu0 %v632
        %v700 = vpop.f32.mrb[0].mxu0
        %v701 = vadd.f32 %v628, %v700
        %v702 = vpop.f32.mrb[0].mxu0
        %703 = vdwg.mxu0
        %s704 = scalar_lea.vmem %s4, 32
        %v705 = vld [vmem:[%s704] sm:$0xff]
        %v706 = vld [vmem:[%s704 + $0x8] sm:$0xff]
        %v707 = vld [vmem:[%s704 + $0x10] sm:$0xff]
        %v708 = vld [vmem:[%s704 + $0x18] sm:$0xff]
        %s709 = scalar_lea.vmem %s5, 1
        %v710 = vld [vmem:[%s709] sm:$0x1]
        %v712 = vlaneseq
        %v713 = vshrl.u32 %v712, 7
        %v714 = vsub.s32 0, %v713
        %v715 = vrot.slane %v710, %v714
        %717 = vmatprep.subr.mxu0 0.0
        %718 = vmatpush1.msra.mxu0 %v705
        %719 = vmatprep.subr.mxu0 0.0
        %720 = vmatpush1.msra.mxu0 %v706
        %721 = vmatprep.subr.mxu0 0.0
        %722 = vmatpush1.msra.mxu0 %v707
        %723 = vmatprep.subr.mxu0 0.0
        %724 = vmatpush1.msra.mxu0 %v708
        %725 = vmatprep.subr.mxu0 0.0
        %726 = vmatpush1.msra.mxu0 0.0
        %727 = vmatprep.subr.mxu0 0.0
        %728 = vmatpush1.msra.mxu0 0.0
        %729 = vmatprep.subr.mxu0 0.0
        %730 = vmatpush1.msra.mxu0 0.0
        %731 = vmatprep.subr.mxu0 0.0
        %732 = vmatpush1.msra.mxu0 0.0
        %733 = vmatprep.subr.mxu0 0.0
        %734 = vmatpush1.msra.mxu0 0.0
        %735 = vmatprep.subr.mxu0 0.0
        %736 = vmatpush1.msra.mxu0 0.0
        %737 = vmatprep.subr.mxu0 0.0
        %738 = vmatpush1.msra.mxu0 0.0
        %739 = vmatprep.subr.mxu0 0.0
        %740 = vmatpush1.msra.mxu0 0.0
        %741 = vmatprep.subr.mxu0 0.0
        %742 = vmatpush1.msra.mxu0 0.0
        %743 = vmatprep.subr.mxu0 0.0
        %744 = vmatpush1.msra.mxu0 0.0
        %745 = vmatprep.subr.mxu0 0.0
        %746 = vmatpush1.msra.mxu0 0.0
        %747 = vmatprep.subr.mxu0 0.0
        %748 = vmatpush1.msra.mxu0 0.0
        %749 = vmatprep.subr.mxu0 0.0
        %750 = vmatpush1.msra.mxu0 0.0
        %751 = vmatprep.subr.mxu0 0.0
        %752 = vmatpush1.msra.mxu0 0.0
        %753 = vmatprep.subr.mxu0 0.0
        %754 = vmatpush1.msra.mxu0 0.0
        %755 = vmatprep.subr.mxu0 0.0
        %756 = vmatpush1.msra.mxu0 0.0
        %757 = vmatprep.subr.mxu0 0.0
        %758 = vmatpush1.msra.mxu0 0.0
        %759 = vmatprep.subr.mxu0 0.0
        %760 = vmatpush1.msra.mxu0 0.0
        %761 = vmatprep.subr.mxu0 0.0
        %762 = vmatpush1.msra.mxu0 0.0
        %763 = vmatprep.subr.mxu0 0.0
        %764 = vmatpush1.msra.mxu0 0.0
        %765 = vmatprep.subr.mxu0 0.0
        %766 = vmatpush1.msra.mxu0 0.0
        %767 = vmatprep.subr.mxu0 0.0
        %768 = vmatpush1.msra.mxu0 0.0
        %769 = vmatprep.subr.mxu0 0.0
        %770 = vmatpush1.msra.mxu0 0.0
        %771 = vmatprep.subr.mxu0 0.0
        %772 = vmatpush1.msra.mxu0 0.0
        %773 = vmatprep.subr.mxu0 0.0
        %774 = vmatpush1.msra.mxu0 0.0
        %775 = vmatprep.subr.mxu0 0.0
        %776 = vmatpush1.msra.mxu0 0.0
        %777 = vmatprep.subr.mxu0 0.0
        %778 = vmatpush1.msra.mxu0 0.0
        %779 = vmatprep.subr.mxu0 0.0
        %780 = vmatpush1.msra.mxu0 0.0
        %781 = vmatprep.mubr.f32.mxu0 0.0
        %782 = vmatmul.mubr.f32.gmra.mrb[0].mxu0 %v632
        %v783 = vpop.f32.mrb[0].mxu0
        %v784 = vadd.f32 %v715, %v783
        %v785 = vpop.f32.mrb[0].mxu0
        %786 = vdwg.mxu0
        %s787 = scalar_lea.vmem %s4, 64
        %v788 = vld [vmem:[%s787] sm:$0xff]
        %v789 = vld [vmem:[%s787 + $0x8] sm:$0xff]
        %v790 = vld [vmem:[%s787 + $0x10] sm:$0xff]
        %v791 = vld [vmem:[%s787 + $0x18] sm:$0xff]
        %s792 = scalar_lea.vmem %s5, 2
        %v793 = vld [vmem:[%s792] sm:$0x1]
        %v795 = vlaneseq
        %v796 = vshrl.u32 %v795, 7
        %v797 = vsub.s32 0, %v796
        %v798 = vrot.slane %v793, %v797
        %v801 = vsel %vm630, %v612, 0
        %803 = vmatprep.subr.mxu0 0.0
        %804 = vmatpush1.msra.mxu0 %v788
        %805 = vmatprep.subr.mxu0 0.0
        %806 = vmatpush1.msra.mxu0 %v789
        %807 = vmatprep.subr.mxu0 0.0
        %808 = vmatpush1.msra.mxu0 %v790
        %809 = vmatprep.subr.mxu0 0.0
        %810 = vmatpush1.msra.mxu0 %v791
        %811 = vmatprep.subr.mxu0 0.0
        %812 = vmatpush1.msra.mxu0 0.0
        %813 = vmatprep.subr.mxu0 0.0
        %814 = vmatpush1.msra.mxu0 0.0
        %815 = vmatprep.subr.mxu0 0.0
        %816 = vmatpush1.msra.mxu0 0.0
        %817 = vmatprep.subr.mxu0 0.0
        %818 = vmatpush1.msra.mxu0 0.0
        %819 = vmatprep.subr.mxu0 0.0
        %820 = vmatpush1.msra.mxu0 0.0
        %821 = vmatprep.subr.mxu0 0.0
        %822 = vmatpush1.msra.mxu0 0.0
        %823 = vmatprep.subr.mxu0 0.0
        %824 = vmatpush1.msra.mxu0 0.0
        %825 = vmatprep.subr.mxu0 0.0
        %826 = vmatpush1.msra.mxu0 0.0
        %827 = vmatprep.subr.mxu0 0.0
        %828 = vmatpush1.msra.mxu0 0.0
        %829 = vmatprep.subr.mxu0 0.0
        %830 = vmatpush1.msra.mxu0 0.0
        %831 = vmatprep.subr.mxu0 0.0
        %832 = vmatpush1.msra.mxu0 0.0
        %833 = vmatprep.subr.mxu0 0.0
        %834 = vmatpush1.msra.mxu0 0.0
        %835 = vmatprep.subr.mxu0 0.0
        %836 = vmatpush1.msra.mxu0 0.0
        %837 = vmatprep.subr.mxu0 0.0
        %838 = vmatpush1.msra.mxu0 0.0
        %839 = vmatprep.subr.mxu0 0.0
        %840 = vmatpush1.msra.mxu0 0.0
        %841 = vmatprep.subr.mxu0 0.0
        %842 = vmatpush1.msra.mxu0 0.0
        %843 = vmatprep.subr.mxu0 0.0
        %844 = vmatpush1.msra.mxu0 0.0
        %845 = vmatprep.subr.mxu0 0.0
        %846 = vmatpush1.msra.mxu0 0.0
        %847 = vmatprep.subr.mxu0 0.0
        %848 = vmatpush1.msra.mxu0 0.0
        %849 = vmatprep.subr.mxu0 0.0
        %850 = vmatpush1.msra.mxu0 0.0
        %851 = vmatprep.subr.mxu0 0.0
        %852 = vmatpush1.msra.mxu0 0.0
        %853 = vmatprep.subr.mxu0 0.0
        %854 = vmatpush1.msra.mxu0 0.0
        %855 = vmatprep.subr.mxu0 0.0
        %856 = vmatpush1.msra.mxu0 0.0
        %857 = vmatprep.subr.mxu0 0.0
        %858 = vmatpush1.msra.mxu0 0.0
        %859 = vmatprep.subr.mxu0 0.0
        %860 = vmatpush1.msra.mxu0 0.0
        %861 = vmatprep.subr.mxu0 0.0
        %862 = vmatpush1.msra.mxu0 0.0
        %863 = vmatprep.subr.mxu0 0.0
        %864 = vmatpush1.msra.mxu0 0.0
        %865 = vmatprep.subr.mxu0 0.0
        %866 = vmatpush1.msra.mxu0 0.0
        %867 = vmatprep.mubr.f32.mxu0 0.0
        %868 = vmatmul.mubr.f32.gmra.mrb[0].mxu0 %v801
        %v869 = vpop.f32.mrb[0].mxu0
        %v870 = vadd.f32 %v798, %v869
        %v871 = vpop.f32.mrb[0].mxu0
        %872 = vdwg.mxu0
        %v874 = vsel %vm630, %v701, 0
        %v877 = vsel %vm630, %v784, 0
        %879 = vmatprep.subr.mxu0 0.0
        %880 = vmatpush1.xpose.msra.mxu0 %v877
        %881 = vmatprep.subr.mxu0 0.0
        %882 = vmatpush1.xpose.msra.mxu0 0.0
        %883 = vmatprep.subr.mxu0 0.0
        %884 = vmatpush1.xpose.msra.mxu0 0.0
        %885 = vmatprep.subr.mxu0 0.0
        %886 = vmatpush1.xpose.msra.mxu0 0.0
        %887 = vmatprep.subr.mxu0 0.0
        %888 = vmatpush1.xpose.msra.mxu0 0.0
        %889 = vmatprep.subr.mxu0 0.0
        %890 = vmatpush1.xpose.msra.mxu0 0.0
        %891 = vmatprep.subr.mxu0 0.0
        %892 = vmatpush1.xpose.msra.mxu0 0.0
        %893 = vmatprep.subr.mxu0 0.0
        %894 = vmatpush1.xpose.msra.mxu0 0.0
        %895 = vmatprep.subr.mxu0 0.0
        %896 = vmatpush1.xpose.msra.mxu0 0.0
        %897 = vmatprep.subr.mxu0 0.0
        %898 = vmatpush1.xpose.msra.mxu0 0.0
        %899 = vmatprep.subr.mxu0 0.0
        %900 = vmatpush1.xpose.msra.mxu0 0.0
        %901 = vmatprep.subr.mxu0 0.0
        %902 = vmatpush1.xpose.msra.mxu0 0.0
        %903 = vmatprep.subr.mxu0 0.0
        %904 = vmatpush1.xpose.msra.mxu0 0.0
        %905 = vmatprep.subr.mxu0 0.0
        %906 = vmatpush1.xpose.msra.mxu0 0.0
        %907 = vmatprep.subr.mxu0 0.0
        %908 = vmatpush1.xpose.msra.mxu0 0.0
        %909 = vmatprep.subr.mxu0 0.0
        %910 = vmatpush1.xpose.msra.mxu0 0.0
        %911 = vmatprep.subr.mxu0 0.0
        %912 = vmatpush1.xpose.msra.mxu0 0.0
        %913 = vmatprep.subr.mxu0 0.0
        %914 = vmatpush1.xpose.msra.mxu0 0.0
        %915 = vmatprep.subr.mxu0 0.0
        %916 = vmatpush1.xpose.msra.mxu0 0.0
        %917 = vmatprep.subr.mxu0 0.0
        %918 = vmatpush1.xpose.msra.mxu0 0.0
        %919 = vmatprep.subr.mxu0 0.0
        %920 = vmatpush1.xpose.msra.mxu0 0.0
        %921 = vmatprep.subr.mxu0 0.0
        %922 = vmatpush1.xpose.msra.mxu0 0.0
        %923 = vmatprep.subr.mxu0 0.0
        %924 = vmatpush1.xpose.msra.mxu0 0.0
        %925 = vmatprep.subr.mxu0 0.0
        %926 = vmatpush1.xpose.msra.mxu0 0.0
        %927 = vmatprep.subr.mxu0 0.0
        %928 = vmatpush1.xpose.msra.mxu0 0.0
        %929 = vmatprep.subr.mxu0 0.0
        %930 = vmatpush1.xpose.msra.mxu0 0.0
        %931 = vmatprep.subr.mxu0 0.0
        %932 = vmatpush1.xpose.msra.mxu0 0.0
        %933 = vmatprep.subr.mxu0 0.0
        %934 = vmatpush1.xpose.msra.mxu0 0.0
        %935 = vmatprep.subr.mxu0 0.0
        %936 = vmatpush1.xpose.msra.mxu0 0.0
        %937 = vmatprep.subr.mxu0 0.0
        %938 = vmatpush1.xpose.msra.mxu0 0.0
        %939 = vmatprep.subr.mxu0 0.0
        %940 = vmatpush1.xpose.msra.mxu0 0.0
        %941 = vmatprep.subr.mxu0 0.0
        %942 = vmatpush1.xpose.msra.mxu0 0.0
        %943 = vmatprep.mubr.f32.mxu0 0.0
        %944 = vmatmul.mubr.f32.gmra.mrb[0].mxu0 %v874
        %v945 = vpop.f32.mrb[0].mxu0
        %v946 = vadd.f32 0.0, %v945
        %v947 = vpop.f32.mrb[0].mxu0
        %948 = vdwg.mxu0
        %v949 = vmul.f32 %v946, 0.17677669
        %vm950 = vcmask 64512
        %v951 = vsel %vm950, %v949, -inf
        %952 = vmax.xlane.f32.xlu0 %v951
        %v953 = vpop.xlane.xlu0 %952
        %v954 = vsub.f32 %v949, %v953
        %v955 = vmul.f32 %v954, 1.442695
        %v956 = vpow.pop %v955
        %v957 = vsel %vm950, %v956, 0.0
        %958 = vadd.xlane.f32.xlu0 %v957
        %v959 = vpop.xlane.xlu0 %958
        %v960 = vrcp.pop %v959
        %v961 = vmul.f32 %v956, %v960
        %v963 = vsel %vm950, %v961, 0
        %965 = vmatprep.subr.mxu0 0.0
        %966 = vmatpush1.msra.mxu0 %v870
        %967 = vmatprep.subr.mxu0 0.0
        %968 = vmatpush1.msra.mxu0 0.0
        %969 = vmatprep.subr.mxu0 0.0
        %970 = vmatpush1.msra.mxu0 0.0
        %971 = vmatprep.subr.mxu0 0.0
        %972 = vmatpush1.msra.mxu0 0.0
        %973 = vmatprep.subr.mxu0 0.0
        %974 = vmatpush1.msra.mxu0 0.0
        %975 = vmatprep.subr.mxu0 0.0
        %976 = vmatpush1.msra.mxu0 0.0
        %977 = vmatprep.subr.mxu0 0.0
        %978 = vmatpush1.msra.mxu0 0.0
        %979 = vmatprep.subr.mxu0 0.0
        %980 = vmatpush1.msra.mxu0 0.0
        %981 = vmatprep.subr.mxu0 0.0
        %982 = vmatpush1.msra.mxu0 0.0
        %983 = vmatprep.subr.mxu0 0.0
        %984 = vmatpush1.msra.mxu0 0.0
        %985 = vmatprep.subr.mxu0 0.0
        %986 = vmatpush1.msra.mxu0 0.0
        %987 = vmatprep.subr.mxu0 0.0
        %988 = vmatpush1.msra.mxu0 0.0
        %989 = vmatprep.subr.mxu0 0.0
        %990 = vmatpush1.msra.mxu0 0.0
        %991 = vmatprep.subr.mxu0 0.0
        %992 = vmatpush1.msra.mxu0 0.0
        %993 = vmatprep.subr.mxu0 0.0
        %994 = vmatpush1.msra.mxu0 0.0
        %995 = vmatprep.subr.mxu0 0.0
        %996 = vmatpush1.msra.mxu0 0.0
        %997 = vmatprep.subr.mxu0 0.0
        %998 = vmatpush1.msra.mxu0 0.0
        %999 = vmatprep.subr.mxu0 0.0
        %1000 = vmatpush1.msra.mxu0 0.0
        %1001 = vmatprep.subr.mxu0 0.0
        %1002 = vmatpush1.msra.mxu0 0.0
        %1003 = vmatprep.subr.mxu0 0.0
        %1004 = vmatpush1.msra.mxu0 0.0
        %1005 = vmatprep.subr.mxu0 0.0
        %1006 = vmatpush1.msra.mxu0 0.0
        %1007 = vmatprep.subr.mxu0 0.0
        %1008 = vmatpush1.msra.mxu0 0.0
        %1009 = vmatprep.subr.mxu0 0.0
        %1010 = vmatpush1.msra.mxu0 0.0
        %1011 = vmatprep.subr.mxu0 0.0
        %1012 = vmatpush1.msra.mxu0 0.0
        %1013 = vmatprep.subr.mxu0 0.0
        %1014 = vmatpush1.msra.mxu0 0.0
        %1015 = vmatprep.subr.mxu0 0.0
        %1016 = vmatpush1.msra.mxu0 0.0
        %1017 = vmatprep.subr.mxu0 0.0
        %1018 = vmatpush1.msra.mxu0 0.0
        %1019 = vmatprep.subr.mxu0 0.0
        %1020 = vmatpush1.msra.mxu0 0.0
        %1021 = vmatprep.subr.mxu0 0.0
        %1022 = vmatpush1.msra.mxu0 0.0
        %1023 = vmatprep.subr.mxu0 0.0
        %1024 = vmatpush1.msra.mxu0 0.0
        %1025 = vmatprep.subr.mxu0 0.0
        %1026 = vmatpush1.msra.mxu0 0.0
        %1027 = vmatprep.subr.mxu0 0.0
        %1028 = vmatpush1.msra.mxu0 0.0
        %1029 = vmatprep.mubr.f32.mxu0 0.0
        %1030 = vmatmul.mubr.f32.gmra.mrb[0].mxu0 %v963
        %v1031 = vpop.f32.mrb[0].mxu0
        %v1032 = vadd.f32 0.0, %v1031
        %v1033 = vpop.f32.mrb[0].mxu0
        %1034 = vdwg.mxu0
        %s1035 = scalar_lea.vmem %s4, 96
        %v1036 = vld [vmem:[%s1035] sm:$0xff]
        %v1037 = vld [vmem:[%s1035 + $0x8] sm:$0xff]
        %v1038 = vld [vmem:[%s1035 + $0x10] sm:$0xff]
        %v1039 = vld [vmem:[%s1035 + $0x18] sm:$0xff]
        %s1040 = scalar_lea.vmem %s5, 3
        %v1041 = vld [vmem:[%s1040] sm:$0x1]
        %v1043 = vlaneseq
        %v1044 = vshrl.u32 %v1043, 7
        %v1045 = vsub.s32 0, %v1044
        %v1046 = vrot.slane %v1041, %v1045
        %v1049 = vsel %vm630, %v1032, 0
        %1051 = vmatprep.subr.mxu0 0.0
        %1052 = vmatpush1.msra.mxu0 %v1036
        %1053 = vmatprep.subr.mxu0 0.0
        %1054 = vmatpush1.msra.mxu0 %v1037
        %1055 = vmatprep.subr.mxu0 0.0
        %1056 = vmatpush1.msra.mxu0 %v1038
        %1057 = vmatprep.subr.mxu0 0.0
        %1058 = vmatpush1.msra.mxu0 %v1039
        %1059 = vmatprep.subr.mxu0 0.0
        %1060 = vmatpush1.msra.mxu0 0.0
        %1061 = vmatprep.subr.mxu0 0.0
        %1062 = vmatpush1.msra.mxu0 0.0
        %1063 = vmatprep.subr.mxu0 0.0
        %1064 = vmatpush1.msra.mxu0 0.0
        %1065 = vmatprep.subr.mxu0 0.0
        %1066 = vmatpush1.msra.mxu0 0.0
        %1067 = vmatprep.subr.mxu0 0.0
        %1068 = vmatpush1.msra.mxu0 0.0
        %1069 = vmatprep.subr.mxu0 0.0
        %1070 = vmatpush1.msra.mxu0 0.0
        %1071 = vmatprep.subr.mxu0 0.0
        %1072 = vmatpush1.msra.mxu0 0.0
        %1073 = vmatprep.subr.mxu0 0.0
        %1074 = vmatpush1.msra.mxu0 0.0
        %1075 = vmatprep.subr.mxu0 0.0
        %1076 = vmatpush1.msra.mxu0 0.0
        %1077 = vmatprep.subr.mxu0 0.0
        %1078 = vmatpush1.msra.mxu0 0.0
        %1079 = vmatprep.subr.mxu0 0.0
        %1080 = vmatpush1.msra.mxu0 0.0
        %1081 = vmatprep.subr.mxu0 0.0
        %1082 = vmatpush1.msra.mxu0 0.0
        %1083 = vmatprep.subr.mxu0 0.0
        %1084 = vmatpush1.msra.mxu0 0.0
        %1085 = vmatprep.subr.mxu0 0.0
        %1086 = vmatpush1.msra.mxu0 0.0
        %1087 = vmatprep.subr.mxu0 0.0
        %1088 = vmatpush1.msra.mxu0 0.0
        %1089 = vmatprep.subr.mxu0 0.0
        %1090 = vmatpush1.msra.mxu0 0.0
        %1091 = vmatprep.subr.mxu0 0.0
        %1092 = vmatpush1.msra.mxu0 0.0
        %1093 = vmatprep.subr.mxu0 0.0
        %1094 = vmatpush1.msra.mxu0 0.0
        %1095 = vmatprep.subr.mxu0 0.0
        %1096 = vmatpush1.msra.mxu0 0.0
        %1097 = vmatprep.subr.mxu0 0.0
        %1098 = vmatpush1.msra.mxu0 0.0
        %1099 = vmatprep.subr.mxu0 0.0
        %1100 = vmatpush1.msra.mxu0 0.0
        %1101 = vmatprep.subr.mxu0 0.0
        %1102 = vmatpush1.msra.mxu0 0.0
        %1103 = vmatprep.subr.mxu0 0.0
        %1104 = vmatpush1.msra.mxu0 0.0
        %1105 = vmatprep.subr.mxu0 0.0
        %1106 = vmatpush1.msra.mxu0 0.0
        %1107 = vmatprep.subr.mxu0 0.0
        %1108 = vmatpush1.msra.mxu0 0.0
        %1109 = vmatprep.subr.mxu0 0.0
        %1110 = vmatpush1.msra.mxu0 0.0
        %1111 = vmatprep.subr.mxu0 0.0
        %1112 = vmatpush1.msra.mxu0 0.0
        %1113 = vmatprep.subr.mxu0 0.0
        %1114 = vmatpush1.msra.mxu0 0.0
        %1115 = vmatprep.mubr.f32.mxu0 0.0
        %1116 = vmatmul.mubr.f32.gmra.mrb[0].mxu0 %v1049
        %v1117 = vpop.f32.mrb[0].mxu0
        %v1118 = vadd.f32 %v1046, %v1117
        %v1119 = vpop.f32.mrb[0].mxu0
        %1120 = vdwg.mxu0
        %v1121 = vadd.f32 %v612, %v1118
        %v1122 = vld [vmem:[%s8] sm:$0x1]
        %v1123 = vld [vmem:[%s9] sm:$0x1]
        %v1124 = vsel %vm630, %v1121, 0.0
        %1125 = vadd.xlane.f32.xlu0 %v1124
        %v1126 = vpop.xlane.xlu0 %1125
        %v1127 = vrcp.pop 32.0
        %v1128 = vmul.f32 %v1126, %v1127
        %v1129 = vsub.f32 %v1121, %v1128
        %v1130 = vmul.f32 %v1129, %v1129
        %v1131 = vsel %vm630, %v1130, 0.0
        %1132 = vadd.xlane.f32.xlu0 %v1131
        %v1133 = vpop.xlane.xlu0 %1132
        %v1134 = vmul.f32 %v1133, %v1127
        %v1135 = vadd.f32 %v1134, 1e-05
        %v1136 = vrsqrt.pop %v1135
        %v1137 = vmul.f32 %v1129, %v1136
        %v1139 = vlaneseq
        %v1140 = vshrl.u32 %v1139, 7
        %v1141 = vsub.s32 0, %v1140
        %v1142 = vrot.slane %v1122, %v1141
        %v1144 = vmul.f32 %v1137, %v1142
        %v1146 = vlaneseq
        %v1147 = vshrl.u32 %v1146, 7
        %v1148 = vsub.s32 0, %v1147
        %v1149 = vrot.slane %v1123, %v1148
        %v1151 = vadd.f32 %v1144, %v1149
        %v1152 = vadd.f32 %v1151, %v613
        %v1153 = vld [vmem:[%s6] sm:$0xff]
        %v1154 = vld [vmem:[%s6 + $0x8] sm:$0xff]
        %v1155 = vld [vmem:[%s6 + $0x10] sm:$0xff]
        %v1156 = vld [vmem:[%s6 + $0x18] sm:$0xff]
        %v1157 = vld [vmem:[%s7] sm:$0x1]
        %v1159 = vlaneseq
        %v1160 = vshrl.u32 %v1159, 7
        %v1161 = vsub.s32 0, %v1160
        %v1162 = vrot.slane %v1157, %v1161
        %v1165 = vsel %vm630, %v1152, 0
        %1167 = vmatprep.subr.mxu0 0.0
        %1168 = vmatpush1.msra.mxu0 %v1153
        %1169 = vmatprep.subr.mxu0 0.0
        %1170 = vmatpush1.msra.mxu0 %v1154
        %1171 = vmatprep.subr.mxu0 0.0
        %1172 = vmatpush1.msra.mxu0 %v1155
        %1173 = vmatprep.subr.mxu0 0.0
        %1174 = vmatpush1.msra.mxu0 %v1156
        %1175 = vmatprep.subr.mxu0 0.0
        %1176 = vmatpush1.msra.mxu0 0.0
        %1177 = vmatprep.subr.mxu0 0.0
        %1178 = vmatpush1.msra.mxu0 0.0
        %1179 = vmatprep.subr.mxu0 0.0
        %1180 = vmatpush1.msra.mxu0 0.0
        %1181 = vmatprep.subr.mxu0 0.0
        %1182 = vmatpush1.msra.mxu0 0.0
        %1183 = vmatprep.subr.mxu0 0.0
        %1184 = vmatpush1.msra.mxu0 0.0
        %1185 = vmatprep.subr.mxu0 0.0
        %1186 = vmatpush1.msra.mxu0 0.0
        %1187 = vmatprep.subr.mxu0 0.0
        %1188 = vmatpush1.msra.mxu0 0.0
        %1189 = vmatprep.subr.mxu0 0.0
        %1190 = vmatpush1.msra.mxu0 0.0
        %1191 = vmatprep.subr.mxu0 0.0
        %1192 = vmatpush1.msra.mxu0 0.0
        %1193 = vmatprep.subr.mxu0 0.0
        %1194 = vmatpush1.msra.mxu0 0.0
        %1195 = vmatprep.subr.mxu0 0.0
        %1196 = vmatpush1.msra.mxu0 0.0
        %1197 = vmatprep.subr.mxu0 0.0
        %1198 = vmatpush1.msra.mxu0 0.0
        %1199 = vmatprep.subr.mxu0 0.0
        %1200 = vmatpush1.msra.mxu0 0.0
        %1201 = vmatprep.subr.mxu0 0.0
        %1202 = vmatpush1.msra.mxu0 0.0
        %1203 = vmatprep.subr.mxu0 0.0
        %1204 = vmatpush1.msra.mxu0 0.0
        %1205 = vmatprep.subr.mxu0 0.0
        %1206 = vmatpush1.msra.mxu0 0.0
        %1207 = vmatprep.subr.mxu0 0.0
        %1208 = vmatpush1.msra.mxu0 0.0
        %1209 = vmatprep.subr.mxu0 0.0
        %1210 = vmatpush1.msra.mxu0 0.0
        %1211 = vmatprep.subr.mxu0 0.0
        %1212 = vmatpush1.msra.mxu0 0.0
        %1213 = vmatprep.subr.mxu0 0.0
        %1214 = vmatpush1.msra.mxu0 0.0
        %1215 = vmatprep.subr.mxu0 0.0
        %1216 = vmatpush1.msra.mxu0 0.0
        %1217 = vmatprep.subr.mxu0 0.0
        %1218 = vmatpush1.msra.mxu0 0.0
        %1219 = vmatprep.subr.mxu0 0.0
        %1220 = vmatpush1.msra.mxu0 0.0
        %1221 = vmatprep.subr.mxu0 0.0
        %1222 = vmatpush1.msra.mxu0 0.0
        %1223 = vmatprep.subr.mxu0 0.0
        %1224 = vmatpush1.msra.mxu0 0.0
        %1225 = vmatprep.subr.mxu0 0.0
        %1226 = vmatpush1.msra.mxu0 0.0
        %1227 = vmatprep.subr.mxu0 0.0
        %1228 = vmatpush1.msra.mxu0 0.0
        %1229 = vmatprep.subr.mxu0 0.0
        %1230 = vmatpush1.msra.mxu0 0.0
        %1231 = vmatprep.mubr.f32.mxu0 0.0
        %1232 = vmatmul.mubr.f32.gmra.mrb[0].mxu0 %v1165
        %v1233 = vpop.f32.mrb[0].mxu0
        %v1234 = vadd.f32 %v1162, %v1233
        %v1235 = vpop.f32.mrb[0].mxu0
        %1236 = vdwg.mxu0
        %v1237 = vadd.f32 %v614, %v616
        %v1238 = vadd.f32 %v615, %v617
        %s1239 = scalar_lea.vmem %s6, 32
        %v1240 = vld [vmem:[%s1239] sm:$0xff]
        %v1241 = vld [vmem:[%s1239 + $0x8] sm:$0xff]
        %v1242 = vld [vmem:[%s1239 + $0x10] sm:$0xff]
        %v1243 = vld [vmem:[%s1239 + $0x18] sm:$0xff]
        %s1244 = scalar_lea.vmem %s7, 1
        %v1245 = vld [vmem:[%s1244] sm:$0x1]
        %v1247 = vlaneseq
        %v1248 = vshrl.u32 %v1247, 7
        %v1249 = vsub.s32 0, %v1248
        %v1250 = vrot.slane %v1245, %v1249
        %v1253 = vsel %vm630, %v1237, 0
        %v1256 = vsel %vm630, %v1238, 0
        %1258 = vmatprep.subr.mxu0 0.0
        %1259 = vmatpush1.msra.mxu0 %v1240
        %1260 = vmatprep.subr.mxu0 0.0
        %1261 = vmatpush1.msra.mxu0 %v1241
        %1262 = vmatprep.subr.mxu0 0.0
        %1263 = vmatpush1.msra.mxu0 %v1242
        %1264 = vmatprep.subr.mxu0 0.0
        %1265 = vmatpush1.msra.mxu0 %v1243
        %1266 = vmatprep.subr.mxu0 0.0
        %1267 = vmatpush1.msra.mxu0 0.0
        %1268 = vmatprep.subr.mxu0 0.0
        %1269 = vmatpush1.msra.mxu0 0.0
        %1270 = vmatprep.subr.mxu0 0.0
        %1271 = vmatpush1.msra.mxu0 0.0
        %1272 = vmatprep.subr.mxu0 0.0
        %1273 = vmatpush1.msra.mxu0 0.0
        %1274 = vmatprep.subr.mxu0 0.0
        %1275 = vmatpush1.msra.mxu0 0.0
        %1276 = vmatprep.subr.mxu0 0.0
        %1277 = vmatpush1.msra.mxu0 0.0
        %1278 = vmatprep.subr.mxu0 0.0
        %1279 = vmatpush1.msra.mxu0 0.0
        %1280 = vmatprep.subr.mxu0 0.0
        %1281 = vmatpush1.msra.mxu0 0.0
        %1282 = vmatprep.subr.mxu0 0.0
        %1283 = vmatpush1.msra.mxu0 0.0
        %1284 = vmatprep.subr.mxu0 0.0
        %1285 = vmatpush1.msra.mxu0 0.0
        %1286 = vmatprep.subr.mxu0 0.0
        %1287 = vmatpush1.msra.mxu0 0.0
        %1288 = vmatprep.subr.mxu0 0.0
        %1289 = vmatpush1.msra.mxu0 0.0
        %1290 = vmatprep.subr.mxu0 0.0
        %1291 = vmatpush1.msra.mxu0 0.0
        %1292 = vmatprep.subr.mxu0 0.0
        %1293 = vmatpush1.msra.mxu0 0.0
        %1294 = vmatprep.subr.mxu0 0.0
        %1295 = vmatpush1.msra.mxu0 0.0
        %1296 = vmatprep.subr.mxu0 0.0
        %1297 = vmatpush1.msra.mxu0 0.0
        %1298 = vmatprep.subr.mxu0 0.0
        %1299 = vmatpush1.msra.mxu0 0.0
        %1300 = vmatprep.subr.mxu0 0.0
        %1301 = vmatpush1.msra.mxu0 0.0
        %1302 = vmatprep.subr.mxu0 0.0
        %1303 = vmatpush1.msra.mxu0 0.0
        %1304 = vmatprep.subr.mxu0 0.0
        %1305 = vmatpush1.msra.mxu0 0.0
        %1306 = vmatprep.subr.mxu0 0.0
        %1307 = vmatpush1.msra.mxu0 0.0
        %1308 = vmatprep.subr.mxu0 0.0
        %1309 = vmatpush1.msra.mxu0 0.0
        %1310 = vmatprep.subr.mxu0 0.0
        %1311 = vmatpush1.msra.mxu0 0.0
        %1312 = vmatprep.subr.mxu0 0.0
        %1313 = vmatpush1.msra.mxu0 0.0
        %1314 = vmatprep.subr.mxu0 0.0
        %1315 = vmatpush1.msra.mxu0 0.0
        %1316 = vmatprep.subr.mxu0 0.0
        %1317 = vmatpush1.msra.mxu0 0.0
        %1318 = vmatprep.subr.mxu0 0.0
        %1319 = vmatpush1.msra.mxu0 0.0
        %1320 = vmatprep.subr.mxu0 0.0
        %1321 = vmatpush1.msra.mxu0 0.0
        %1322 = vmatprep.mubr.f32.mxu0 0.0
        %1323 = vmatmul.mubr.f32.gmra.mrb[0].mxu0 %v1253
        %v1324 = vpop.f32.mrb[0].mxu0
        %v1325 = vadd.f32 %v1250, %v1324
        %v1326 = vpop.f32.mrb[0].mxu0
        %1327 = vmatprep.mubr.f32.mxu0 0.0
        %1328 = vmatmul.mubr.f32.gmra.mrb[0].mxu0 %v1256
        %v1329 = vpop.f32.mrb[0].mxu0
        %v1330 = vadd.f32 %v1250, %v1329
        %v1331 = vpop.f32.mrb[0].mxu0
        %1332 = vdwg.mxu0
        %s1333 = scalar_lea.vmem %s6, 64
        %v1334 = vld [vmem:[%s1333] sm:$0xff]
        %v1335 = vld [vmem:[%s1333 + $0x8] sm:$0xff]
        %v1336 = vld [vmem:[%s1333 + $0x10] sm:$0xff]
        %v1337 = vld [vmem:[%s1333 + $0x18] sm:$0xff]
        %s1338 = scalar_lea.vmem %s7, 2
        %v1339 = vld [vmem:[%s1338] sm:$0x1]
        %v1341 = vlaneseq
        %v1342 = vshrl.u32 %v1341, 7
        %v1343 = vsub.s32 0, %v1342
        %v1344 = vrot.slane %v1339, %v1343
        %v1347 = vsel %vm630, %v614, 0
        %v1350 = vsel %vm630, %v615, 0
        %1352 = vmatprep.subr.mxu0 0.0
        %1353 = vmatpush1.msra.mxu0 %v1334
        %1354 = vmatprep.subr.mxu0 0.0
        %1355 = vmatpush1.msra.mxu0 %v1335
        %1356 = vmatprep.subr.mxu0 0.0
        %1357 = vmatpush1.msra.mxu0 %v1336
        %1358 = vmatprep.subr.mxu0 0.0
        %1359 = vmatpush1.msra.mxu0 %v1337
        %1360 = vmatprep.subr.mxu0 0.0
        %1361 = vmatpush1.msra.mxu0 0.0
        %1362 = vmatprep.subr.mxu0 0.0
        %1363 = vmatpush1.msra.mxu0 0.0
        %1364 = vmatprep.subr.mxu0 0.0
        %1365 = vmatpush1.msra.mxu0 0.0
        %1366 = vmatprep.subr.mxu0 0.0
        %1367 = vmatpush1.msra.mxu0 0.0
        %1368 = vmatprep.subr.mxu0 0.0
        %1369 = vmatpush1.msra.mxu0 0.0
        %1370 = vmatprep.subr.mxu0 0.0
        %1371 = vmatpush1.msra.mxu0 0.0
        %1372 = vmatprep.subr.mxu0 0.0
        %1373 = vmatpush1.msra.mxu0 0.0
        %1374 = vmatprep.subr.mxu0 0.0
        %1375 = vmatpush1.msra.mxu0 0.0
        %1376 = vmatprep.subr.mxu0 0.0
        %1377 = vmatpush1.msra.mxu0 0.0
        %1378 = vmatprep.subr.mxu0 0.0
        %1379 = vmatpush1.msra.mxu0 0.0
        %1380 = vmatprep.subr.mxu0 0.0
        %1381 = vmatpush1.msra.mxu0 0.0
        %1382 = vmatprep.subr.mxu0 0.0
        %1383 = vmatpush1.msra.mxu0 0.0
        %1384 = vmatprep.subr.mxu0 0.0
        %1385 = vmatpush1.msra.mxu0 0.0
        %1386 = vmatprep.subr.mxu0 0.0
        %1387 = vmatpush1.msra.mxu0 0.0
        %1388 = vmatprep.subr.mxu0 0.0
        %1389 = vmatpush1.msra.mxu0 0.0
        %1390 = vmatprep.subr.mxu0 0.0
        %1391 = vmatpush1.msra.mxu0 0.0
        %1392 = vmatprep.subr.mxu0 0.0
        %1393 = vmatpush1.msra.mxu0 0.0
        %1394 = vmatprep.subr.mxu0 0.0
        %1395 = vmatpush1.msra.mxu0 0.0
        %1396 = vmatprep.subr.mxu0 0.0
        %1397 = vmatpush1.msra.mxu0 0.0
        %1398 = vmatprep.subr.mxu0 0.0
        %1399 = vmatpush1.msra.mxu0 0.0
        %1400 = vmatprep.subr.mxu0 0.0
        %1401 = vmatpush1.msra.mxu0 0.0
        %1402 = vmatprep.subr.mxu0 0.0
        %1403 = vmatpush1.msra.mxu0 0.0
        %1404 = vmatprep.subr.mxu0 0.0
        %1405 = vmatpush1.msra.mxu0 0.0
        %1406 = vmatprep.subr.mxu0 0.0
        %1407 = vmatpush1.msra.mxu0 0.0
        %1408 = vmatprep.subr.mxu0 0.0
        %1409 = vmatpush1.msra.mxu0 0.0
        %1410 = vmatprep.subr.mxu0 0.0
        %1411 = vmatpush1.msra.mxu0 0.0
        %1412 = vmatprep.subr.mxu0 0.0
        %1413 = vmatpush1.msra.mxu0 0.0
        %1414 = vmatprep.subr.mxu0 0.0
        %1415 = vmatpush1.msra.mxu0 0.0
        %1416 = vmatprep.mubr.f32.mxu0 0.0
        %1417 = vmatmul.mubr.f32.gmra.mrb[0].mxu0 %v1347
        %v1418 = vpop.f32.mrb[0].mxu0
        %v1419 = vadd.f32 %v1344, %v1418
        %v1420 = vpop.f32.mrb[0].mxu0
        %1421 = vmatprep.mubr.f32.mxu0 0.0
        %1422 = vmatmul.mubr.f32.gmra.mrb[0].mxu0 %v1350
        %v1423 = vpop.f32.mrb[0].mxu0
        %v1424 = vadd.f32 %v1344, %v1423
        %v1425 = vpop.f32.mrb[0].mxu0
        %1426 = vdwg.mxu0
        %v1428 = vsel %vm630, %v1234, 0
        %v1431 = vsel %vm630, %v1325, 0
        %v1434 = vsel %vm630, %v1330, 0
        %1436 = vmatprep.subr.mxu0 0.0
        %1437 = vmatpush1.xpose.msra.mxu0 %v1431
        %1438 = vmatprep.subr.mxu0 0.0
        %1439 = vmatpush1.xpose.msra.mxu0 %v1434
        %1440 = vmatprep.subr.mxu0 0.0
        %1441 = vmatpush1.xpose.msra.mxu0 0.0
        %1442 = vmatprep.subr.mxu0 0.0
        %1443 = vmatpush1.xpose.msra.mxu0 0.0
        %1444 = vmatprep.subr.mxu0 0.0
        %1445 = vmatpush1.xpose.msra.mxu0 0.0
        %1446 = vmatprep.subr.mxu0 0.0
        %1447 = vmatpush1.xpose.msra.mxu0 0.0
        %1448 = vmatprep.subr.mxu0 0.0
        %1449 = vmatpush1.xpose.msra.mxu0 0.0
        %1450 = vmatprep.subr.mxu0 0.0
        %1451 = vmatpush1.xpose.msra.mxu0 0.0
        %1452 = vmatprep.subr.mxu0 0.0
        %1453 = vmatpush1.xpose.msra.mxu0 0.0
        %1454 = vmatprep.subr.mxu0 0.0
        %1455 = vmatpush1.xpose.msra.mxu0 0.0
        %1456 = vmatprep.subr.mxu0 0.0
        %1457 = vmatpush1.xpose.msra.mxu0 0.0
        %1458 = vmatprep.subr.mxu0 0.0
        %1459 = vmatpush1.xpose.msra.mxu0 0.0
        %1460 = vmatprep.subr.mxu0 0.0
        %1461 = vmatpush1.xpose.msra.mxu0 0.0
        %1462 = vmatprep.subr.mxu0 0.0
        %1463 = vmatpush1.xpose.msra.mxu0 0.0
        %1464 = vmatprep.subr.mxu0 0.0
        %1465 = vmatpush1.xpose.msra.mxu0 0.0
        %1466 = vmatprep.subr.mxu0 0.0
        %1467 = vmatpush1.xpose.msra.mxu0 0.0
        %1468 = vmatprep.subr.mxu0 0.0
        %1469 = vmatpush1.xpose.msra.mxu0 0.0
        %1470 = vmatprep.subr.mxu0 0.0
        %1471 = vmatpush1.xpose.msra.mxu0 0.0
        %1472 = vmatprep.subr.mxu0 0.0
        %1473 = vmatpush1.xpose.msra.mxu0 0.0
        %1474 = vmatprep.subr.mxu0 0.0
        %1475 = vmatpush1.xpose.msra.mxu0 0.0
        %1476 = vmatprep.subr.mxu0 0.0
        %1477 = vmatpush1.xpose.msra.mxu0 0.0
        %1478 = vmatprep.subr.mxu0 0.0
        %1479 = vmatpush1.xpose.msra.mxu0 0.0
        %1480 = vmatprep.subr.mxu0 0.0
        %1481 = vmatpush1.xpose.msra.mxu0 0.0
        %1482 = vmatprep.subr.mxu0 0.0
        %1483 = vmatpush1.xpose.msra.mxu0 0.0
        %1484 = vmatprep.subr.mxu0 0.0
        %1485 = vmatpush1.xpose.msra.mxu0 0.0
        %1486 = vmatprep.subr.mxu0 0.0
        %1487 = vmatpush1.xpose.msra.mxu0 0.0
        %1488 = vmatprep.subr.mxu0 0.0
        %1489 = vmatpush1.xpose.msra.mxu0 0.0
        %1490 = vmatprep.subr.mxu0 0.0
        %1491 = vmatpush1.xpose.msra.mxu0 0.0
        %1492 = vmatprep.subr.mxu0 0.0
        %1493 = vmatpush1.xpose.msra.mxu0 0.0
        %1494 = vmatprep.subr.mxu0 0.0
        %1495 = vmatpush1.xpose.msra.mxu0 0.0
        %1496 = vmatprep.subr.mxu0 0.0
        %1497 = vmatpush1.xpose.msra.mxu0 0.0
        %1498 = vmatprep.subr.mxu0 0.0
        %1499 = vmatpush1.xpose.msra.mxu0 0.0
        %1500 = vmatprep.mubr.f32.mxu0 0.0
        %1501 = vmatmul.mubr.f32.gmra.mrb[0].mxu0 %v1428
        %v1502 = vpop.f32.mrb[0].mxu0
        %v1503 = vadd.f32 0.0, %v1502
        %v1504 = vpop.f32.mrb[0].mxu0
        %1505 = vdwg.mxu0
        %v1506 = vmul.f32 %v1503, 0.17677669
        %vm1507 = vcmask 130048
        %v1508 = vsel %vm1507, %v1506, -inf
        %1509 = vmax.xlane.f32.xlu0 %v1508
        %v1510 = vpop.xlane.xlu0 %1509
        %v1511 = vsub.f32 %v1506, %v1510
        %v1512 = vmul.f32 %v1511, 1.442695
        %v1513 = vpow.pop %v1512
        %v1514 = vsel %vm1507, %v1513, 0.0
        %1515 = vadd.xlane.f32.xlu0 %v1514
        %v1516 = vpop.xlane.xlu0 %1515
        %v1517 = vrcp.pop %v1516
        %v1518 = vmul.f32 %v1513, %v1517
        %v1520 = vsel %vm1507, %v1518, 0
        %1522 = vmatprep.subr.mxu0 0.0
        %1523 = vmatpush1.msra.mxu0 %v1419
        %1524 = vmatprep.subr.mxu0 0.0
        %1525 = vmatpush1.msra.mxu0 %v1424
        %1526 = vmatprep.subr.mxu0 0.0
        %1527 = vmatpush1.msra.mxu0 0.0
        %1528 = vmatprep.subr.mxu0 0.0
        %1529 = vmatpush1.msra.mxu0 0.0
        %1530 = vmatprep.subr.mxu0 0.0
        %1531 = vmatpush1.msra.mxu0 0.0
        %1532 = vmatprep.subr.mxu0 0.0
        %1533 = vmatpush1.msra.mxu0 0.0
        %1534 = vmatprep.subr.mxu0 0.0
        %1535 = vmatpush1.msra.mxu0 0.0
        %1536 = vmatprep.subr.mxu0 0.0
        %1537 = vmatpush1.msra.mxu0 0.0
        %1538 = vmatprep.subr.mxu0 0.0
        %1539 = vmatpush1.msra.mxu0 0.0
        %1540 = vmatprep.subr.mxu0 0.0
        %1541 = vmatpush1.msra.mxu0 0.0
        %1542 = vmatprep.subr.mxu0 0.0
        %1543 = vmatpush1.msra.mxu0 0.0
        %1544 = vmatprep.subr.mxu0 0.0
        %1545 = vmatpush1.msra.mxu0 0.0
        %1546 = vmatprep.subr.mxu0 0.0
        %1547 = vmatpush1.msra.mxu0 0.0
        %1548 = vmatprep.subr.mxu0 0.0
        %1549 = vmatpush1.msra.mxu0 0.0
        %1550 = vmatprep.subr.mxu0 0.0
        %1551 = vmatpush1.msra.mxu0 0.0
        %1552 = vmatprep.subr.mxu0 0.0
        %1553 = vmatpush1.msra.mxu0 0.0
        %1554 = vmatprep.subr.mxu0 0.0
        %1555 = vmatpush1.msra.mxu0 0.0
        %1556 = vmatprep.subr.mxu0 0.0
        %1557 = vmatpush1.msra.mxu0 0.0
        %1558 = vmatprep.subr.mxu0 0.0
        %1559 = vmatpush1.msra.mxu0 0.0
        %1560 = vmatprep.subr.mxu0 0.0
        %1561 = vmatpush1.msra.mxu0 0.0
        %1562 = vmatprep.subr.mxu0 0.0
        %1563 = vmatpush1.msra.mxu0 0.0
        %1564 = vmatprep.subr.mxu0 0.0
        %1565 = vmatpush1.msra.mxu0 0.0
        %1566 = vmatprep.subr.mxu0 0.0
        %1567 = vmatpush1.msra.mxu0 0.0
        %1568 = vmatprep.subr.mxu0 0.0
        %1569 = vmatpush1.msra.mxu0 0.0
        %1570 = vmatprep.subr.mxu0 0.0
        %1571 = vmatpush1.msra.mxu0 0.0
        %1572 = vmatprep.subr.mxu0 0.0
        %1573 = vmatpush1.msra.mxu0 0.0
        %1574 = vmatprep.subr.mxu0 0.0
        %1575 = vmatpush1.msra.mxu0 0.0
        %1576 = vmatprep.subr.mxu0 0.0
        %1577 = vmatpush1.msra.mxu0 0.0
        %1578 = vmatprep.subr.mxu0 0.0
        %1579 = vmatpush1.msra.mxu0 0.0
        %1580 = vmatprep.subr.mxu0 0.0
        %1581 = vmatpush1.msra.mxu0 0.0
        %1582 = vmatprep.subr.mxu0 0.0
        %1583 = vmatpush1.msra.mxu0 0.0
        %1584 = vmatprep.subr.mxu0 0.0
        %1585 = vmatpush1.msra.mxu0 0.0
        %1586 = vmatprep.mubr.f32.mxu0 0.0
        %1587 = vmatmul.mubr.f32.gmra.mrb[0].mxu0 %v1520
        %v1588 = vpop.f32.mrb[0].mxu0
        %v1589 = vadd.f32 0.0, %v1588
        %v1590 = vpop.f32.mrb[0].mxu0
        %1591 = vdwg.mxu0
        %s1592 = scalar_lea.vmem %s6, 96
        %v1593 = vld [vmem:[%s1592] sm:$0xff]
        %v1594 = vld [vmem:[%s1592 + $0x8] sm:$0xff]
        %v1595 = vld [vmem:[%s1592 + $0x10] sm:$0xff]
        %v1596 = vld [vmem:[%s1592 + $0x18] sm:$0xff]
        %s1597 = scalar_lea.vmem %s7, 3
        %v1598 = vld [vmem:[%s1597] sm:$0x1]
        %v1600 = vlaneseq
        %v1601 = vshrl.u32 %v1600, 7
        %v1602 = vsub.s32 0, %v1601
        %v1603 = vrot.slane %v1598, %v1602
        %v1606 = vsel %vm630, %v1589, 0
        %1608 = vmatprep.subr.mxu0 0.0
        %1609 = vmatpush1.msra.mxu0 %v1593
        %1610 = vmatprep.subr.mxu0 0.0
        %1611 = vmatpush1.msra.mxu0 %v1594
        %1612 = vmatprep.subr.mxu0 0.0
        %1613 = vmatpush1.msra.mxu0 %v1595
        %1614 = vmatprep.subr.mxu0 0.0
        %1615 = vmatpush1.msra.mxu0 %v1596
        %1616 = vmatprep.subr.mxu0 0.0
        %1617 = vmatpush1.msra.mxu0 0.0
        %1618 = vmatprep.subr.mxu0 0.0
        %1619 = vmatpush1.msra.mxu0 0.0
        %1620 = vmatprep.subr.mxu0 0.0
        %1621 = vmatpush1.msra.mxu0 0.0
        %1622 = vmatprep.subr.mxu0 0.0
        %1623 = vmatpush1.msra.mxu0 0.0
        %1624 = vmatprep.subr.mxu0 0.0
        %1625 = vmatpush1.msra.mxu0 0.0
        %1626 = vmatprep.subr.mxu0 0.0
        %1627 = vmatpush1.msra.mxu0 0.0
        %1628 = vmatprep.subr.mxu0 0.0
        %1629 = vmatpush1.msra.mxu0 0.0
        %1630 = vmatprep.subr.mxu0 0.0
        %1631 = vmatpush1.msra.mxu0 0.0
        %1632 = vmatprep.subr.mxu0 0.0
        %1633 = vmatpush1.msra.mxu0 0.0
        %1634 = vmatprep.subr.mxu0 0.0
        %1635 = vmatpush1.msra.mxu0 0.0
        %1636 = vmatprep.subr.mxu0 0.0
        %1637 = vmatpush1.msra.mxu0 0.0
        %1638 = vmatprep.subr.mxu0 0.0
        %1639 = vmatpush1.msra.mxu0 0.0
        %1640 = vmatprep.subr.mxu0 0.0
        %1641 = vmatpush1.msra.mxu0 0.0
        %1642 = vmatprep.subr.mxu0 0.0
        %1643 = vmatpush1.msra.mxu0 0.0
        %1644 = vmatprep.subr.mxu0 0.0
        %1645 = vmatpush1.msra.mxu0 0.0
        %1646 = vmatprep.subr.mxu0 0.0
        %1647 = vmatpush1.msra.mxu0 0.0
        %1648 = vmatprep.subr.mxu0 0.0
        %1649 = vmatpush1.msra.mxu0 0.0
        %1650 = vmatprep.subr.mxu0 0.0
        %1651 = vmatpush1.msra.mxu0 0.0
        %1652 = vmatprep.subr.mxu0 0.0
        %1653 = vmatpush1.msra.mxu0 0.0
        %1654 = vmatprep.subr.mxu0 0.0
        %1655 = vmatpush1.msra.mxu0 0.0
        %1656 = vmatprep.subr.mxu0 0.0
        %1657 = vmatpush1.msra.mxu0 0.0
        %1658 = vmatprep.subr.mxu0 0.0
        %1659 = vmatpush1.msra.mxu0 0.0
        %1660 = vmatprep.subr.mxu0 0.0
        %1661 = vmatpush1.msra.mxu0 0.0
        %1662 = vmatprep.subr.mxu0 0.0
        %1663 = vmatpush1.msra.mxu0 0.0
        %1664 = vmatprep.subr.mxu0 0.0
        %1665 = vmatpush1.msra.mxu0 0.0
        %1666 = vmatprep.subr.mxu0 0.0
        %1667 = vmatpush1.msra.mxu0 0.0
        %1668 = vmatprep.subr.mxu0 0.0
        %1669 = vmatpush1.msra.mxu0 0.0
        %1670 = vmatprep.subr.mxu0 0.0
        %1671 = vmatpush1.msra.mxu0 0.0
        %1672 = vmatprep.mubr.f32.mxu0 0.0
        %1673 = vmatmul.mubr.f32.gmra.mrb[0].mxu0 %v1606
        %v1674 = vpop.f32.mrb[0].mxu0
        %v1675 = vadd.f32 %v1603, %v1674
        %v1676 = vpop.f32.mrb[0].mxu0
        %1677 = vdwg.mxu0
        %v1678 = vadd.f32 %v1151, %v1675
        %s1679 = scalar_lea.vmem %s8, 1
        %v1680 = vld [vmem:[%s1679] sm:$0x1]
        %s1681 = scalar_lea.vmem %s9, 1
        %v1682 = vld [vmem:[%s1681] sm:$0x1]
        %v1683 = vsel %vm630, %v1678, 0.0
        %1684 = vadd.xlane.f32.xlu0 %v1683
        %v1685 = vpop.xlane.xlu0 %1684
        %v1686 = vmul.f32 %v1685, %v1127
        %v1687 = vsub.f32 %v1678, %v1686
        %v1688 = vmul.f32 %v1687, %v1687
        %v1689 = vsel %vm630, %v1688, 0.0
        %1690 = vadd.xlane.f32.xlu0 %v1689
        %v1691 = vpop.xlane.xlu0 %1690
        %v1692 = vmul.f32 %v1691, %v1127
        %v1693 = vadd.f32 %v1692, 1e-05
        %v1694 = vrsqrt.pop %v1693
        %v1695 = vmul.f32 %v1687, %v1694
        %v1697 = vlaneseq
        %v1698 = vshrl.u32 %v1697, 7
        %v1699 = vsub.s32 0, %v1698
        %v1700 = vrot.slane %v1680, %v1699
        %v1702 = vmul.f32 %v1695, %v1700
        %v1704 = vlaneseq
        %v1705 = vshrl.u32 %v1704, 7
        %v1706 = vsub.s32 0, %v1705
        %v1707 = vrot.slane %v1682, %v1706
        %v1709 = vadd.f32 %v1702, %v1707
        %v1710 = vld [vmem:[%s10] sm:$0xff]
        %v1711 = vld [vmem:[%s10 + $0x8] sm:$0xff]
        %v1712 = vld [vmem:[%s10 + $0x10] sm:$0xff]
        %v1713 = vld [vmem:[%s10 + $0x18] sm:$0xff]
        %v1714 = vld [vmem:[%s11] sm:$0x1]
        %v1716 = vlaneseq
        %v1717 = vshrl.u32 %v1716, 7
        %v1718 = vsub.s32 0, %v1717
        %v1719 = vrot.slane %v1714, %v1718
        %v1722 = vsel %vm630, %v1709, 0
        %1724 = vmatprep.subr.mxu0 0.0
        %1725 = vmatpush1.msra.mxu0 %v1710
        %1726 = vmatprep.subr.mxu0 0.0
        %1727 = vmatpush1.msra.mxu0 %v1711
        %1728 = vmatprep.subr.mxu0 0.0
        %1729 = vmatpush1.msra.mxu0 %v1712
        %1730 = vmatprep.subr.mxu0 0.0
        %1731 = vmatpush1.msra.mxu0 %v1713
        %1732 = vmatprep.subr.mxu0 0.0
        %1733 = vmatpush1.msra.mxu0 0.0
        %1734 = vmatprep.subr.mxu0 0.0
        %1735 = vmatpush1.msra.mxu0 0.0
        %1736 = vmatprep.subr.mxu0 0.0
        %1737 = vmatpush1.msra.mxu0 0.0
        %1738 = vmatprep.subr.mxu0 0.0
        %1739 = vmatpush1.msra.mxu0 0.0
        %1740 = vmatprep.subr.mxu0 0.0
        %1741 = vmatpush1.msra.mxu0 0.0
        %1742 = vmatprep.subr.mxu0 0.0
        %1743 = vmatpush1.msra.mxu0 0.0
        %1744 = vmatprep.subr.mxu0 0.0
        %1745 = vmatpush1.msra.mxu0 0.0
        %1746 = vmatprep.subr.mxu0 0.0
        %1747 = vmatpush1.msra.mxu0 0.0
        %1748 = vmatprep.subr.mxu0 0.0
        %1749 = vmatpush1.msra.mxu0 0.0
        %1750 = vmatprep.subr.mxu0 0.0
        %1751 = vmatpush1.msra.mxu0 0.0
        %1752 = vmatprep.subr.mxu0 0.0
        %1753 = vmatpush1.msra.mxu0 0.0
        %1754 = vmatprep.subr.mxu0 0.0
        %1755 = vmatpush1.msra.mxu0 0.0
        %1756 = vmatprep.subr.mxu0 0.0
        %1757 = vmatpush1.msra.mxu0 0.0
        %1758 = vmatprep.subr.mxu0 0.0
        %1759 = vmatpush1.msra.mxu0 0.0
        %1760 = vmatprep.subr.mxu0 0.0
        %1761 = vmatpush1.msra.mxu0 0.0
        %1762 = vmatprep.subr.mxu0 0.0
        %1763 = vmatpush1.msra.mxu0 0.0
        %1764 = vmatprep.subr.mxu0 0.0
        %1765 = vmatpush1.msra.mxu0 0.0
        %1766 = vmatprep.subr.mxu0 0.0
        %1767 = vmatpush1.msra.mxu0 0.0
        %1768 = vmatprep.subr.mxu0 0.0
        %1769 = vmatpush1.msra.mxu0 0.0
        %1770 = vmatprep.subr.mxu0 0.0
        %1771 = vmatpush1.msra.mxu0 0.0
        %1772 = vmatprep.subr.mxu0 0.0
        %1773 = vmatpush1.msra.mxu0 0.0
        %1774 = vmatprep.subr.mxu0 0.0
        %1775 = vmatpush1.msra.mxu0 0.0
        %1776 = vmatprep.subr.mxu0 0.0
        %1777 = vmatpush1.msra.mxu0 0.0
        %1778 = vmatprep.subr.mxu0 0.0
        %1779 = vmatpush1.msra.mxu0 0.0
        %1780 = vmatprep.subr.mxu0 0.0
        %1781 = vmatpush1.msra.mxu0 0.0
        %1782 = vmatprep.subr.mxu0 0.0
        %1783 = vmatpush1.msra.mxu0 0.0
        %1784 = vmatprep.subr.mxu0 0.0
        %1785 = vmatpush1.msra.mxu0 0.0
        %1786 = vmatprep.subr.mxu0 0.0
        %1787 = vmatpush1.msra.mxu0 0.0
        %1788 = vmatprep.mubr.f32.mxu0 0.0
        %1789 = vmatmul.mubr.f32.gmra.mrb[0].mxu0 %v1722
        %v1790 = vpop.f32.mrb[0].mxu0
        %v1791 = vadd.f32 %v1719, %v1790
        %v1792 = vpop.f32.mrb[0].mxu0
        %1793 = vdwg.mxu0
        %v1794 = vmax.f32 %v1791, 0.0
        %v1795 = vld [vmem:[%s12] sm:$0xff]
        %v1796 = vld [vmem:[%s12 + $0x8] sm:$0xff]
        %v1797 = vld [vmem:[%s12 + $0x10] sm:$0xff]
        %v1798 = vld [vmem:[%s12 + $0x18] sm:$0xff]
        %v1799 = vld [vmem:[%s12 + $0x20] sm:$0xff]
        %v1800 = vld [vmem:[%s12 + $0x28] sm:$0xff]
        %v1801 = vld [vmem:[%s12 + $0x30] sm:$0xff]
        %v1802 = vld [vmem:[%s12 + $0x38] sm:$0xff]
        %v1803 = vld [vmem:[%s13] sm:$0x1]
        %v1805 = vlaneseq
        %v1806 = vshrl.u32 %v1805, 7
        %v1807 = vsub.s32 0, %v1806
        %v1808 = vrot.slane %v1803, %v1807
        %vm1810 = vcmask 523264
        %v1812 = vsel %vm1810, %v1794, 0
        %1814 = vmatprep.subr.mxu0 0.0
        %1815 = vmatpush1.msra.mxu0 %v1795
        %1816 = vmatprep.subr.mxu0 0.0
        %1817 = vmatpush1.msra.mxu0 %v1796
        %1818 = vmatprep.subr.mxu0 0.0
        %1819 = vmatpush1.msra.mxu0 %v1797
        %1820 = vmatprep.subr.mxu0 0.0
        %1821 = vmatpush1.msra.mxu0 %v1798
        %1822 = vmatprep.subr.mxu0 0.0
        %1823 = vmatpush1.msra.mxu0 %v1799
        %1824 = vmatprep.subr.mxu0 0.0
        %1825 = vmatpush1.msra.mxu0 %v1800
        %1826 = vmatprep.subr.mxu0 0.0
        %1827 = vmatpush1.msra.mxu0 %v1801
        %1828 = vmatprep.subr.mxu0 0.0
        %1829 = vmatpush1.msra.mxu0 %v1802
        %1830 = vmatprep.subr.mxu0 0.0
        %1831 = vmatpush1.msra.mxu0 0.0
        %1832 = vmatprep.subr.mxu0 0.0
        %1833 = vmatpush1.msra.mxu0 0.0
        %1834 = vmatprep.subr.mxu0 0.0
        %1835 = vmatpush1.msra.mxu0 0.0
        %1836 = vmatprep.subr.mxu0 0.0
        %1837 = vmatpush1.msra.mxu0 0.0
        %1838 = vmatprep.subr.mxu0 0.0
        %1839 = vmatpush1.msra.mxu0 0.0
        %1840 = vmatprep.subr.mxu0 0.0
        %1841 = vmatpush1.msra.mxu0 0.0
        %1842 = vmatprep.subr.mxu0 0.0
        %1843 = vmatpush1.msra.mxu0 0.0
        %1844 = vmatprep.subr.mxu0 0.0
        %1845 = vmatpush1.msra.mxu0 0.0
        %1846 = vmatprep.subr.mxu0 0.0
        %1847 = vmatpush1.msra.mxu0 0.0
        %1848 = vmatprep.subr.mxu0 0.0
        %1849 = vmatpush1.msra.mxu0 0.0
        %1850 = vmatprep.subr.mxu0 0.0
        %1851 = vmatpush1.msra.mxu0 0.0
        %1852 = vmatprep.subr.mxu0 0.0
        %1853 = vmatpush1.msra.mxu0 0.0
        %1854 = vmatprep.subr.mxu0 0.0
        %1855 = vmatpush1.msra.mxu0 0.0
        %1856 = vmatprep.subr.mxu0 0.0
        %1857 = vmatpush1.msra.mxu0 0.0
        %1858 = vmatprep.subr.mxu0 0.0
        %1859 = vmatpush1.msra.mxu0 0.0
        %1860 = vmatprep.subr.mxu0 0.0
        %1861 = vmatpush1.msra.mxu0 0.0
        %1862 = vmatprep.subr.mxu0 0.0
        %1863 = vmatpush1.msra.mxu0 0.0
        %1864 = vmatprep.subr.mxu0 0.0
        %1865 = vmatpush1.msra.mxu0 0.0
        %1866 = vmatprep.subr.mxu0 0.0
        %1867 = vmatpush1.msra.mxu0 0.0
        %1868 = vmatprep.subr.mxu0 0.0
        %1869 = vmatpush1.msra.mxu0 0.0
        %1870 = vmatprep.subr.mxu0 0.0
        %1871 = vmatpush1.msra.mxu0 0.0
        %1872 = vmatprep.subr.mxu0 0.0
        %1873 = vmatpush1.msra.mxu0 0.0
        %1874 = vmatprep.subr.mxu0 0.0
        %1875 = vmatpush1.msra.mxu0 0.0
        %1876 = vmatprep.subr.mxu0 0.0
        %1877 = vmatpush1.msra.mxu0 0.0
        %1878 = vmatprep.mubr.f32.mxu0 0.0
        %1879 = vmatmul.mubr.f32.gmra.mrb[0].mxu0 %v1812
        %v1880 = vpop.f32.mrb[0].mxu0
        %v1881 = vadd.f32 %v1808, %v1880
        %v1882 = vpop.f32.mrb[0].mxu0
        %1883 = vdwg.mxu0
        %v1884 = vadd.f32 %v1709, %v1881
        %s1885 = scalar_lea.vmem %s8, 2
        %v1886 = vld [vmem:[%s1885] sm:$0x1]
        %s1887 = scalar_lea.vmem %s9, 2
        %v1888 = vld [vmem:[%s1887] sm:$0x1]
        %v1889 = vsel %vm630, %v1884, 0.0
        %1890 = vadd.xlane.f32.xlu0 %v1889
        %v1891 = vpop.xlane.xlu0 %1890
        %v1892 = vmul.f32 %v1891, %v1127
        %v1893 = vsub.f32 %v1884, %v1892
        %v1894 = vmul.f32 %v1893, %v1893
        %v1895 = vsel %vm630, %v1894, 0.0
        %1896 = vadd.xlane.f32.xlu0 %v1895
        %v1897 = vpop.xlane.xlu0 %1896
        %v1898 = vmul.f32 %v1897, %v1127
        %v1899 = vadd.f32 %v1898, 1e-05
        %v1900 = vrsqrt.pop %v1899
        %v1901 = vmul.f32 %v1893, %v1900
        %v1903 = vlaneseq
        %v1904 = vshrl.u32 %v1903, 7
        %v1905 = vsub.s32 0, %v1904
        %v1906 = vrot.slane %v1886, %v1905
        %v1908 = vmul.f32 %v1901, %v1906
        %v1910 = vlaneseq
        %v1911 = vshrl.u32 %v1910, 7
        %v1912 = vsub.s32 0, %v1911
        %v1913 = vrot.slane %v1888, %v1912
        %v1915 = vadd.f32 %v1908, %v1913
        %1916 = vst.msk [vmem:[%s583] sm:$0xff] %vm630, %v1915
        %v1917 = vld [vmem:[%s14] sm:$0x1]
        %v1918 = vld [vmem:[%s15] sm:$0x1]
        %v1919 = vsel %vm630, %v1915, 0.0
        %1920 = vadd.xlane.f32.xlu0 %v1919
        %v1921 = vpop.xlane.xlu0 %1920
        %v1922 = vmul.f32 %v1921, %v1127
        %v1923 = vsub.f32 %v1915, %v1922
        %v1924 = vmul.f32 %v1923, %v1923
        %v1925 = vsel %vm630, %v1924, 0.0
        %1926 = vadd.xlane.f32.xlu0 %v1925
        %v1927 = vpop.xlane.xlu0 %1926
        %v1928 = vmul.f32 %v1927, %v1127
        %v1929 = vadd.f32 %v1928, 1e-05
        %v1930 = vrsqrt.pop %v1929
        %v1931 = vmul.f32 %v1923, %v1930
        %v1933 = vlaneseq
        %v1934 = vshrl.u32 %v1933, 7
        %v1935 = vsub.s32 0, %v1934
        %v1936 = vrot.slane %v1917, %v1935
        %v1938 = vmul.f32 %v1931, %v1936
        %v1940 = vlaneseq
        %v1941 = vshrl.u32 %v1940, 7
        %v1942 = vsub.s32 0, %v1941
        %v1943 = vrot.slane %v1918, %v1942
        %v1945 = vadd.f32 %v1938, %v1943
        %1946 = vst.msk [vmem:[%s611] sm:$0xff] %vm630, %v1945
        %s1947 = sand.u32 %s396, 1
        %s1948 = scalar_lea.sflag [#allocation3], %s1947
        %s1949 = sand.u32 %s396, 1
        %s1950 = smul.addr %s1949, 8
        %s1951 = scalar_lea.vmem [#allocation2], %s1950
        %p1952 = scmp.lt.s32.totalorder %s32, 1
        %s1953 = scalar_select %p1952, %s32, 1
        %s1954 = smul.addr %s1953, 8
        %s1955 = scalar_lea.vmem %s17, %s1954
        // Predicated region
        $region85: #{_lambda_.14} parent=83 // pred_check
          %p1956 = pneg %p406
        $region86: #{_lambda_.14} parent=83 // pred_check_branch
          %1958 = sbr.rel (%p1956) target = $region88
        $region87: #{_lambda_.14} parent=83 // pred_region
          %s1960 = ssub.s32 128, 128
          %1961 = vsyncadd %s1948, %s1960
          %s1962 = smul.addr %s32, 128
          %s1963 = scalar_lea.hbm %s16, %s1962
          %s1965 = sshll.u32 %s1951, 4
          %s1966 = int_to_ptr.vmem [resolvable:$true] %s1965
          %1968 = dma.vmem_to_hbm [thread:$0]  %s1966, 128, %s1963, %s1948
        $region88: #{_lambda_.14} parent=83 // pred_fallthru
          _
        // Predicated region
        $region89: #{_lambda_.14} parent=83 // pred_check
          %p1969 = pneg %p432
        $region90: #{_lambda_.14} parent=83 // pred_check_branch
          %1971 = sbr.rel (%p1969) target = $region92
        $region91: #{_lambda_.14} parent=83 // pred_region
          _
        $region92: #{_lambda_.14} parent=83 // pred_fallthru
          _
      $region84: #{_lambda_.14} parent=5 // pred_fallthru
        _
      %p1972 = scmp.le.s32.totalorder 2, %s27
      // Predicated region
      $region93: #{_lambda_.14} parent=5 // pred_check
        %p1973 = pneg %p1972
      $region94: #{_lambda_.14} parent=5 // pred_check_branch
        %1975 = sbr.rel (%p1973) target = $region96
      $region95: #{_lambda_.14} parent=5 // pred_region
        %s1976 = ssub.s32 %s27, 2
        // Predicated region
        $region97: #{_lambda_.14} parent=95 // pred_check
          %p1977 = pneg %p412
        $region98: #{_lambda_.14} parent=95 // pred_check_branch
          %1979 = sbr.rel (%p1977) target = $region100
        $region99: #{_lambda_.14} parent=95 // pred_region
          %s1980 = sand.u32 %s397, 1
          %s1981 = scalar_lea.sflag [#allocation3], %s1980
          %s1982 = sand.u32 %s397, 1
          %s1983 = smul.addr %s1982, 8
          %s1984 = scalar_lea.vmem [#allocation2], %s1983
          %1985 = dma.done %s1981, 128
        $region100: #{_lambda_.14} parent=95 // pred_fallthru
          _
        // Predicated region
        $region101: #{_lambda_.14} parent=95 // pred_check
          %p1986 = pneg %p438
        $region102: #{_lambda_.14} parent=95 // pred_check_branch
          %1988 = sbr.rel (%p1986) target = $region104
        $region103: #{_lambda_.14} parent=95 // pred_region
          %p1989 = scmp.lt.s32.totalorder %s33, 1
          %s1990 = scalar_select %p1989, %s33, 1
          %s1991 = smul.addr %s1990, 8
          %s1992 = scalar_lea.vmem %s17, %s1991
        $region104: #{_lambda_.14} parent=95 // pred_fallthru
          _
      $region96: #{_lambda_.14} parent=5 // pred_fallthru
        _
    $region6: #{_lambda_.14} parent=1 // loop_footer
      %s31 = sadd.s32 1, %s27
    $region7: #{_lambda_.14} parent=1 // loop_footer_branch
      %26 = sbr.rel target = $region3
    $region8: #{_lambda_.14} parent=1 // loop_exit
      _
    %1993 = vsyncpa [#allocation3], 1
    %s1994 = scalar_lea.sflag [#allocation3], 1
    %1995 = vsyncpa %s1994, 1

</llo_original>
